<compile_context>
chip_gen: v5e
topology: v5e:2x2
jax: 0.10.0
libtpu: 0.0.40
codegen_flags: <defaults>
</compile_context>

<pallas_src>
import functools

import jax
import jax.numpy as jnp
from jax.experimental import pallas as pl
from jax.experimental.pallas import tpu as pltpu


# ----------------------------------------------------------------------------
# In-kernel helpers
# ----------------------------------------------------------------------------
def _gelu(x):
    # tanh-approximate GELU (EUP tanh).  PyTorch nn.GELU default is erf; the
    # tanh approximation differs by ~1e-3 relative.
    # TODO(synk): switch to erf-GELU if bit-exact parity with PyTorch is needed.
    c = 0.7978845608028654  # sqrt(2/pi)
    return 0.5 * x * (1.0 + jnp.tanh(c * (x + 0.044715 * x * x * x)))


def _silu(x):
    return x * (1.0 / (1.0 + jnp.exp(-x)))


# ----------------------------------------------------------------------------
# Fused forward kernel (one grid step == one batch element)
# ----------------------------------------------------------------------------
def _mask_transformer_kernel(
    # data
    pts_ref, ctr_ref,
    # TinyPointNet (concat-matmul pre-split into global/local halves)
    pn_w1, pn_b1, pn_w2, pn_b2, pn_w3g, pn_w3l, pn_b3, pn_w4, pn_b4,
    # positional embedding
    pos_w1, pos_b1, pos_w2, pos_b2,
    # transformer blocks (stacked over depth; attention weights pre-split per head)
    ln1_g, ln1_b, wq, bq, wk, bk, wv, bv, wproj, bproj,
    ln2_g, ln2_b, w1s, w3s, w2s,
    # final norm + masknet
    lnf_g, lnf_b, mask_w1, mask_b1, mask_w2,
    # output
    o_ref,
    *, G, N, D, H, depth, inv_temp, eps,
):
    Dh = D // H
    scale = float(Dh) ** -0.5

    def mm(a, w, b=None):
        y = jnp.dot(a, w, preferred_element_type=jnp.float32)
        if b is not None:
            y = y + b
        return y

    def layernorm(x, g, b):
        mu = jnp.mean(x, axis=-1, keepdims=True)
        xc = x - mu
        var = jnp.mean(xc * xc, axis=-1, keepdims=True)
        return xc * jax.lax.rsqrt(var + eps) * g + b

    # ---------------- TinyPointNet (Conv1d k=1 == per-point Linear) ----------
    pts = pts_ref[0]                                              # (G*N, 3)
    f1 = jnp.maximum(mm(pts, pn_w1[...], pn_b1[...]), 0.0)       # (G*N, 128)
    f2 = mm(f1, pn_w2[...], pn_b2[...])                          # (G*N, 256)

    # per-group max over the N points of each patch (sublane reduction)
    gmax = jnp.max(f2.reshape(G, N, 256), axis=1)                # (G, 256)

    # concat([global, local], -1) @ W3  ==  global @ W3[:256] + local @ W3[256:]
    glob = mm(gmax, pn_w3g[...])                                 # (G, 512)   N x fewer flops
    loc = mm(f2, pn_w3l[...])                                    # (G*N, 512)
    f3 = loc.reshape(G, N, 512) + glob[:, None, :] + pn_b3[...]  # broadcast global per group
    f4 = jnp.maximum(f3, 0.0).reshape(G * N, 512)                # ReLU
    f5 = mm(f4, pn_w4[...], pn_b4[...])                          # (G*N, D)
    emb = jnp.max(f5.reshape(G, N, D), axis=1)                   # (G, D) pooled token embeddings

    # ---------------- positional embedding from patch centers ----------------
    ctr = ctr_ref[0]                                             # (G, 3)
    pos_h = _gelu(mm(ctr, pos_w1[...], pos_b1[...]))             # (G, 128)
    pos = mm(pos_h, pos_w2[...], pos_b2[...])                    # (G, D)

    # ---------------- transformer (pre-LN, pos added each block) -------------
    x = emb
    for d in range(depth):
        x = x + pos
        h = layernorm(x, ln1_g[d], ln1_b[d])                     # (G, D)
        attn_acc = None
        for hi in range(H):
            q = mm(h, wq[d, hi], bq[d, hi])                      # (G, Dh)
            k = mm(h, wk[d, hi], bk[d, hi])                      # (G, Dh)
            v = mm(h, wv[d, hi], bv[d, hi])                      # (G, Dh)
            s = jax.lax.dot_general(
                q, k, (((1,), (1,)), ((), ())),
                preferred_element_type=jnp.float32) * scale      # (G, G)
            s = s - jnp.max(s, axis=-1, keepdims=True)
            p = jnp.exp(s)
            p = p * pl.reciprocal(
                jnp.sum(p, axis=-1, keepdims=True), approx=True)
            o_h = jnp.dot(p, v, preferred_element_type=jnp.float32)   # (G, Dh)
            contrib = jnp.dot(o_h, wproj[d, hi],
                              preferred_element_type=jnp.float32)     # (G, D)
            attn_acc = contrib if attn_acc is None else attn_acc + contrib
        a = attn_acc + bproj[d]
        x = x + a                                                # DropPath: no-op (inference)
        h2 = layernorm(x, ln2_g[d], ln2_b[d])
        gate = mm(h2, w1s[d])                                    # (G, Hf)
        up = mm(h2, w3s[d])                                      # (G, Hf)
        ff = mm(_silu(gate) * up, w2s[d])                        # SwiGLU -> (G, D)
        x = x + ff                                               # Dropout: no-op (inference)

    # ---------------- final norm + masknet + 1/temp + softmax (fp32) ---------
    x = layernorm(x, lnf_g[...], lnf_b[...])
    hm = _gelu(mm(x, mask_w1[...], mask_b1[...]))                # Dropout(0.5): no-op
    logits = mm(hm, mask_w2[...]) * inv_temp                     # (G, n_masks), no bias
    logits = logits - jnp.max(logits, axis=-1, keepdims=True)
    pexp = jnp.exp(logits)
    probs = pexp / jnp.sum(pexp, axis=-1, keepdims=True)
    o_ref[0] = probs.astype(o_ref.dtype)


# ----------------------------------------------------------------------------
# Parameter construction (deterministic, synthetic)
# ----------------------------------------------------------------------------
def _fold_bn(w, b, eps=1e-5):
    # Eval-mode BatchNorm1d with default buffers (running_mean=0, running_var=1,
    # gamma=1, beta=0) folded into the preceding 1x1 conv.
    # NOTE: exact only for untrained/synthetic params; a real checkpoint must
    # fold its actual running statistics and affine parameters.
    scale = 1.0 / jnp.sqrt(1.0 + eps)
    return w * scale, b * scale


def init_params(key, *, embedding_dim, n_heads, depth, n_masks):
    D = embedding_dim
    assert D % n_heads == 0, "embedding_dim must be divisible by n_heads"
    Dh = D // n_heads
    ffn_hidden = int(2 * 4 * D / 3)  # SwiGLU hidden size (2/3 * 4D)
    keys = list(jax.random.split(key, 16 + depth * 8))
    it = iter(keys)

    def lin(fin, fout, std=0.02):
        w = jax.random.normal(next(it), (fin, fout), jnp.float32) * std
        b = jnp.zeros((1, fout), jnp.float32)
        return w, b

    p = {}
    # TinyPointNet: 3->128 (BN,ReLU) -> 256, maxpool, concat global
    #               -> 512->512 (BN,ReLU) -> D, maxpool.
    w, b = lin(3, 128)
    p["pn_w1"], p["pn_b1"] = _fold_bn(w, b)
    p["pn_w2"], p["pn_b2"] = lin(128, 256)
    w, b = lin(512, 512)
    w, b = _fold_bn(w, b)
    p["pn_w3g"] = w[:256, :]     # multiplies the broadcast global feature
    p["pn_w3l"] = w[256:, :]     # multiplies the per-point local feature
    p["pn_b3"] = b
    p["pn_w4"], p["pn_b4"] = lin(512, D)
    # pos embedding: Linear(3,128) GELU Linear(128, D)
    p["pos_w1"], p["pos_b1"] = lin(3, 128)
    p["pos_w2"], p["pos_b2"] = lin(128, D)

    # transformer blocks: stack over depth; split QKV / proj weights per head
    # once here so the kernel never slices the lane dim at runtime.
    ln1_g, ln1_b, wq, bq, wk, bk, wv, bv, wproj, bproj = ([] for _ in range(10))
    ln2_g, ln2_b, w1s, w3s, w2s = ([] for _ in range(5))
    H = n_heads
    for _ in range(depth):
        ln1_g.append(jnp.ones((1, D), jnp.float32))
        ln1_b.append(jnp.zeros((1, D), jnp.float32))
        wqkv, bqkv = lin(D, 3 * D)
        wq.append(wqkv[:, 0 * D:1 * D].reshape(D, H, Dh).transpose(1, 0, 2))
        wk.append(wqkv[:, 1 * D:2 * D].reshape(D, H, Dh).transpose(1, 0, 2))
        wv.append(wqkv[:, 2 * D:3 * D].reshape(D, H, Dh).transpose(1, 0, 2))
        bq.append(bqkv[:, 0 * D:1 * D].reshape(1, H, Dh).transpose(1, 0, 2))
        bk.append(bqkv[:, 1 * D:2 * D].reshape(1, H, Dh).transpose(1, 0, 2))
        bv.append(bqkv[:, 2 * D:3 * D].reshape(1, H, Dh).transpose(1, 0, 2))
        wp, bp = lin(D, D)
        wproj.append(wp.reshape(H, Dh, D))
        bproj.append(bp)
        ln2_g.append(jnp.ones((1, D), jnp.float32))
        ln2_b.append(jnp.zeros((1, D), jnp.float32))
        a, _ = lin(D, ffn_hidden); w1s.append(a)
        a, _ = lin(D, ffn_hidden); w3s.append(a)
        a, _ = lin(ffn_hidden, D); w2s.append(a)

    p["ln1_g"] = jnp.stack(ln1_g); p["ln1_b"] = jnp.stack(ln1_b)
    p["wq"] = jnp.stack(wq); p["bq"] = jnp.stack(bq)
    p["wk"] = jnp.stack(wk); p["bk"] = jnp.stack(bk)
    p["wv"] = jnp.stack(wv); p["bv"] = jnp.stack(bv)
    p["wproj"] = jnp.stack(wproj); p["bproj"] = jnp.stack(bproj)
    p["ln2_g"] = jnp.stack(ln2_g); p["ln2_b"] = jnp.stack(ln2_b)
    p["w1"] = jnp.stack(w1s); p["w3"] = jnp.stack(w3s); p["w2"] = jnp.stack(w2s)

    p["lnf_g"] = jnp.ones((1, D), jnp.float32)
    p["lnf_b"] = jnp.zeros((1, D), jnp.float32)
    # masknet: Linear(D,256) GELU Dropout Linear(256, n_masks, bias=False)
    p["mask_w1"], p["mask_b1"] = lin(D, 256)
    p["mask_w2"], _ = lin(256, n_masks)
    return p


# ----------------------------------------------------------------------------
# Forward pass: one fused pallas_call, grid=(B,) parallel
# ----------------------------------------------------------------------------
def mask_transformer_forward(params, points, centers, *, n_heads, temp):
    """points: (B, G, N, 3), centers: (B, G, 3) -> probs (B, G, n_masks)."""
    B, G, N, _ = points.shape
    D = int(params["lnf_g"].shape[-1])
    depth = int(params["wq"].shape[0])
    n_masks = int(params["mask_w2"].shape[-1])
    assert D % n_heads == 0
    # Pooling is done with a sublane-aligned (G*N, C) -> (G, N, C) reshape.
    assert N % 8 == 0, "points-per-patch must be a multiple of 8 for this kernel"

    pts = points.reshape(B, G * N, 3)

    weight_order = [
        "pn_w1", "pn_b1", "pn_w2", "pn_b2", "pn_w3g", "pn_w3l", "pn_b3",
        "pn_w4", "pn_b4",
        "pos_w1", "pos_b1", "pos_w2", "pos_b2",
        "ln1_g", "ln1_b", "wq", "bq", "wk", "bk", "wv", "bv", "wproj", "bproj",
        "ln2_g", "ln2_b", "w1", "w3", "w2",
        "lnf_g", "lnf_b", "mask_w1", "mask_b1", "mask_w2",
    ]
    weights = [params[k] for k in weight_order]

    in_specs = [
        pl.BlockSpec((1, G * N, 3), lambda b: (b, 0, 0)),
        pl.BlockSpec((1, G, 3), lambda b: (b, 0, 0)),
    ]
    for w in weights:  # full-array, VMEM-resident, same block for every grid step
        in_specs.append(pl.BlockSpec(w.shape, lambda b, _n=w.ndim: (0,) * _n))

    kernel = functools.partial(
        _mask_transformer_kernel,
        G=G, N=N, D=D, H=n_heads, depth=depth,
        inv_temp=1.0 / float(temp), eps=1e-5,
    )

    probs = pl.pallas_call(
        kernel,
        out_shape=jax.ShapeDtypeStruct((B, G, n_masks), jnp.float32),
        grid=(B,),
        in_specs=in_specs,
        out_specs=pl.BlockSpec((1, G, n_masks), lambda b: (b, 0, 0)),
        compiler_params=pltpu.CompilerParams(
            dimension_semantics=("parallel",),       # shard batches across TCs (v7x)
        ),
    )(pts, centers, *weights)
    return probs


# ----------------------------------------------------------------------------
if __name__ == "__main__":
    # Small shapes consistent with the module:
    #   batch=2, n_patches(G)=8, points-per-patch(N)=16, embedding_dim=48,
    #   n_heads=3, depth=2, n_masks=3, temp=0.02
    B, G, N = 2, 8, 16
    D, HEADS, DEPTH, N_MASKS, TEMP = 48, 3, 2, 3, 0.02

    key = jax.random.PRNGKey(0)
    kp, kpts, kctr = jax.random.split(key, 3)
    params = init_params(
        kp, embedding_dim=D, n_heads=HEADS, depth=DEPTH, n_masks=N_MASKS
    )
    # PatchedCloud.flatten(): grouped points (B, G, N, 3) and centers (B, G, 3)
    # TODO(synk): PatchedCloud source not provided; assuming grouped-points + centers layout.
    points = jax.random.normal(kpts, (B, G, N, 3), jnp.float32)
    centers = jax.random.normal(kctr, (B, G, 3), jnp.float32)

    probs = mask_transformer_forward(
        params, points, centers, n_heads=HEADS, temp=TEMP
    )
    probs = jax.block_until_ready(probs)

    assert probs.shape == (B, G, N_MASKS), probs.shape
    sums = jnp.sum(probs, axis=-1)
    assert bool(jnp.all(jnp.abs(sums - 1.0) < 1e-3)), "softmax rows must sum to 1"
    assert bool(jnp.all(jnp.isfinite(probs))), "probs must be finite"
    print("KERNEL_OK")
</pallas_src>

<mosaic_0001>
module attributes {stable_mosaic.version = 11 : i64} {
  func.func @_mask_transformer_kernel(%arg0: i32, %arg1: memref<1x128x3xf32, #tpu.memory_space<vmem>>, %arg2: memref<1x8x3xf32, #tpu.memory_space<vmem>>, %arg3: memref<3x128xf32, #tpu.memory_space<vmem>>, %arg4: memref<1x128xf32, #tpu.memory_space<vmem>>, %arg5: memref<128x256xf32, #tpu.memory_space<vmem>>, %arg6: memref<1x256xf32, #tpu.memory_space<vmem>>, %arg7: memref<256x512xf32, #tpu.memory_space<vmem>>, %arg8: memref<256x512xf32, #tpu.memory_space<vmem>>, %arg9: memref<1x512xf32, #tpu.memory_space<vmem>>, %arg10: memref<512x48xf32, #tpu.memory_space<vmem>>, %arg11: memref<1x48xf32, #tpu.memory_space<vmem>>, %arg12: memref<3x128xf32, #tpu.memory_space<vmem>>, %arg13: memref<1x128xf32, #tpu.memory_space<vmem>>, %arg14: memref<128x48xf32, #tpu.memory_space<vmem>>, %arg15: memref<1x48xf32, #tpu.memory_space<vmem>>, %arg16: memref<2x1x48xf32, #tpu.memory_space<vmem>>, %arg17: memref<2x1x48xf32, #tpu.memory_space<vmem>>, %arg18: memref<2x3x48x16xf32, #tpu.memory_space<vmem>>, %arg19: memref<2x3x1x16xf32, #tpu.memory_space<vmem>>, %arg20: memref<2x3x48x16xf32, #tpu.memory_space<vmem>>, %arg21: memref<2x3x1x16xf32, #tpu.memory_space<vmem>>, %arg22: memref<2x3x48x16xf32, #tpu.memory_space<vmem>>, %arg23: memref<2x3x1x16xf32, #tpu.memory_space<vmem>>, %arg24: memref<2x3x16x48xf32, #tpu.memory_space<vmem>>, %arg25: memref<2x1x48xf32, #tpu.memory_space<vmem>>, %arg26: memref<2x1x48xf32, #tpu.memory_space<vmem>>, %arg27: memref<2x1x48xf32, #tpu.memory_space<vmem>>, %arg28: memref<2x48x128xf32, #tpu.memory_space<vmem>>, %arg29: memref<2x48x128xf32, #tpu.memory_space<vmem>>, %arg30: memref<2x128x48xf32, #tpu.memory_space<vmem>>, %arg31: memref<1x48xf32, #tpu.memory_space<vmem>>, %arg32: memref<1x48xf32, #tpu.memory_space<vmem>>, %arg33: memref<48x256xf32, #tpu.memory_space<vmem>>, %arg34: memref<1x256xf32, #tpu.memory_space<vmem>>, %arg35: memref<256x3xf32, #tpu.memory_space<vmem>>, %arg36: memref<1x8x3xf32, #tpu.memory_space<vmem>>) attributes {dimension_semantics = [#tpu.dimension_semantics<parallel>], iteration_bounds = array<i64: 2>, scalar_prefetch = 0 : i64, scratch_operands = 0 : i64, tpu.core_type = #tpu.core_type<tc>, window_params = [{transform_indices = @transform_0, window_bounds = array<i64: 1, 128, 3>}, {transform_indices = @transform_1, window_bounds = array<i64: 1, 8, 3>}, {pipeline_mode = #tpu.pipeline_mode<synchronous>, transform_indices = @transform_2, window_bounds = array<i64: 3, 128>}, {pipeline_mode = #tpu.pipeline_mode<synchronous>, transform_indices = @transform_3, window_bounds = array<i64: 1, 128>}, {pipeline_mode = #tpu.pipeline_mode<synchronous>, transform_indices = @transform_4, window_bounds = array<i64: 128, 256>}, {pipeline_mode = #tpu.pipeline_mode<synchronous>, transform_indices = @transform_5, window_bounds = array<i64: 1, 256>}, {pipeline_mode = #tpu.pipeline_mode<synchronous>, transform_indices = @transform_6, window_bounds = array<i64: 256, 512>}, {pipeline_mode = #tpu.pipeline_mode<synchronous>, transform_indices = @transform_7, window_bounds = array<i64: 256, 512>}, {pipeline_mode = #tpu.pipeline_mode<synchronous>, transform_indices = @transform_8, window_bounds = array<i64: 1, 512>}, {pipeline_mode = #tpu.pipeline_mode<synchronous>, transform_indices = @transform_9, window_bounds = array<i64: 512, 48>}, {pipeline_mode = #tpu.pipeline_mode<synchronous>, transform_indices = @transform_10, window_bounds = array<i64: 1, 48>}, {pipeline_mode = #tpu.pipeline_mode<synchronous>, transform_indices = @transform_11, window_bounds = array<i64: 3, 128>}, {pipeline_mode = #tpu.pipeline_mode<synchronous>, transform_indices = @transform_12, window_bounds = array<i64: 1, 128>}, {pipeline_mode = #tpu.pipeline_mode<synchronous>, transform_indices = @transform_13, window_bounds = array<i64: 128, 48>}, {pipeline_mode = #tpu.pipeline_mode<synchronous>, transform_indices = @transform_14, window_bounds = array<i64: 1, 48>}, {pipeline_mode = #tpu.pipeline_mode<synchronous>, transform_indices = @transform_15, window_bounds = array<i64: 2, 1, 48>}, {pipeline_mode = #tpu.pipeline_mode<synchronous>, transform_indices = @transform_16, window_bounds = array<i64: 2, 1, 48>}, {pipeline_mode = #tpu.pipeline_mode<synchronous>, transform_indices = @transform_17, window_bounds = array<i64: 2, 3, 48, 16>}, {pipeline_mode = #tpu.pipeline_mode<synchronous>, transform_indices = @transform_18, window_bounds = array<i64: 2, 3, 1, 16>}, {pipeline_mode = #tpu.pipeline_mode<synchronous>, transform_indices = @transform_19, window_bounds = array<i64: 2, 3, 48, 16>}, {pipeline_mode = #tpu.pipeline_mode<synchronous>, transform_indices = @transform_20, window_bounds = array<i64: 2, 3, 1, 16>}, {pipeline_mode = #tpu.pipeline_mode<synchronous>, transform_indices = @transform_21, window_bounds = array<i64: 2, 3, 48, 16>}, {pipeline_mode = #tpu.pipeline_mode<synchronous>, transform_indices = @transform_22, window_bounds = array<i64: 2, 3, 1, 16>}, {pipeline_mode = #tpu.pipeline_mode<synchronous>, transform_indices = @transform_23, window_bounds = array<i64: 2, 3, 16, 48>}, {pipeline_mode = #tpu.pipeline_mode<synchronous>, transform_indices = @transform_24, window_bounds = array<i64: 2, 1, 48>}, {pipeline_mode = #tpu.pipeline_mode<synchronous>, transform_indices = @transform_25, window_bounds = array<i64: 2, 1, 48>}, {pipeline_mode = #tpu.pipeline_mode<synchronous>, transform_indices = @transform_26, window_bounds = array<i64: 2, 1, 48>}, {pipeline_mode = #tpu.pipeline_mode<synchronous>, transform_indices = @transform_27, window_bounds = array<i64: 2, 48, 128>}, {pipeline_mode = #tpu.pipeline_mode<synchronous>, transform_indices = @transform_28, window_bounds = array<i64: 2, 48, 128>}, {pipeline_mode = #tpu.pipeline_mode<synchronous>, transform_indices = @transform_29, window_bounds = array<i64: 2, 128, 48>}, {pipeline_mode = #tpu.pipeline_mode<synchronous>, transform_indices = @transform_30, window_bounds = array<i64: 1, 48>}, {pipeline_mode = #tpu.pipeline_mode<synchronous>, transform_indices = @transform_31, window_bounds = array<i64: 1, 48>}, {pipeline_mode = #tpu.pipeline_mode<synchronous>, transform_indices = @transform_32, window_bounds = array<i64: 48, 256>}, {pipeline_mode = #tpu.pipeline_mode<synchronous>, transform_indices = @transform_33, window_bounds = array<i64: 1, 256>}, {pipeline_mode = #tpu.pipeline_mode<synchronous>, transform_indices = @transform_34, window_bounds = array<i64: 256, 3>}, {transform_indices = @transform_35, window_bounds = array<i64: 1, 8, 3>}]} {
    %c0 = arith.constant 0 : index
    %c0_0 = arith.constant 0 : index
    %c0_1 = arith.constant 0 : index
    %0 = vector.load %arg1[%c0, %c0_0, %c0_1] : memref<1x128x3xf32, #tpu.memory_space<vmem>>, vector<1x128x3xf32>
    %1 = vector.shape_cast %0 : vector<1x128x3xf32> to vector<128x3xf32>
    %c0_2 = arith.constant 0 : index
    %c0_3 = arith.constant 0 : index
    %2 = vector.load %arg3[%c0_2, %c0_3] : memref<3x128xf32, #tpu.memory_space<vmem>>, vector<3x128xf32>
    %c0_4 = arith.constant 0 : index
    %c0_5 = arith.constant 0 : index
    %3 = vector.load %arg4[%c0_4, %c0_5] : memref<1x128xf32, #tpu.memory_space<vmem>>, vector<1x128xf32>
    %cst = arith.constant dense<0.000000e+00> : vector<128x128xf32>
    %4 = tpu.matmul %1, %2, %cst {dimension_numbers = #tpu.dot_dimension_numbers<[1], [0], [0], [1], [0, 0, 1, 1], [], []>} : vector<128x3xf32>, vector<3x128xf32>, vector<128x128xf32> -> vector<128x128xf32>
    %5 = vector.broadcast %3 : vector<1x128xf32> to vector<128x128xf32>
    %6 = arith.addf %4, %5 : vector<128x128xf32>
    %cst_6 = arith.constant 0.000000e+00 : f32
    %7 = vector.broadcast %cst_6 : f32 to vector<128x128xf32>
    %8 = arith.maximumf %6, %7 : vector<128x128xf32>
    %c0_7 = arith.constant 0 : index
    %c0_8 = arith.constant 0 : index
    %9 = vector.load %arg5[%c0_7, %c0_8] : memref<128x256xf32, #tpu.memory_space<vmem>>, vector<128x256xf32>
    %c0_9 = arith.constant 0 : index
    %c0_10 = arith.constant 0 : index
    %10 = vector.load %arg6[%c0_9, %c0_10] : memref<1x256xf32, #tpu.memory_space<vmem>>, vector<1x256xf32>
    %cst_11 = arith.constant dense<0.000000e+00> : vector<128x256xf32>
    %11 = tpu.matmul %8, %9, %cst_11 {dimension_numbers = #tpu.dot_dimension_numbers<[1], [0], [0], [1], [0, 0, 1, 1], [], []>} : vector<128x128xf32>, vector<128x256xf32>, vector<128x256xf32> -> vector<128x256xf32>
    %12 = vector.broadcast %10 : vector<1x256xf32> to vector<128x256xf32>
    %13 = arith.addf %11, %12 : vector<128x256xf32>
    %14 = vector.shape_cast %13 : vector<128x256xf32> to vector<8x16x256xf32>
    %cst_12 = arith.constant dense<0xFF800000> : vector<8x256xf32>
    %15 = vector.multi_reduction <maximumf>, %14, %cst_12 [1] : vector<8x16x256xf32> to vector<8x256xf32>
    %c0_13 = arith.constant 0 : index
    %c0_14 = arith.constant 0 : index
    %16 = vector.load %arg7[%c0_13, %c0_14] : memref<256x512xf32, #tpu.memory_space<vmem>>, vector<256x512xf32>
    %cst_15 = arith.constant dense<0.000000e+00> : vector<8x512xf32>
    %17 = tpu.matmul %15, %16, %cst_15 {dimension_numbers = #tpu.dot_dimension_numbers<[1], [0], [0], [1], [0, 0, 1, 1], [], []>} : vector<8x256xf32>, vector<256x512xf32>, vector<8x512xf32> -> vector<8x512xf32>
    %c0_16 = arith.constant 0 : index
    %c0_17 = arith.constant 0 : index
    %18 = vector.load %arg8[%c0_16, %c0_17] : memref<256x512xf32, #tpu.memory_space<vmem>>, vector<256x512xf32>
    %cst_18 = arith.constant dense<0.000000e+00> : vector<128x512xf32>
    %19 = tpu.matmul %13, %18, %cst_18 {dimension_numbers = #tpu.dot_dimension_numbers<[1], [0], [0], [1], [0, 0, 1, 1], [], []>} : vector<128x256xf32>, vector<256x512xf32>, vector<128x512xf32> -> vector<128x512xf32>
    %20 = vector.shape_cast %19 : vector<128x512xf32> to vector<8x16x512xf32>
    %21 = vector.shape_cast %17 : vector<8x512xf32> to vector<8x1x512xf32>
    %22 = vector.broadcast %21 : vector<8x1x512xf32> to vector<8x16x512xf32>
    %23 = arith.addf %20, %22 : vector<8x16x512xf32>
    %c0_19 = arith.constant 0 : index
    %c0_20 = arith.constant 0 : index
    %24 = vector.load %arg9[%c0_19, %c0_20] : memref<1x512xf32, #tpu.memory_space<vmem>>, vector<1x512xf32>
    %25 = vector.shape_cast %24 : vector<1x512xf32> to vector<1x1x512xf32>
    %26 = vector.broadcast %25 : vector<1x1x512xf32> to vector<8x16x512xf32>
    %27 = arith.addf %23, %26 : vector<8x16x512xf32>
    %cst_21 = arith.constant 0.000000e+00 : f32
    %28 = vector.broadcast %cst_21 : f32 to vector<8x16x512xf32>
    %29 = arith.maximumf %27, %28 : vector<8x16x512xf32>
    %30 = vector.shape_cast %29 : vector<8x16x512xf32> to vector<128x512xf32>
    %c0_22 = arith.constant 0 : index
    %c0_23 = arith.constant 0 : index
    %31 = vector.load %arg10[%c0_22, %c0_23] : memref<512x48xf32, #tpu.memory_space<vmem>>, vector<512x48xf32>
    %c0_24 = arith.constant 0 : index
    %c0_25 = arith.constant 0 : index
    %32 = vector.load %arg11[%c0_24, %c0_25] : memref<1x48xf32, #tpu.memory_space<vmem>>, vector<1x48xf32>
    %cst_26 = arith.constant dense<0.000000e+00> : vector<128x48xf32>
    %33 = tpu.matmul %30, %31, %cst_26 {dimension_numbers = #tpu.dot_dimension_numbers<[1], [0], [0], [1], [0, 0, 1, 1], [], []>} : vector<128x512xf32>, vector<512x48xf32>, vector<128x48xf32> -> vector<128x48xf32>
    %34 = vector.broadcast %32 : vector<1x48xf32> to vector<128x48xf32>
    %35 = arith.addf %33, %34 : vector<128x48xf32>
    %36 = vector.shape_cast %35 : vector<128x48xf32> to vector<8x16x48xf32>
    %cst_27 = arith.constant dense<0xFF800000> : vector<8x48xf32>
    %37 = vector.multi_reduction <maximumf>, %36, %cst_27 [1] : vector<8x16x48xf32> to vector<8x48xf32>
    %c0_28 = arith.constant 0 : index
    %c0_29 = arith.constant 0 : index
    %c0_30 = arith.constant 0 : index
    %38 = vector.load %arg2[%c0_28, %c0_29, %c0_30] : memref<1x8x3xf32, #tpu.memory_space<vmem>>, vector<1x8x3xf32>
    %39 = vector.shape_cast %38 : vector<1x8x3xf32> to vector<8x3xf32>
    %c0_31 = arith.constant 0 : index
    %c0_32 = arith.constant 0 : index
    %40 = vector.load %arg12[%c0_31, %c0_32] : memref<3x128xf32, #tpu.memory_space<vmem>>, vector<3x128xf32>
    %c0_33 = arith.constant 0 : index
    %c0_34 = arith.constant 0 : index
    %41 = vector.load %arg13[%c0_33, %c0_34] : memref<1x128xf32, #tpu.memory_space<vmem>>, vector<1x128xf32>
    %cst_35 = arith.constant dense<0.000000e+00> : vector<8x128xf32>
    %42 = tpu.matmul %39, %40, %cst_35 {dimension_numbers = #tpu.dot_dimension_numbers<[1], [0], [0], [1], [0, 0, 1, 1], [], []>} : vector<8x3xf32>, vector<3x128xf32>, vector<8x128xf32> -> vector<8x128xf32>
    %43 = vector.broadcast %41 : vector<1x128xf32> to vector<8x128xf32>
    %44 = arith.addf %42, %43 : vector<8x128xf32>
    %cst_36 = arith.constant 5.000000e-01 : f32
    %45 = vector.broadcast %cst_36 : f32 to vector<8x128xf32>
    %46 = arith.mulf %45, %44 : vector<8x128xf32>
    %cst_37 = arith.constant 4.471500e-02 : f32
    %47 = vector.broadcast %cst_37 : f32 to vector<8x128xf32>
    %48 = arith.mulf %47, %44 : vector<8x128xf32>
    %49 = arith.mulf %48, %44 : vector<8x128xf32>
    %50 = arith.mulf %49, %44 : vector<8x128xf32>
    %51 = arith.addf %44, %50 : vector<8x128xf32>
    %cst_38 = arith.constant 0.797884583 : f32
    %52 = vector.broadcast %cst_38 : f32 to vector<8x128xf32>
    %53 = arith.mulf %52, %51 : vector<8x128xf32>
    %54 = math.tanh %53 : vector<8x128xf32>
    %cst_39 = arith.constant 1.000000e+00 : f32
    %55 = vector.broadcast %cst_39 : f32 to vector<8x128xf32>
    %56 = arith.addf %55, %54 : vector<8x128xf32>
    %57 = arith.mulf %46, %56 : vector<8x128xf32>
    %c0_40 = arith.constant 0 : index
    %c0_41 = arith.constant 0 : index
    %58 = vector.load %arg14[%c0_40, %c0_41] : memref<128x48xf32, #tpu.memory_space<vmem>>, vector<128x48xf32>
    %c0_42 = arith.constant 0 : index
    %c0_43 = arith.constant 0 : index
    %59 = vector.load %arg15[%c0_42, %c0_43] : memref<1x48xf32, #tpu.memory_space<vmem>>, vector<1x48xf32>
    %cst_44 = arith.constant dense<0.000000e+00> : vector<8x48xf32>
    %60 = tpu.matmul %57, %58, %cst_44 {dimension_numbers = #tpu.dot_dimension_numbers<[1], [0], [0], [1], [0, 0, 1, 1], [], []>} : vector<8x128xf32>, vector<128x48xf32>, vector<8x48xf32> -> vector<8x48xf32>
    %61 = vector.broadcast %59 : vector<1x48xf32> to vector<8x48xf32>
    %62 = arith.addf %60, %61 : vector<8x48xf32>
    %63 = arith.addf %37, %62 : vector<8x48xf32>
    %c0_45 = arith.constant 0 : index
    %c0_46 = arith.constant 0 : index
    %c0_47 = arith.constant 0 : index
    %64 = vector.load %arg16[%c0_45, %c0_46, %c0_47] : memref<2x1x48xf32, #tpu.memory_space<vmem>>, vector<1x1x48xf32>
    %65 = vector.shape_cast %64 : vector<1x1x48xf32> to vector<1x48xf32>
    %c0_48 = arith.constant 0 : index
    %c0_49 = arith.constant 0 : index
    %c0_50 = arith.constant 0 : index
    %66 = vector.load %arg17[%c0_48, %c0_49, %c0_50] : memref<2x1x48xf32, #tpu.memory_space<vmem>>, vector<1x1x48xf32>
    %67 = vector.shape_cast %66 : vector<1x1x48xf32> to vector<1x48xf32>
    %cst_51 = arith.constant dense<0.000000e+00> : vector<8xf32>
    %68 = vector.multi_reduction <add>, %63, %cst_51 [1] : vector<8x48xf32> to vector<8xf32>
    %69 = vector.shape_cast %68 : vector<8xf32> to vector<8x1xf32>
    %cst_52 = arith.constant 4.800000e+01 : f32
    %70 = vector.broadcast %cst_52 : f32 to vector<8x1xf32>
    %71 = arith.divf %69, %70 : vector<8x1xf32>
    %72 = vector.broadcast %71 : vector<8x1xf32> to vector<8x48xf32>
    %73 = arith.subf %63, %72 : vector<8x48xf32>
    %74 = arith.mulf %73, %73 : vector<8x48xf32>
    %cst_53 = arith.constant dense<0.000000e+00> : vector<8xf32>
    %75 = vector.multi_reduction <add>, %74, %cst_53 [1] : vector<8x48xf32> to vector<8xf32>
    %76 = vector.shape_cast %75 : vector<8xf32> to vector<8x1xf32>
    %cst_54 = arith.constant 4.800000e+01 : f32
    %77 = vector.broadcast %cst_54 : f32 to vector<8x1xf32>
    %78 = arith.divf %76, %77 : vector<8x1xf32>
    %cst_55 = arith.constant 9.99999974E-6 : f32
    %79 = vector.broadcast %cst_55 : f32 to vector<8x1xf32>
    %80 = arith.addf %78, %79 : vector<8x1xf32>
    %81 = math.rsqrt %80 : vector<8x1xf32>
    %82 = vector.broadcast %81 : vector<8x1xf32> to vector<8x48xf32>
    %83 = arith.mulf %73, %82 : vector<8x48xf32>
    %84 = vector.broadcast %65 : vector<1x48xf32> to vector<8x48xf32>
    %85 = arith.mulf %83, %84 : vector<8x48xf32>
    %86 = vector.broadcast %67 : vector<1x48xf32> to vector<8x48xf32>
    %87 = arith.addf %85, %86 : vector<8x48xf32>
    %c0_56 = arith.constant 0 : index
    %c0_57 = arith.constant 0 : index
    %c0_58 = arith.constant 0 : index
    %c0_59 = arith.constant 0 : index
    %88 = vector.load %arg18[%c0_56, %c0_57, %c0_58, %c0_59] : memref<2x3x48x16xf32, #tpu.memory_space<vmem>>, vector<1x1x48x16xf32>
    %89 = vector.shape_cast %88 : vector<1x1x48x16xf32> to vector<48x16xf32>
    %c0_60 = arith.constant 0 : index
    %c0_61 = arith.constant 0 : index
    %c0_62 = arith.constant 0 : index
    %c0_63 = arith.constant 0 : index
    %90 = vector.load %arg19[%c0_60, %c0_61, %c0_62, %c0_63] : memref<2x3x1x16xf32, #tpu.memory_space<vmem>>, vector<1x1x1x16xf32>
    %91 = vector.shape_cast %90 : vector<1x1x1x16xf32> to vector<1x16xf32>
    %cst_64 = arith.constant dense<0.000000e+00> : vector<8x16xf32>
    %92 = tpu.matmul %87, %89, %cst_64 {dimension_numbers = #tpu.dot_dimension_numbers<[1], [0], [0], [1], [0, 0, 1, 1], [], []>} : vector<8x48xf32>, vector<48x16xf32>, vector<8x16xf32> -> vector<8x16xf32>
    %93 = vector.broadcast %91 : vector<1x16xf32> to vector<8x16xf32>
    %94 = arith.addf %92, %93 : vector<8x16xf32>
    %c0_65 = arith.constant 0 : index
    %c0_66 = arith.constant 0 : index
    %c0_67 = arith.constant 0 : index
    %c0_68 = arith.constant 0 : index
    %95 = vector.load %arg20[%c0_65, %c0_66, %c0_67, %c0_68] : memref<2x3x48x16xf32, #tpu.memory_space<vmem>>, vector<1x1x48x16xf32>
    %96 = vector.shape_cast %95 : vector<1x1x48x16xf32> to vector<48x16xf32>
    %c0_69 = arith.constant 0 : index
    %c0_70 = arith.constant 0 : index
    %c0_71 = arith.constant 0 : index
    %c0_72 = arith.constant 0 : index
    %97 = vector.load %arg21[%c0_69, %c0_70, %c0_71, %c0_72] : memref<2x3x1x16xf32, #tpu.memory_space<vmem>>, vector<1x1x1x16xf32>
    %98 = vector.shape_cast %97 : vector<1x1x1x16xf32> to vector<1x16xf32>
    %cst_73 = arith.constant dense<0.000000e+00> : vector<8x16xf32>
    %99 = tpu.matmul %87, %96, %cst_73 {dimension_numbers = #tpu.dot_dimension_numbers<[1], [0], [0], [1], [0, 0, 1, 1], [], []>} : vector<8x48xf32>, vector<48x16xf32>, vector<8x16xf32> -> vector<8x16xf32>
    %100 = vector.broadcast %98 : vector<1x16xf32> to vector<8x16xf32>
    %101 = arith.addf %99, %100 : vector<8x16xf32>
    %c0_74 = arith.constant 0 : index
    %c0_75 = arith.constant 0 : index
    %c0_76 = arith.constant 0 : index
    %c0_77 = arith.constant 0 : index
    %102 = vector.load %arg22[%c0_74, %c0_75, %c0_76, %c0_77] : memref<2x3x48x16xf32, #tpu.memory_space<vmem>>, vector<1x1x48x16xf32>
    %103 = vector.shape_cast %102 : vector<1x1x48x16xf32> to vector<48x16xf32>
    %c0_78 = arith.constant 0 : index
    %c0_79 = arith.constant 0 : index
    %c0_80 = arith.constant 0 : index
    %c0_81 = arith.constant 0 : index
    %104 = vector.load %arg23[%c0_78, %c0_79, %c0_80, %c0_81] : memref<2x3x1x16xf32, #tpu.memory_space<vmem>>, vector<1x1x1x16xf32>
    %105 = vector.shape_cast %104 : vector<1x1x1x16xf32> to vector<1x16xf32>
    %cst_82 = arith.constant dense<0.000000e+00> : vector<8x16xf32>
    %106 = tpu.matmul %87, %103, %cst_82 {dimension_numbers = #tpu.dot_dimension_numbers<[1], [0], [0], [1], [0, 0, 1, 1], [], []>} : vector<8x48xf32>, vector<48x16xf32>, vector<8x16xf32> -> vector<8x16xf32>
    %107 = vector.broadcast %105 : vector<1x16xf32> to vector<8x16xf32>
    %108 = arith.addf %106, %107 : vector<8x16xf32>
    %cst_83 = arith.constant dense<0.000000e+00> : vector<8x8xf32>
    %109 = tpu.matmul %94, %101, %cst_83 {dimension_numbers = #tpu.dot_dimension_numbers<[1], [1], [0], [0], [0, 0, 1, 0], [], []>} : vector<8x16xf32>, vector<8x16xf32>, vector<8x8xf32> -> vector<8x8xf32>
    %cst_84 = arith.constant 2.500000e-01 : f32
    %110 = vector.broadcast %cst_84 : f32 to vector<8x8xf32>
    %111 = arith.mulf %109, %110 : vector<8x8xf32>
    %cst_85 = arith.constant dense<0xFF800000> : vector<8xf32>
    %112 = vector.multi_reduction <maximumf>, %111, %cst_85 [1] : vector<8x8xf32> to vector<8xf32>
    %113 = vector.shape_cast %112 : vector<8xf32> to vector<8x1xf32>
    %114 = vector.broadcast %113 : vector<8x1xf32> to vector<8x8xf32>
    %115 = arith.subf %111, %114 : vector<8x8xf32>
    %116 = math.exp %115 : vector<8x8xf32>
    %cst_86 = arith.constant dense<0.000000e+00> : vector<8xf32>
    %117 = vector.multi_reduction <add>, %116, %cst_86 [1] : vector<8x8xf32> to vector<8xf32>
    %118 = vector.shape_cast %117 : vector<8xf32> to vector<8x1xf32>
    %119 = tpu.reciprocal %118 {approx = true} : vector<8x1xf32> -> vector<8x1xf32>
    %120 = vector.broadcast %119 : vector<8x1xf32> to vector<8x8xf32>
    %121 = arith.mulf %116, %120 : vector<8x8xf32>
    %cst_87 = arith.constant dense<0.000000e+00> : vector<8x16xf32>
    %122 = tpu.matmul %121, %108, %cst_87 {dimension_numbers = #tpu.dot_dimension_numbers<[1], [0], [0], [1], [0, 0, 1, 1], [], []>} : vector<8x8xf32>, vector<8x16xf32>, vector<8x16xf32> -> vector<8x16xf32>
    %c0_88 = arith.constant 0 : index
    %c0_89 = arith.constant 0 : index
    %c0_90 = arith.constant 0 : index
    %c0_91 = arith.constant 0 : index
    %123 = vector.load %arg24[%c0_88, %c0_89, %c0_90, %c0_91] : memref<2x3x16x48xf32, #tpu.memory_space<vmem>>, vector<1x1x16x48xf32>
    %124 = vector.shape_cast %123 : vector<1x1x16x48xf32> to vector<16x48xf32>
    %cst_92 = arith.constant dense<0.000000e+00> : vector<8x48xf32>
    %125 = tpu.matmul %122, %124, %cst_92 {dimension_numbers = #tpu.dot_dimension_numbers<[1], [0], [0], [1], [0, 0, 1, 1], [], []>} : vector<8x16xf32>, vector<16x48xf32>, vector<8x48xf32> -> vector<8x48xf32>
    %c0_93 = arith.constant 0 : index
    %c1 = arith.constant 1 : index
    %c0_94 = arith.constant 0 : index
    %c0_95 = arith.constant 0 : index
    %126 = vector.load %arg18[%c0_93, %c1, %c0_94, %c0_95] : memref<2x3x48x16xf32, #tpu.memory_space<vmem>>, vector<1x1x48x16xf32>
    %127 = vector.shape_cast %126 : vector<1x1x48x16xf32> to vector<48x16xf32>
    %c0_96 = arith.constant 0 : index
    %c1_97 = arith.constant 1 : index
    %c0_98 = arith.constant 0 : index
    %c0_99 = arith.constant 0 : index
    %128 = vector.load %arg19[%c0_96, %c1_97, %c0_98, %c0_99] : memref<2x3x1x16xf32, #tpu.memory_space<vmem>>, vector<1x1x1x16xf32>
    %129 = vector.shape_cast %128 : vector<1x1x1x16xf32> to vector<1x16xf32>
    %cst_100 = arith.constant dense<0.000000e+00> : vector<8x16xf32>
    %130 = tpu.matmul %87, %127, %cst_100 {dimension_numbers = #tpu.dot_dimension_numbers<[1], [0], [0], [1], [0, 0, 1, 1], [], []>} : vector<8x48xf32>, vector<48x16xf32>, vector<8x16xf32> -> vector<8x16xf32>
    %131 = vector.broadcast %129 : vector<1x16xf32> to vector<8x16xf32>
    %132 = arith.addf %130, %131 : vector<8x16xf32>
    %c0_101 = arith.constant 0 : index
    %c1_102 = arith.constant 1 : index
    %c0_103 = arith.constant 0 : index
    %c0_104 = arith.constant 0 : index
    %133 = vector.load %arg20[%c0_101, %c1_102, %c0_103, %c0_104] : memref<2x3x48x16xf32, #tpu.memory_space<vmem>>, vector<1x1x48x16xf32>
    %134 = vector.shape_cast %133 : vector<1x1x48x16xf32> to vector<48x16xf32>
    %c0_105 = arith.constant 0 : index
    %c1_106 = arith.constant 1 : index
    %c0_107 = arith.constant 0 : index
    %c0_108 = arith.constant 0 : index
    %135 = vector.load %arg21[%c0_105, %c1_106, %c0_107, %c0_108] : memref<2x3x1x16xf32, #tpu.memory_space<vmem>>, vector<1x1x1x16xf32>
    %136 = vector.shape_cast %135 : vector<1x1x1x16xf32> to vector<1x16xf32>
    %cst_109 = arith.constant dense<0.000000e+00> : vector<8x16xf32>
    %137 = tpu.matmul %87, %134, %cst_109 {dimension_numbers = #tpu.dot_dimension_numbers<[1], [0], [0], [1], [0, 0, 1, 1], [], []>} : vector<8x48xf32>, vector<48x16xf32>, vector<8x16xf32> -> vector<8x16xf32>
    %138 = vector.broadcast %136 : vector<1x16xf32> to vector<8x16xf32>
    %139 = arith.addf %137, %138 : vector<8x16xf32>
    %c0_110 = arith.constant 0 : index
    %c1_111 = arith.constant 1 : index
    %c0_112 = arith.constant 0 : index
    %c0_113 = arith.constant 0 : index
    %140 = vector.load %arg22[%c0_110, %c1_111, %c0_112, %c0_113] : memref<2x3x48x16xf32, #tpu.memory_space<vmem>>, vector<1x1x48x16xf32>
    %141 = vector.shape_cast %140 : vector<1x1x48x16xf32> to vector<48x16xf32>
    %c0_114 = arith.constant 0 : index
    %c1_115 = arith.constant 1 : index
    %c0_116 = arith.constant 0 : index
    %c0_117 = arith.constant 0 : index
    %142 = vector.load %arg23[%c0_114, %c1_115, %c0_116, %c0_117] : memref<2x3x1x16xf32, #tpu.memory_space<vmem>>, vector<1x1x1x16xf32>
    %143 = vector.shape_cast %142 : vector<1x1x1x16xf32> to vector<1x16xf32>
    %cst_118 = arith.constant dense<0.000000e+00> : vector<8x16xf32>
    %144 = tpu.matmul %87, %141, %cst_118 {dimension_numbers = #tpu.dot_dimension_numbers<[1], [0], [0], [1], [0, 0, 1, 1], [], []>} : vector<8x48xf32>, vector<48x16xf32>, vector<8x16xf32> -> vector<8x16xf32>
    %145 = vector.broadcast %143 : vector<1x16xf32> to vector<8x16xf32>
    %146 = arith.addf %144, %145 : vector<8x16xf32>
    %cst_119 = arith.constant dense<0.000000e+00> : vector<8x8xf32>
    %147 = tpu.matmul %132, %139, %cst_119 {dimension_numbers = #tpu.dot_dimension_numbers<[1], [1], [0], [0], [0, 0, 1, 0], [], []>} : vector<8x16xf32>, vector<8x16xf32>, vector<8x8xf32> -> vector<8x8xf32>
    %cst_120 = arith.constant 2.500000e-01 : f32
    %148 = vector.broadcast %cst_120 : f32 to vector<8x8xf32>
    %149 = arith.mulf %147, %148 : vector<8x8xf32>
    %cst_121 = arith.constant dense<0xFF800000> : vector<8xf32>
    %150 = vector.multi_reduction <maximumf>, %149, %cst_121 [1] : vector<8x8xf32> to vector<8xf32>
    %151 = vector.shape_cast %150 : vector<8xf32> to vector<8x1xf32>
    %152 = vector.broadcast %151 : vector<8x1xf32> to vector<8x8xf32>
    %153 = arith.subf %149, %152 : vector<8x8xf32>
    %154 = math.exp %153 : vector<8x8xf32>
    %cst_122 = arith.constant dense<0.000000e+00> : vector<8xf32>
    %155 = vector.multi_reduction <add>, %154, %cst_122 [1] : vector<8x8xf32> to vector<8xf32>
    %156 = vector.shape_cast %155 : vector<8xf32> to vector<8x1xf32>
    %157 = tpu.reciprocal %156 {approx = true} : vector<8x1xf32> -> vector<8x1xf32>
    %158 = vector.broadcast %157 : vector<8x1xf32> to vector<8x8xf32>
    %159 = arith.mulf %154, %158 : vector<8x8xf32>
    %cst_123 = arith.constant dense<0.000000e+00> : vector<8x16xf32>
    %160 = tpu.matmul %159, %146, %cst_123 {dimension_numbers = #tpu.dot_dimension_numbers<[1], [0], [0], [1], [0, 0, 1, 1], [], []>} : vector<8x8xf32>, vector<8x16xf32>, vector<8x16xf32> -> vector<8x16xf32>
    %c0_124 = arith.constant 0 : index
    %c1_125 = arith.constant 1 : index
    %c0_126 = arith.constant 0 : index
    %c0_127 = arith.constant 0 : index
    %161 = vector.load %arg24[%c0_124, %c1_125, %c0_126, %c0_127] : memref<2x3x16x48xf32, #tpu.memory_space<vmem>>, vector<1x1x16x48xf32>
    %162 = vector.shape_cast %161 : vector<1x1x16x48xf32> to vector<16x48xf32>
    %cst_128 = arith.constant dense<0.000000e+00> : vector<8x48xf32>
    %163 = tpu.matmul %160, %162, %cst_128 {dimension_numbers = #tpu.dot_dimension_numbers<[1], [0], [0], [1], [0, 0, 1, 1], [], []>} : vector<8x16xf32>, vector<16x48xf32>, vector<8x48xf32> -> vector<8x48xf32>
    %164 = arith.addf %125, %163 : vector<8x48xf32>
    %c0_129 = arith.constant 0 : index
    %c2 = arith.constant 2 : index
    %c0_130 = arith.constant 0 : index
    %c0_131 = arith.constant 0 : index
    %165 = vector.load %arg18[%c0_129, %c2, %c0_130, %c0_131] : memref<2x3x48x16xf32, #tpu.memory_space<vmem>>, vector<1x1x48x16xf32>
    %166 = vector.shape_cast %165 : vector<1x1x48x16xf32> to vector<48x16xf32>
    %c0_132 = arith.constant 0 : index
    %c2_133 = arith.constant 2 : index
    %c0_134 = arith.constant 0 : index
    %c0_135 = arith.constant 0 : index
    %167 = vector.load %arg19[%c0_132, %c2_133, %c0_134, %c0_135] : memref<2x3x1x16xf32, #tpu.memory_space<vmem>>, vector<1x1x1x16xf32>
    %168 = vector.shape_cast %167 : vector<1x1x1x16xf32> to vector<1x16xf32>
    %cst_136 = arith.constant dense<0.000000e+00> : vector<8x16xf32>
    %169 = tpu.matmul %87, %166, %cst_136 {dimension_numbers = #tpu.dot_dimension_numbers<[1], [0], [0], [1], [0, 0, 1, 1], [], []>} : vector<8x48xf32>, vector<48x16xf32>, vector<8x16xf32> -> vector<8x16xf32>
    %170 = vector.broadcast %168 : vector<1x16xf32> to vector<8x16xf32>
    %171 = arith.addf %169, %170 : vector<8x16xf32>
    %c0_137 = arith.constant 0 : index
    %c2_138 = arith.constant 2 : index
    %c0_139 = arith.constant 0 : index
    %c0_140 = arith.constant 0 : index
    %172 = vector.load %arg20[%c0_137, %c2_138, %c0_139, %c0_140] : memref<2x3x48x16xf32, #tpu.memory_space<vmem>>, vector<1x1x48x16xf32>
    %173 = vector.shape_cast %172 : vector<1x1x48x16xf32> to vector<48x16xf32>
    %c0_141 = arith.constant 0 : index
    %c2_142 = arith.constant 2 : index
    %c0_143 = arith.constant 0 : index
    %c0_144 = arith.constant 0 : index
    %174 = vector.load %arg21[%c0_141, %c2_142, %c0_143, %c0_144] : memref<2x3x1x16xf32, #tpu.memory_space<vmem>>, vector<1x1x1x16xf32>
    %175 = vector.shape_cast %174 : vector<1x1x1x16xf32> to vector<1x16xf32>
    %cst_145 = arith.constant dense<0.000000e+00> : vector<8x16xf32>
    %176 = tpu.matmul %87, %173, %cst_145 {dimension_numbers = #tpu.dot_dimension_numbers<[1], [0], [0], [1], [0, 0, 1, 1], [], []>} : vector<8x48xf32>, vector<48x16xf32>, vector<8x16xf32> -> vector<8x16xf32>
    %177 = vector.broadcast %175 : vector<1x16xf32> to vector<8x16xf32>
    %178 = arith.addf %176, %177 : vector<8x16xf32>
    %c0_146 = arith.constant 0 : index
    %c2_147 = arith.constant 2 : index
    %c0_148 = arith.constant 0 : index
    %c0_149 = arith.constant 0 : index
    %179 = vector.load %arg22[%c0_146, %c2_147, %c0_148, %c0_149] : memref<2x3x48x16xf32, #tpu.memory_space<vmem>>, vector<1x1x48x16xf32>
    %180 = vector.shape_cast %179 : vector<1x1x48x16xf32> to vector<48x16xf32>
    %c0_150 = arith.constant 0 : index
    %c2_151 = arith.constant 2 : index
    %c0_152 = arith.constant 0 : index
    %c0_153 = arith.constant 0 : index
    %181 = vector.load %arg23[%c0_150, %c2_151, %c0_152, %c0_153] : memref<2x3x1x16xf32, #tpu.memory_space<vmem>>, vector<1x1x1x16xf32>
    %182 = vector.shape_cast %181 : vector<1x1x1x16xf32> to vector<1x16xf32>
    %cst_154 = arith.constant dense<0.000000e+00> : vector<8x16xf32>
    %183 = tpu.matmul %87, %180, %cst_154 {dimension_numbers = #tpu.dot_dimension_numbers<[1], [0], [0], [1], [0, 0, 1, 1], [], []>} : vector<8x48xf32>, vector<48x16xf32>, vector<8x16xf32> -> vector<8x16xf32>
    %184 = vector.broadcast %182 : vector<1x16xf32> to vector<8x16xf32>
    %185 = arith.addf %183, %184 : vector<8x16xf32>
    %cst_155 = arith.constant dense<0.000000e+00> : vector<8x8xf32>
    %186 = tpu.matmul %171, %178, %cst_155 {dimension_numbers = #tpu.dot_dimension_numbers<[1], [1], [0], [0], [0, 0, 1, 0], [], []>} : vector<8x16xf32>, vector<8x16xf32>, vector<8x8xf32> -> vector<8x8xf32>
    %cst_156 = arith.constant 2.500000e-01 : f32
    %187 = vector.broadcast %cst_156 : f32 to vector<8x8xf32>
    %188 = arith.mulf %186, %187 : vector<8x8xf32>
    %cst_157 = arith.constant dense<0xFF800000> : vector<8xf32>
    %189 = vector.multi_reduction <maximumf>, %188, %cst_157 [1] : vector<8x8xf32> to vector<8xf32>
    %190 = vector.shape_cast %189 : vector<8xf32> to vector<8x1xf32>
    %191 = vector.broadcast %190 : vector<8x1xf32> to vector<8x8xf32>
    %192 = arith.subf %188, %191 : vector<8x8xf32>
    %193 = math.exp %192 : vector<8x8xf32>
    %cst_158 = arith.constant dense<0.000000e+00> : vector<8xf32>
    %194 = vector.multi_reduction <add>, %193, %cst_158 [1] : vector<8x8xf32> to vector<8xf32>
    %195 = vector.shape_cast %194 : vector<8xf32> to vector<8x1xf32>
    %196 = tpu.reciprocal %195 {approx = true} : vector<8x1xf32> -> vector<8x1xf32>
    %197 = vector.broadcast %196 : vector<8x1xf32> to vector<8x8xf32>
    %198 = arith.mulf %193, %197 : vector<8x8xf32>
    %cst_159 = arith.constant dense<0.000000e+00> : vector<8x16xf32>
    %199 = tpu.matmul %198, %185, %cst_159 {dimension_numbers = #tpu.dot_dimension_numbers<[1], [0], [0], [1], [0, 0, 1, 1], [], []>} : vector<8x8xf32>, vector<8x16xf32>, vector<8x16xf32> -> vector<8x16xf32>
    %c0_160 = arith.constant 0 : index
    %c2_161 = arith.constant 2 : index
    %c0_162 = arith.constant 0 : index
    %c0_163 = arith.constant 0 : index
    %200 = vector.load %arg24[%c0_160, %c2_161, %c0_162, %c0_163] : memref<2x3x16x48xf32, #tpu.memory_space<vmem>>, vector<1x1x16x48xf32>
    %201 = vector.shape_cast %200 : vector<1x1x16x48xf32> to vector<16x48xf32>
    %cst_164 = arith.constant dense<0.000000e+00> : vector<8x48xf32>
    %202 = tpu.matmul %199, %201, %cst_164 {dimension_numbers = #tpu.dot_dimension_numbers<[1], [0], [0], [1], [0, 0, 1, 1], [], []>} : vector<8x16xf32>, vector<16x48xf32>, vector<8x48xf32> -> vector<8x48xf32>
    %203 = arith.addf %164, %202 : vector<8x48xf32>
    %c0_165 = arith.constant 0 : index
    %c0_166 = arith.constant 0 : index
    %c0_167 = arith.constant 0 : index
    %204 = vector.load %arg25[%c0_165, %c0_166, %c0_167] : memref<2x1x48xf32, #tpu.memory_space<vmem>>, vector<1x1x48xf32>
    %205 = vector.shape_cast %204 : vector<1x1x48xf32> to vector<1x48xf32>
    %206 = vector.broadcast %205 : vector<1x48xf32> to vector<8x48xf32>
    %207 = arith.addf %203, %206 : vector<8x48xf32>
    %208 = arith.addf %63, %207 : vector<8x48xf32>
    %c0_168 = arith.constant 0 : index
    %c0_169 = arith.constant 0 : index
    %c0_170 = arith.constant 0 : index
    %209 = vector.load %arg26[%c0_168, %c0_169, %c0_170] : memref<2x1x48xf32, #tpu.memory_space<vmem>>, vector<1x1x48xf32>
    %210 = vector.shape_cast %209 : vector<1x1x48xf32> to vector<1x48xf32>
    %c0_171 = arith.constant 0 : index
    %c0_172 = arith.constant 0 : index
    %c0_173 = arith.constant 0 : index
    %211 = vector.load %arg27[%c0_171, %c0_172, %c0_173] : memref<2x1x48xf32, #tpu.memory_space<vmem>>, vector<1x1x48xf32>
    %212 = vector.shape_cast %211 : vector<1x1x48xf32> to vector<1x48xf32>
    %cst_174 = arith.constant dense<0.000000e+00> : vector<8xf32>
    %213 = vector.multi_reduction <add>, %208, %cst_174 [1] : vector<8x48xf32> to vector<8xf32>
    %214 = vector.shape_cast %213 : vector<8xf32> to vector<8x1xf32>
    %cst_175 = arith.constant 4.800000e+01 : f32
    %215 = vector.broadcast %cst_175 : f32 to vector<8x1xf32>
    %216 = arith.divf %214, %215 : vector<8x1xf32>
    %217 = vector.broadcast %216 : vector<8x1xf32> to vector<8x48xf32>
    %218 = arith.subf %208, %217 : vector<8x48xf32>
    %219 = arith.mulf %218, %218 : vector<8x48xf32>
    %cst_176 = arith.constant dense<0.000000e+00> : vector<8xf32>
    %220 = vector.multi_reduction <add>, %219, %cst_176 [1] : vector<8x48xf32> to vector<8xf32>
    %221 = vector.shape_cast %220 : vector<8xf32> to vector<8x1xf32>
    %cst_177 = arith.constant 4.800000e+01 : f32
    %222 = vector.broadcast %cst_177 : f32 to vector<8x1xf32>
    %223 = arith.divf %221, %222 : vector<8x1xf32>
    %cst_178 = arith.constant 9.99999974E-6 : f32
    %224 = vector.broadcast %cst_178 : f32 to vector<8x1xf32>
    %225 = arith.addf %223, %224 : vector<8x1xf32>
    %226 = math.rsqrt %225 : vector<8x1xf32>
    %227 = vector.broadcast %226 : vector<8x1xf32> to vector<8x48xf32>
    %228 = arith.mulf %218, %227 : vector<8x48xf32>
    %229 = vector.broadcast %210 : vector<1x48xf32> to vector<8x48xf32>
    %230 = arith.mulf %228, %229 : vector<8x48xf32>
    %231 = vector.broadcast %212 : vector<1x48xf32> to vector<8x48xf32>
    %232 = arith.addf %230, %231 : vector<8x48xf32>
    %c0_179 = arith.constant 0 : index
    %c0_180 = arith.constant 0 : index
    %c0_181 = arith.constant 0 : index
    %233 = vector.load %arg28[%c0_179, %c0_180, %c0_181] : memref<2x48x128xf32, #tpu.memory_space<vmem>>, vector<1x48x128xf32>
    %234 = vector.shape_cast %233 : vector<1x48x128xf32> to vector<48x128xf32>
    %cst_182 = arith.constant dense<0.000000e+00> : vector<8x128xf32>
    %235 = tpu.matmul %232, %234, %cst_182 {dimension_numbers = #tpu.dot_dimension_numbers<[1], [0], [0], [1], [0, 0, 1, 1], [], []>} : vector<8x48xf32>, vector<48x128xf32>, vector<8x128xf32> -> vector<8x128xf32>
    %c0_183 = arith.constant 0 : index
    %c0_184 = arith.constant 0 : index
    %c0_185 = arith.constant 0 : index
    %236 = vector.load %arg29[%c0_183, %c0_184, %c0_185] : memref<2x48x128xf32, #tpu.memory_space<vmem>>, vector<1x48x128xf32>
    %237 = vector.shape_cast %236 : vector<1x48x128xf32> to vector<48x128xf32>
    %cst_186 = arith.constant dense<0.000000e+00> : vector<8x128xf32>
    %238 = tpu.matmul %232, %237, %cst_186 {dimension_numbers = #tpu.dot_dimension_numbers<[1], [0], [0], [1], [0, 0, 1, 1], [], []>} : vector<8x48xf32>, vector<48x128xf32>, vector<8x128xf32> -> vector<8x128xf32>
    %cst_187 = arith.constant 0.000000e+00 : f32
    %239 = vector.broadcast %cst_187 : f32 to vector<8x128xf32>
    %240 = arith.subf %239, %235 : vector<8x128xf32>
    %241 = math.exp %240 : vector<8x128xf32>
    %cst_188 = arith.constant 1.000000e+00 : f32
    %242 = vector.broadcast %cst_188 : f32 to vector<8x128xf32>
    %243 = arith.addf %242, %241 : vector<8x128xf32>
    %cst_189 = arith.constant 1.000000e+00 : f32
    %244 = vector.broadcast %cst_189 : f32 to vector<8x128xf32>
    %245 = arith.divf %244, %243 : vector<8x128xf32>
    %246 = arith.mulf %235, %245 : vector<8x128xf32>
    %247 = arith.mulf %246, %238 : vector<8x128xf32>
    %c0_190 = arith.constant 0 : index
    %c0_191 = arith.constant 0 : index
    %c0_192 = arith.constant 0 : index
    %248 = vector.load %arg30[%c0_190, %c0_191, %c0_192] : memref<2x128x48xf32, #tpu.memory_space<vmem>>, vector<1x128x48xf32>
    %249 = vector.shape_cast %248 : vector<1x128x48xf32> to vector<128x48xf32>
    %cst_193 = arith.constant dense<0.000000e+00> : vector<8x48xf32>
    %250 = tpu.matmul %247, %249, %cst_193 {dimension_numbers = #tpu.dot_dimension_numbers<[1], [0], [0], [1], [0, 0, 1, 1], [], []>} : vector<8x128xf32>, vector<128x48xf32>, vector<8x48xf32> -> vector<8x48xf32>
    %251 = arith.addf %208, %250 : vector<8x48xf32>
    %252 = arith.addf %251, %62 : vector<8x48xf32>
    %c1_194 = arith.constant 1 : index
    %c0_195 = arith.constant 0 : index
    %c0_196 = arith.constant 0 : index
    %253 = vector.load %arg16[%c1_194, %c0_195, %c0_196] : memref<2x1x48xf32, #tpu.memory_space<vmem>>, vector<1x1x48xf32>
    %254 = vector.shape_cast %253 : vector<1x1x48xf32> to vector<1x48xf32>
    %c1_197 = arith.constant 1 : index
    %c0_198 = arith.constant 0 : index
    %c0_199 = arith.constant 0 : index
    %255 = vector.load %arg17[%c1_197, %c0_198, %c0_199] : memref<2x1x48xf32, #tpu.memory_space<vmem>>, vector<1x1x48xf32>
    %256 = vector.shape_cast %255 : vector<1x1x48xf32> to vector<1x48xf32>
    %cst_200 = arith.constant dense<0.000000e+00> : vector<8xf32>
    %257 = vector.multi_reduction <add>, %252, %cst_200 [1] : vector<8x48xf32> to vector<8xf32>
    %258 = vector.shape_cast %257 : vector<8xf32> to vector<8x1xf32>
    %cst_201 = arith.constant 4.800000e+01 : f32
    %259 = vector.broadcast %cst_201 : f32 to vector<8x1xf32>
    %260 = arith.divf %258, %259 : vector<8x1xf32>
    %261 = vector.broadcast %260 : vector<8x1xf32> to vector<8x48xf32>
    %262 = arith.subf %252, %261 : vector<8x48xf32>
    %263 = arith.mulf %262, %262 : vector<8x48xf32>
    %cst_202 = arith.constant dense<0.000000e+00> : vector<8xf32>
    %264 = vector.multi_reduction <add>, %263, %cst_202 [1] : vector<8x48xf32> to vector<8xf32>
    %265 = vector.shape_cast %264 : vector<8xf32> to vector<8x1xf32>
    %cst_203 = arith.constant 4.800000e+01 : f32
    %266 = vector.broadcast %cst_203 : f32 to vector<8x1xf32>
    %267 = arith.divf %265, %266 : vector<8x1xf32>
    %cst_204 = arith.constant 9.99999974E-6 : f32
    %268 = vector.broadcast %cst_204 : f32 to vector<8x1xf32>
    %269 = arith.addf %267, %268 : vector<8x1xf32>
    %270 = math.rsqrt %269 : vector<8x1xf32>
    %271 = vector.broadcast %270 : vector<8x1xf32> to vector<8x48xf32>
    %272 = arith.mulf %262, %271 : vector<8x48xf32>
    %273 = vector.broadcast %254 : vector<1x48xf32> to vector<8x48xf32>
    %274 = arith.mulf %272, %273 : vector<8x48xf32>
    %275 = vector.broadcast %256 : vector<1x48xf32> to vector<8x48xf32>
    %276 = arith.addf %274, %275 : vector<8x48xf32>
    %c1_205 = arith.constant 1 : index
    %c0_206 = arith.constant 0 : index
    %c0_207 = arith.constant 0 : index
    %c0_208 = arith.constant 0 : index
    %277 = vector.load %arg18[%c1_205, %c0_206, %c0_207, %c0_208] : memref<2x3x48x16xf32, #tpu.memory_space<vmem>>, vector<1x1x48x16xf32>
    %278 = vector.shape_cast %277 : vector<1x1x48x16xf32> to vector<48x16xf32>
    %c1_209 = arith.constant 1 : index
    %c0_210 = arith.constant 0 : index
    %c0_211 = arith.constant 0 : index
    %c0_212 = arith.constant 0 : index
    %279 = vector.load %arg19[%c1_209, %c0_210, %c0_211, %c0_212] : memref<2x3x1x16xf32, #tpu.memory_space<vmem>>, vector<1x1x1x16xf32>
    %280 = vector.shape_cast %279 : vector<1x1x1x16xf32> to vector<1x16xf32>
    %cst_213 = arith.constant dense<0.000000e+00> : vector<8x16xf32>
    %281 = tpu.matmul %276, %278, %cst_213 {dimension_numbers = #tpu.dot_dimension_numbers<[1], [0], [0], [1], [0, 0, 1, 1], [], []>} : vector<8x48xf32>, vector<48x16xf32>, vector<8x16xf32> -> vector<8x16xf32>
    %282 = vector.broadcast %280 : vector<1x16xf32> to vector<8x16xf32>
    %283 = arith.addf %281, %282 : vector<8x16xf32>
    %c1_214 = arith.constant 1 : index
    %c0_215 = arith.constant 0 : index
    %c0_216 = arith.constant 0 : index
    %c0_217 = arith.constant 0 : index
    %284 = vector.load %arg20[%c1_214, %c0_215, %c0_216, %c0_217] : memref<2x3x48x16xf32, #tpu.memory_space<vmem>>, vector<1x1x48x16xf32>
    %285 = vector.shape_cast %284 : vector<1x1x48x16xf32> to vector<48x16xf32>
    %c1_218 = arith.constant 1 : index
    %c0_219 = arith.constant 0 : index
    %c0_220 = arith.constant 0 : index
    %c0_221 = arith.constant 0 : index
    %286 = vector.load %arg21[%c1_218, %c0_219, %c0_220, %c0_221] : memref<2x3x1x16xf32, #tpu.memory_space<vmem>>, vector<1x1x1x16xf32>
    %287 = vector.shape_cast %286 : vector<1x1x1x16xf32> to vector<1x16xf32>
    %cst_222 = arith.constant dense<0.000000e+00> : vector<8x16xf32>
    %288 = tpu.matmul %276, %285, %cst_222 {dimension_numbers = #tpu.dot_dimension_numbers<[1], [0], [0], [1], [0, 0, 1, 1], [], []>} : vector<8x48xf32>, vector<48x16xf32>, vector<8x16xf32> -> vector<8x16xf32>
    %289 = vector.broadcast %287 : vector<1x16xf32> to vector<8x16xf32>
    %290 = arith.addf %288, %289 : vector<8x16xf32>
    %c1_223 = arith.constant 1 : index
    %c0_224 = arith.constant 0 : index
    %c0_225 = arith.constant 0 : index
    %c0_226 = arith.constant 0 : index
    %291 = vector.load %arg22[%c1_223, %c0_224, %c0_225, %c0_226] : memref<2x3x48x16xf32, #tpu.memory_space<vmem>>, vector<1x1x48x16xf32>
    %292 = vector.shape_cast %291 : vector<1x1x48x16xf32> to vector<48x16xf32>
    %c1_227 = arith.constant 1 : index
    %c0_228 = arith.constant 0 : index
    %c0_229 = arith.constant 0 : index
    %c0_230 = arith.constant 0 : index
    %293 = vector.load %arg23[%c1_227, %c0_228, %c0_229, %c0_230] : memref<2x3x1x16xf32, #tpu.memory_space<vmem>>, vector<1x1x1x16xf32>
    %294 = vector.shape_cast %293 : vector<1x1x1x16xf32> to vector<1x16xf32>
    %cst_231 = arith.constant dense<0.000000e+00> : vector<8x16xf32>
    %295 = tpu.matmul %276, %292, %cst_231 {dimension_numbers = #tpu.dot_dimension_numbers<[1], [0], [0], [1], [0, 0, 1, 1], [], []>} : vector<8x48xf32>, vector<48x16xf32>, vector<8x16xf32> -> vector<8x16xf32>
    %296 = vector.broadcast %294 : vector<1x16xf32> to vector<8x16xf32>
    %297 = arith.addf %295, %296 : vector<8x16xf32>
    %cst_232 = arith.constant dense<0.000000e+00> : vector<8x8xf32>
    %298 = tpu.matmul %283, %290, %cst_232 {dimension_numbers = #tpu.dot_dimension_numbers<[1], [1], [0], [0], [0, 0, 1, 0], [], []>} : vector<8x16xf32>, vector<8x16xf32>, vector<8x8xf32> -> vector<8x8xf32>
    %cst_233 = arith.constant 2.500000e-01 : f32
    %299 = vector.broadcast %cst_233 : f32 to vector<8x8xf32>
    %300 = arith.mulf %298, %299 : vector<8x8xf32>
    %cst_234 = arith.constant dense<0xFF800000> : vector<8xf32>
    %301 = vector.multi_reduction <maximumf>, %300, %cst_234 [1] : vector<8x8xf32> to vector<8xf32>
    %302 = vector.shape_cast %301 : vector<8xf32> to vector<8x1xf32>
    %303 = vector.broadcast %302 : vector<8x1xf32> to vector<8x8xf32>
    %304 = arith.subf %300, %303 : vector<8x8xf32>
    %305 = math.exp %304 : vector<8x8xf32>
    %cst_235 = arith.constant dense<0.000000e+00> : vector<8xf32>
    %306 = vector.multi_reduction <add>, %305, %cst_235 [1] : vector<8x8xf32> to vector<8xf32>
    %307 = vector.shape_cast %306 : vector<8xf32> to vector<8x1xf32>
    %308 = tpu.reciprocal %307 {approx = true} : vector<8x1xf32> -> vector<8x1xf32>
    %309 = vector.broadcast %308 : vector<8x1xf32> to vector<8x8xf32>
    %310 = arith.mulf %305, %309 : vector<8x8xf32>
    %cst_236 = arith.constant dense<0.000000e+00> : vector<8x16xf32>
    %311 = tpu.matmul %310, %297, %cst_236 {dimension_numbers = #tpu.dot_dimension_numbers<[1], [0], [0], [1], [0, 0, 1, 1], [], []>} : vector<8x8xf32>, vector<8x16xf32>, vector<8x16xf32> -> vector<8x16xf32>
    %c1_237 = arith.constant 1 : index
    %c0_238 = arith.constant 0 : index
    %c0_239 = arith.constant 0 : index
    %c0_240 = arith.constant 0 : index
    %312 = vector.load %arg24[%c1_237, %c0_238, %c0_239, %c0_240] : memref<2x3x16x48xf32, #tpu.memory_space<vmem>>, vector<1x1x16x48xf32>
    %313 = vector.shape_cast %312 : vector<1x1x16x48xf32> to vector<16x48xf32>
    %cst_241 = arith.constant dense<0.000000e+00> : vector<8x48xf32>
    %314 = tpu.matmul %311, %313, %cst_241 {dimension_numbers = #tpu.dot_dimension_numbers<[1], [0], [0], [1], [0, 0, 1, 1], [], []>} : vector<8x16xf32>, vector<16x48xf32>, vector<8x48xf32> -> vector<8x48xf32>
    %c1_242 = arith.constant 1 : index
    %c1_243 = arith.constant 1 : index
    %c0_244 = arith.constant 0 : index
    %c0_245 = arith.constant 0 : index
    %315 = vector.load %arg18[%c1_242, %c1_243, %c0_244, %c0_245] : memref<2x3x48x16xf32, #tpu.memory_space<vmem>>, vector<1x1x48x16xf32>
    %316 = vector.shape_cast %315 : vector<1x1x48x16xf32> to vector<48x16xf32>
    %c1_246 = arith.constant 1 : index
    %c1_247 = arith.constant 1 : index
    %c0_248 = arith.constant 0 : index
    %c0_249 = arith.constant 0 : index
    %317 = vector.load %arg19[%c1_246, %c1_247, %c0_248, %c0_249] : memref<2x3x1x16xf32, #tpu.memory_space<vmem>>, vector<1x1x1x16xf32>
    %318 = vector.shape_cast %317 : vector<1x1x1x16xf32> to vector<1x16xf32>
    %cst_250 = arith.constant dense<0.000000e+00> : vector<8x16xf32>
    %319 = tpu.matmul %276, %316, %cst_250 {dimension_numbers = #tpu.dot_dimension_numbers<[1], [0], [0], [1], [0, 0, 1, 1], [], []>} : vector<8x48xf32>, vector<48x16xf32>, vector<8x16xf32> -> vector<8x16xf32>
    %320 = vector.broadcast %318 : vector<1x16xf32> to vector<8x16xf32>
    %321 = arith.addf %319, %320 : vector<8x16xf32>
    %c1_251 = arith.constant 1 : index
    %c1_252 = arith.constant 1 : index
    %c0_253 = arith.constant 0 : index
    %c0_254 = arith.constant 0 : index
    %322 = vector.load %arg20[%c1_251, %c1_252, %c0_253, %c0_254] : memref<2x3x48x16xf32, #tpu.memory_space<vmem>>, vector<1x1x48x16xf32>
    %323 = vector.shape_cast %322 : vector<1x1x48x16xf32> to vector<48x16xf32>
    %c1_255 = arith.constant 1 : index
    %c1_256 = arith.constant 1 : index
    %c0_257 = arith.constant 0 : index
    %c0_258 = arith.constant 0 : index
    %324 = vector.load %arg21[%c1_255, %c1_256, %c0_257, %c0_258] : memref<2x3x1x16xf32, #tpu.memory_space<vmem>>, vector<1x1x1x16xf32>
    %325 = vector.shape_cast %324 : vector<1x1x1x16xf32> to vector<1x16xf32>
    %cst_259 = arith.constant dense<0.000000e+00> : vector<8x16xf32>
    %326 = tpu.matmul %276, %323, %cst_259 {dimension_numbers = #tpu.dot_dimension_numbers<[1], [0], [0], [1], [0, 0, 1, 1], [], []>} : vector<8x48xf32>, vector<48x16xf32>, vector<8x16xf32> -> vector<8x16xf32>
    %327 = vector.broadcast %325 : vector<1x16xf32> to vector<8x16xf32>
    %328 = arith.addf %326, %327 : vector<8x16xf32>
    %c1_260 = arith.constant 1 : index
    %c1_261 = arith.constant 1 : index
    %c0_262 = arith.constant 0 : index
    %c0_263 = arith.constant 0 : index
    %329 = vector.load %arg22[%c1_260, %c1_261, %c0_262, %c0_263] : memref<2x3x48x16xf32, #tpu.memory_space<vmem>>, vector<1x1x48x16xf32>
    %330 = vector.shape_cast %329 : vector<1x1x48x16xf32> to vector<48x16xf32>
    %c1_264 = arith.constant 1 : index
    %c1_265 = arith.constant 1 : index
    %c0_266 = arith.constant 0 : index
    %c0_267 = arith.constant 0 : index
    %331 = vector.load %arg23[%c1_264, %c1_265, %c0_266, %c0_267] : memref<2x3x1x16xf32, #tpu.memory_space<vmem>>, vector<1x1x1x16xf32>
    %332 = vector.shape_cast %331 : vector<1x1x1x16xf32> to vector<1x16xf32>
    %cst_268 = arith.constant dense<0.000000e+00> : vector<8x16xf32>
    %333 = tpu.matmul %276, %330, %cst_268 {dimension_numbers = #tpu.dot_dimension_numbers<[1], [0], [0], [1], [0, 0, 1, 1], [], []>} : vector<8x48xf32>, vector<48x16xf32>, vector<8x16xf32> -> vector<8x16xf32>
    %334 = vector.broadcast %332 : vector<1x16xf32> to vector<8x16xf32>
    %335 = arith.addf %333, %334 : vector<8x16xf32>
    %cst_269 = arith.constant dense<0.000000e+00> : vector<8x8xf32>
    %336 = tpu.matmul %321, %328, %cst_269 {dimension_numbers = #tpu.dot_dimension_numbers<[1], [1], [0], [0], [0, 0, 1, 0], [], []>} : vector<8x16xf32>, vector<8x16xf32>, vector<8x8xf32> -> vector<8x8xf32>
    %cst_270 = arith.constant 2.500000e-01 : f32
    %337 = vector.broadcast %cst_270 : f32 to vector<8x8xf32>
    %338 = arith.mulf %336, %337 : vector<8x8xf32>
    %cst_271 = arith.constant dense<0xFF800000> : vector<8xf32>
    %339 = vector.multi_reduction <maximumf>, %338, %cst_271 [1] : vector<8x8xf32> to vector<8xf32>
    %340 = vector.shape_cast %339 : vector<8xf32> to vector<8x1xf32>
    %341 = vector.broadcast %340 : vector<8x1xf32> to vector<8x8xf32>
    %342 = arith.subf %338, %341 : vector<8x8xf32>
    %343 = math.exp %342 : vector<8x8xf32>
    %cst_272 = arith.constant dense<0.000000e+00> : vector<8xf32>
    %344 = vector.multi_reduction <add>, %343, %cst_272 [1] : vector<8x8xf32> to vector<8xf32>
    %345 = vector.shape_cast %344 : vector<8xf32> to vector<8x1xf32>
    %346 = tpu.reciprocal %345 {approx = true} : vector<8x1xf32> -> vector<8x1xf32>
    %347 = vector.broadcast %346 : vector<8x1xf32> to vector<8x8xf32>
    %348 = arith.mulf %343, %347 : vector<8x8xf32>
    %cst_273 = arith.constant dense<0.000000e+00> : vector<8x16xf32>
    %349 = tpu.matmul %348, %335, %cst_273 {dimension_numbers = #tpu.dot_dimension_numbers<[1], [0], [0], [1], [0, 0, 1, 1], [], []>} : vector<8x8xf32>, vector<8x16xf32>, vector<8x16xf32> -> vector<8x16xf32>
    %c1_274 = arith.constant 1 : index
    %c1_275 = arith.constant 1 : index
    %c0_276 = arith.constant 0 : index
    %c0_277 = arith.constant 0 : index
    %350 = vector.load %arg24[%c1_274, %c1_275, %c0_276, %c0_277] : memref<2x3x16x48xf32, #tpu.memory_space<vmem>>, vector<1x1x16x48xf32>
    %351 = vector.shape_cast %350 : vector<1x1x16x48xf32> to vector<16x48xf32>
    %cst_278 = arith.constant dense<0.000000e+00> : vector<8x48xf32>
    %352 = tpu.matmul %349, %351, %cst_278 {dimension_numbers = #tpu.dot_dimension_numbers<[1], [0], [0], [1], [0, 0, 1, 1], [], []>} : vector<8x16xf32>, vector<16x48xf32>, vector<8x48xf32> -> vector<8x48xf32>
    %353 = arith.addf %314, %352 : vector<8x48xf32>
    %c1_279 = arith.constant 1 : index
    %c2_280 = arith.constant 2 : index
    %c0_281 = arith.constant 0 : index
    %c0_282 = arith.constant 0 : index
    %354 = vector.load %arg18[%c1_279, %c2_280, %c0_281, %c0_282] : memref<2x3x48x16xf32, #tpu.memory_space<vmem>>, vector<1x1x48x16xf32>
    %355 = vector.shape_cast %354 : vector<1x1x48x16xf32> to vector<48x16xf32>
    %c1_283 = arith.constant 1 : index
    %c2_284 = arith.constant 2 : index
    %c0_285 = arith.constant 0 : index
    %c0_286 = arith.constant 0 : index
    %356 = vector.load %arg19[%c1_283, %c2_284, %c0_285, %c0_286] : memref<2x3x1x16xf32, #tpu.memory_space<vmem>>, vector<1x1x1x16xf32>
    %357 = vector.shape_cast %356 : vector<1x1x1x16xf32> to vector<1x16xf32>
    %cst_287 = arith.constant dense<0.000000e+00> : vector<8x16xf32>
    %358 = tpu.matmul %276, %355, %cst_287 {dimension_numbers = #tpu.dot_dimension_numbers<[1], [0], [0], [1], [0, 0, 1, 1], [], []>} : vector<8x48xf32>, vector<48x16xf32>, vector<8x16xf32> -> vector<8x16xf32>
    %359 = vector.broadcast %357 : vector<1x16xf32> to vector<8x16xf32>
    %360 = arith.addf %358, %359 : vector<8x16xf32>
    %c1_288 = arith.constant 1 : index
    %c2_289 = arith.constant 2 : index
    %c0_290 = arith.constant 0 : index
    %c0_291 = arith.constant 0 : index
    %361 = vector.load %arg20[%c1_288, %c2_289, %c0_290, %c0_291] : memref<2x3x48x16xf32, #tpu.memory_space<vmem>>, vector<1x1x48x16xf32>
    %362 = vector.shape_cast %361 : vector<1x1x48x16xf32> to vector<48x16xf32>
    %c1_292 = arith.constant 1 : index
    %c2_293 = arith.constant 2 : index
    %c0_294 = arith.constant 0 : index
    %c0_295 = arith.constant 0 : index
    %363 = vector.load %arg21[%c1_292, %c2_293, %c0_294, %c0_295] : memref<2x3x1x16xf32, #tpu.memory_space<vmem>>, vector<1x1x1x16xf32>
    %364 = vector.shape_cast %363 : vector<1x1x1x16xf32> to vector<1x16xf32>
    %cst_296 = arith.constant dense<0.000000e+00> : vector<8x16xf32>
    %365 = tpu.matmul %276, %362, %cst_296 {dimension_numbers = #tpu.dot_dimension_numbers<[1], [0], [0], [1], [0, 0, 1, 1], [], []>} : vector<8x48xf32>, vector<48x16xf32>, vector<8x16xf32> -> vector<8x16xf32>
    %366 = vector.broadcast %364 : vector<1x16xf32> to vector<8x16xf32>
    %367 = arith.addf %365, %366 : vector<8x16xf32>
    %c1_297 = arith.constant 1 : index
    %c2_298 = arith.constant 2 : index
    %c0_299 = arith.constant 0 : index
    %c0_300 = arith.constant 0 : index
    %368 = vector.load %arg22[%c1_297, %c2_298, %c0_299, %c0_300] : memref<2x3x48x16xf32, #tpu.memory_space<vmem>>, vector<1x1x48x16xf32>
    %369 = vector.shape_cast %368 : vector<1x1x48x16xf32> to vector<48x16xf32>
    %c1_301 = arith.constant 1 : index
    %c2_302 = arith.constant 2 : index
    %c0_303 = arith.constant 0 : index
    %c0_304 = arith.constant 0 : index
    %370 = vector.load %arg23[%c1_301, %c2_302, %c0_303, %c0_304] : memref<2x3x1x16xf32, #tpu.memory_space<vmem>>, vector<1x1x1x16xf32>
    %371 = vector.shape_cast %370 : vector<1x1x1x16xf32> to vector<1x16xf32>
    %cst_305 = arith.constant dense<0.000000e+00> : vector<8x16xf32>
    %372 = tpu.matmul %276, %369, %cst_305 {dimension_numbers = #tpu.dot_dimension_numbers<[1], [0], [0], [1], [0, 0, 1, 1], [], []>} : vector<8x48xf32>, vector<48x16xf32>, vector<8x16xf32> -> vector<8x16xf32>
    %373 = vector.broadcast %371 : vector<1x16xf32> to vector<8x16xf32>
    %374 = arith.addf %372, %373 : vector<8x16xf32>
    %cst_306 = arith.constant dense<0.000000e+00> : vector<8x8xf32>
    %375 = tpu.matmul %360, %367, %cst_306 {dimension_numbers = #tpu.dot_dimension_numbers<[1], [1], [0], [0], [0, 0, 1, 0], [], []>} : vector<8x16xf32>, vector<8x16xf32>, vector<8x8xf32> -> vector<8x8xf32>
    %cst_307 = arith.constant 2.500000e-01 : f32
    %376 = vector.broadcast %cst_307 : f32 to vector<8x8xf32>
    %377 = arith.mulf %375, %376 : vector<8x8xf32>
    %cst_308 = arith.constant dense<0xFF800000> : vector<8xf32>
    %378 = vector.multi_reduction <maximumf>, %377, %cst_308 [1] : vector<8x8xf32> to vector<8xf32>
    %379 = vector.shape_cast %378 : vector<8xf32> to vector<8x1xf32>
    %380 = vector.broadcast %379 : vector<8x1xf32> to vector<8x8xf32>
    %381 = arith.subf %377, %380 : vector<8x8xf32>
    %382 = math.exp %381 : vector<8x8xf32>
    %cst_309 = arith.constant dense<0.000000e+00> : vector<8xf32>
    %383 = vector.multi_reduction <add>, %382, %cst_309 [1] : vector<8x8xf32> to vector<8xf32>
    %384 = vector.shape_cast %383 : vector<8xf32> to vector<8x1xf32>
    %385 = tpu.reciprocal %384 {approx = true} : vector<8x1xf32> -> vector<8x1xf32>
    %386 = vector.broadcast %385 : vector<8x1xf32> to vector<8x8xf32>
    %387 = arith.mulf %382, %386 : vector<8x8xf32>
    %cst_310 = arith.constant dense<0.000000e+00> : vector<8x16xf32>
    %388 = tpu.matmul %387, %374, %cst_310 {dimension_numbers = #tpu.dot_dimension_numbers<[1], [0], [0], [1], [0, 0, 1, 1], [], []>} : vector<8x8xf32>, vector<8x16xf32>, vector<8x16xf32> -> vector<8x16xf32>
    %c1_311 = arith.constant 1 : index
    %c2_312 = arith.constant 2 : index
    %c0_313 = arith.constant 0 : index
    %c0_314 = arith.constant 0 : index
    %389 = vector.load %arg24[%c1_311, %c2_312, %c0_313, %c0_314] : memref<2x3x16x48xf32, #tpu.memory_space<vmem>>, vector<1x1x16x48xf32>
    %390 = vector.shape_cast %389 : vector<1x1x16x48xf32> to vector<16x48xf32>
    %cst_315 = arith.constant dense<0.000000e+00> : vector<8x48xf32>
    %391 = tpu.matmul %388, %390, %cst_315 {dimension_numbers = #tpu.dot_dimension_numbers<[1], [0], [0], [1], [0, 0, 1, 1], [], []>} : vector<8x16xf32>, vector<16x48xf32>, vector<8x48xf32> -> vector<8x48xf32>
    %392 = arith.addf %353, %391 : vector<8x48xf32>
    %c1_316 = arith.constant 1 : index
    %c0_317 = arith.constant 0 : index
    %c0_318 = arith.constant 0 : index
    %393 = vector.load %arg25[%c1_316, %c0_317, %c0_318] : memref<2x1x48xf32, #tpu.memory_space<vmem>>, vector<1x1x48xf32>
    %394 = vector.shape_cast %393 : vector<1x1x48xf32> to vector<1x48xf32>
    %395 = vector.broadcast %394 : vector<1x48xf32> to vector<8x48xf32>
    %396 = arith.addf %392, %395 : vector<8x48xf32>
    %397 = arith.addf %252, %396 : vector<8x48xf32>
    %c1_319 = arith.constant 1 : index
    %c0_320 = arith.constant 0 : index
    %c0_321 = arith.constant 0 : index
    %398 = vector.load %arg26[%c1_319, %c0_320, %c0_321] : memref<2x1x48xf32, #tpu.memory_space<vmem>>, vector<1x1x48xf32>
    %399 = vector.shape_cast %398 : vector<1x1x48xf32> to vector<1x48xf32>
    %c1_322 = arith.constant 1 : index
    %c0_323 = arith.constant 0 : index
    %c0_324 = arith.constant 0 : index
    %400 = vector.load %arg27[%c1_322, %c0_323, %c0_324] : memref<2x1x48xf32, #tpu.memory_space<vmem>>, vector<1x1x48xf32>
    %401 = vector.shape_cast %400 : vector<1x1x48xf32> to vector<1x48xf32>
    %cst_325 = arith.constant dense<0.000000e+00> : vector<8xf32>
    %402 = vector.multi_reduction <add>, %397, %cst_325 [1] : vector<8x48xf32> to vector<8xf32>
    %403 = vector.shape_cast %402 : vector<8xf32> to vector<8x1xf32>
    %cst_326 = arith.constant 4.800000e+01 : f32
    %404 = vector.broadcast %cst_326 : f32 to vector<8x1xf32>
    %405 = arith.divf %403, %404 : vector<8x1xf32>
    %406 = vector.broadcast %405 : vector<8x1xf32> to vector<8x48xf32>
    %407 = arith.subf %397, %406 : vector<8x48xf32>
    %408 = arith.mulf %407, %407 : vector<8x48xf32>
    %cst_327 = arith.constant dense<0.000000e+00> : vector<8xf32>
    %409 = vector.multi_reduction <add>, %408, %cst_327 [1] : vector<8x48xf32> to vector<8xf32>
    %410 = vector.shape_cast %409 : vector<8xf32> to vector<8x1xf32>
    %cst_328 = arith.constant 4.800000e+01 : f32
    %411 = vector.broadcast %cst_328 : f32 to vector<8x1xf32>
    %412 = arith.divf %410, %411 : vector<8x1xf32>
    %cst_329 = arith.constant 9.99999974E-6 : f32
    %413 = vector.broadcast %cst_329 : f32 to vector<8x1xf32>
    %414 = arith.addf %412, %413 : vector<8x1xf32>
    %415 = math.rsqrt %414 : vector<8x1xf32>
    %416 = vector.broadcast %415 : vector<8x1xf32> to vector<8x48xf32>
    %417 = arith.mulf %407, %416 : vector<8x48xf32>
    %418 = vector.broadcast %399 : vector<1x48xf32> to vector<8x48xf32>
    %419 = arith.mulf %417, %418 : vector<8x48xf32>
    %420 = vector.broadcast %401 : vector<1x48xf32> to vector<8x48xf32>
    %421 = arith.addf %419, %420 : vector<8x48xf32>
    %c1_330 = arith.constant 1 : index
    %c0_331 = arith.constant 0 : index
    %c0_332 = arith.constant 0 : index
    %422 = vector.load %arg28[%c1_330, %c0_331, %c0_332] : memref<2x48x128xf32, #tpu.memory_space<vmem>>, vector<1x48x128xf32>
    %423 = vector.shape_cast %422 : vector<1x48x128xf32> to vector<48x128xf32>
    %cst_333 = arith.constant dense<0.000000e+00> : vector<8x128xf32>
    %424 = tpu.matmul %421, %423, %cst_333 {dimension_numbers = #tpu.dot_dimension_numbers<[1], [0], [0], [1], [0, 0, 1, 1], [], []>} : vector<8x48xf32>, vector<48x128xf32>, vector<8x128xf32> -> vector<8x128xf32>
    %c1_334 = arith.constant 1 : index
    %c0_335 = arith.constant 0 : index
    %c0_336 = arith.constant 0 : index
    %425 = vector.load %arg29[%c1_334, %c0_335, %c0_336] : memref<2x48x128xf32, #tpu.memory_space<vmem>>, vector<1x48x128xf32>
    %426 = vector.shape_cast %425 : vector<1x48x128xf32> to vector<48x128xf32>
    %cst_337 = arith.constant dense<0.000000e+00> : vector<8x128xf32>
    %427 = tpu.matmul %421, %426, %cst_337 {dimension_numbers = #tpu.dot_dimension_numbers<[1], [0], [0], [1], [0, 0, 1, 1], [], []>} : vector<8x48xf32>, vector<48x128xf32>, vector<8x128xf32> -> vector<8x128xf32>
    %cst_338 = arith.constant 0.000000e+00 : f32
    %428 = vector.broadcast %cst_338 : f32 to vector<8x128xf32>
    %429 = arith.subf %428, %424 : vector<8x128xf32>
    %430 = math.exp %429 : vector<8x128xf32>
    %cst_339 = arith.constant 1.000000e+00 : f32
    %431 = vector.broadcast %cst_339 : f32 to vector<8x128xf32>
    %432 = arith.addf %431, %430 : vector<8x128xf32>
    %cst_340 = arith.constant 1.000000e+00 : f32
    %433 = vector.broadcast %cst_340 : f32 to vector<8x128xf32>
    %434 = arith.divf %433, %432 : vector<8x128xf32>
    %435 = arith.mulf %424, %434 : vector<8x128xf32>
    %436 = arith.mulf %435, %427 : vector<8x128xf32>
    %c1_341 = arith.constant 1 : index
    %c0_342 = arith.constant 0 : index
    %c0_343 = arith.constant 0 : index
    %437 = vector.load %arg30[%c1_341, %c0_342, %c0_343] : memref<2x128x48xf32, #tpu.memory_space<vmem>>, vector<1x128x48xf32>
    %438 = vector.shape_cast %437 : vector<1x128x48xf32> to vector<128x48xf32>
    %cst_344 = arith.constant dense<0.000000e+00> : vector<8x48xf32>
    %439 = tpu.matmul %436, %438, %cst_344 {dimension_numbers = #tpu.dot_dimension_numbers<[1], [0], [0], [1], [0, 0, 1, 1], [], []>} : vector<8x128xf32>, vector<128x48xf32>, vector<8x48xf32> -> vector<8x48xf32>
    %440 = arith.addf %397, %439 : vector<8x48xf32>
    %c0_345 = arith.constant 0 : index
    %c0_346 = arith.constant 0 : index
    %441 = vector.load %arg31[%c0_345, %c0_346] : memref<1x48xf32, #tpu.memory_space<vmem>>, vector<1x48xf32>
    %c0_347 = arith.constant 0 : index
    %c0_348 = arith.constant 0 : index
    %442 = vector.load %arg32[%c0_347, %c0_348] : memref<1x48xf32, #tpu.memory_space<vmem>>, vector<1x48xf32>
    %cst_349 = arith.constant dense<0.000000e+00> : vector<8xf32>
    %443 = vector.multi_reduction <add>, %440, %cst_349 [1] : vector<8x48xf32> to vector<8xf32>
    %444 = vector.shape_cast %443 : vector<8xf32> to vector<8x1xf32>
    %cst_350 = arith.constant 4.800000e+01 : f32
    %445 = vector.broadcast %cst_350 : f32 to vector<8x1xf32>
    %446 = arith.divf %444, %445 : vector<8x1xf32>
    %447 = vector.broadcast %446 : vector<8x1xf32> to vector<8x48xf32>
    %448 = arith.subf %440, %447 : vector<8x48xf32>
    %449 = arith.mulf %448, %448 : vector<8x48xf32>
    %cst_351 = arith.constant dense<0.000000e+00> : vector<8xf32>
    %450 = vector.multi_reduction <add>, %449, %cst_351 [1] : vector<8x48xf32> to vector<8xf32>
    %451 = vector.shape_cast %450 : vector<8xf32> to vector<8x1xf32>
    %cst_352 = arith.constant 4.800000e+01 : f32
    %452 = vector.broadcast %cst_352 : f32 to vector<8x1xf32>
    %453 = arith.divf %451, %452 : vector<8x1xf32>
    %cst_353 = arith.constant 9.99999974E-6 : f32
    %454 = vector.broadcast %cst_353 : f32 to vector<8x1xf32>
    %455 = arith.addf %453, %454 : vector<8x1xf32>
    %456 = math.rsqrt %455 : vector<8x1xf32>
    %457 = vector.broadcast %456 : vector<8x1xf32> to vector<8x48xf32>
    %458 = arith.mulf %448, %457 : vector<8x48xf32>
    %459 = vector.broadcast %441 : vector<1x48xf32> to vector<8x48xf32>
    %460 = arith.mulf %458, %459 : vector<8x48xf32>
    %461 = vector.broadcast %442 : vector<1x48xf32> to vector<8x48xf32>
    %462 = arith.addf %460, %461 : vector<8x48xf32>
    %c0_354 = arith.constant 0 : index
    %c0_355 = arith.constant 0 : index
    %463 = vector.load %arg33[%c0_354, %c0_355] : memref<48x256xf32, #tpu.memory_space<vmem>>, vector<48x256xf32>
    %c0_356 = arith.constant 0 : index
    %c0_357 = arith.constant 0 : index
    %464 = vector.load %arg34[%c0_356, %c0_357] : memref<1x256xf32, #tpu.memory_space<vmem>>, vector<1x256xf32>
    %cst_358 = arith.constant dense<0.000000e+00> : vector<8x256xf32>
    %465 = tpu.matmul %462, %463, %cst_358 {dimension_numbers = #tpu.dot_dimension_numbers<[1], [0], [0], [1], [0, 0, 1, 1], [], []>} : vector<8x48xf32>, vector<48x256xf32>, vector<8x256xf32> -> vector<8x256xf32>
    %466 = vector.broadcast %464 : vector<1x256xf32> to vector<8x256xf32>
    %467 = arith.addf %465, %466 : vector<8x256xf32>
    %cst_359 = arith.constant 5.000000e-01 : f32
    %468 = vector.broadcast %cst_359 : f32 to vector<8x256xf32>
    %469 = arith.mulf %468, %467 : vector<8x256xf32>
    %cst_360 = arith.constant 4.471500e-02 : f32
    %470 = vector.broadcast %cst_360 : f32 to vector<8x256xf32>
    %471 = arith.mulf %470, %467 : vector<8x256xf32>
    %472 = arith.mulf %471, %467 : vector<8x256xf32>
    %473 = arith.mulf %472, %467 : vector<8x256xf32>
    %474 = arith.addf %467, %473 : vector<8x256xf32>
    %cst_361 = arith.constant 0.797884583 : f32
    %475 = vector.broadcast %cst_361 : f32 to vector<8x256xf32>
    %476 = arith.mulf %475, %474 : vector<8x256xf32>
    %477 = math.tanh %476 : vector<8x256xf32>
    %cst_362 = arith.constant 1.000000e+00 : f32
    %478 = vector.broadcast %cst_362 : f32 to vector<8x256xf32>
    %479 = arith.addf %478, %477 : vector<8x256xf32>
    %480 = arith.mulf %469, %479 : vector<8x256xf32>
    %c0_363 = arith.constant 0 : index
    %c0_364 = arith.constant 0 : index
    %481 = vector.load %arg35[%c0_363, %c0_364] : memref<256x3xf32, #tpu.memory_space<vmem>>, vector<256x3xf32>
    %cst_365 = arith.constant dense<0.000000e+00> : vector<8x3xf32>
    %482 = tpu.matmul %480, %481, %cst_365 {dimension_numbers = #tpu.dot_dimension_numbers<[1], [0], [0], [1], [0, 0, 1, 1], [], []>} : vector<8x256xf32>, vector<256x3xf32>, vector<8x3xf32> -> vector<8x3xf32>
    %cst_366 = arith.constant 5.000000e+01 : f32
    %483 = vector.broadcast %cst_366 : f32 to vector<8x3xf32>
    %484 = arith.mulf %482, %483 : vector<8x3xf32>
    %cst_367 = arith.constant dense<0xFF800000> : vector<8xf32>
    %485 = vector.multi_reduction <maximumf>, %484, %cst_367 [1] : vector<8x3xf32> to vector<8xf32>
    %486 = vector.shape_cast %485 : vector<8xf32> to vector<8x1xf32>
    %487 = vector.broadcast %486 : vector<8x1xf32> to vector<8x3xf32>
    %488 = arith.subf %484, %487 : vector<8x3xf32>
    %489 = math.exp %488 : vector<8x3xf32>
    %cst_368 = arith.constant dense<0.000000e+00> : vector<8xf32>
    %490 = vector.multi_reduction <add>, %489, %cst_368 [1] : vector<8x3xf32> to vector<8xf32>
    %491 = vector.shape_cast %490 : vector<8xf32> to vector<8x1xf32>
    %492 = vector.broadcast %491 : vector<8x1xf32> to vector<8x3xf32>
    %493 = arith.divf %489, %492 : vector<8x3xf32>
    %c0_369 = arith.constant 0 : index
    %c0_370 = arith.constant 0 : index
    %c0_371 = arith.constant 0 : index
    %494 = vector.load %arg36[%c0_369, %c0_370, %c0_371] : memref<1x8x3xf32, #tpu.memory_space<vmem>>, vector<1x8x3xf32>
    %495 = vector.shape_cast %494 : vector<1x8x3xf32> to vector<8x3xf32>
    %496 = vector.shape_cast %493 : vector<8x3xf32> to vector<1x8x3xf32>
    tpu.vector_store %arg36[%c0_369, %c0_370, %c0_371], %496 {strides = array<i32>} : memref<1x8x3xf32, #tpu.memory_space<vmem>>, vector<1x8x3xf32>,
    return
  }
  func.func @transform_0(%arg0: i32) -> (i32, i32, i32) {
    %c0_i32 = arith.constant 0 : i32
    %c0_i32_0 = arith.constant 0 : i32
    %c0_i32_1 = arith.constant 0 : i32
    return %arg0, %c0_i32, %c0_i32_0 : i32, i32, i32
  }
  func.func @transform_1(%arg0: i32) -> (i32, i32, i32) {
    %c0_i32 = arith.constant 0 : i32
    %c0_i32_0 = arith.constant 0 : i32
    %c0_i32_1 = arith.constant 0 : i32
    return %arg0, %c0_i32, %c0_i32_0 : i32, i32, i32
  }
  func.func @transform_2(%arg0: i32) -> (i32, i32) {
    %c0_i32 = arith.constant 0 : i32
    %c0_i32_0 = arith.constant 0 : i32
    %c0_i32_1 = arith.constant 0 : i32
    return %c0_i32, %c0_i32_0 : i32, i32
  }
  func.func @transform_3(%arg0: i32) -> (i32, i32) {
    %c0_i32 = arith.constant 0 : i32
    %c0_i32_0 = arith.constant 0 : i32
    %c0_i32_1 = arith.constant 0 : i32
    return %c0_i32, %c0_i32_0 : i32, i32
  }
  func.func @transform_4(%arg0: i32) -> (i32, i32) {
    %c0_i32 = arith.constant 0 : i32
    %c0_i32_0 = arith.constant 0 : i32
    %c0_i32_1 = arith.constant 0 : i32
    return %c0_i32, %c0_i32_0 : i32, i32
  }
  func.func @transform_5(%arg0: i32) -> (i32, i32) {
    %c0_i32 = arith.constant 0 : i32
    %c0_i32_0 = arith.constant 0 : i32
    %c0_i32_1 = arith.constant 0 : i32
    return %c0_i32, %c0_i32_0 : i32, i32
  }
  func.func @transform_6(%arg0: i32) -> (i32, i32) {
    %c0_i32 = arith.constant 0 : i32
    %c0_i32_0 = arith.constant 0 : i32
    %c0_i32_1 = arith.constant 0 : i32
    return %c0_i32, %c0_i32_0 : i32, i32
  }
  func.func @transform_7(%arg0: i32) -> (i32, i32) {
    %c0_i32 = arith.constant 0 : i32
    %c0_i32_0 = arith.constant 0 : i32
    %c0_i32_1 = arith.constant 0 : i32
    return %c0_i32, %c0_i32_0 : i32, i32
  }
  func.func @transform_8(%arg0: i32) -> (i32, i32) {
    %c0_i32 = arith.constant 0 : i32
    %c0_i32_0 = arith.constant 0 : i32
    %c0_i32_1 = arith.constant 0 : i32
    return %c0_i32, %c0_i32_0 : i32, i32
  }
  func.func @transform_9(%arg0: i32) -> (i32, i32) {
    %c0_i32 = arith.constant 0 : i32
    %c0_i32_0 = arith.constant 0 : i32
    %c0_i32_1 = arith.constant 0 : i32
    return %c0_i32, %c0_i32_0 : i32, i32
  }
  func.func @transform_10(%arg0: i32) -> (i32, i32) {
    %c0_i32 = arith.constant 0 : i32
    %c0_i32_0 = arith.constant 0 : i32
    %c0_i32_1 = arith.constant 0 : i32
    return %c0_i32, %c0_i32_0 : i32, i32
  }
  func.func @transform_11(%arg0: i32) -> (i32, i32) {
    %c0_i32 = arith.constant 0 : i32
    %c0_i32_0 = arith.constant 0 : i32
    %c0_i32_1 = arith.constant 0 : i32
    return %c0_i32, %c0_i32_0 : i32, i32
  }
  func.func @transform_12(%arg0: i32) -> (i32, i32) {
    %c0_i32 = arith.constant 0 : i32
    %c0_i32_0 = arith.constant 0 : i32
    %c0_i32_1 = arith.constant 0 : i32
    return %c0_i32, %c0_i32_0 : i32, i32
  }
  func.func @transform_13(%arg0: i32) -> (i32, i32) {
    %c0_i32 = arith.constant 0 : i32
    %c0_i32_0 = arith.constant 0 : i32
    %c0_i32_1 = arith.constant 0 : i32
    return %c0_i32, %c0_i32_0 : i32, i32
  }
  func.func @transform_14(%arg0: i32) -> (i32, i32) {
    %c0_i32 = arith.constant 0 : i32
    %c0_i32_0 = arith.constant 0 : i32
    %c0_i32_1 = arith.constant 0 : i32
    return %c0_i32, %c0_i32_0 : i32, i32
  }
  func.func @transform_15(%arg0: i32) -> (i32, i32, i32) {
    %c0_i32 = arith.constant 0 : i32
    %c0_i32_0 = arith.constant 0 : i32
    %c0_i32_1 = arith.constant 0 : i32
    %c0_i32_2 = arith.constant 0 : i32
    return %c0_i32, %c0_i32_0, %c0_i32_1 : i32, i32, i32
  }
  func.func @transform_16(%arg0: i32) -> (i32, i32, i32) {
    %c0_i32 = arith.constant 0 : i32
    %c0_i32_0 = arith.constant 0 : i32
    %c0_i32_1 = arith.constant 0 : i32
    %c0_i32_2 = arith.constant 0 : i32
    return %c0_i32, %c0_i32_0, %c0_i32_1 : i32, i32, i32
  }
  func.func @transform_17(%arg0: i32) -> (i32, i32, i32, i32) {
    %c0_i32 = arith.constant 0 : i32
    %c0_i32_0 = arith.constant 0 : i32
    %c0_i32_1 = arith.constant 0 : i32
    %c0_i32_2 = arith.constant 0 : i32
    %c0_i32_3 = arith.constant 0 : i32
    return %c0_i32, %c0_i32_0, %c0_i32_1, %c0_i32_2 : i32, i32, i32, i32
  }
  func.func @transform_18(%arg0: i32) -> (i32, i32, i32, i32) {
    %c0_i32 = arith.constant 0 : i32
    %c0_i32_0 = arith.constant 0 : i32
    %c0_i32_1 = arith.constant 0 : i32
    %c0_i32_2 = arith.constant 0 : i32
    %c0_i32_3 = arith.constant 0 : i32
    return %c0_i32, %c0_i32_0, %c0_i32_1, %c0_i32_2 : i32, i32, i32, i32
  }
  func.func @transform_19(%arg0: i32) -> (i32, i32, i32, i32) {
    %c0_i32 = arith.constant 0 : i32
    %c0_i32_0 = arith.constant 0 : i32
    %c0_i32_1 = arith.constant 0 : i32
    %c0_i32_2 = arith.constant 0 : i32
    %c0_i32_3 = arith.constant 0 : i32
    return %c0_i32, %c0_i32_0, %c0_i32_1, %c0_i32_2 : i32, i32, i32, i32
  }
  func.func @transform_20(%arg0: i32) -> (i32, i32, i32, i32) {
    %c0_i32 = arith.constant 0 : i32
    %c0_i32_0 = arith.constant 0 : i32
    %c0_i32_1 = arith.constant 0 : i32
    %c0_i32_2 = arith.constant 0 : i32
    %c0_i32_3 = arith.constant 0 : i32
    return %c0_i32, %c0_i32_0, %c0_i32_1, %c0_i32_2 : i32, i32, i32, i32
  }
  func.func @transform_21(%arg0: i32) -> (i32, i32, i32, i32) {
    %c0_i32 = arith.constant 0 : i32
    %c0_i32_0 = arith.constant 0 : i32
    %c0_i32_1 = arith.constant 0 : i32
    %c0_i32_2 = arith.constant 0 : i32
    %c0_i32_3 = arith.constant 0 : i32
    return %c0_i32, %c0_i32_0, %c0_i32_1, %c0_i32_2 : i32, i32, i32, i32
  }
  func.func @transform_22(%arg0: i32) -> (i32, i32, i32, i32) {
    %c0_i32 = arith.constant 0 : i32
    %c0_i32_0 = arith.constant 0 : i32
    %c0_i32_1 = arith.constant 0 : i32
    %c0_i32_2 = arith.constant 0 : i32
    %c0_i32_3 = arith.constant 0 : i32
    return %c0_i32, %c0_i32_0, %c0_i32_1, %c0_i32_2 : i32, i32, i32, i32
  }
  func.func @transform_23(%arg0: i32) -> (i32, i32, i32, i32) {
    %c0_i32 = arith.constant 0 : i32
    %c0_i32_0 = arith.constant 0 : i32
    %c0_i32_1 = arith.constant 0 : i32
    %c0_i32_2 = arith.constant 0 : i32
    %c0_i32_3 = arith.constant 0 : i32
    return %c0_i32, %c0_i32_0, %c0_i32_1, %c0_i32_2 : i32, i32, i32, i32
  }
  func.func @transform_24(%arg0: i32) -> (i32, i32, i32) {
    %c0_i32 = arith.constant 0 : i32
    %c0_i32_0 = arith.constant 0 : i32
    %c0_i32_1 = arith.constant 0 : i32
    %c0_i32_2 = arith.constant 0 : i32
    return %c0_i32, %c0_i32_0, %c0_i32_1 : i32, i32, i32
  }
  func.func @transform_25(%arg0: i32) -> (i32, i32, i32) {
    %c0_i32 = arith.constant 0 : i32
    %c0_i32_0 = arith.constant 0 : i32
    %c0_i32_1 = arith.constant 0 : i32
    %c0_i32_2 = arith.constant 0 : i32
    return %c0_i32, %c0_i32_0, %c0_i32_1 : i32, i32, i32
  }
  func.func @transform_26(%arg0: i32) -> (i32, i32, i32) {
    %c0_i32 = arith.constant 0 : i32
    %c0_i32_0 = arith.constant 0 : i32
    %c0_i32_1 = arith.constant 0 : i32
    %c0_i32_2 = arith.constant 0 : i32
    return %c0_i32, %c0_i32_0, %c0_i32_1 : i32, i32, i32
  }
  func.func @transform_27(%arg0: i32) -> (i32, i32, i32) {
    %c0_i32 = arith.constant 0 : i32
    %c0_i32_0 = arith.constant 0 : i32
    %c0_i32_1 = arith.constant 0 : i32
    %c0_i32_2 = arith.constant 0 : i32
    return %c0_i32, %c0_i32_0, %c0_i32_1 : i32, i32, i32
  }
  func.func @transform_28(%arg0: i32) -> (i32, i32, i32) {
    %c0_i32 = arith.constant 0 : i32
    %c0_i32_0 = arith.constant 0 : i32
    %c0_i32_1 = arith.constant 0 : i32
    %c0_i32_2 = arith.constant 0 : i32
    return %c0_i32, %c0_i32_0, %c0_i32_1 : i32, i32, i32
  }
  func.func @transform_29(%arg0: i32) -> (i32, i32, i32) {
    %c0_i32 = arith.constant 0 : i32
    %c0_i32_0 = arith.constant 0 : i32
    %c0_i32_1 = arith.constant 0 : i32
    %c0_i32_2 = arith.constant 0 : i32
    return %c0_i32, %c0_i32_0, %c0_i32_1 : i32, i32, i32
  }
  func.func @transform_30(%arg0: i32) -> (i32, i32) {
    %c0_i32 = arith.constant 0 : i32
    %c0_i32_0 = arith.constant 0 : i32
    %c0_i32_1 = arith.constant 0 : i32
    return %c0_i32, %c0_i32_0 : i32, i32
  }
  func.func @transform_31(%arg0: i32) -> (i32, i32) {
    %c0_i32 = arith.constant 0 : i32
    %c0_i32_0 = arith.constant 0 : i32
    %c0_i32_1 = arith.constant 0 : i32
    return %c0_i32, %c0_i32_0 : i32, i32
  }
  func.func @transform_32(%arg0: i32) -> (i32, i32) {
    %c0_i32 = arith.constant 0 : i32
    %c0_i32_0 = arith.constant 0 : i32
    %c0_i32_1 = arith.constant 0 : i32
    return %c0_i32, %c0_i32_0 : i32, i32
  }
  func.func @transform_33(%arg0: i32) -> (i32, i32) {
    %c0_i32 = arith.constant 0 : i32
    %c0_i32_0 = arith.constant 0 : i32
    %c0_i32_1 = arith.constant 0 : i32
    return %c0_i32, %c0_i32_0 : i32, i32
  }
  func.func @transform_34(%arg0: i32) -> (i32, i32) {
    %c0_i32 = arith.constant 0 : i32
    %c0_i32_0 = arith.constant 0 : i32
    %c0_i32_1 = arith.constant 0 : i32
    return %c0_i32, %c0_i32_0 : i32, i32
  }
  func.func @transform_35(%arg0: i32) -> (i32, i32, i32) {
    %c0_i32 = arith.constant 0 : i32
    %c0_i32_0 = arith.constant 0 : i32
    %c0_i32_1 = arith.constant 0 : i32
    return %arg0, %c0_i32, %c0_i32_0 : i32, i32, i32
  }
}

</mosaic_0001>

<llo_original>
// kernel: tpu_custom_call.1
$region0: #{tpu_custom_call.1}
  #allocation0 [shape = 'u32[]', space=smem, size = 0x4, offset = 0x4, fixed_abs, tag = 'smem constant byte address 0x4 - core index']
  #allocation1 [shape = 'u32[72,128]{1,0:T(1,128)}', space=vmem, size = 0x9000, scoped, tag = 'internal scratch']
  %s0 = inlined_call_operand.smem [shape: u32[36], index: -1, kind: input, shape index: {}]
  %s1 = sld [smem:[%s0]]
  %s2 = scalar_lea.smem %s0, 1
  %s3 = sld [smem:[%s2]]
  %s4 = scalar_lea.smem %s0, 2
  %s5 = sld [smem:[%s4]]
  %s6 = scalar_lea.smem %s0, 3
  %s7 = sld [smem:[%s6]]
  %s8 = scalar_lea.smem %s0, 4
  %s9 = sld [smem:[%s8]]
  %s10 = scalar_lea.smem %s0, 5
  %s11 = sld [smem:[%s10]]
  %s12 = scalar_lea.smem %s0, 6
  %s13 = sld [smem:[%s12]]
  %s14 = scalar_lea.smem %s0, 7
  %s15 = sld [smem:[%s14]]
  %s16 = scalar_lea.smem %s0, 8
  %s17 = sld [smem:[%s16]]
  %s18 = scalar_lea.smem %s0, 9
  %s19 = sld [smem:[%s18]]
  %s20 = scalar_lea.smem %s0, 10
  %s21 = sld [smem:[%s20]]
  %s22 = scalar_lea.smem %s0, 11
  %s23 = sld [smem:[%s22]]
  %s24 = scalar_lea.smem %s0, 12
  %s25 = sld [smem:[%s24]]
  %s26 = scalar_lea.smem %s0, 13
  %s27 = sld [smem:[%s26]]
  %s28 = scalar_lea.smem %s0, 14
  %s29 = sld [smem:[%s28]]
  %s30 = scalar_lea.smem %s0, 15
  %s31 = sld [smem:[%s30]]
  %s32 = scalar_lea.smem %s0, 16
  %s33 = sld [smem:[%s32]]
  %s34 = scalar_lea.smem %s0, 17
  %s35 = sld [smem:[%s34]]
  %s36 = scalar_lea.smem %s0, 18
  %s37 = sld [smem:[%s36]]
  %s38 = scalar_lea.smem %s0, 19
  %s39 = sld [smem:[%s38]]
  %s40 = scalar_lea.smem %s0, 20
  %s41 = sld [smem:[%s40]]
  %s42 = scalar_lea.smem %s0, 21
  %s43 = sld [smem:[%s42]]
  %s44 = scalar_lea.smem %s0, 22
  %s45 = sld [smem:[%s44]]
  %s46 = scalar_lea.smem %s0, 23
  %s47 = sld [smem:[%s46]]
  %s48 = scalar_lea.smem %s0, 24
  %s49 = sld [smem:[%s48]]
  %s50 = scalar_lea.smem %s0, 25
  %s51 = sld [smem:[%s50]]
  %s52 = scalar_lea.smem %s0, 26
  %s53 = sld [smem:[%s52]]
  %s54 = scalar_lea.smem %s0, 27
  %s55 = sld [smem:[%s54]]
  %s56 = scalar_lea.smem %s0, 28
  %s57 = sld [smem:[%s56]]
  %s58 = scalar_lea.smem %s0, 29
  %s59 = sld [smem:[%s58]]
  %s60 = scalar_lea.smem %s0, 30
  %s61 = sld [smem:[%s60]]
  %s62 = scalar_lea.smem %s0, 31
  %s63 = sld [smem:[%s62]]
  %s64 = scalar_lea.smem %s0, 32
  %s65 = sld [smem:[%s64]]
  %s66 = scalar_lea.smem %s0, 33
  %s67 = sld [smem:[%s66]]
  %s68 = scalar_lea.smem %s0, 34
  %s69 = sld [smem:[%s68]]
  %s70 = scalar_lea.smem %s0, 35
  %s71 = sld [smem:[%s70]]
  %s72 = sld [smem:[#allocation0]]
  $region181: #{tpu_custom_call.1} parent=0
    _
  %s74 = ssub.s32 1, %s72
  %s75 = scalar_select 0, %s74, %s72
  $region1: #{tpu_custom_call.1} parent=0
    #allocation2 [shape = 'u8[524288]{0}', space=vmem, size = 0x80000, scoped, tag = 'input window, operand 6, single buffered']
    #allocation3 [shape = 's32[2]{0}', space=sflag, size = 0x8, scoped, tag = 'scoped memory for tpu_custom_call.1']
    #allocation4 [shape = 'u8[524288]{0}', space=vmem, size = 0x80000, scoped, tag = 'input window, operand 7, single buffered']
    #allocation5 [shape = 's32[1]{0}', space=sflag, size = 0x4, scoped, tag = 'scoped memory for tpu_custom_call.1']
    %76 = vsyncpa [#allocation3], 0
    %77 = vsyncpa [#allocation5], 0
    loop: start=0, step=1, limit=4
    $region2: #{tpu_custom_call.1} parent=1 // loop_pre_header
      _
    $region3: #{tpu_custom_call.1} parent=1 // loop_header
      %s79 = sphi 0, %s83
      %p80 = scmp.ge.s32.totalorder %s79, 4
      %s89 = sphi 0, %s91
      %s92 = sphi 0, %s89
      %s93 = sphi 0, %s92
      %s109 = sphi 0, %s93
      %s115 = sphi 0, %s117
      %s118 = sphi 0, %s115
      %s119 = sphi 0, %s118
      %s135 = sphi 0, %s119
      %s139 = sphi 0, %s139
      %s141 = sphi 0, %s139
      %s142 = sphi 0, %s141
      %s156 = sphi 0, %s142
      %s160 = sphi 0, %s160
      %s162 = sphi 0, %s160
      %s163 = sphi 0, %s162
      %s177 = sphi 0, %s163
      %s181 = sphi 0, %s181
      %s183 = sphi 0, %s181
      %s184 = sphi 0, %s183
      %s198 = sphi 0, %s184
      %s202 = sphi 0, %s202
      %s204 = sphi 0, %s202
      %s205 = sphi 0, %s204
      %s219 = sphi 0, %s205
      %s223 = sphi 0, %s223
      %s225 = sphi 0, %s223
      %s226 = sphi 0, %s225
      %s240 = sphi 0, %s226
      %s244 = sphi 0, %s244
      %s246 = sphi 0, %s244
      %s247 = sphi 0, %s246
      %s261 = sphi 0, %s247
      %s265 = sphi 0, %s265
      %s267 = sphi 0, %s265
      %s268 = sphi 0, %s267
      %s282 = sphi 0, %s268
      %s286 = sphi 0, %s286
      %s288 = sphi 0, %s286
      %s289 = sphi 0, %s288
      %s303 = sphi 0, %s289
      %s307 = sphi 0, %s307
      %s309 = sphi 0, %s307
      %s310 = sphi 0, %s309
      %s324 = sphi 0, %s310
      %s328 = sphi 0, %s328
      %s330 = sphi 0, %s328
      %s331 = sphi 0, %s330
      %s345 = sphi 0, %s331
      %s349 = sphi 0, %s349
      %s351 = sphi 0, %s349
      %s352 = sphi 0, %s351
      %s366 = sphi 0, %s352
      %s370 = sphi 0, %s370
      %s372 = sphi 0, %s370
      %s373 = sphi 0, %s372
      %s387 = sphi 0, %s373
      %s391 = sphi 0, %s391
      %s393 = sphi 0, %s391
      %s394 = sphi 0, %s393
      %s408 = sphi 0, %s394
      %s412 = sphi 0, %s412
      %s414 = sphi 0, %s412
      %s415 = sphi 0, %s414
      %s429 = sphi 0, %s415
      %s433 = sphi 0, %s433
      %s435 = sphi 0, %s433
      %s436 = sphi 0, %s435
      %s450 = sphi 0, %s436
      %s454 = sphi 0, %s454
      %s456 = sphi 0, %s454
      %s457 = sphi 0, %s456
      %s471 = sphi 0, %s457
      %s475 = sphi 0, %s475
      %s477 = sphi 0, %s475
      %s478 = sphi 0, %s477
      %s492 = sphi 0, %s478
      %s496 = sphi 0, %s496
      %s498 = sphi 0, %s496
      %s499 = sphi 0, %s498
      %s513 = sphi 0, %s499
      %s517 = sphi 0, %s517
      %s519 = sphi 0, %s517
      %s520 = sphi 0, %s519
      %s534 = sphi 0, %s520
      %s538 = sphi 0, %s538
      %s540 = sphi 0, %s538
      %s541 = sphi 0, %s540
      %s555 = sphi 0, %s541
      %s559 = sphi 0, %s559
      %s561 = sphi 0, %s559
      %s562 = sphi 0, %s561
      %s576 = sphi 0, %s562
      %s580 = sphi 0, %s580
      %s582 = sphi 0, %s580
      %s583 = sphi 0, %s582
      %s597 = sphi 0, %s583
      %s601 = sphi 0, %s601
      %s603 = sphi 0, %s601
      %s604 = sphi 0, %s603
      %s618 = sphi 0, %s604
      %s622 = sphi 0, %s622
      %s624 = sphi 0, %s622
      %s625 = sphi 0, %s624
      %s639 = sphi 0, %s625
      %s643 = sphi 0, %s643
      %s645 = sphi 0, %s643
      %s646 = sphi 0, %s645
      %s660 = sphi 0, %s646
      %s664 = sphi 0, %s664
      %s666 = sphi 0, %s664
      %s667 = sphi 0, %s666
      %s681 = sphi 0, %s667
      %s685 = sphi 0, %s685
      %s687 = sphi 0, %s685
      %s688 = sphi 0, %s687
      %s702 = sphi 0, %s688
      %s706 = sphi 0, %s706
      %s708 = sphi 0, %s706
      %s709 = sphi 0, %s708
      %s723 = sphi 0, %s709
      %s727 = sphi 0, %s727
      %s729 = sphi 0, %s727
      %s730 = sphi 0, %s729
      %s744 = sphi 0, %s730
      %s748 = sphi 0, %s748
      %s750 = sphi 0, %s748
      %s751 = sphi 0, %s750
      %s765 = sphi 0, %s751
      %s769 = sphi 0, %s769
      %s771 = sphi 0, %s769
      %s772 = sphi 0, %s771
      %s786 = sphi 0, %s772
      %s790 = sphi 0, %s790
      %s792 = sphi 0, %s790
      %s793 = sphi 0, %s792
      %s807 = sphi 0, %s793
      %s811 = sphi 0, %s811
      %s813 = sphi 0, %s811
      %s814 = sphi 0, %s813
      %s828 = sphi 0, %s814
      %s834 = sphi 0, %s836
      %s837 = sphi 0, %s834
      %s838 = sphi 0, %s837
      %s854 = sphi 0, %s838
    $region4: #{tpu_custom_call.1} parent=1 // loop_header_branch
      %82 = sbr.rel (%p80) target = $region8
    $region5: #{tpu_custom_call.1} parent=1 // loop_body
      %s84 = ssub.s32 %s79, 1
      %s85 = ssub.s32 %s79, 2
      %s86 = sadd.s32 %s79, 1
      %s87 = ssub.s32 %s79, %s86
      %p88 = scmp.eq.s32.totalorder %s87, 0
      %s90 = sadd.s32 %s89, 1
      %s91 = scalar_select %p88, %s89, %s90
      %p94 = pneg %p88
      %p95 = scmp.eq.s32.totalorder %s79, 1
      %p96 = por %p94, %p95
      %p97 = scmp.ne.s32.totalorder %s89, %s92
      %p98 = scmp.eq.s32.totalorder %s79, 0
      %p99 = por %p97, %p98
      %p100 = scmp.ne.s32.totalorder %s89, %s92
      %p101 = scmp.eq.s32.totalorder %s84, 1
      %p102 = por %p100, %p101
      %p103 = scmp.ne.s32.totalorder %s92, %s93
      %p104 = scmp.eq.s32.totalorder %s84, 0
      %p105 = por %p103, %p104
      %p106 = scmp.ne.s32.totalorder %s92, %s93
      %p107 = scmp.eq.s32.totalorder %s85, 1
      %p108 = por %p106, %p107
      %p110 = scmp.ne.s32.totalorder %s93, %s109
      %p111 = scmp.eq.s32.totalorder %s85, 0
      %p112 = por %p110, %p111
      %s113 = ssub.s32 %s79, %s86
      %p114 = scmp.eq.s32.totalorder %s113, 0
      %s116 = sadd.s32 %s115, 1
      %s117 = scalar_select %p114, %s115, %s116
      %p120 = pneg %p114
      %p121 = scmp.eq.s32.totalorder %s79, 1
      %p122 = por %p120, %p121
      %p123 = scmp.ne.s32.totalorder %s115, %s118
      %p124 = scmp.eq.s32.totalorder %s79, 0
      %p125 = por %p123, %p124
      %p126 = scmp.ne.s32.totalorder %s115, %s118
      %p127 = scmp.eq.s32.totalorder %s84, 1
      %p128 = por %p126, %p127
      %p129 = scmp.ne.s32.totalorder %s118, %s119
      %p130 = scmp.eq.s32.totalorder %s84, 0
      %p131 = por %p129, %p130
      %p132 = scmp.ne.s32.totalorder %s118, %s119
      %p133 = scmp.eq.s32.totalorder %s85, 1
      %p134 = por %p132, %p133
      %p136 = scmp.ne.s32.totalorder %s119, %s135
      %p137 = scmp.eq.s32.totalorder %s85, 0
      %p138 = por %p136, %p137
      %s140 = sadd.s32 %s139, 1
      %p143 = scmp.eq.s32.totalorder %s79, 1
      %p144 = scmp.ne.s32.totalorder %s139, %s141
      %p145 = scmp.eq.s32.totalorder %s79, 0
      %p146 = por %p144, %p145
      %p147 = scmp.ne.s32.totalorder %s139, %s141
      %p148 = scmp.eq.s32.totalorder %s84, 1
      %p149 = por %p147, %p148
      %p150 = scmp.ne.s32.totalorder %s141, %s142
      %p151 = scmp.eq.s32.totalorder %s84, 0
      %p152 = por %p150, %p151
      %p153 = scmp.ne.s32.totalorder %s141, %s142
      %p154 = scmp.eq.s32.totalorder %s85, 1
      %p155 = por %p153, %p154
      %p157 = scmp.ne.s32.totalorder %s142, %s156
      %p158 = scmp.eq.s32.totalorder %s85, 0
      %p159 = por %p157, %p158
      %s161 = sadd.s32 %s160, 1
      %p164 = scmp.eq.s32.totalorder %s79, 1
      %p165 = scmp.ne.s32.totalorder %s160, %s162
      %p166 = scmp.eq.s32.totalorder %s79, 0
      %p167 = por %p165, %p166
      %p168 = scmp.ne.s32.totalorder %s160, %s162
      %p169 = scmp.eq.s32.totalorder %s84, 1
      %p170 = por %p168, %p169
      %p171 = scmp.ne.s32.totalorder %s162, %s163
      %p172 = scmp.eq.s32.totalorder %s84, 0
      %p173 = por %p171, %p172
      %p174 = scmp.ne.s32.totalorder %s162, %s163
      %p175 = scmp.eq.s32.totalorder %s85, 1
      %p176 = por %p174, %p175
      %p178 = scmp.ne.s32.totalorder %s163, %s177
      %p179 = scmp.eq.s32.totalorder %s85, 0
      %p180 = por %p178, %p179
      %s182 = sadd.s32 %s181, 1
      %p185 = scmp.eq.s32.totalorder %s79, 1
      %p186 = scmp.ne.s32.totalorder %s181, %s183
      %p187 = scmp.eq.s32.totalorder %s79, 0
      %p188 = por %p186, %p187
      %p189 = scmp.ne.s32.totalorder %s181, %s183
      %p190 = scmp.eq.s32.totalorder %s84, 1
      %p191 = por %p189, %p190
      %p192 = scmp.ne.s32.totalorder %s183, %s184
      %p193 = scmp.eq.s32.totalorder %s84, 0
      %p194 = por %p192, %p193
      %p195 = scmp.ne.s32.totalorder %s183, %s184
      %p196 = scmp.eq.s32.totalorder %s85, 1
      %p197 = por %p195, %p196
      %p199 = scmp.ne.s32.totalorder %s184, %s198
      %p200 = scmp.eq.s32.totalorder %s85, 0
      %p201 = por %p199, %p200
      %s203 = sadd.s32 %s202, 1
      %p206 = scmp.eq.s32.totalorder %s79, 1
      %p207 = scmp.ne.s32.totalorder %s202, %s204
      %p208 = scmp.eq.s32.totalorder %s79, 0
      %p209 = por %p207, %p208
      %p210 = scmp.ne.s32.totalorder %s202, %s204
      %p211 = scmp.eq.s32.totalorder %s84, 1
      %p212 = por %p210, %p211
      %p213 = scmp.ne.s32.totalorder %s204, %s205
      %p214 = scmp.eq.s32.totalorder %s84, 0
      %p215 = por %p213, %p214
      %p216 = scmp.ne.s32.totalorder %s204, %s205
      %p217 = scmp.eq.s32.totalorder %s85, 1
      %p218 = por %p216, %p217
      %p220 = scmp.ne.s32.totalorder %s205, %s219
      %p221 = scmp.eq.s32.totalorder %s85, 0
      %p222 = por %p220, %p221
      %s224 = sadd.s32 %s223, 1
      %p227 = scmp.eq.s32.totalorder %s79, 1
      %p228 = scmp.ne.s32.totalorder %s223, %s225
      %p229 = scmp.eq.s32.totalorder %s79, 0
      %p230 = por %p228, %p229
      %p231 = scmp.ne.s32.totalorder %s223, %s225
      %p232 = scmp.eq.s32.totalorder %s84, 1
      %p233 = por %p231, %p232
      %p234 = scmp.ne.s32.totalorder %s225, %s226
      %p235 = scmp.eq.s32.totalorder %s84, 0
      %p236 = por %p234, %p235
      %p237 = scmp.ne.s32.totalorder %s225, %s226
      %p238 = scmp.eq.s32.totalorder %s85, 1
      %p239 = por %p237, %p238
      %p241 = scmp.ne.s32.totalorder %s226, %s240
      %p242 = scmp.eq.s32.totalorder %s85, 0
      %p243 = por %p241, %p242
      %s245 = sadd.s32 %s244, 1
      %p248 = scmp.eq.s32.totalorder %s79, 1
      %p249 = scmp.ne.s32.totalorder %s244, %s246
      %p250 = scmp.eq.s32.totalorder %s79, 0
      %p251 = por %p249, %p250
      %p252 = scmp.ne.s32.totalorder %s244, %s246
      %p253 = scmp.eq.s32.totalorder %s84, 1
      %p254 = por %p252, %p253
      %p255 = scmp.ne.s32.totalorder %s246, %s247
      %p256 = scmp.eq.s32.totalorder %s84, 0
      %p257 = por %p255, %p256
      %p258 = scmp.ne.s32.totalorder %s246, %s247
      %p259 = scmp.eq.s32.totalorder %s85, 1
      %p260 = por %p258, %p259
      %p262 = scmp.ne.s32.totalorder %s247, %s261
      %p263 = scmp.eq.s32.totalorder %s85, 0
      %p264 = por %p262, %p263
      %s266 = sadd.s32 %s265, 1
      %p269 = scmp.eq.s32.totalorder %s79, 1
      %p270 = scmp.ne.s32.totalorder %s265, %s267
      %p271 = scmp.eq.s32.totalorder %s79, 0
      %p272 = por %p270, %p271
      %p273 = scmp.ne.s32.totalorder %s265, %s267
      %p274 = scmp.eq.s32.totalorder %s84, 1
      %p275 = por %p273, %p274
      %p276 = scmp.ne.s32.totalorder %s267, %s268
      %p277 = scmp.eq.s32.totalorder %s84, 0
      %p278 = por %p276, %p277
      %p279 = scmp.ne.s32.totalorder %s267, %s268
      %p280 = scmp.eq.s32.totalorder %s85, 1
      %p281 = por %p279, %p280
      %p283 = scmp.ne.s32.totalorder %s268, %s282
      %p284 = scmp.eq.s32.totalorder %s85, 0
      %p285 = por %p283, %p284
      %s287 = sadd.s32 %s286, 1
      %p290 = scmp.eq.s32.totalorder %s79, 1
      %p291 = scmp.ne.s32.totalorder %s286, %s288
      %p292 = scmp.eq.s32.totalorder %s79, 0
      %p293 = por %p291, %p292
      %p294 = scmp.ne.s32.totalorder %s286, %s288
      %p295 = scmp.eq.s32.totalorder %s84, 1
      %p296 = por %p294, %p295
      %p297 = scmp.ne.s32.totalorder %s288, %s289
      %p298 = scmp.eq.s32.totalorder %s84, 0
      %p299 = por %p297, %p298
      %p300 = scmp.ne.s32.totalorder %s288, %s289
      %p301 = scmp.eq.s32.totalorder %s85, 1
      %p302 = por %p300, %p301
      %p304 = scmp.ne.s32.totalorder %s289, %s303
      %p305 = scmp.eq.s32.totalorder %s85, 0
      %p306 = por %p304, %p305
      %s308 = sadd.s32 %s307, 1
      %p311 = scmp.eq.s32.totalorder %s79, 1
      %p312 = scmp.ne.s32.totalorder %s307, %s309
      %p313 = scmp.eq.s32.totalorder %s79, 0
      %p314 = por %p312, %p313
      %p315 = scmp.ne.s32.totalorder %s307, %s309
      %p316 = scmp.eq.s32.totalorder %s84, 1
      %p317 = por %p315, %p316
      %p318 = scmp.ne.s32.totalorder %s309, %s310
      %p319 = scmp.eq.s32.totalorder %s84, 0
      %p320 = por %p318, %p319
      %p321 = scmp.ne.s32.totalorder %s309, %s310
      %p322 = scmp.eq.s32.totalorder %s85, 1
      %p323 = por %p321, %p322
      %p325 = scmp.ne.s32.totalorder %s310, %s324
      %p326 = scmp.eq.s32.totalorder %s85, 0
      %p327 = por %p325, %p326
      %s329 = sadd.s32 %s328, 1
      %p332 = scmp.eq.s32.totalorder %s79, 1
      %p333 = scmp.ne.s32.totalorder %s328, %s330
      %p334 = scmp.eq.s32.totalorder %s79, 0
      %p335 = por %p333, %p334
      %p336 = scmp.ne.s32.totalorder %s328, %s330
      %p337 = scmp.eq.s32.totalorder %s84, 1
      %p338 = por %p336, %p337
      %p339 = scmp.ne.s32.totalorder %s330, %s331
      %p340 = scmp.eq.s32.totalorder %s84, 0
      %p341 = por %p339, %p340
      %p342 = scmp.ne.s32.totalorder %s330, %s331
      %p343 = scmp.eq.s32.totalorder %s85, 1
      %p344 = por %p342, %p343
      %p346 = scmp.ne.s32.totalorder %s331, %s345
      %p347 = scmp.eq.s32.totalorder %s85, 0
      %p348 = por %p346, %p347
      %s350 = sadd.s32 %s349, 1
      %p353 = scmp.eq.s32.totalorder %s79, 1
      %p354 = scmp.ne.s32.totalorder %s349, %s351
      %p355 = scmp.eq.s32.totalorder %s79, 0
      %p356 = por %p354, %p355
      %p357 = scmp.ne.s32.totalorder %s349, %s351
      %p358 = scmp.eq.s32.totalorder %s84, 1
      %p359 = por %p357, %p358
      %p360 = scmp.ne.s32.totalorder %s351, %s352
      %p361 = scmp.eq.s32.totalorder %s84, 0
      %p362 = por %p360, %p361
      %p363 = scmp.ne.s32.totalorder %s351, %s352
      %p364 = scmp.eq.s32.totalorder %s85, 1
      %p365 = por %p363, %p364
      %p367 = scmp.ne.s32.totalorder %s352, %s366
      %p368 = scmp.eq.s32.totalorder %s85, 0
      %p369 = por %p367, %p368
      %s371 = sadd.s32 %s370, 1
      %p374 = scmp.eq.s32.totalorder %s79, 1
      %p375 = scmp.ne.s32.totalorder %s370, %s372
      %p376 = scmp.eq.s32.totalorder %s79, 0
      %p377 = por %p375, %p376
      %p378 = scmp.ne.s32.totalorder %s370, %s372
      %p379 = scmp.eq.s32.totalorder %s84, 1
      %p380 = por %p378, %p379
      %p381 = scmp.ne.s32.totalorder %s372, %s373
      %p382 = scmp.eq.s32.totalorder %s84, 0
      %p383 = por %p381, %p382
      %p384 = scmp.ne.s32.totalorder %s372, %s373
      %p385 = scmp.eq.s32.totalorder %s85, 1
      %p386 = por %p384, %p385
      %p388 = scmp.ne.s32.totalorder %s373, %s387
      %p389 = scmp.eq.s32.totalorder %s85, 0
      %p390 = por %p388, %p389
      %s392 = sadd.s32 %s391, 1
      %p395 = scmp.eq.s32.totalorder %s79, 1
      %p396 = scmp.ne.s32.totalorder %s391, %s393
      %p397 = scmp.eq.s32.totalorder %s79, 0
      %p398 = por %p396, %p397
      %p399 = scmp.ne.s32.totalorder %s391, %s393
      %p400 = scmp.eq.s32.totalorder %s84, 1
      %p401 = por %p399, %p400
      %p402 = scmp.ne.s32.totalorder %s393, %s394
      %p403 = scmp.eq.s32.totalorder %s84, 0
      %p404 = por %p402, %p403
      %p405 = scmp.ne.s32.totalorder %s393, %s394
      %p406 = scmp.eq.s32.totalorder %s85, 1
      %p407 = por %p405, %p406
      %p409 = scmp.ne.s32.totalorder %s394, %s408
      %p410 = scmp.eq.s32.totalorder %s85, 0
      %p411 = por %p409, %p410
      %s413 = sadd.s32 %s412, 1
      %p416 = scmp.eq.s32.totalorder %s79, 1
      %p417 = scmp.ne.s32.totalorder %s412, %s414
      %p418 = scmp.eq.s32.totalorder %s79, 0
      %p419 = por %p417, %p418
      %p420 = scmp.ne.s32.totalorder %s412, %s414
      %p421 = scmp.eq.s32.totalorder %s84, 1
      %p422 = por %p420, %p421
      %p423 = scmp.ne.s32.totalorder %s414, %s415
      %p424 = scmp.eq.s32.totalorder %s84, 0
      %p425 = por %p423, %p424
      %p426 = scmp.ne.s32.totalorder %s414, %s415
      %p427 = scmp.eq.s32.totalorder %s85, 1
      %p428 = por %p426, %p427
      %p430 = scmp.ne.s32.totalorder %s415, %s429
      %p431 = scmp.eq.s32.totalorder %s85, 0
      %p432 = por %p430, %p431
      %s434 = sadd.s32 %s433, 1
      %p437 = scmp.eq.s32.totalorder %s79, 1
      %p438 = scmp.ne.s32.totalorder %s433, %s435
      %p439 = scmp.eq.s32.totalorder %s79, 0
      %p440 = por %p438, %p439
      %p441 = scmp.ne.s32.totalorder %s433, %s435
      %p442 = scmp.eq.s32.totalorder %s84, 1
      %p443 = por %p441, %p442
      %p444 = scmp.ne.s32.totalorder %s435, %s436
      %p445 = scmp.eq.s32.totalorder %s84, 0
      %p446 = por %p444, %p445
      %p447 = scmp.ne.s32.totalorder %s435, %s436
      %p448 = scmp.eq.s32.totalorder %s85, 1
      %p449 = por %p447, %p448
      %p451 = scmp.ne.s32.totalorder %s436, %s450
      %p452 = scmp.eq.s32.totalorder %s85, 0
      %p453 = por %p451, %p452
      %s455 = sadd.s32 %s454, 1
      %p458 = scmp.eq.s32.totalorder %s79, 1
      %p459 = scmp.ne.s32.totalorder %s454, %s456
      %p460 = scmp.eq.s32.totalorder %s79, 0
      %p461 = por %p459, %p460
      %p462 = scmp.ne.s32.totalorder %s454, %s456
      %p463 = scmp.eq.s32.totalorder %s84, 1
      %p464 = por %p462, %p463
      %p465 = scmp.ne.s32.totalorder %s456, %s457
      %p466 = scmp.eq.s32.totalorder %s84, 0
      %p467 = por %p465, %p466
      %p468 = scmp.ne.s32.totalorder %s456, %s457
      %p469 = scmp.eq.s32.totalorder %s85, 1
      %p470 = por %p468, %p469
      %p472 = scmp.ne.s32.totalorder %s457, %s471
      %p473 = scmp.eq.s32.totalorder %s85, 0
      %p474 = por %p472, %p473
      %s476 = sadd.s32 %s475, 1
      %p479 = scmp.eq.s32.totalorder %s79, 1
      %p480 = scmp.ne.s32.totalorder %s475, %s477
      %p481 = scmp.eq.s32.totalorder %s79, 0
      %p482 = por %p480, %p481
      %p483 = scmp.ne.s32.totalorder %s475, %s477
      %p484 = scmp.eq.s32.totalorder %s84, 1
      %p485 = por %p483, %p484
      %p486 = scmp.ne.s32.totalorder %s477, %s478
      %p487 = scmp.eq.s32.totalorder %s84, 0
      %p488 = por %p486, %p487
      %p489 = scmp.ne.s32.totalorder %s477, %s478
      %p490 = scmp.eq.s32.totalorder %s85, 1
      %p491 = por %p489, %p490
      %p493 = scmp.ne.s32.totalorder %s478, %s492
      %p494 = scmp.eq.s32.totalorder %s85, 0
      %p495 = por %p493, %p494
      %s497 = sadd.s32 %s496, 1
      %p500 = scmp.eq.s32.totalorder %s79, 1
      %p501 = scmp.ne.s32.totalorder %s496, %s498
      %p502 = scmp.eq.s32.totalorder %s79, 0
      %p503 = por %p501, %p502
      %p504 = scmp.ne.s32.totalorder %s496, %s498
      %p505 = scmp.eq.s32.totalorder %s84, 1
      %p506 = por %p504, %p505
      %p507 = scmp.ne.s32.totalorder %s498, %s499
      %p508 = scmp.eq.s32.totalorder %s84, 0
      %p509 = por %p507, %p508
      %p510 = scmp.ne.s32.totalorder %s498, %s499
      %p511 = scmp.eq.s32.totalorder %s85, 1
      %p512 = por %p510, %p511
      %p514 = scmp.ne.s32.totalorder %s499, %s513
      %p515 = scmp.eq.s32.totalorder %s85, 0
      %p516 = por %p514, %p515
      %s518 = sadd.s32 %s517, 1
      %p521 = scmp.eq.s32.totalorder %s79, 1
      %p522 = scmp.ne.s32.totalorder %s517, %s519
      %p523 = scmp.eq.s32.totalorder %s79, 0
      %p524 = por %p522, %p523
      %p525 = scmp.ne.s32.totalorder %s517, %s519
      %p526 = scmp.eq.s32.totalorder %s84, 1
      %p527 = por %p525, %p526
      %p528 = scmp.ne.s32.totalorder %s519, %s520
      %p529 = scmp.eq.s32.totalorder %s84, 0
      %p530 = por %p528, %p529
      %p531 = scmp.ne.s32.totalorder %s519, %s520
      %p532 = scmp.eq.s32.totalorder %s85, 1
      %p533 = por %p531, %p532
      %p535 = scmp.ne.s32.totalorder %s520, %s534
      %p536 = scmp.eq.s32.totalorder %s85, 0
      %p537 = por %p535, %p536
      %s539 = sadd.s32 %s538, 1
      %p542 = scmp.eq.s32.totalorder %s79, 1
      %p543 = scmp.ne.s32.totalorder %s538, %s540
      %p544 = scmp.eq.s32.totalorder %s79, 0
      %p545 = por %p543, %p544
      %p546 = scmp.ne.s32.totalorder %s538, %s540
      %p547 = scmp.eq.s32.totalorder %s84, 1
      %p548 = por %p546, %p547
      %p549 = scmp.ne.s32.totalorder %s540, %s541
      %p550 = scmp.eq.s32.totalorder %s84, 0
      %p551 = por %p549, %p550
      %p552 = scmp.ne.s32.totalorder %s540, %s541
      %p553 = scmp.eq.s32.totalorder %s85, 1
      %p554 = por %p552, %p553
      %p556 = scmp.ne.s32.totalorder %s541, %s555
      %p557 = scmp.eq.s32.totalorder %s85, 0
      %p558 = por %p556, %p557
      %s560 = sadd.s32 %s559, 1
      %p563 = scmp.eq.s32.totalorder %s79, 1
      %p564 = scmp.ne.s32.totalorder %s559, %s561
      %p565 = scmp.eq.s32.totalorder %s79, 0
      %p566 = por %p564, %p565
      %p567 = scmp.ne.s32.totalorder %s559, %s561
      %p568 = scmp.eq.s32.totalorder %s84, 1
      %p569 = por %p567, %p568
      %p570 = scmp.ne.s32.totalorder %s561, %s562
      %p571 = scmp.eq.s32.totalorder %s84, 0
      %p572 = por %p570, %p571
      %p573 = scmp.ne.s32.totalorder %s561, %s562
      %p574 = scmp.eq.s32.totalorder %s85, 1
      %p575 = por %p573, %p574
      %p577 = scmp.ne.s32.totalorder %s562, %s576
      %p578 = scmp.eq.s32.totalorder %s85, 0
      %p579 = por %p577, %p578
      %s581 = sadd.s32 %s580, 1
      %p584 = scmp.eq.s32.totalorder %s79, 1
      %p585 = scmp.ne.s32.totalorder %s580, %s582
      %p586 = scmp.eq.s32.totalorder %s79, 0
      %p587 = por %p585, %p586
      %p588 = scmp.ne.s32.totalorder %s580, %s582
      %p589 = scmp.eq.s32.totalorder %s84, 1
      %p590 = por %p588, %p589
      %p591 = scmp.ne.s32.totalorder %s582, %s583
      %p592 = scmp.eq.s32.totalorder %s84, 0
      %p593 = por %p591, %p592
      %p594 = scmp.ne.s32.totalorder %s582, %s583
      %p595 = scmp.eq.s32.totalorder %s85, 1
      %p596 = por %p594, %p595
      %p598 = scmp.ne.s32.totalorder %s583, %s597
      %p599 = scmp.eq.s32.totalorder %s85, 0
      %p600 = por %p598, %p599
      %s602 = sadd.s32 %s601, 1
      %p605 = scmp.eq.s32.totalorder %s79, 1
      %p606 = scmp.ne.s32.totalorder %s601, %s603
      %p607 = scmp.eq.s32.totalorder %s79, 0
      %p608 = por %p606, %p607
      %p609 = scmp.ne.s32.totalorder %s601, %s603
      %p610 = scmp.eq.s32.totalorder %s84, 1
      %p611 = por %p609, %p610
      %p612 = scmp.ne.s32.totalorder %s603, %s604
      %p613 = scmp.eq.s32.totalorder %s84, 0
      %p614 = por %p612, %p613
      %p615 = scmp.ne.s32.totalorder %s603, %s604
      %p616 = scmp.eq.s32.totalorder %s85, 1
      %p617 = por %p615, %p616
      %p619 = scmp.ne.s32.totalorder %s604, %s618
      %p620 = scmp.eq.s32.totalorder %s85, 0
      %p621 = por %p619, %p620
      %s623 = sadd.s32 %s622, 1
      %p626 = scmp.eq.s32.totalorder %s79, 1
      %p627 = scmp.ne.s32.totalorder %s622, %s624
      %p628 = scmp.eq.s32.totalorder %s79, 0
      %p629 = por %p627, %p628
      %p630 = scmp.ne.s32.totalorder %s622, %s624
      %p631 = scmp.eq.s32.totalorder %s84, 1
      %p632 = por %p630, %p631
      %p633 = scmp.ne.s32.totalorder %s624, %s625
      %p634 = scmp.eq.s32.totalorder %s84, 0
      %p635 = por %p633, %p634
      %p636 = scmp.ne.s32.totalorder %s624, %s625
      %p637 = scmp.eq.s32.totalorder %s85, 1
      %p638 = por %p636, %p637
      %p640 = scmp.ne.s32.totalorder %s625, %s639
      %p641 = scmp.eq.s32.totalorder %s85, 0
      %p642 = por %p640, %p641
      %s644 = sadd.s32 %s643, 1
      %p647 = scmp.eq.s32.totalorder %s79, 1
      %p648 = scmp.ne.s32.totalorder %s643, %s645
      %p649 = scmp.eq.s32.totalorder %s79, 0
      %p650 = por %p648, %p649
      %p651 = scmp.ne.s32.totalorder %s643, %s645
      %p652 = scmp.eq.s32.totalorder %s84, 1
      %p653 = por %p651, %p652
      %p654 = scmp.ne.s32.totalorder %s645, %s646
      %p655 = scmp.eq.s32.totalorder %s84, 0
      %p656 = por %p654, %p655
      %p657 = scmp.ne.s32.totalorder %s645, %s646
      %p658 = scmp.eq.s32.totalorder %s85, 1
      %p659 = por %p657, %p658
      %p661 = scmp.ne.s32.totalorder %s646, %s660
      %p662 = scmp.eq.s32.totalorder %s85, 0
      %p663 = por %p661, %p662
      %s665 = sadd.s32 %s664, 1
      %p668 = scmp.eq.s32.totalorder %s79, 1
      %p669 = scmp.ne.s32.totalorder %s664, %s666
      %p670 = scmp.eq.s32.totalorder %s79, 0
      %p671 = por %p669, %p670
      %p672 = scmp.ne.s32.totalorder %s664, %s666
      %p673 = scmp.eq.s32.totalorder %s84, 1
      %p674 = por %p672, %p673
      %p675 = scmp.ne.s32.totalorder %s666, %s667
      %p676 = scmp.eq.s32.totalorder %s84, 0
      %p677 = por %p675, %p676
      %p678 = scmp.ne.s32.totalorder %s666, %s667
      %p679 = scmp.eq.s32.totalorder %s85, 1
      %p680 = por %p678, %p679
      %p682 = scmp.ne.s32.totalorder %s667, %s681
      %p683 = scmp.eq.s32.totalorder %s85, 0
      %p684 = por %p682, %p683
      %s686 = sadd.s32 %s685, 1
      %p689 = scmp.eq.s32.totalorder %s79, 1
      %p690 = scmp.ne.s32.totalorder %s685, %s687
      %p691 = scmp.eq.s32.totalorder %s79, 0
      %p692 = por %p690, %p691
      %p693 = scmp.ne.s32.totalorder %s685, %s687
      %p694 = scmp.eq.s32.totalorder %s84, 1
      %p695 = por %p693, %p694
      %p696 = scmp.ne.s32.totalorder %s687, %s688
      %p697 = scmp.eq.s32.totalorder %s84, 0
      %p698 = por %p696, %p697
      %p699 = scmp.ne.s32.totalorder %s687, %s688
      %p700 = scmp.eq.s32.totalorder %s85, 1
      %p701 = por %p699, %p700
      %p703 = scmp.ne.s32.totalorder %s688, %s702
      %p704 = scmp.eq.s32.totalorder %s85, 0
      %p705 = por %p703, %p704
      %s707 = sadd.s32 %s706, 1
      %p710 = scmp.eq.s32.totalorder %s79, 1
      %p711 = scmp.ne.s32.totalorder %s706, %s708
      %p712 = scmp.eq.s32.totalorder %s79, 0
      %p713 = por %p711, %p712
      %p714 = scmp.ne.s32.totalorder %s706, %s708
      %p715 = scmp.eq.s32.totalorder %s84, 1
      %p716 = por %p714, %p715
      %p717 = scmp.ne.s32.totalorder %s708, %s709
      %p718 = scmp.eq.s32.totalorder %s84, 0
      %p719 = por %p717, %p718
      %p720 = scmp.ne.s32.totalorder %s708, %s709
      %p721 = scmp.eq.s32.totalorder %s85, 1
      %p722 = por %p720, %p721
      %p724 = scmp.ne.s32.totalorder %s709, %s723
      %p725 = scmp.eq.s32.totalorder %s85, 0
      %p726 = por %p724, %p725
      %s728 = sadd.s32 %s727, 1
      %p731 = scmp.eq.s32.totalorder %s79, 1
      %p732 = scmp.ne.s32.totalorder %s727, %s729
      %p733 = scmp.eq.s32.totalorder %s79, 0
      %p734 = por %p732, %p733
      %p735 = scmp.ne.s32.totalorder %s727, %s729
      %p736 = scmp.eq.s32.totalorder %s84, 1
      %p737 = por %p735, %p736
      %p738 = scmp.ne.s32.totalorder %s729, %s730
      %p739 = scmp.eq.s32.totalorder %s84, 0
      %p740 = por %p738, %p739
      %p741 = scmp.ne.s32.totalorder %s729, %s730
      %p742 = scmp.eq.s32.totalorder %s85, 1
      %p743 = por %p741, %p742
      %p745 = scmp.ne.s32.totalorder %s730, %s744
      %p746 = scmp.eq.s32.totalorder %s85, 0
      %p747 = por %p745, %p746
      %s749 = sadd.s32 %s748, 1
      %p752 = scmp.eq.s32.totalorder %s79, 1
      %p753 = scmp.ne.s32.totalorder %s748, %s750
      %p754 = scmp.eq.s32.totalorder %s79, 0
      %p755 = por %p753, %p754
      %p756 = scmp.ne.s32.totalorder %s748, %s750
      %p757 = scmp.eq.s32.totalorder %s84, 1
      %p758 = por %p756, %p757
      %p759 = scmp.ne.s32.totalorder %s750, %s751
      %p760 = scmp.eq.s32.totalorder %s84, 0
      %p761 = por %p759, %p760
      %p762 = scmp.ne.s32.totalorder %s750, %s751
      %p763 = scmp.eq.s32.totalorder %s85, 1
      %p764 = por %p762, %p763
      %p766 = scmp.ne.s32.totalorder %s751, %s765
      %p767 = scmp.eq.s32.totalorder %s85, 0
      %p768 = por %p766, %p767
      %s770 = sadd.s32 %s769, 1
      %p773 = scmp.eq.s32.totalorder %s79, 1
      %p774 = scmp.ne.s32.totalorder %s769, %s771
      %p775 = scmp.eq.s32.totalorder %s79, 0
      %p776 = por %p774, %p775
      %p777 = scmp.ne.s32.totalorder %s769, %s771
      %p778 = scmp.eq.s32.totalorder %s84, 1
      %p779 = por %p777, %p778
      %p780 = scmp.ne.s32.totalorder %s771, %s772
      %p781 = scmp.eq.s32.totalorder %s84, 0
      %p782 = por %p780, %p781
      %p783 = scmp.ne.s32.totalorder %s771, %s772
      %p784 = scmp.eq.s32.totalorder %s85, 1
      %p785 = por %p783, %p784
      %p787 = scmp.ne.s32.totalorder %s772, %s786
      %p788 = scmp.eq.s32.totalorder %s85, 0
      %p789 = por %p787, %p788
      %s791 = sadd.s32 %s790, 1
      %p794 = scmp.eq.s32.totalorder %s79, 1
      %p795 = scmp.ne.s32.totalorder %s790, %s792
      %p796 = scmp.eq.s32.totalorder %s79, 0
      %p797 = por %p795, %p796
      %p798 = scmp.ne.s32.totalorder %s790, %s792
      %p799 = scmp.eq.s32.totalorder %s84, 1
      %p800 = por %p798, %p799
      %p801 = scmp.ne.s32.totalorder %s792, %s793
      %p802 = scmp.eq.s32.totalorder %s84, 0
      %p803 = por %p801, %p802
      %p804 = scmp.ne.s32.totalorder %s792, %s793
      %p805 = scmp.eq.s32.totalorder %s85, 1
      %p806 = por %p804, %p805
      %p808 = scmp.ne.s32.totalorder %s793, %s807
      %p809 = scmp.eq.s32.totalorder %s85, 0
      %p810 = por %p808, %p809
      %s812 = sadd.s32 %s811, 1
      %p815 = scmp.eq.s32.totalorder %s79, 1
      %p816 = scmp.ne.s32.totalorder %s811, %s813
      %p817 = scmp.eq.s32.totalorder %s79, 0
      %p818 = por %p816, %p817
      %p819 = scmp.ne.s32.totalorder %s811, %s813
      %p820 = scmp.eq.s32.totalorder %s84, 1
      %p821 = por %p819, %p820
      %p822 = scmp.ne.s32.totalorder %s813, %s814
      %p823 = scmp.eq.s32.totalorder %s84, 0
      %p824 = por %p822, %p823
      %p825 = scmp.ne.s32.totalorder %s813, %s814
      %p826 = scmp.eq.s32.totalorder %s85, 1
      %p827 = por %p825, %p826
      %p829 = scmp.ne.s32.totalorder %s814, %s828
      %p830 = scmp.eq.s32.totalorder %s85, 0
      %p831 = por %p829, %p830
      %s832 = ssub.s32 %s79, %s86
      %p833 = scmp.eq.s32.totalorder %s832, 0
      %s835 = sadd.s32 %s834, 1
      %s836 = scalar_select %p833, %s834, %s835
      %p839 = pneg %p833
      %p840 = scmp.eq.s32.totalorder %s79, 1
      %p841 = por %p839, %p840
      %p842 = scmp.ne.s32.totalorder %s834, %s837
      %p843 = scmp.eq.s32.totalorder %s79, 0
      %p844 = por %p842, %p843
      %p845 = scmp.ne.s32.totalorder %s834, %s837
      %p846 = scmp.eq.s32.totalorder %s84, 1
      %p847 = por %p845, %p846
      %p848 = scmp.ne.s32.totalorder %s837, %s838
      %p849 = scmp.eq.s32.totalorder %s84, 0
      %p850 = por %p848, %p849
      %p851 = scmp.ne.s32.totalorder %s837, %s838
      %p852 = scmp.eq.s32.totalorder %s85, 1
      %p853 = por %p851, %p852
      %p855 = scmp.ne.s32.totalorder %s838, %s854
      %p856 = scmp.eq.s32.totalorder %s85, 0
      %p857 = por %p855, %p856
      %p858 = scmp.le.s32.totalorder 1, %s79
      %p859 = scmp.lt.s32.totalorder %s79, 3
      %p860 = pnand %p858, %p859
      %p861 = pneg %p860
      // Predicated region
      $region9: #{tpu_custom_call.1} parent=5 // pred_check
        _
      $region10: #{tpu_custom_call.1} parent=5 // pred_check_branch
        %863 = sbr.rel (%p860) target = $region12
      $region11: #{tpu_custom_call.1} parent=5 // pred_region
        %s864 = ssub.s32 %s79, 1
        // Predicated region
        $region13: #{tpu_custom_call.1} parent=11 // pred_check
          %p865 = pneg %p152
        $region14: #{tpu_custom_call.1} parent=11 // pred_check_branch
          %867 = sbr.rel (%p865) target = $region16
        $region15: #{tpu_custom_call.1} parent=11 // pred_region
          _
        $region16: #{tpu_custom_call.1} parent=11 // pred_fallthru
          _
        // Predicated region
        $region17: #{tpu_custom_call.1} parent=11 // pred_check
          %p868 = pneg %p173
        $region18: #{tpu_custom_call.1} parent=11 // pred_check_branch
          %870 = sbr.rel (%p868) target = $region20
        $region19: #{tpu_custom_call.1} parent=11 // pred_region
          _
        $region20: #{tpu_custom_call.1} parent=11 // pred_fallthru
          _
        // Predicated region
        $region21: #{tpu_custom_call.1} parent=11 // pred_check
          %p871 = pneg %p194
        $region22: #{tpu_custom_call.1} parent=11 // pred_check_branch
          %873 = sbr.rel (%p871) target = $region24
        $region23: #{tpu_custom_call.1} parent=11 // pred_region
          _
        $region24: #{tpu_custom_call.1} parent=11 // pred_fallthru
          _
        // Predicated region
        $region25: #{tpu_custom_call.1} parent=11 // pred_check
          %p874 = pneg %p215
        $region26: #{tpu_custom_call.1} parent=11 // pred_check_branch
          %876 = sbr.rel (%p874) target = $region28
        $region27: #{tpu_custom_call.1} parent=11 // pred_region
          _
        $region28: #{tpu_custom_call.1} parent=11 // pred_fallthru
          _
        // Predicated region
        $region29: #{tpu_custom_call.1} parent=11 // pred_check
          %p877 = pneg %p236
        $region30: #{tpu_custom_call.1} parent=11 // pred_check_branch
          %879 = sbr.rel (%p877) target = $region32
        $region31: #{tpu_custom_call.1} parent=11 // pred_region
          %881 = vsyncadd [#allocation3], 0
          %s882 = sshll.u32 %s13, 4
          %s883 = int_to_ptr.hbm [resolvable:$true] %s882
          %s884 = sshll.u32 [#allocation2], 4
          %s885 = int_to_ptr.vmem [resolvable:$true] %s884
          %890 = dma.hbm_to_vmem [thread:$0]  %s883, 16384, %s885, [#allocation3], 512, 512, 32
        $region32: #{tpu_custom_call.1} parent=11 // pred_fallthru
          _
        // Predicated region
        $region33: #{tpu_custom_call.1} parent=11 // pred_check
          %p891 = pneg %p257
        $region34: #{tpu_custom_call.1} parent=11 // pred_check_branch
          %893 = sbr.rel (%p891) target = $region36
        $region35: #{tpu_custom_call.1} parent=11 // pred_region
          %895 = vsyncadd [#allocation5], 0
          %s896 = sshll.u32 %s15, 4
          %s897 = int_to_ptr.hbm [resolvable:$true] %s896
          %s898 = sshll.u32 [#allocation4], 4
          %s899 = int_to_ptr.vmem [resolvable:$true] %s898
          %904 = dma.hbm_to_vmem [thread:$0]  %s897, 16384, %s899, [#allocation5], 512, 512, 32
        $region36: #{tpu_custom_call.1} parent=11 // pred_fallthru
          _
        // Predicated region
        $region37: #{tpu_custom_call.1} parent=11 // pred_check
          %p905 = pneg %p278
        $region38: #{tpu_custom_call.1} parent=11 // pred_check_branch
          %907 = sbr.rel (%p905) target = $region40
        $region39: #{tpu_custom_call.1} parent=11 // pred_region
          _
        $region40: #{tpu_custom_call.1} parent=11 // pred_fallthru
          _
        // Predicated region
        $region41: #{tpu_custom_call.1} parent=11 // pred_check
          %p908 = pneg %p299
        $region42: #{tpu_custom_call.1} parent=11 // pred_check_branch
          %910 = sbr.rel (%p908) target = $region44
        $region43: #{tpu_custom_call.1} parent=11 // pred_region
          _
        $region44: #{tpu_custom_call.1} parent=11 // pred_fallthru
          _
        // Predicated region
        $region45: #{tpu_custom_call.1} parent=11 // pred_check
          %p911 = pneg %p320
        $region46: #{tpu_custom_call.1} parent=11 // pred_check_branch
          %913 = sbr.rel (%p911) target = $region48
        $region47: #{tpu_custom_call.1} parent=11 // pred_region
          _
        $region48: #{tpu_custom_call.1} parent=11 // pred_fallthru
          _
        // Predicated region
        $region49: #{tpu_custom_call.1} parent=11 // pred_check
          %p914 = pneg %p341
        $region50: #{tpu_custom_call.1} parent=11 // pred_check_branch
          %916 = sbr.rel (%p914) target = $region52
        $region51: #{tpu_custom_call.1} parent=11 // pred_region
          _
        $region52: #{tpu_custom_call.1} parent=11 // pred_fallthru
          _
        // Predicated region
        $region53: #{tpu_custom_call.1} parent=11 // pred_check
          %p917 = pneg %p362
        $region54: #{tpu_custom_call.1} parent=11 // pred_check_branch
          %919 = sbr.rel (%p917) target = $region56
        $region55: #{tpu_custom_call.1} parent=11 // pred_region
          _
        $region56: #{tpu_custom_call.1} parent=11 // pred_fallthru
          _
        // Predicated region
        $region57: #{tpu_custom_call.1} parent=11 // pred_check
          %p920 = pneg %p383
        $region58: #{tpu_custom_call.1} parent=11 // pred_check_branch
          %922 = sbr.rel (%p920) target = $region60
        $region59: #{tpu_custom_call.1} parent=11 // pred_region
          _
        $region60: #{tpu_custom_call.1} parent=11 // pred_fallthru
          _
        // Predicated region
        $region61: #{tpu_custom_call.1} parent=11 // pred_check
          %p923 = pneg %p404
        $region62: #{tpu_custom_call.1} parent=11 // pred_check_branch
          %925 = sbr.rel (%p923) target = $region64
        $region63: #{tpu_custom_call.1} parent=11 // pred_region
          _
        $region64: #{tpu_custom_call.1} parent=11 // pred_fallthru
          _
        // Predicated region
        $region65: #{tpu_custom_call.1} parent=11 // pred_check
          %p926 = pneg %p425
        $region66: #{tpu_custom_call.1} parent=11 // pred_check_branch
          %928 = sbr.rel (%p926) target = $region68
        $region67: #{tpu_custom_call.1} parent=11 // pred_region
          _
        $region68: #{tpu_custom_call.1} parent=11 // pred_fallthru
          _
        // Predicated region
        $region69: #{tpu_custom_call.1} parent=11 // pred_check
          %p929 = pneg %p446
        $region70: #{tpu_custom_call.1} parent=11 // pred_check_branch
          %931 = sbr.rel (%p929) target = $region72
        $region71: #{tpu_custom_call.1} parent=11 // pred_region
          _
        $region72: #{tpu_custom_call.1} parent=11 // pred_fallthru
          _
        // Predicated region
        $region73: #{tpu_custom_call.1} parent=11 // pred_check
          %p932 = pneg %p467
        $region74: #{tpu_custom_call.1} parent=11 // pred_check_branch
          %934 = sbr.rel (%p932) target = $region76
        $region75: #{tpu_custom_call.1} parent=11 // pred_region
          _
        $region76: #{tpu_custom_call.1} parent=11 // pred_fallthru
          _
        // Predicated region
        $region77: #{tpu_custom_call.1} parent=11 // pred_check
          %p935 = pneg %p488
        $region78: #{tpu_custom_call.1} parent=11 // pred_check_branch
          %937 = sbr.rel (%p935) target = $region80
        $region79: #{tpu_custom_call.1} parent=11 // pred_region
          _
        $region80: #{tpu_custom_call.1} parent=11 // pred_fallthru
          _
        // Predicated region
        $region81: #{tpu_custom_call.1} parent=11 // pred_check
          %p938 = pneg %p509
        $region82: #{tpu_custom_call.1} parent=11 // pred_check_branch
          %940 = sbr.rel (%p938) target = $region84
        $region83: #{tpu_custom_call.1} parent=11 // pred_region
          _
        $region84: #{tpu_custom_call.1} parent=11 // pred_fallthru
          _
        // Predicated region
        $region85: #{tpu_custom_call.1} parent=11 // pred_check
          %p941 = pneg %p530
        $region86: #{tpu_custom_call.1} parent=11 // pred_check_branch
          %943 = sbr.rel (%p941) target = $region88
        $region87: #{tpu_custom_call.1} parent=11 // pred_region
          _
        $region88: #{tpu_custom_call.1} parent=11 // pred_fallthru
          _
        // Predicated region
        $region89: #{tpu_custom_call.1} parent=11 // pred_check
          %p944 = pneg %p551
        $region90: #{tpu_custom_call.1} parent=11 // pred_check_branch
          %946 = sbr.rel (%p944) target = $region92
        $region91: #{tpu_custom_call.1} parent=11 // pred_region
          _
        $region92: #{tpu_custom_call.1} parent=11 // pred_fallthru
          _
        // Predicated region
        $region93: #{tpu_custom_call.1} parent=11 // pred_check
          %p947 = pneg %p572
        $region94: #{tpu_custom_call.1} parent=11 // pred_check_branch
          %949 = sbr.rel (%p947) target = $region96
        $region95: #{tpu_custom_call.1} parent=11 // pred_region
          _
        $region96: #{tpu_custom_call.1} parent=11 // pred_fallthru
          _
        // Predicated region
        $region97: #{tpu_custom_call.1} parent=11 // pred_check
          %p950 = pneg %p593
        $region98: #{tpu_custom_call.1} parent=11 // pred_check_branch
          %952 = sbr.rel (%p950) target = $region100
        $region99: #{tpu_custom_call.1} parent=11 // pred_region
          _
        $region100: #{tpu_custom_call.1} parent=11 // pred_fallthru
          _
        // Predicated region
        $region101: #{tpu_custom_call.1} parent=11 // pred_check
          %p953 = pneg %p614
        $region102: #{tpu_custom_call.1} parent=11 // pred_check_branch
          %955 = sbr.rel (%p953) target = $region104
        $region103: #{tpu_custom_call.1} parent=11 // pred_region
          _
        $region104: #{tpu_custom_call.1} parent=11 // pred_fallthru
          _
        // Predicated region
        $region105: #{tpu_custom_call.1} parent=11 // pred_check
          %p956 = pneg %p635
        $region106: #{tpu_custom_call.1} parent=11 // pred_check_branch
          %958 = sbr.rel (%p956) target = $region108
        $region107: #{tpu_custom_call.1} parent=11 // pred_region
          _
        $region108: #{tpu_custom_call.1} parent=11 // pred_fallthru
          _
        // Predicated region
        $region109: #{tpu_custom_call.1} parent=11 // pred_check
          %p959 = pneg %p656
        $region110: #{tpu_custom_call.1} parent=11 // pred_check_branch
          %961 = sbr.rel (%p959) target = $region112
        $region111: #{tpu_custom_call.1} parent=11 // pred_region
          _
        $region112: #{tpu_custom_call.1} parent=11 // pred_fallthru
          _
        // Predicated region
        $region113: #{tpu_custom_call.1} parent=11 // pred_check
          %p962 = pneg %p677
        $region114: #{tpu_custom_call.1} parent=11 // pred_check_branch
          %964 = sbr.rel (%p962) target = $region116
        $region115: #{tpu_custom_call.1} parent=11 // pred_region
          _
        $region116: #{tpu_custom_call.1} parent=11 // pred_fallthru
          _
        // Predicated region
        $region117: #{tpu_custom_call.1} parent=11 // pred_check
          %p965 = pneg %p698
        $region118: #{tpu_custom_call.1} parent=11 // pred_check_branch
          %967 = sbr.rel (%p965) target = $region120
        $region119: #{tpu_custom_call.1} parent=11 // pred_region
          _
        $region120: #{tpu_custom_call.1} parent=11 // pred_fallthru
          _
        // Predicated region
        $region121: #{tpu_custom_call.1} parent=11 // pred_check
          %p968 = pneg %p719
        $region122: #{tpu_custom_call.1} parent=11 // pred_check_branch
          %970 = sbr.rel (%p968) target = $region124
        $region123: #{tpu_custom_call.1} parent=11 // pred_region
          _
        $region124: #{tpu_custom_call.1} parent=11 // pred_fallthru
          _
        // Predicated region
        $region125: #{tpu_custom_call.1} parent=11 // pred_check
          %p971 = pneg %p740
        $region126: #{tpu_custom_call.1} parent=11 // pred_check_branch
          %973 = sbr.rel (%p971) target = $region128
        $region127: #{tpu_custom_call.1} parent=11 // pred_region
          _
        $region128: #{tpu_custom_call.1} parent=11 // pred_fallthru
          _
        // Predicated region
        $region129: #{tpu_custom_call.1} parent=11 // pred_check
          %p974 = pneg %p761
        $region130: #{tpu_custom_call.1} parent=11 // pred_check_branch
          %976 = sbr.rel (%p974) target = $region132
        $region131: #{tpu_custom_call.1} parent=11 // pred_region
          _
        $region132: #{tpu_custom_call.1} parent=11 // pred_fallthru
          _
        // Predicated region
        $region133: #{tpu_custom_call.1} parent=11 // pred_check
          %p977 = pneg %p782
        $region134: #{tpu_custom_call.1} parent=11 // pred_check_branch
          %979 = sbr.rel (%p977) target = $region136
        $region135: #{tpu_custom_call.1} parent=11 // pred_region
          _
        $region136: #{tpu_custom_call.1} parent=11 // pred_fallthru
          _
        // Predicated region
        $region137: #{tpu_custom_call.1} parent=11 // pred_check
          %p980 = pneg %p803
        $region138: #{tpu_custom_call.1} parent=11 // pred_check_branch
          %982 = sbr.rel (%p980) target = $region140
        $region139: #{tpu_custom_call.1} parent=11 // pred_region
          _
        $region140: #{tpu_custom_call.1} parent=11 // pred_fallthru
          _
        // Predicated region
        $region141: #{tpu_custom_call.1} parent=11 // pred_check
          %p983 = pneg %p824
        $region142: #{tpu_custom_call.1} parent=11 // pred_check_branch
          %985 = sbr.rel (%p983) target = $region144
        $region143: #{tpu_custom_call.1} parent=11 // pred_region
          _
        $region144: #{tpu_custom_call.1} parent=11 // pred_fallthru
          _
      $region12: #{tpu_custom_call.1} parent=5 // pred_fallthru
        _
      %p986 = scmp.lt.s32.totalorder %s79, 2
      // Predicated region
      $region145: #{tpu_custom_call.1} parent=5 // pred_check
        %p987 = pneg %p986
      $region146: #{tpu_custom_call.1} parent=5 // pred_check_branch
        %989 = sbr.rel (%p987) target = $region148
      $region147: #{tpu_custom_call.1} parent=5 // pred_region
        // Predicated region
        $region149: #{tpu_custom_call.1} parent=147 // pred_check
          %p990 = pneg %p99
        $region150: #{tpu_custom_call.1} parent=147 // pred_check_branch
          %992 = sbr.rel (%p990) target = $region152
        $region151: #{tpu_custom_call.1} parent=147 // pred_region
          %p993 = scmp.lt.s32.totalorder %s79, 1
          %s994 = scalar_select %p993, %s79, 1
          %s995 = smul.addr %s994, 16
          %s996 = smul.addr %s995, 8
          %s997 = scalar_lea.vmem %s1, %s996
        $region152: #{tpu_custom_call.1} parent=147 // pred_fallthru
          _
        // Predicated region
        $region153: #{tpu_custom_call.1} parent=147 // pred_check
          %p998 = pneg %p125
        $region154: #{tpu_custom_call.1} parent=147 // pred_check_branch
          %1000 = sbr.rel (%p998) target = $region156
        $region155: #{tpu_custom_call.1} parent=147 // pred_region
          %p1001 = scmp.lt.s32.totalorder %s79, 1
          %s1002 = scalar_select %p1001, %s79, 1
          %s1003 = smul.addr %s1002, 8
          %s1004 = scalar_lea.vmem %s3, %s1003
        $region156: #{tpu_custom_call.1} parent=147 // pred_fallthru
          _
      $region148: #{tpu_custom_call.1} parent=5 // pred_fallthru
        _
      %p1005 = scmp.le.s32.totalorder 1, %s79
      %p1006 = scmp.lt.s32.totalorder %s79, 3
      %p1007 = pnand %p1005, %p1006
      %p1008 = pneg %p1007
      // Predicated region
      $region157: #{tpu_custom_call.1} parent=5 // pred_check
        _
      $region158: #{tpu_custom_call.1} parent=5 // pred_check_branch
        %1010 = sbr.rel (%p1007) target = $region160
      $region159: #{tpu_custom_call.1} parent=5 // pred_region
        %s1011 = ssub.s32 %s79, 1
        // Predicated region
        $region161: #{tpu_custom_call.1} parent=159 // pred_check
          %p1012 = pneg %p236
        $region162: #{tpu_custom_call.1} parent=159 // pred_check_branch
          %1014 = sbr.rel (%p1012) target = $region164
        $region163: #{tpu_custom_call.1} parent=159 // pred_region
          %1016 = dma.done [#allocation3], 16384
        $region164: #{tpu_custom_call.1} parent=159 // pred_fallthru
          _
        // Predicated region
        $region165: #{tpu_custom_call.1} parent=159 // pred_check
          %p1017 = pneg %p257
        $region166: #{tpu_custom_call.1} parent=159 // pred_check_branch
          %1019 = sbr.rel (%p1017) target = $region168
        $region167: #{tpu_custom_call.1} parent=159 // pred_region
          %1021 = dma.done [#allocation5], 16384
        $region168: #{tpu_custom_call.1} parent=159 // pred_fallthru
          _
        %p1022 = scmp.lt.s32.totalorder %s84, 1
        %s1023 = scalar_select %p1022, %s84, 1
        %s1024 = smul.addr %s1023, 16
        %s1025 = smul.addr %s1024, 8
        %s1026 = scalar_lea.vmem %s1, %s1025
        %p1027 = pneg %p105
        %p1028 = pneg %p102
        %p1029 = scmp.lt.s32.totalorder %s84, 1
        %s1030 = scalar_select %p1029, %s84, 1
        %s1031 = smul.addr %s1030, 8
        %s1032 = scalar_lea.vmem %s3, %s1031
        %p1033 = pneg %p131
        %p1034 = pneg %p128
        %p1035 = pneg %p152
        %p1036 = pneg %p149
        %p1037 = pneg %p173
        %p1038 = pneg %p170
        %p1039 = pneg %p194
        %p1040 = pneg %p191
        %p1041 = pneg %p215
        %p1042 = pneg %p212
        %p1043 = pneg %p236
        %p1044 = pneg %p233
        %p1045 = pneg %p257
        %p1046 = pneg %p254
        %p1047 = pneg %p278
        %p1048 = pneg %p275
        %p1049 = pneg %p299
        %p1050 = pneg %p296
        %p1051 = pneg %p320
        %p1052 = pneg %p317
        %p1053 = pneg %p341
        %p1054 = pneg %p338
        %p1055 = pneg %p362
        %p1056 = pneg %p359
        %p1057 = pneg %p383
        %p1058 = pneg %p380
        %p1059 = pneg %p404
        %p1060 = pneg %p401
        %p1061 = pneg %p425
        %p1062 = pneg %p422
        %p1063 = pneg %p446
        %p1064 = pneg %p443
        %p1065 = pneg %p467
        %p1066 = pneg %p464
        %p1067 = pneg %p488
        %p1068 = pneg %p485
        %p1069 = pneg %p509
        %p1070 = pneg %p506
        %p1071 = pneg %p530
        %p1072 = pneg %p527
        %p1073 = pneg %p551
        %p1074 = pneg %p548
        %p1075 = pneg %p572
        %p1076 = pneg %p569
        %p1077 = pneg %p593
        %p1078 = pneg %p590
        %p1079 = pneg %p614
        %p1080 = pneg %p611
        %p1081 = pneg %p635
        %p1082 = pneg %p632
        %p1083 = pneg %p656
        %p1084 = pneg %p653
        %p1085 = pneg %p677
        %p1086 = pneg %p674
        %p1087 = pneg %p698
        %p1088 = pneg %p695
        %p1089 = pneg %p719
        %p1090 = pneg %p716
        %p1091 = pneg %p740
        %p1092 = pneg %p737
        %p1093 = pneg %p761
        %p1094 = pneg %p758
        %p1095 = pneg %p782
        %p1096 = pneg %p779
        %p1097 = pneg %p803
        %p1098 = pneg %p800
        %p1099 = pneg %p824
        %p1100 = pneg %p821
        %p1101 = pneg %p850
        %p1102 = pneg %p847
        %p1103 = scmp.lt.s32.totalorder %s84, 1
        %s1104 = scalar_select %p1103, %s84, 1
        %s1105 = smul.addr %s1104, 8
        %s1106 = scalar_lea.vmem %s71, %s1105
        %p1107 = scmp.lt.s32.totalorder %s84, 1
        %s1108 = scalar_select %p1107, %s84, 1
        %s1109 = smul.addr %s1108, 16
        %s1110 = smul.addr %s1109, 8
        %s1111 = scalar_lea.vmem %s1, %s1110
        %p1112 = scmp.lt.s32.totalorder %s84, 1
        %s1113 = scalar_select %p1112, %s84, 1
        %s1114 = smul.addr %s1113, 8
        %s1115 = scalar_lea.vmem %s3, %s1114
        %p1116 = scmp.lt.s32.totalorder %s84, 1
        %s1117 = scalar_select %p1116, %s84, 1
        %s1118 = smul.addr %s1117, 8
        %s1119 = scalar_lea.vmem %s71, %s1118
        %v1120 = vld [vmem:[%s1111] sm:$0xff]
        %v1121 = vld [vmem:[%s1111 + $0x8] sm:$0xff]
        %v1122 = vld [vmem:[%s1111 + $0x10] sm:$0xff]
        %v1123 = vld [vmem:[%s1111 + $0x18] sm:$0xff]
        %v1124 = vld [vmem:[%s1111 + $0x20] sm:$0xff]
        %v1125 = vld [vmem:[%s1111 + $0x28] sm:$0xff]
        %v1126 = vld [vmem:[%s1111 + $0x30] sm:$0xff]
        %v1127 = vld [vmem:[%s1111 + $0x38] sm:$0xff]
        %v1128 = vld [vmem:[%s1111 + $0x40] sm:$0xff]
        %v1129 = vld [vmem:[%s1111 + $0x48] sm:$0xff]
        %v1130 = vld [vmem:[%s1111 + $0x50] sm:$0xff]
        %v1131 = vld [vmem:[%s1111 + $0x58] sm:$0xff]
        %v1132 = vld [vmem:[%s1111 + $0x60] sm:$0xff]
        %v1133 = vld [vmem:[%s1111 + $0x68] sm:$0xff]
        %v1134 = vld [vmem:[%s1111 + $0x70] sm:$0xff]
        %v1135 = vld [vmem:[%s1111 + $0x78] sm:$0xff]
        %v1136 = vld [vmem:[%s5] sm:$0x7]
        %v1137 = vld [vmem:[%s7] sm:$0x1]
        %v1139 = vperm.slane %v1137, 0
        %vm1141 = vcmask 23552
        %v1143 = vsel %vm1141, %v1120, 0
        %v1146 = vsel %vm1141, %v1121, 0
        %v1149 = vsel %vm1141, %v1122, 0
        %v1152 = vsel %vm1141, %v1123, 0
        %v1155 = vsel %vm1141, %v1124, 0
        %v1158 = vsel %vm1141, %v1125, 0
        %v1161 = vsel %vm1141, %v1126, 0
        %v1164 = vsel %vm1141, %v1127, 0
        %v1167 = vsel %vm1141, %v1128, 0
        %v1170 = vsel %vm1141, %v1129, 0
        %v1173 = vsel %vm1141, %v1130, 0
        %v1176 = vsel %vm1141, %v1131, 0
        %v1179 = vsel %vm1141, %v1132, 0
        %v1182 = vsel %vm1141, %v1133, 0
        %v1185 = vsel %vm1141, %v1134, 0
        %v1188 = vsel %vm1141, %v1135, 0
        %vm1190 = vcmask 1042432
        %v1192 = vsel %vm1190, %v1136, 0
        %1194 = vmatpush.msra.mxu0 0.0
        %1195 = vmatpush.msra.mxu0 0.0
        %1196 = vmatpush.msra.mxu0 0.0
        %1197 = vmatpush.msra.mxu0 0.0
        %1198 = vmatpush.msra.mxu0 0.0
        %1199 = vmatpush.msra.mxu0 0.0
        %1200 = vmatpush.msra.mxu0 0.0
        %1201 = vmatpush.msra.mxu0 0.0
        %1202 = vmatpush.msra.mxu0 0.0
        %1203 = vmatpush.msra.mxu0 0.0
        %1204 = vmatpush.msra.mxu0 0.0
        %1205 = vmatpush.msra.mxu0 0.0
        %1206 = vmatpush.msra.mxu0 0.0
        %1207 = vmatpush.msra.mxu0 0.0
        %1208 = vmatpush.msra.mxu0 0.0
        %1209 = vmatpush.msra.mxu0 %v1192
        %1210 = vmatmul.f32.gmra.mxu0 %v1143
        %v1211 = vpop.f32.mrf.mxu0
        %v1212 = vadd.f32 %v1139, %v1211
        %1213 = vmatmul.f32.gmra.mxu0 %v1146
        %v1214 = vpop.f32.mrf.mxu0
        %v1215 = vadd.f32 %v1139, %v1214
        %1216 = vmatmul.f32.gmra.mxu0 %v1149
        %v1217 = vpop.f32.mrf.mxu0
        %v1218 = vadd.f32 %v1139, %v1217
        %1219 = vmatmul.f32.gmra.mxu0 %v1152
        %v1220 = vpop.f32.mrf.mxu0
        %v1221 = vadd.f32 %v1139, %v1220
        %1222 = vmatmul.f32.gmra.mxu0 %v1155
        %v1223 = vpop.f32.mrf.mxu0
        %v1224 = vadd.f32 %v1139, %v1223
        %1225 = vmatmul.f32.gmra.mxu0 %v1158
        %v1226 = vpop.f32.mrf.mxu0
        %v1227 = vadd.f32 %v1139, %v1226
        %1228 = vmatmul.f32.gmra.mxu0 %v1161
        %v1229 = vpop.f32.mrf.mxu0
        %v1230 = vadd.f32 %v1139, %v1229
        %1231 = vmatmul.f32.gmra.mxu0 %v1164
        %v1232 = vpop.f32.mrf.mxu0
        %v1233 = vadd.f32 %v1139, %v1232
        %1234 = vmatmul.f32.gmra.mxu0 %v1167
        %v1235 = vpop.f32.mrf.mxu0
        %v1236 = vadd.f32 %v1139, %v1235
        %1237 = vmatmul.f32.gmra.mxu0 %v1170
        %v1238 = vpop.f32.mrf.mxu0
        %v1239 = vadd.f32 %v1139, %v1238
        %1240 = vmatmul.f32.gmra.mxu0 %v1173
        %v1241 = vpop.f32.mrf.mxu0
        %v1242 = vadd.f32 %v1139, %v1241
        %1243 = vmatmul.f32.gmra.mxu0 %v1176
        %v1244 = vpop.f32.mrf.mxu0
        %v1245 = vadd.f32 %v1139, %v1244
        %1246 = vmatmul.f32.gmra.mxu0 %v1179
        %v1247 = vpop.f32.mrf.mxu0
        %v1248 = vadd.f32 %v1139, %v1247
        %1249 = vmatmul.f32.gmra.mxu0 %v1182
        %v1250 = vpop.f32.mrf.mxu0
        %v1251 = vadd.f32 %v1139, %v1250
        %1252 = vmatmul.f32.gmra.mxu0 %v1185
        %v1253 = vpop.f32.mrf.mxu0
        %v1254 = vadd.f32 %v1139, %v1253
        %1255 = vmatmul.f32.gmra.mxu0 %v1188
        %v1256 = vpop.f32.mrf.mxu0
        %v1257 = vadd.f32 %v1139, %v1256
        %1258 = vdwg.mxu0
        %v1259 = vmax.f32 %v1212, 0.0
        %v1260 = vmax.f32 %v1215, 0.0
        %v1261 = vmax.f32 %v1218, 0.0
        %v1262 = vmax.f32 %v1221, 0.0
        %v1263 = vmax.f32 %v1224, 0.0
        %v1264 = vmax.f32 %v1227, 0.0
        %v1265 = vmax.f32 %v1230, 0.0
        %v1266 = vmax.f32 %v1233, 0.0
        %v1267 = vmax.f32 %v1236, 0.0
        %v1268 = vmax.f32 %v1239, 0.0
        %v1269 = vmax.f32 %v1242, 0.0
        %v1270 = vmax.f32 %v1245, 0.0
        %v1271 = vmax.f32 %v1248, 0.0
        %v1272 = vmax.f32 %v1251, 0.0
        %v1273 = vmax.f32 %v1254, 0.0
        %v1274 = vmax.f32 %v1257, 0.0
        %v1275 = vld [vmem:[%s9] sm:$0xff]
        %v1276 = vld [vmem:[%s9 + $0x8] sm:$0xff]
        %v1277 = vld [vmem:[%s9 + $0x10] sm:$0xff]
        %v1278 = vld [vmem:[%s9 + $0x18] sm:$0xff]
        %v1279 = vld [vmem:[%s9 + $0x20] sm:$0xff]
        %v1280 = vld [vmem:[%s9 + $0x28] sm:$0xff]
        %v1281 = vld [vmem:[%s9 + $0x30] sm:$0xff]
        %v1282 = vld [vmem:[%s9 + $0x38] sm:$0xff]
        %v1283 = vld [vmem:[%s9 + $0x40] sm:$0xff]
        %v1284 = vld [vmem:[%s9 + $0x48] sm:$0xff]
        %v1285 = vld [vmem:[%s9 + $0x50] sm:$0xff]
        %v1286 = vld [vmem:[%s9 + $0x58] sm:$0xff]
        %v1287 = vld [vmem:[%s9 + $0x60] sm:$0xff]
        %v1288 = vld [vmem:[%s9 + $0x68] sm:$0xff]
        %v1289 = vld [vmem:[%s9 + $0x70] sm:$0xff]
        %v1290 = vld [vmem:[%s9 + $0x78] sm:$0xff]
        %v1291 = vld [vmem:[%s9 + $0x80] sm:$0xff]
        %v1292 = vld [vmem:[%s9 + $0x88] sm:$0xff]
        %v1293 = vld [vmem:[%s9 + $0x90] sm:$0xff]
        %v1294 = vld [vmem:[%s9 + $0x98] sm:$0xff]
        %v1295 = vld [vmem:[%s9 + $0xa0] sm:$0xff]
        %v1296 = vld [vmem:[%s9 + $0xa8] sm:$0xff]
        %v1297 = vld [vmem:[%s9 + $0xb0] sm:$0xff]
        %v1298 = vld [vmem:[%s9 + $0xb8] sm:$0xff]
        %v1299 = vld [vmem:[%s9 + $0xc0] sm:$0xff]
        %v1300 = vld [vmem:[%s9 + $0xc8] sm:$0xff]
        %v1301 = vld [vmem:[%s9 + $0xd0] sm:$0xff]
        %v1302 = vld [vmem:[%s9 + $0xd8] sm:$0xff]
        %v1303 = vld [vmem:[%s9 + $0xe0] sm:$0xff]
        %v1304 = vld [vmem:[%s9 + $0xe8] sm:$0xff]
        %v1305 = vld [vmem:[%s9 + $0xf0] sm:$0xff]
        %v1306 = vld [vmem:[%s9 + $0xf8] sm:$0xff]
        %v1307 = vld [vmem:[%s11] sm:$0x3]
        %v1309 = vperm.slane %v1307, 0
        %v1310 = vperm.slane %v1307, 1
        %1313 = vmatpush.msra.mxu0 %v1305
        %1314 = vmatpush.msra.mxu0 %v1303
        %1315 = vmatpush.msra.mxu0 %v1301
        %1316 = vmatpush.msra.mxu0 %v1299
        %1317 = vmatpush.msra.mxu0 %v1297
        %1318 = vmatpush.msra.mxu0 %v1295
        %1319 = vmatpush.msra.mxu0 %v1293
        %1320 = vmatpush.msra.mxu0 %v1291
        %1321 = vmatpush.msra.mxu0 %v1289
        %1322 = vmatpush.msra.mxu0 %v1287
        %1323 = vmatpush.msra.mxu0 %v1285
        %1324 = vmatpush.msra.mxu0 %v1283
        %1325 = vmatpush.msra.mxu0 %v1281
        %1326 = vmatpush.msra.mxu0 %v1279
        %1327 = vmatpush.msra.mxu0 %v1277
        %1328 = vmatpush.msra.mxu0 %v1275
        %1329 = vmatmul.f32.gmra.mxu0 %v1259
        %v1330 = vpop.f32.mrf.mxu0
        %v1331 = vadd.f32 %v1309, %v1330
        %1332 = vmatmul.f32.gmra.mxu0 %v1260
        %v1333 = vpop.f32.mrf.mxu0
        %v1334 = vadd.f32 %v1309, %v1333
        %1335 = vmatmul.f32.gmra.mxu0 %v1261
        %v1336 = vpop.f32.mrf.mxu0
        %v1337 = vadd.f32 %v1309, %v1336
        %1338 = vmatmul.f32.gmra.mxu0 %v1262
        %v1339 = vpop.f32.mrf.mxu0
        %v1340 = vadd.f32 %v1309, %v1339
        %1341 = vmatmul.f32.gmra.mxu0 %v1263
        %v1342 = vpop.f32.mrf.mxu0
        %v1343 = vadd.f32 %v1309, %v1342
        %1344 = vmatmul.f32.gmra.mxu0 %v1264
        %v1345 = vpop.f32.mrf.mxu0
        %v1346 = vadd.f32 %v1309, %v1345
        %1347 = vmatmul.f32.gmra.mxu0 %v1265
        %v1348 = vpop.f32.mrf.mxu0
        %v1349 = vadd.f32 %v1309, %v1348
        %1350 = vmatmul.f32.gmra.mxu0 %v1266
        %v1351 = vpop.f32.mrf.mxu0
        %v1352 = vadd.f32 %v1309, %v1351
        %1353 = vmatmul.f32.gmra.mxu0 %v1267
        %v1354 = vpop.f32.mrf.mxu0
        %v1355 = vadd.f32 %v1309, %v1354
        %1356 = vmatmul.f32.gmra.mxu0 %v1268
        %v1357 = vpop.f32.mrf.mxu0
        %v1358 = vadd.f32 %v1309, %v1357
        %1359 = vmatmul.f32.gmra.mxu0 %v1269
        %v1360 = vpop.f32.mrf.mxu0
        %v1361 = vadd.f32 %v1309, %v1360
        %1362 = vmatmul.f32.gmra.mxu0 %v1270
        %v1363 = vpop.f32.mrf.mxu0
        %v1364 = vadd.f32 %v1309, %v1363
        %1365 = vmatmul.f32.gmra.mxu0 %v1271
        %v1366 = vpop.f32.mrf.mxu0
        %v1367 = vadd.f32 %v1309, %v1366
        %1368 = vmatmul.f32.gmra.mxu0 %v1272
        %v1369 = vpop.f32.mrf.mxu0
        %v1370 = vadd.f32 %v1309, %v1369
        %1371 = vmatmul.f32.gmra.mxu0 %v1273
        %v1372 = vpop.f32.mrf.mxu0
        %v1373 = vadd.f32 %v1309, %v1372
        %1374 = vmatmul.f32.gmra.mxu0 %v1274
        %v1375 = vpop.f32.mrf.mxu0
        %v1376 = vadd.f32 %v1309, %v1375
        %1377 = vdwg.mxu0
        %1378 = vmatpush.msra.mxu0 %v1306
        %1379 = vmatpush.msra.mxu0 %v1304
        %1380 = vmatpush.msra.mxu0 %v1302
        %1381 = vmatpush.msra.mxu0 %v1300
        %1382 = vmatpush.msra.mxu0 %v1298
        %1383 = vmatpush.msra.mxu0 %v1296
        %1384 = vmatpush.msra.mxu0 %v1294
        %1385 = vmatpush.msra.mxu0 %v1292
        %1386 = vmatpush.msra.mxu0 %v1290
        %1387 = vmatpush.msra.mxu0 %v1288
        %1388 = vmatpush.msra.mxu0 %v1286
        %1389 = vmatpush.msra.mxu0 %v1284
        %1390 = vmatpush.msra.mxu0 %v1282
        %1391 = vmatpush.msra.mxu0 %v1280
        %1392 = vmatpush.msra.mxu0 %v1278
        %1393 = vmatpush.msra.mxu0 %v1276
        %1394 = vmatmul.f32.gmra.mxu0 %v1259
        %v1395 = vpop.f32.mrf.mxu0
        %v1396 = vadd.f32 %v1310, %v1395
        %1397 = vmatmul.f32.gmra.mxu0 %v1260
        %v1398 = vpop.f32.mrf.mxu0
        %v1399 = vadd.f32 %v1310, %v1398
        %1400 = vmatmul.f32.gmra.mxu0 %v1261
        %v1401 = vpop.f32.mrf.mxu0
        %v1402 = vadd.f32 %v1310, %v1401
        %1403 = vmatmul.f32.gmra.mxu0 %v1262
        %v1404 = vpop.f32.mrf.mxu0
        %v1405 = vadd.f32 %v1310, %v1404
        %1406 = vmatmul.f32.gmra.mxu0 %v1263
        %v1407 = vpop.f32.mrf.mxu0
        %v1408 = vadd.f32 %v1310, %v1407
        %1409 = vmatmul.f32.gmra.mxu0 %v1264
        %v1410 = vpop.f32.mrf.mxu0
        %v1411 = vadd.f32 %v1310, %v1410
        %1412 = vmatmul.f32.gmra.mxu0 %v1265
        %v1413 = vpop.f32.mrf.mxu0
        %v1414 = vadd.f32 %v1310, %v1413
        %1415 = vmatmul.f32.gmra.mxu0 %v1266
        %v1416 = vpop.f32.mrf.mxu0
        %v1417 = vadd.f32 %v1310, %v1416
        %1418 = vmatmul.f32.gmra.mxu0 %v1267
        %v1419 = vpop.f32.mrf.mxu0
        %v1420 = vadd.f32 %v1310, %v1419
        %1421 = vmatmul.f32.gmra.mxu0 %v1268
        %v1422 = vpop.f32.mrf.mxu0
        %v1423 = vadd.f32 %v1310, %v1422
        %1424 = vmatmul.f32.gmra.mxu0 %v1269
        %v1425 = vpop.f32.mrf.mxu0
        %v1426 = vadd.f32 %v1310, %v1425
        %1427 = vmatmul.f32.gmra.mxu0 %v1270
        %v1428 = vpop.f32.mrf.mxu0
        %v1429 = vadd.f32 %v1310, %v1428
        %1430 = vmatmul.f32.gmra.mxu0 %v1271
        %v1431 = vpop.f32.mrf.mxu0
        %v1432 = vadd.f32 %v1310, %v1431
        %1433 = vmatmul.f32.gmra.mxu0 %v1272
        %v1434 = vpop.f32.mrf.mxu0
        %v1435 = vadd.f32 %v1310, %v1434
        %1436 = vmatmul.f32.gmra.mxu0 %v1273
        %v1437 = vpop.f32.mrf.mxu0
        %v1438 = vadd.f32 %v1310, %v1437
        %1439 = vmatmul.f32.gmra.mxu0 %v1274
        %v1440 = vpop.f32.mrf.mxu0
        %v1441 = vadd.f32 %v1310, %v1440
        %1442 = vdwg.mxu0
        %v1443 = vmax.f32 %v1331, %v1334
        %v1444 = vrot.slane %v1443, 4
        %v1445 = vmax.f32 %v1443, %v1444
        %v1446 = vrot.slane %v1445, 2
        %v1447 = vmax.f32 %v1445, %v1446
        %v1448 = vrot.slane %v1447, 1
        %v1449 = vmax.f32 %v1447, %v1448
        %v1450 = vmax.f32 %v1396, %v1399
        %v1451 = vrot.slane %v1450, 4
        %v1452 = vmax.f32 %v1450, %v1451
        %v1453 = vrot.slane %v1452, 2
        %v1454 = vmax.f32 %v1452, %v1453
        %v1455 = vrot.slane %v1454, 1
        %v1456 = vmax.f32 %v1454, %v1455
        %v1457 = vmax.f32 %v1337, %v1340
        %v1458 = vrot.slane %v1457, 4
        %v1459 = vmax.f32 %v1457, %v1458
        %v1460 = vrot.slane %v1459, 2
        %v1461 = vmax.f32 %v1459, %v1460
        %v1462 = vrot.slane %v1461, 1
        %v1463 = vmax.f32 %v1461, %v1462
        %v1464 = vmax.f32 %v1402, %v1405
        %v1465 = vrot.slane %v1464, 4
        %v1466 = vmax.f32 %v1464, %v1465
        %v1467 = vrot.slane %v1466, 2
        %v1468 = vmax.f32 %v1466, %v1467
        %v1469 = vrot.slane %v1468, 1
        %v1470 = vmax.f32 %v1468, %v1469
        %v1471 = vmax.f32 %v1343, %v1346
        %v1472 = vrot.slane %v1471, 4
        %v1473 = vmax.f32 %v1471, %v1472
        %v1474 = vrot.slane %v1473, 2
        %v1475 = vmax.f32 %v1473, %v1474
        %v1476 = vrot.slane %v1475, 1
        %v1477 = vmax.f32 %v1475, %v1476
        %v1478 = vmax.f32 %v1408, %v1411
        %v1479 = vrot.slane %v1478, 4
        %v1480 = vmax.f32 %v1478, %v1479
        %v1481 = vrot.slane %v1480, 2
        %v1482 = vmax.f32 %v1480, %v1481
        %v1483 = vrot.slane %v1482, 1
        %v1484 = vmax.f32 %v1482, %v1483
        %v1485 = vmax.f32 %v1349, %v1352
        %v1486 = vrot.slane %v1485, 4
        %v1487 = vmax.f32 %v1485, %v1486
        %v1488 = vrot.slane %v1487, 2
        %v1489 = vmax.f32 %v1487, %v1488
        %v1490 = vrot.slane %v1489, 1
        %v1491 = vmax.f32 %v1489, %v1490
        %v1492 = vmax.f32 %v1414, %v1417
        %v1493 = vrot.slane %v1492, 4
        %v1494 = vmax.f32 %v1492, %v1493
        %v1495 = vrot.slane %v1494, 2
        %v1496 = vmax.f32 %v1494, %v1495
        %v1497 = vrot.slane %v1496, 1
        %v1498 = vmax.f32 %v1496, %v1497
        %v1499 = vmax.f32 %v1355, %v1358
        %v1500 = vrot.slane %v1499, 4
        %v1501 = vmax.f32 %v1499, %v1500
        %v1502 = vrot.slane %v1501, 2
        %v1503 = vmax.f32 %v1501, %v1502
        %v1504 = vrot.slane %v1503, 1
        %v1505 = vmax.f32 %v1503, %v1504
        %v1506 = vmax.f32 %v1420, %v1423
        %v1507 = vrot.slane %v1506, 4
        %v1508 = vmax.f32 %v1506, %v1507
        %v1509 = vrot.slane %v1508, 2
        %v1510 = vmax.f32 %v1508, %v1509
        %v1511 = vrot.slane %v1510, 1
        %v1512 = vmax.f32 %v1510, %v1511
        %v1513 = vmax.f32 %v1361, %v1364
        %v1514 = vrot.slane %v1513, 4
        %v1515 = vmax.f32 %v1513, %v1514
        %v1516 = vrot.slane %v1515, 2
        %v1517 = vmax.f32 %v1515, %v1516
        %v1518 = vrot.slane %v1517, 1
        %v1519 = vmax.f32 %v1517, %v1518
        %v1520 = vmax.f32 %v1426, %v1429
        %v1521 = vrot.slane %v1520, 4
        %v1522 = vmax.f32 %v1520, %v1521
        %v1523 = vrot.slane %v1522, 2
        %v1524 = vmax.f32 %v1522, %v1523
        %v1525 = vrot.slane %v1524, 1
        %v1526 = vmax.f32 %v1524, %v1525
        %v1527 = vmax.f32 %v1367, %v1370
        %v1528 = vrot.slane %v1527, 4
        %v1529 = vmax.f32 %v1527, %v1528
        %v1530 = vrot.slane %v1529, 2
        %v1531 = vmax.f32 %v1529, %v1530
        %v1532 = vrot.slane %v1531, 1
        %v1533 = vmax.f32 %v1531, %v1532
        %v1534 = vmax.f32 %v1432, %v1435
        %v1535 = vrot.slane %v1534, 4
        %v1536 = vmax.f32 %v1534, %v1535
        %v1537 = vrot.slane %v1536, 2
        %v1538 = vmax.f32 %v1536, %v1537
        %v1539 = vrot.slane %v1538, 1
        %v1540 = vmax.f32 %v1538, %v1539
        %v1541 = vmax.f32 %v1373, %v1376
        %v1542 = vrot.slane %v1541, 4
        %v1543 = vmax.f32 %v1541, %v1542
        %v1544 = vrot.slane %v1543, 2
        %v1545 = vmax.f32 %v1543, %v1544
        %v1546 = vrot.slane %v1545, 1
        %v1547 = vmax.f32 %v1545, %v1546
        %v1548 = vmax.f32 %v1438, %v1441
        %v1549 = vrot.slane %v1548, 4
        %v1550 = vmax.f32 %v1548, %v1549
        %v1551 = vrot.slane %v1550, 2
        %v1552 = vmax.f32 %v1550, %v1551
        %v1553 = vrot.slane %v1552, 1
        %v1554 = vmax.f32 %v1552, %v1553
        %v1555 = vld [vmem:[#allocation2] sm:$0xff]
        %v1556 = vld [vmem:[#allocation2 + $0x8] sm:$0xff]
        %v1557 = vld [vmem:[#allocation2 + $0x10] sm:$0xff]
        %v1558 = vld [vmem:[#allocation2 + $0x18] sm:$0xff]
        %v1559 = vld [vmem:[#allocation2 + $0x20] sm:$0xff]
        %v1560 = vld [vmem:[#allocation2 + $0x28] sm:$0xff]
        %v1561 = vld [vmem:[#allocation2 + $0x30] sm:$0xff]
        %v1562 = vld [vmem:[#allocation2 + $0x38] sm:$0xff]
        %v1563 = vld [vmem:[#allocation2 + $0x40] sm:$0xff]
        %v1564 = vld [vmem:[#allocation2 + $0x48] sm:$0xff]
        %v1565 = vld [vmem:[#allocation2 + $0x50] sm:$0xff]
        %v1566 = vld [vmem:[#allocation2 + $0x58] sm:$0xff]
        %v1567 = vld [vmem:[#allocation2 + $0x60] sm:$0xff]
        %v1568 = vld [vmem:[#allocation2 + $0x68] sm:$0xff]
        %v1569 = vld [vmem:[#allocation2 + $0x70] sm:$0xff]
        %v1570 = vld [vmem:[#allocation2 + $0x78] sm:$0xff]
        %v1571 = vld [vmem:[#allocation2 + $0x80] sm:$0xff]
        %v1572 = vld [vmem:[#allocation2 + $0x88] sm:$0xff]
        %v1573 = vld [vmem:[#allocation2 + $0x90] sm:$0xff]
        %v1574 = vld [vmem:[#allocation2 + $0x98] sm:$0xff]
        %v1575 = vld [vmem:[#allocation2 + $0xa0] sm:$0xff]
        %v1576 = vld [vmem:[#allocation2 + $0xa8] sm:$0xff]
        %v1577 = vld [vmem:[#allocation2 + $0xb0] sm:$0xff]
        %v1578 = vld [vmem:[#allocation2 + $0xb8] sm:$0xff]
        %v1579 = vld [vmem:[#allocation2 + $0xc0] sm:$0xff]
        %v1580 = vld [vmem:[#allocation2 + $0xc8] sm:$0xff]
        %v1581 = vld [vmem:[#allocation2 + $0xd0] sm:$0xff]
        %v1582 = vld [vmem:[#allocation2 + $0xd8] sm:$0xff]
        %v1583 = vld [vmem:[#allocation2 + $0xe0] sm:$0xff]
        %v1584 = vld [vmem:[#allocation2 + $0xe8] sm:$0xff]
        %v1585 = vld [vmem:[#allocation2 + $0xf0] sm:$0xff]
        %v1586 = vld [vmem:[#allocation2 + $0xf8] sm:$0xff]
        %v1587 = vld [vmem:[#allocation2 + $0x100] sm:$0xff]
        %v1588 = vld [vmem:[#allocation2 + $0x108] sm:$0xff]
        %v1589 = vld [vmem:[#allocation2 + $0x110] sm:$0xff]
        %v1590 = vld [vmem:[#allocation2 + $0x118] sm:$0xff]
        %v1591 = vld [vmem:[#allocation2 + $0x120] sm:$0xff]
        %v1592 = vld [vmem:[#allocation2 + $0x128] sm:$0xff]
        %v1593 = vld [vmem:[#allocation2 + $0x130] sm:$0xff]
        %v1594 = vld [vmem:[#allocation2 + $0x138] sm:$0xff]
        %v1595 = vld [vmem:[#allocation2 + $0x140] sm:$0xff]
        %v1596 = vld [vmem:[#allocation2 + $0x148] sm:$0xff]
        %v1597 = vld [vmem:[#allocation2 + $0x150] sm:$0xff]
        %v1598 = vld [vmem:[#allocation2 + $0x158] sm:$0xff]
        %v1599 = vld [vmem:[#allocation2 + $0x160] sm:$0xff]
        %v1600 = vld [vmem:[#allocation2 + $0x168] sm:$0xff]
        %v1601 = vld [vmem:[#allocation2 + $0x170] sm:$0xff]
        %v1602 = vld [vmem:[#allocation2 + $0x178] sm:$0xff]
        %v1603 = vld [vmem:[#allocation2 + $0x180] sm:$0xff]
        %v1604 = vld [vmem:[#allocation2 + $0x188] sm:$0xff]
        %v1605 = vld [vmem:[#allocation2 + $0x190] sm:$0xff]
        %v1606 = vld [vmem:[#allocation2 + $0x198] sm:$0xff]
        %v1607 = vld [vmem:[#allocation2 + $0x1a0] sm:$0xff]
        %v1608 = vld [vmem:[#allocation2 + $0x1a8] sm:$0xff]
        %v1609 = vld [vmem:[#allocation2 + $0x1b0] sm:$0xff]
        %v1610 = vld [vmem:[#allocation2 + $0x1b8] sm:$0xff]
        %v1611 = vld [vmem:[#allocation2 + $0x1c0] sm:$0xff]
        %v1612 = vld [vmem:[#allocation2 + $0x1c8] sm:$0xff]
        %v1613 = vld [vmem:[#allocation2 + $0x1d0] sm:$0xff]
        %v1614 = vld [vmem:[#allocation2 + $0x1d8] sm:$0xff]
        %v1615 = vld [vmem:[#allocation2 + $0x1e0] sm:$0xff]
        %v1616 = vld [vmem:[#allocation2 + $0x1e8] sm:$0xff]
        %v1617 = vld [vmem:[#allocation2 + $0x1f0] sm:$0xff]
        %v1618 = vld [vmem:[#allocation2 + $0x1f8] sm:$0xff]
        %v1619 = vld [vmem:[#allocation2 + $0x200] sm:$0xff]
        %v1620 = vld [vmem:[#allocation2 + $0x208] sm:$0xff]
        %v1621 = vld [vmem:[#allocation2 + $0x210] sm:$0xff]
        %v1622 = vld [vmem:[#allocation2 + $0x218] sm:$0xff]
        %v1623 = vld [vmem:[#allocation2 + $0x220] sm:$0xff]
        %v1624 = vld [vmem:[#allocation2 + $0x228] sm:$0xff]
        %v1625 = vld [vmem:[#allocation2 + $0x230] sm:$0xff]
        %v1626 = vld [vmem:[#allocation2 + $0x238] sm:$0xff]
        %v1627 = vld [vmem:[#allocation2 + $0x240] sm:$0xff]
        %v1628 = vld [vmem:[#allocation2 + $0x248] sm:$0xff]
        %v1629 = vld [vmem:[#allocation2 + $0x250] sm:$0xff]
        %v1630 = vld [vmem:[#allocation2 + $0x258] sm:$0xff]
        %v1631 = vld [vmem:[#allocation2 + $0x260] sm:$0xff]
        %v1632 = vld [vmem:[#allocation2 + $0x268] sm:$0xff]
        %v1633 = vld [vmem:[#allocation2 + $0x270] sm:$0xff]
        %v1634 = vld [vmem:[#allocation2 + $0x278] sm:$0xff]
        %v1635 = vld [vmem:[#allocation2 + $0x280] sm:$0xff]
        %v1636 = vld [vmem:[#allocation2 + $0x288] sm:$0xff]
        %v1637 = vld [vmem:[#allocation2 + $0x290] sm:$0xff]
        %v1638 = vld [vmem:[#allocation2 + $0x298] sm:$0xff]
        %v1639 = vld [vmem:[#allocation2 + $0x2a0] sm:$0xff]
        %v1640 = vld [vmem:[#allocation2 + $0x2a8] sm:$0xff]
        %v1641 = vld [vmem:[#allocation2 + $0x2b0] sm:$0xff]
        %v1642 = vld [vmem:[#allocation2 + $0x2b8] sm:$0xff]
        %v1643 = vld [vmem:[#allocation2 + $0x2c0] sm:$0xff]
        %v1644 = vld [vmem:[#allocation2 + $0x2c8] sm:$0xff]
        %v1645 = vld [vmem:[#allocation2 + $0x2d0] sm:$0xff]
        %v1646 = vld [vmem:[#allocation2 + $0x2d8] sm:$0xff]
        %v1647 = vld [vmem:[#allocation2 + $0x2e0] sm:$0xff]
        %v1648 = vld [vmem:[#allocation2 + $0x2e8] sm:$0xff]
        %v1649 = vld [vmem:[#allocation2 + $0x2f0] sm:$0xff]
        %v1650 = vld [vmem:[#allocation2 + $0x2f8] sm:$0xff]
        %v1651 = vld [vmem:[#allocation2 + $0x300] sm:$0xff]
        %v1652 = vld [vmem:[#allocation2 + $0x308] sm:$0xff]
        %v1653 = vld [vmem:[#allocation2 + $0x310] sm:$0xff]
        %v1654 = vld [vmem:[#allocation2 + $0x318] sm:$0xff]
        %v1655 = vld [vmem:[#allocation2 + $0x320] sm:$0xff]
        %v1656 = vld [vmem:[#allocation2 + $0x328] sm:$0xff]
        %v1657 = vld [vmem:[#allocation2 + $0x330] sm:$0xff]
        %v1658 = vld [vmem:[#allocation2 + $0x338] sm:$0xff]
        %v1659 = vld [vmem:[#allocation2 + $0x340] sm:$0xff]
        %v1660 = vld [vmem:[#allocation2 + $0x348] sm:$0xff]
        %v1661 = vld [vmem:[#allocation2 + $0x350] sm:$0xff]
        %v1662 = vld [vmem:[#allocation2 + $0x358] sm:$0xff]
        %v1663 = vld [vmem:[#allocation2 + $0x360] sm:$0xff]
        %v1664 = vld [vmem:[#allocation2 + $0x368] sm:$0xff]
        %v1665 = vld [vmem:[#allocation2 + $0x370] sm:$0xff]
        %v1666 = vld [vmem:[#allocation2 + $0x378] sm:$0xff]
        %v1667 = vld [vmem:[#allocation2 + $0x380] sm:$0xff]
        %v1668 = vld [vmem:[#allocation2 + $0x388] sm:$0xff]
        %v1669 = vld [vmem:[#allocation2 + $0x390] sm:$0xff]
        %v1670 = vld [vmem:[#allocation2 + $0x398] sm:$0xff]
        %v1671 = vld [vmem:[#allocation2 + $0x3a0] sm:$0xff]
        %v1672 = vld [vmem:[#allocation2 + $0x3a8] sm:$0xff]
        %v1673 = vld [vmem:[#allocation2 + $0x3b0] sm:$0xff]
        %v1674 = vld [vmem:[#allocation2 + $0x3b8] sm:$0xff]
        %v1675 = vld [vmem:[#allocation2 + $0x3c0] sm:$0xff]
        %v1676 = vld [vmem:[#allocation2 + $0x3c8] sm:$0xff]
        %v1677 = vld [vmem:[#allocation2 + $0x3d0] sm:$0xff]
        %v1678 = vld [vmem:[#allocation2 + $0x3d8] sm:$0xff]
        %v1679 = vld [vmem:[#allocation2 + $0x3e0] sm:$0xff]
        %v1680 = vld [vmem:[#allocation2 + $0x3e8] sm:$0xff]
        %v1681 = vld [vmem:[#allocation2 + $0x3f0] sm:$0xff]
        %v1682 = vld [vmem:[#allocation2 + $0x3f8] sm:$0xff]
        %vm1699 = vcmask 1041409
        %v1700 = vsel %vm1699, %v1463, %v1449
        %vm1701 = vcmask 1042434
        %v1702 = vsel %vm1701, %v1477, %v1700
        %vm1703 = vcmask 1043459
        %v1704 = vsel %vm1703, %v1491, %v1702
        %vm1705 = vcmask 1044484
        %v1706 = vsel %vm1705, %v1505, %v1704
        %vm1707 = vcmask 1045509
        %v1708 = vsel %vm1707, %v1519, %v1706
        %vm1709 = vcmask 1046534
        %v1710 = vsel %vm1709, %v1533, %v1708
        %vm1711 = vcmask 1047559
        %v1712 = vsel %vm1711, %v1547, %v1710
        %v1713 = vsel %vm1699, %v1470, %v1456
        %v1714 = vsel %vm1701, %v1484, %v1713
        %v1715 = vsel %vm1703, %v1498, %v1714
        %v1716 = vsel %vm1705, %v1512, %v1715
        %v1717 = vsel %vm1707, %v1526, %v1716
        %v1718 = vsel %vm1709, %v1540, %v1717
        %v1719 = vsel %vm1711, %v1554, %v1718
        %1722 = vmatpush.msra.mxu0 %v1615
        %1723 = vmatpush.msra.mxu0 %v1611
        %1724 = vmatpush.msra.mxu0 %v1607
        %1725 = vmatpush.msra.mxu0 %v1603
        %1726 = vmatpush.msra.mxu0 %v1599
        %1727 = vmatpush.msra.mxu0 %v1595
        %1728 = vmatpush.msra.mxu0 %v1591
        %1729 = vmatpush.msra.mxu0 %v1587
        %1730 = vmatpush.msra.mxu0 %v1583
        %1731 = vmatpush.msra.mxu0 %v1579
        %1732 = vmatpush.msra.mxu0 %v1575
        %1733 = vmatpush.msra.mxu0 %v1571
        %1734 = vmatpush.msra.mxu0 %v1567
        %1735 = vmatpush.msra.mxu0 %v1563
        %1736 = vmatpush.msra.mxu0 %v1559
        %1737 = vmatpush.msra.mxu0 %v1555
        %1738 = vmatmul.f32.gmra.mxu0 %v1712
        %v1739 = vpop.f32.mrf.mxu0
        %v1740 = vadd.f32 0.0, %v1739
        %1741 = vdwg.mxu0
        %1742 = vmatpush.msra.mxu0 %v1679
        %1743 = vmatpush.msra.mxu0 %v1675
        %1744 = vmatpush.msra.mxu0 %v1671
        %1745 = vmatpush.msra.mxu0 %v1667
        %1746 = vmatpush.msra.mxu0 %v1663
        %1747 = vmatpush.msra.mxu0 %v1659
        %1748 = vmatpush.msra.mxu0 %v1655
        %1749 = vmatpush.msra.mxu0 %v1651
        %1750 = vmatpush.msra.mxu0 %v1647
        %1751 = vmatpush.msra.mxu0 %v1643
        %1752 = vmatpush.msra.mxu0 %v1639
        %1753 = vmatpush.msra.mxu0 %v1635
        %1754 = vmatpush.msra.mxu0 %v1631
        %1755 = vmatpush.msra.mxu0 %v1627
        %1756 = vmatpush.msra.mxu0 %v1623
        %1757 = vmatpush.msra.mxu0 %v1619
        %1758 = vmatmul.f32.gmra.mxu0 %v1719
        %v1759 = vpop.f32.mrf.mxu0
        %v1760 = vadd.f32 %v1740, %v1759
        %1761 = vdwg.mxu0
        %1762 = vmatpush.msra.mxu0 %v1616
        %1763 = vmatpush.msra.mxu0 %v1612
        %1764 = vmatpush.msra.mxu0 %v1608
        %1765 = vmatpush.msra.mxu0 %v1604
        %1766 = vmatpush.msra.mxu0 %v1600
        %1767 = vmatpush.msra.mxu0 %v1596
        %1768 = vmatpush.msra.mxu0 %v1592
        %1769 = vmatpush.msra.mxu0 %v1588
        %1770 = vmatpush.msra.mxu0 %v1584
        %1771 = vmatpush.msra.mxu0 %v1580
        %1772 = vmatpush.msra.mxu0 %v1576
        %1773 = vmatpush.msra.mxu0 %v1572
        %1774 = vmatpush.msra.mxu0 %v1568
        %1775 = vmatpush.msra.mxu0 %v1564
        %1776 = vmatpush.msra.mxu0 %v1560
        %1777 = vmatpush.msra.mxu0 %v1556
        %1778 = vmatmul.f32.gmra.mxu0 %v1712
        %v1779 = vpop.f32.mrf.mxu0
        %v1780 = vadd.f32 0.0, %v1779
        %1781 = vdwg.mxu0
        %1782 = vmatpush.msra.mxu0 %v1680
        %1783 = vmatpush.msra.mxu0 %v1676
        %1784 = vmatpush.msra.mxu0 %v1672
        %1785 = vmatpush.msra.mxu0 %v1668
        %1786 = vmatpush.msra.mxu0 %v1664
        %1787 = vmatpush.msra.mxu0 %v1660
        %1788 = vmatpush.msra.mxu0 %v1656
        %1789 = vmatpush.msra.mxu0 %v1652
        %1790 = vmatpush.msra.mxu0 %v1648
        %1791 = vmatpush.msra.mxu0 %v1644
        %1792 = vmatpush.msra.mxu0 %v1640
        %1793 = vmatpush.msra.mxu0 %v1636
        %1794 = vmatpush.msra.mxu0 %v1632
        %1795 = vmatpush.msra.mxu0 %v1628
        %1796 = vmatpush.msra.mxu0 %v1624
        %1797 = vmatpush.msra.mxu0 %v1620
        %1798 = vmatmul.f32.gmra.mxu0 %v1719
        %v1799 = vpop.f32.mrf.mxu0
        %v1800 = vadd.f32 %v1780, %v1799
        %1801 = vdwg.mxu0
        %1802 = vmatpush.msra.mxu0 %v1617
        %1803 = vmatpush.msra.mxu0 %v1613
        %1804 = vmatpush.msra.mxu0 %v1609
        %1805 = vmatpush.msra.mxu0 %v1605
        %1806 = vmatpush.msra.mxu0 %v1601
        %1807 = vmatpush.msra.mxu0 %v1597
        %1808 = vmatpush.msra.mxu0 %v1593
        %1809 = vmatpush.msra.mxu0 %v1589
        %1810 = vmatpush.msra.mxu0 %v1585
        %1811 = vmatpush.msra.mxu0 %v1581
        %1812 = vmatpush.msra.mxu0 %v1577
        %1813 = vmatpush.msra.mxu0 %v1573
        %1814 = vmatpush.msra.mxu0 %v1569
        %1815 = vmatpush.msra.mxu0 %v1565
        %1816 = vmatpush.msra.mxu0 %v1561
        %1817 = vmatpush.msra.mxu0 %v1557
        %1818 = vmatmul.f32.gmra.mxu0 %v1712
        %v1819 = vpop.f32.mrf.mxu0
        %v1820 = vadd.f32 0.0, %v1819
        %1821 = vdwg.mxu0
        %1822 = vmatpush.msra.mxu0 %v1681
        %1823 = vmatpush.msra.mxu0 %v1677
        %1824 = vmatpush.msra.mxu0 %v1673
        %1825 = vmatpush.msra.mxu0 %v1669
        %1826 = vmatpush.msra.mxu0 %v1665
        %1827 = vmatpush.msra.mxu0 %v1661
        %1828 = vmatpush.msra.mxu0 %v1657
        %1829 = vmatpush.msra.mxu0 %v1653
        %1830 = vmatpush.msra.mxu0 %v1649
        %1831 = vmatpush.msra.mxu0 %v1645
        %1832 = vmatpush.msra.mxu0 %v1641
        %1833 = vmatpush.msra.mxu0 %v1637
        %1834 = vmatpush.msra.mxu0 %v1633
        %1835 = vmatpush.msra.mxu0 %v1629
        %1836 = vmatpush.msra.mxu0 %v1625
        %1837 = vmatpush.msra.mxu0 %v1621
        %1838 = vmatmul.f32.gmra.mxu0 %v1719
        %v1839 = vpop.f32.mrf.mxu0
        %v1840 = vadd.f32 %v1820, %v1839
        %1841 = vdwg.mxu0
        %1842 = vmatpush.msra.mxu0 %v1618
        %1843 = vmatpush.msra.mxu0 %v1614
        %1844 = vmatpush.msra.mxu0 %v1610
        %1845 = vmatpush.msra.mxu0 %v1606
        %1846 = vmatpush.msra.mxu0 %v1602
        %1847 = vmatpush.msra.mxu0 %v1598
        %1848 = vmatpush.msra.mxu0 %v1594
        %1849 = vmatpush.msra.mxu0 %v1590
        %1850 = vmatpush.msra.mxu0 %v1586
        %1851 = vmatpush.msra.mxu0 %v1582
        %1852 = vmatpush.msra.mxu0 %v1578
        %1853 = vmatpush.msra.mxu0 %v1574
        %1854 = vmatpush.msra.mxu0 %v1570
        %1855 = vmatpush.msra.mxu0 %v1566
        %1856 = vmatpush.msra.mxu0 %v1562
        %1857 = vmatpush.msra.mxu0 %v1558
        %1858 = vmatmul.f32.gmra.mxu0 %v1712
        %v1859 = vpop.f32.mrf.mxu0
        %v1860 = vadd.f32 0.0, %v1859
        %1861 = vdwg.mxu0
        %1862 = vmatpush.msra.mxu0 %v1682
        %1863 = vmatpush.msra.mxu0 %v1678
        %1864 = vmatpush.msra.mxu0 %v1674
        %1865 = vmatpush.msra.mxu0 %v1670
        %1866 = vmatpush.msra.mxu0 %v1666
        %1867 = vmatpush.msra.mxu0 %v1662
        %1868 = vmatpush.msra.mxu0 %v1658
        %1869 = vmatpush.msra.mxu0 %v1654
        %1870 = vmatpush.msra.mxu0 %v1650
        %1871 = vmatpush.msra.mxu0 %v1646
        %1872 = vmatpush.msra.mxu0 %v1642
        %1873 = vmatpush.msra.mxu0 %v1638
        %1874 = vmatpush.msra.mxu0 %v1634
        %1875 = vmatpush.msra.mxu0 %v1630
        %1876 = vmatpush.msra.mxu0 %v1626
        %1877 = vmatpush.msra.mxu0 %v1622
        %1878 = vmatmul.f32.gmra.mxu0 %v1719
        %v1879 = vpop.f32.mrf.mxu0
        %v1880 = vadd.f32 %v1860, %v1879
        %1881 = vdwg.mxu0
        %v1882 = vld [vmem:[#allocation4] sm:$0xff]
        %v1883 = vld [vmem:[#allocation4 + $0x8] sm:$0xff]
        %v1884 = vld [vmem:[#allocation4 + $0x10] sm:$0xff]
        %v1885 = vld [vmem:[#allocation4 + $0x18] sm:$0xff]
        %v1886 = vld [vmem:[#allocation4 + $0x20] sm:$0xff]
        %v1887 = vld [vmem:[#allocation4 + $0x28] sm:$0xff]
        %v1888 = vld [vmem:[#allocation4 + $0x30] sm:$0xff]
        %v1889 = vld [vmem:[#allocation4 + $0x38] sm:$0xff]
        %v1890 = vld [vmem:[#allocation4 + $0x40] sm:$0xff]
        %v1891 = vld [vmem:[#allocation4 + $0x48] sm:$0xff]
        %v1892 = vld [vmem:[#allocation4 + $0x50] sm:$0xff]
        %v1893 = vld [vmem:[#allocation4 + $0x58] sm:$0xff]
        %v1894 = vld [vmem:[#allocation4 + $0x60] sm:$0xff]
        %v1895 = vld [vmem:[#allocation4 + $0x68] sm:$0xff]
        %v1896 = vld [vmem:[#allocation4 + $0x70] sm:$0xff]
        %v1897 = vld [vmem:[#allocation4 + $0x78] sm:$0xff]
        %v1898 = vld [vmem:[#allocation4 + $0x80] sm:$0xff]
        %v1899 = vld [vmem:[#allocation4 + $0x88] sm:$0xff]
        %v1900 = vld [vmem:[#allocation4 + $0x90] sm:$0xff]
        %v1901 = vld [vmem:[#allocation4 + $0x98] sm:$0xff]
        %v1902 = vld [vmem:[#allocation4 + $0xa0] sm:$0xff]
        %v1903 = vld [vmem:[#allocation4 + $0xa8] sm:$0xff]
        %v1904 = vld [vmem:[#allocation4 + $0xb0] sm:$0xff]
        %v1905 = vld [vmem:[#allocation4 + $0xb8] sm:$0xff]
        %v1906 = vld [vmem:[#allocation4 + $0xc0] sm:$0xff]
        %v1907 = vld [vmem:[#allocation4 + $0xc8] sm:$0xff]
        %v1908 = vld [vmem:[#allocation4 + $0xd0] sm:$0xff]
        %v1909 = vld [vmem:[#allocation4 + $0xd8] sm:$0xff]
        %v1910 = vld [vmem:[#allocation4 + $0xe0] sm:$0xff]
        %v1911 = vld [vmem:[#allocation4 + $0xe8] sm:$0xff]
        %v1912 = vld [vmem:[#allocation4 + $0xf0] sm:$0xff]
        %v1913 = vld [vmem:[#allocation4 + $0xf8] sm:$0xff]
        %v1914 = vld [vmem:[#allocation4 + $0x100] sm:$0xff]
        %v1915 = vld [vmem:[#allocation4 + $0x108] sm:$0xff]
        %v1916 = vld [vmem:[#allocation4 + $0x110] sm:$0xff]
        %v1917 = vld [vmem:[#allocation4 + $0x118] sm:$0xff]
        %v1918 = vld [vmem:[#allocation4 + $0x120] sm:$0xff]
        %v1919 = vld [vmem:[#allocation4 + $0x128] sm:$0xff]
        %v1920 = vld [vmem:[#allocation4 + $0x130] sm:$0xff]
        %v1921 = vld [vmem:[#allocation4 + $0x138] sm:$0xff]
        %v1922 = vld [vmem:[#allocation4 + $0x140] sm:$0xff]
        %v1923 = vld [vmem:[#allocation4 + $0x148] sm:$0xff]
        %v1924 = vld [vmem:[#allocation4 + $0x150] sm:$0xff]
        %v1925 = vld [vmem:[#allocation4 + $0x158] sm:$0xff]
        %v1926 = vld [vmem:[#allocation4 + $0x160] sm:$0xff]
        %v1927 = vld [vmem:[#allocation4 + $0x168] sm:$0xff]
        %v1928 = vld [vmem:[#allocation4 + $0x170] sm:$0xff]
        %v1929 = vld [vmem:[#allocation4 + $0x178] sm:$0xff]
        %v1930 = vld [vmem:[#allocation4 + $0x180] sm:$0xff]
        %v1931 = vld [vmem:[#allocation4 + $0x188] sm:$0xff]
        %v1932 = vld [vmem:[#allocation4 + $0x190] sm:$0xff]
        %v1933 = vld [vmem:[#allocation4 + $0x198] sm:$0xff]
        %v1934 = vld [vmem:[#allocation4 + $0x1a0] sm:$0xff]
        %v1935 = vld [vmem:[#allocation4 + $0x1a8] sm:$0xff]
        %v1936 = vld [vmem:[#allocation4 + $0x1b0] sm:$0xff]
        %v1937 = vld [vmem:[#allocation4 + $0x1b8] sm:$0xff]
        %v1938 = vld [vmem:[#allocation4 + $0x1c0] sm:$0xff]
        %v1939 = vld [vmem:[#allocation4 + $0x1c8] sm:$0xff]
        %v1940 = vld [vmem:[#allocation4 + $0x1d0] sm:$0xff]
        %v1941 = vld [vmem:[#allocation4 + $0x1d8] sm:$0xff]
        %v1942 = vld [vmem:[#allocation4 + $0x1e0] sm:$0xff]
        %v1943 = vld [vmem:[#allocation4 + $0x1e8] sm:$0xff]
        %v1944 = vld [vmem:[#allocation4 + $0x1f0] sm:$0xff]
        %v1945 = vld [vmem:[#allocation4 + $0x1f8] sm:$0xff]
        %v1946 = vld [vmem:[#allocation4 + $0x200] sm:$0xff]
        %v1947 = vld [vmem:[#allocation4 + $0x208] sm:$0xff]
        %v1948 = vld [vmem:[#allocation4 + $0x210] sm:$0xff]
        %v1949 = vld [vmem:[#allocation4 + $0x218] sm:$0xff]
        %v1950 = vld [vmem:[#allocation4 + $0x220] sm:$0xff]
        %v1951 = vld [vmem:[#allocation4 + $0x228] sm:$0xff]
        %v1952 = vld [vmem:[#allocation4 + $0x230] sm:$0xff]
        %v1953 = vld [vmem:[#allocation4 + $0x238] sm:$0xff]
        %v1954 = vld [vmem:[#allocation4 + $0x240] sm:$0xff]
        %v1955 = vld [vmem:[#allocation4 + $0x248] sm:$0xff]
        %v1956 = vld [vmem:[#allocation4 + $0x250] sm:$0xff]
        %v1957 = vld [vmem:[#allocation4 + $0x258] sm:$0xff]
        %v1958 = vld [vmem:[#allocation4 + $0x260] sm:$0xff]
        %v1959 = vld [vmem:[#allocation4 + $0x268] sm:$0xff]
        %v1960 = vld [vmem:[#allocation4 + $0x270] sm:$0xff]
        %v1961 = vld [vmem:[#allocation4 + $0x278] sm:$0xff]
        %v1962 = vld [vmem:[#allocation4 + $0x280] sm:$0xff]
        %v1963 = vld [vmem:[#allocation4 + $0x288] sm:$0xff]
        %v1964 = vld [vmem:[#allocation4 + $0x290] sm:$0xff]
        %v1965 = vld [vmem:[#allocation4 + $0x298] sm:$0xff]
        %v1966 = vld [vmem:[#allocation4 + $0x2a0] sm:$0xff]
        %v1967 = vld [vmem:[#allocation4 + $0x2a8] sm:$0xff]
        %v1968 = vld [vmem:[#allocation4 + $0x2b0] sm:$0xff]
        %v1969 = vld [vmem:[#allocation4 + $0x2b8] sm:$0xff]
        %v1970 = vld [vmem:[#allocation4 + $0x2c0] sm:$0xff]
        %v1971 = vld [vmem:[#allocation4 + $0x2c8] sm:$0xff]
        %v1972 = vld [vmem:[#allocation4 + $0x2d0] sm:$0xff]
        %v1973 = vld [vmem:[#allocation4 + $0x2d8] sm:$0xff]
        %v1974 = vld [vmem:[#allocation4 + $0x2e0] sm:$0xff]
        %v1975 = vld [vmem:[#allocation4 + $0x2e8] sm:$0xff]
        %v1976 = vld [vmem:[#allocation4 + $0x2f0] sm:$0xff]
        %v1977 = vld [vmem:[#allocation4 + $0x2f8] sm:$0xff]
        %v1978 = vld [vmem:[#allocation4 + $0x300] sm:$0xff]
        %v1979 = vld [vmem:[#allocation4 + $0x308] sm:$0xff]
        %v1980 = vld [vmem:[#allocation4 + $0x310] sm:$0xff]
        %v1981 = vld [vmem:[#allocation4 + $0x318] sm:$0xff]
        %v1982 = vld [vmem:[#allocation4 + $0x320] sm:$0xff]
        %v1983 = vld [vmem:[#allocation4 + $0x328] sm:$0xff]
        %v1984 = vld [vmem:[#allocation4 + $0x330] sm:$0xff]
        %v1985 = vld [vmem:[#allocation4 + $0x338] sm:$0xff]
        %v1986 = vld [vmem:[#allocation4 + $0x340] sm:$0xff]
        %v1987 = vld [vmem:[#allocation4 + $0x348] sm:$0xff]
        %v1988 = vld [vmem:[#allocation4 + $0x350] sm:$0xff]
        %v1989 = vld [vmem:[#allocation4 + $0x358] sm:$0xff]
        %v1990 = vld [vmem:[#allocation4 + $0x360] sm:$0xff]
        %v1991 = vld [vmem:[#allocation4 + $0x368] sm:$0xff]
        %v1992 = vld [vmem:[#allocation4 + $0x370] sm:$0xff]
        %v1993 = vld [vmem:[#allocation4 + $0x378] sm:$0xff]
        %v1994 = vld [vmem:[#allocation4 + $0x380] sm:$0xff]
        %v1995 = vld [vmem:[#allocation4 + $0x388] sm:$0xff]
        %v1996 = vld [vmem:[#allocation4 + $0x390] sm:$0xff]
        %v1997 = vld [vmem:[#allocation4 + $0x398] sm:$0xff]
        %v1998 = vld [vmem:[#allocation4 + $0x3a0] sm:$0xff]
        %v1999 = vld [vmem:[#allocation4 + $0x3a8] sm:$0xff]
        %v2000 = vld [vmem:[#allocation4 + $0x3b0] sm:$0xff]
        %v2001 = vld [vmem:[#allocation4 + $0x3b8] sm:$0xff]
        %v2002 = vld [vmem:[#allocation4 + $0x3c0] sm:$0xff]
        %v2003 = vld [vmem:[#allocation4 + $0x3c8] sm:$0xff]
        %v2004 = vld [vmem:[#allocation4 + $0x3d0] sm:$0xff]
        %v2005 = vld [vmem:[#allocation4 + $0x3d8] sm:$0xff]
        %v2006 = vld [vmem:[#allocation4 + $0x3e0] sm:$0xff]
        %v2007 = vld [vmem:[#allocation4 + $0x3e8] sm:$0xff]
        %v2008 = vld [vmem:[#allocation4 + $0x3f0] sm:$0xff]
        %v2009 = vld [vmem:[#allocation4 + $0x3f8] sm:$0xff]
        %2010 = vmatpush.msra.mxu0 %v1942
        %2011 = vmatpush.msra.mxu0 %v1938
        %2012 = vmatpush.msra.mxu0 %v1934
        %2013 = vmatpush.msra.mxu0 %v1930
        %2014 = vmatpush.msra.mxu0 %v1926
        %2015 = vmatpush.msra.mxu0 %v1922
        %2016 = vmatpush.msra.mxu0 %v1918
        %2017 = vmatpush.msra.mxu0 %v1914
        %2018 = vmatpush.msra.mxu0 %v1910
        %2019 = vmatpush.msra.mxu0 %v1906
        %2020 = vmatpush.msra.mxu0 %v1902
        %2021 = vmatpush.msra.mxu0 %v1898
        %2022 = vmatpush.msra.mxu0 %v1894
        %2023 = vmatpush.msra.mxu0 %v1890
        %2024 = vmatpush.msra.mxu0 %v1886
        %2025 = vmatpush.msra.mxu0 %v1882
        %2026 = vmatmul.f32.gmra.mxu0 %v1331
        %v2027 = vpop.f32.mrf.mxu0
        %v2028 = vadd.f32 0.0, %v2027
        %2029 = vmatmul.f32.gmra.mxu0 %v1334
        %v2030 = vpop.f32.mrf.mxu0
        %v2031 = vadd.f32 0.0, %v2030
        %2032 = vmatmul.f32.gmra.mxu0 %v1337
        %v2033 = vpop.f32.mrf.mxu0
        %v2034 = vadd.f32 0.0, %v2033
        %2035 = vmatmul.f32.gmra.mxu0 %v1340
        %v2036 = vpop.f32.mrf.mxu0
        %v2037 = vadd.f32 0.0, %v2036
        %2038 = vmatmul.f32.gmra.mxu0 %v1343
        %v2039 = vpop.f32.mrf.mxu0
        %v2040 = vadd.f32 0.0, %v2039
        %2041 = vmatmul.f32.gmra.mxu0 %v1346
        %v2042 = vpop.f32.mrf.mxu0
        %v2043 = vadd.f32 0.0, %v2042
        %2044 = vmatmul.f32.gmra.mxu0 %v1349
        %v2045 = vpop.f32.mrf.mxu0
        %v2046 = vadd.f32 0.0, %v2045
        %2047 = vmatmul.f32.gmra.mxu0 %v1352
        %v2048 = vpop.f32.mrf.mxu0
        %v2049 = vadd.f32 0.0, %v2048
        %2050 = vmatmul.f32.gmra.mxu0 %v1355
        %v2051 = vpop.f32.mrf.mxu0
        %v2052 = vadd.f32 0.0, %v2051
        %2053 = vmatmul.f32.gmra.mxu0 %v1358
        %v2054 = vpop.f32.mrf.mxu0
        %v2055 = vadd.f32 0.0, %v2054
        %2056 = vmatmul.f32.gmra.mxu0 %v1361
        %v2057 = vpop.f32.mrf.mxu0
        %v2058 = vadd.f32 0.0, %v2057
        %2059 = vmatmul.f32.gmra.mxu0 %v1364
        %v2060 = vpop.f32.mrf.mxu0
        %v2061 = vadd.f32 0.0, %v2060
        %2062 = vmatmul.f32.gmra.mxu0 %v1367
        %v2063 = vpop.f32.mrf.mxu0
        %v2064 = vadd.f32 0.0, %v2063
        %2065 = vmatmul.f32.gmra.mxu0 %v1370
        %v2066 = vpop.f32.mrf.mxu0
        %v2067 = vadd.f32 0.0, %v2066
        %2068 = vmatmul.f32.gmra.mxu0 %v1373
        %v2069 = vpop.f32.mrf.mxu0
        %v2070 = vadd.f32 0.0, %v2069
        %2071 = vmatmul.f32.gmra.mxu0 %v1376
        %v2072 = vpop.f32.mrf.mxu0
        %v2073 = vadd.f32 0.0, %v2072
        %2074 = vdwg.mxu0
        %2075 = vmatpush.msra.mxu0 %v2006
        %2076 = vmatpush.msra.mxu0 %v2002
        %2077 = vmatpush.msra.mxu0 %v1998
        %2078 = vmatpush.msra.mxu0 %v1994
        %2079 = vmatpush.msra.mxu0 %v1990
        %2080 = vmatpush.msra.mxu0 %v1986
        %2081 = vmatpush.msra.mxu0 %v1982
        %2082 = vmatpush.msra.mxu0 %v1978
        %2083 = vmatpush.msra.mxu0 %v1974
        %2084 = vmatpush.msra.mxu0 %v1970
        %2085 = vmatpush.msra.mxu0 %v1966
        %2086 = vmatpush.msra.mxu0 %v1962
        %2087 = vmatpush.msra.mxu0 %v1958
        %2088 = vmatpush.msra.mxu0 %v1954
        %2089 = vmatpush.msra.mxu0 %v1950
        %2090 = vmatpush.msra.mxu0 %v1946
        %2091 = vmatmul.f32.gmra.mxu0 %v1396
        %v2092 = vpop.f32.mrf.mxu0
        %v2093 = vadd.f32 %v2028, %v2092
        %2094 = vmatmul.f32.gmra.mxu0 %v1399
        %v2095 = vpop.f32.mrf.mxu0
        %v2096 = vadd.f32 %v2031, %v2095
        %2097 = vmatmul.f32.gmra.mxu0 %v1402
        %v2098 = vpop.f32.mrf.mxu0
        %v2099 = vadd.f32 %v2034, %v2098
        %2100 = vmatmul.f32.gmra.mxu0 %v1405
        %v2101 = vpop.f32.mrf.mxu0
        %v2102 = vadd.f32 %v2037, %v2101
        %2103 = vmatmul.f32.gmra.mxu0 %v1408
        %v2104 = vpop.f32.mrf.mxu0
        %v2105 = vadd.f32 %v2040, %v2104
        %2106 = vmatmul.f32.gmra.mxu0 %v1411
        %v2107 = vpop.f32.mrf.mxu0
        %v2108 = vadd.f32 %v2043, %v2107
        %2109 = vmatmul.f32.gmra.mxu0 %v1414
        %v2110 = vpop.f32.mrf.mxu0
        %v2111 = vadd.f32 %v2046, %v2110
        %2112 = vmatmul.f32.gmra.mxu0 %v1417
        %v2113 = vpop.f32.mrf.mxu0
        %v2114 = vadd.f32 %v2049, %v2113
        %2115 = vmatmul.f32.gmra.mxu0 %v1420
        %v2116 = vpop.f32.mrf.mxu0
        %v2117 = vadd.f32 %v2052, %v2116
        %2118 = vmatmul.f32.gmra.mxu0 %v1423
        %v2119 = vpop.f32.mrf.mxu0
        %v2120 = vadd.f32 %v2055, %v2119
        %2121 = vmatmul.f32.gmra.mxu0 %v1426
        %v2122 = vpop.f32.mrf.mxu0
        %v2123 = vadd.f32 %v2058, %v2122
        %2124 = vmatmul.f32.gmra.mxu0 %v1429
        %v2125 = vpop.f32.mrf.mxu0
        %v2126 = vadd.f32 %v2061, %v2125
        %2127 = vmatmul.f32.gmra.mxu0 %v1432
        %v2128 = vpop.f32.mrf.mxu0
        %v2129 = vadd.f32 %v2064, %v2128
        %2130 = vmatmul.f32.gmra.mxu0 %v1435
        %v2131 = vpop.f32.mrf.mxu0
        %v2132 = vadd.f32 %v2067, %v2131
        %2133 = vmatmul.f32.gmra.mxu0 %v1438
        %v2134 = vpop.f32.mrf.mxu0
        %v2135 = vadd.f32 %v2070, %v2134
        %2136 = vmatmul.f32.gmra.mxu0 %v1441
        %v2137 = vpop.f32.mrf.mxu0
        %v2138 = vadd.f32 %v2073, %v2137
        %2139 = vdwg.mxu0
        %2140 = vmatpush.msra.mxu0 %v1943
        %2141 = vmatpush.msra.mxu0 %v1939
        %2142 = vmatpush.msra.mxu0 %v1935
        %2143 = vmatpush.msra.mxu0 %v1931
        %2144 = vmatpush.msra.mxu0 %v1927
        %2145 = vmatpush.msra.mxu0 %v1923
        %2146 = vmatpush.msra.mxu0 %v1919
        %2147 = vmatpush.msra.mxu0 %v1915
        %2148 = vmatpush.msra.mxu0 %v1911
        %2149 = vmatpush.msra.mxu0 %v1907
        %2150 = vmatpush.msra.mxu0 %v1903
        %2151 = vmatpush.msra.mxu0 %v1899
        %2152 = vmatpush.msra.mxu0 %v1895
        %2153 = vmatpush.msra.mxu0 %v1891
        %2154 = vmatpush.msra.mxu0 %v1887
        %2155 = vmatpush.msra.mxu0 %v1883
        %2156 = vmatmul.f32.gmra.mxu0 %v1331
        %v2157 = vpop.f32.mrf.mxu0
        %v2158 = vadd.f32 0.0, %v2157
        %2159 = vmatmul.f32.gmra.mxu0 %v1334
        %v2160 = vpop.f32.mrf.mxu0
        %v2161 = vadd.f32 0.0, %v2160
        %2162 = vmatmul.f32.gmra.mxu0 %v1337
        %v2163 = vpop.f32.mrf.mxu0
        %v2164 = vadd.f32 0.0, %v2163
        %2165 = vmatmul.f32.gmra.mxu0 %v1340
        %v2166 = vpop.f32.mrf.mxu0
        %v2167 = vadd.f32 0.0, %v2166
        %2168 = vmatmul.f32.gmra.mxu0 %v1343
        %v2169 = vpop.f32.mrf.mxu0
        %v2170 = vadd.f32 0.0, %v2169
        %2171 = vmatmul.f32.gmra.mxu0 %v1346
        %v2172 = vpop.f32.mrf.mxu0
        %v2173 = vadd.f32 0.0, %v2172
        %2174 = vmatmul.f32.gmra.mxu0 %v1349
        %v2175 = vpop.f32.mrf.mxu0
        %v2176 = vadd.f32 0.0, %v2175
        %2177 = vmatmul.f32.gmra.mxu0 %v1352
        %v2178 = vpop.f32.mrf.mxu0
        %v2179 = vadd.f32 0.0, %v2178
        %2180 = vmatmul.f32.gmra.mxu0 %v1355
        %v2181 = vpop.f32.mrf.mxu0
        %v2182 = vadd.f32 0.0, %v2181
        %2183 = vmatmul.f32.gmra.mxu0 %v1358
        %v2184 = vpop.f32.mrf.mxu0
        %v2185 = vadd.f32 0.0, %v2184
        %2186 = vmatmul.f32.gmra.mxu0 %v1361
        %v2187 = vpop.f32.mrf.mxu0
        %v2188 = vadd.f32 0.0, %v2187
        %2189 = vmatmul.f32.gmra.mxu0 %v1364
        %v2190 = vpop.f32.mrf.mxu0
        %v2191 = vadd.f32 0.0, %v2190
        %2192 = vmatmul.f32.gmra.mxu0 %v1367
        %v2193 = vpop.f32.mrf.mxu0
        %v2194 = vadd.f32 0.0, %v2193
        %2195 = vmatmul.f32.gmra.mxu0 %v1370
        %v2196 = vpop.f32.mrf.mxu0
        %v2197 = vadd.f32 0.0, %v2196
        %2198 = vmatmul.f32.gmra.mxu0 %v1373
        %v2199 = vpop.f32.mrf.mxu0
        %v2200 = vadd.f32 0.0, %v2199
        %2201 = vmatmul.f32.gmra.mxu0 %v1376
        %v2202 = vpop.f32.mrf.mxu0
        %v2203 = vadd.f32 0.0, %v2202
        %2204 = vdwg.mxu0
        %2205 = vmatpush.msra.mxu0 %v2007
        %2206 = vmatpush.msra.mxu0 %v2003
        %2207 = vmatpush.msra.mxu0 %v1999
        %2208 = vmatpush.msra.mxu0 %v1995
        %2209 = vmatpush.msra.mxu0 %v1991
        %2210 = vmatpush.msra.mxu0 %v1987
        %2211 = vmatpush.msra.mxu0 %v1983
        %2212 = vmatpush.msra.mxu0 %v1979
        %2213 = vmatpush.msra.mxu0 %v1975
        %2214 = vmatpush.msra.mxu0 %v1971
        %2215 = vmatpush.msra.mxu0 %v1967
        %2216 = vmatpush.msra.mxu0 %v1963
        %2217 = vmatpush.msra.mxu0 %v1959
        %2218 = vmatpush.msra.mxu0 %v1955
        %2219 = vmatpush.msra.mxu0 %v1951
        %2220 = vmatpush.msra.mxu0 %v1947
        %2221 = vmatmul.f32.gmra.mxu0 %v1396
        %v2222 = vpop.f32.mrf.mxu0
        %v2223 = vadd.f32 %v2158, %v2222
        %2224 = vmatmul.f32.gmra.mxu0 %v1399
        %v2225 = vpop.f32.mrf.mxu0
        %v2226 = vadd.f32 %v2161, %v2225
        %2227 = vmatmul.f32.gmra.mxu0 %v1402
        %v2228 = vpop.f32.mrf.mxu0
        %v2229 = vadd.f32 %v2164, %v2228
        %2230 = vmatmul.f32.gmra.mxu0 %v1405
        %v2231 = vpop.f32.mrf.mxu0
        %v2232 = vadd.f32 %v2167, %v2231
        %2233 = vmatmul.f32.gmra.mxu0 %v1408
        %v2234 = vpop.f32.mrf.mxu0
        %v2235 = vadd.f32 %v2170, %v2234
        %2236 = vmatmul.f32.gmra.mxu0 %v1411
        %v2237 = vpop.f32.mrf.mxu0
        %v2238 = vadd.f32 %v2173, %v2237
        %2239 = vmatmul.f32.gmra.mxu0 %v1414
        %v2240 = vpop.f32.mrf.mxu0
        %v2241 = vadd.f32 %v2176, %v2240
        %2242 = vmatmul.f32.gmra.mxu0 %v1417
        %v2243 = vpop.f32.mrf.mxu0
        %v2244 = vadd.f32 %v2179, %v2243
        %2245 = vmatmul.f32.gmra.mxu0 %v1420
        %v2246 = vpop.f32.mrf.mxu0
        %v2247 = vadd.f32 %v2182, %v2246
        %2248 = vmatmul.f32.gmra.mxu0 %v1423
        %v2249 = vpop.f32.mrf.mxu0
        %v2250 = vadd.f32 %v2185, %v2249
        %2251 = vmatmul.f32.gmra.mxu0 %v1426
        %v2252 = vpop.f32.mrf.mxu0
        %v2253 = vadd.f32 %v2188, %v2252
        %2254 = vmatmul.f32.gmra.mxu0 %v1429
        %v2255 = vpop.f32.mrf.mxu0
        %v2256 = vadd.f32 %v2191, %v2255
        %2257 = vmatmul.f32.gmra.mxu0 %v1432
        %v2258 = vpop.f32.mrf.mxu0
        %v2259 = vadd.f32 %v2194, %v2258
        %2260 = vmatmul.f32.gmra.mxu0 %v1435
        %v2261 = vpop.f32.mrf.mxu0
        %v2262 = vadd.f32 %v2197, %v2261
        %2263 = vmatmul.f32.gmra.mxu0 %v1438
        %v2264 = vpop.f32.mrf.mxu0
        %v2265 = vadd.f32 %v2200, %v2264
        %2266 = vmatmul.f32.gmra.mxu0 %v1441
        %v2267 = vpop.f32.mrf.mxu0
        %v2268 = vadd.f32 %v2203, %v2267
        %2269 = vdwg.mxu0
        %2270 = vmatpush.msra.mxu0 %v1944
        %2271 = vmatpush.msra.mxu0 %v1940
        %2272 = vmatpush.msra.mxu0 %v1936
        %2273 = vmatpush.msra.mxu0 %v1932
        %2274 = vmatpush.msra.mxu0 %v1928
        %2275 = vmatpush.msra.mxu0 %v1924
        %2276 = vmatpush.msra.mxu0 %v1920
        %2277 = vmatpush.msra.mxu0 %v1916
        %2278 = vmatpush.msra.mxu0 %v1912
        %2279 = vmatpush.msra.mxu0 %v1908
        %2280 = vmatpush.msra.mxu0 %v1904
        %2281 = vmatpush.msra.mxu0 %v1900
        %2282 = vmatpush.msra.mxu0 %v1896
        %2283 = vmatpush.msra.mxu0 %v1892
        %2284 = vmatpush.msra.mxu0 %v1888
        %2285 = vmatpush.msra.mxu0 %v1884
        %2286 = vmatmul.f32.gmra.mxu0 %v1331
        %v2287 = vpop.f32.mrf.mxu0
        %v2288 = vadd.f32 0.0, %v2287
        %2289 = vmatmul.f32.gmra.mxu0 %v1334
        %v2290 = vpop.f32.mrf.mxu0
        %v2291 = vadd.f32 0.0, %v2290
        %2292 = vmatmul.f32.gmra.mxu0 %v1337
        %v2293 = vpop.f32.mrf.mxu0
        %v2294 = vadd.f32 0.0, %v2293
        %2295 = vmatmul.f32.gmra.mxu0 %v1340
        %v2296 = vpop.f32.mrf.mxu0
        %v2297 = vadd.f32 0.0, %v2296
        %2298 = vmatmul.f32.gmra.mxu0 %v1343
        %v2299 = vpop.f32.mrf.mxu0
        %v2300 = vadd.f32 0.0, %v2299
        %2301 = vmatmul.f32.gmra.mxu0 %v1346
        %v2302 = vpop.f32.mrf.mxu0
        %v2303 = vadd.f32 0.0, %v2302
        %2304 = vmatmul.f32.gmra.mxu0 %v1349
        %v2305 = vpop.f32.mrf.mxu0
        %v2306 = vadd.f32 0.0, %v2305
        %2307 = vmatmul.f32.gmra.mxu0 %v1352
        %v2308 = vpop.f32.mrf.mxu0
        %v2309 = vadd.f32 0.0, %v2308
        %2310 = vmatmul.f32.gmra.mxu0 %v1355
        %v2311 = vpop.f32.mrf.mxu0
        %v2312 = vadd.f32 0.0, %v2311
        %2313 = vmatmul.f32.gmra.mxu0 %v1358
        %v2314 = vpop.f32.mrf.mxu0
        %v2315 = vadd.f32 0.0, %v2314
        %2316 = vmatmul.f32.gmra.mxu0 %v1361
        %v2317 = vpop.f32.mrf.mxu0
        %v2318 = vadd.f32 0.0, %v2317
        %2319 = vmatmul.f32.gmra.mxu0 %v1364
        %v2320 = vpop.f32.mrf.mxu0
        %v2321 = vadd.f32 0.0, %v2320
        %2322 = vmatmul.f32.gmra.mxu0 %v1367
        %v2323 = vpop.f32.mrf.mxu0
        %v2324 = vadd.f32 0.0, %v2323
        %2325 = vmatmul.f32.gmra.mxu0 %v1370
        %v2326 = vpop.f32.mrf.mxu0
        %v2327 = vadd.f32 0.0, %v2326
        %2328 = vmatmul.f32.gmra.mxu0 %v1373
        %v2329 = vpop.f32.mrf.mxu0
        %v2330 = vadd.f32 0.0, %v2329
        %2331 = vmatmul.f32.gmra.mxu0 %v1376
        %v2332 = vpop.f32.mrf.mxu0
        %v2333 = vadd.f32 0.0, %v2332
        %2334 = vdwg.mxu0
        %2335 = vmatpush.msra.mxu0 %v2008
        %2336 = vmatpush.msra.mxu0 %v2004
        %2337 = vmatpush.msra.mxu0 %v2000
        %2338 = vmatpush.msra.mxu0 %v1996
        %2339 = vmatpush.msra.mxu0 %v1992
        %2340 = vmatpush.msra.mxu0 %v1988
        %2341 = vmatpush.msra.mxu0 %v1984
        %2342 = vmatpush.msra.mxu0 %v1980
        %2343 = vmatpush.msra.mxu0 %v1976
        %2344 = vmatpush.msra.mxu0 %v1972
        %2345 = vmatpush.msra.mxu0 %v1968
        %2346 = vmatpush.msra.mxu0 %v1964
        %2347 = vmatpush.msra.mxu0 %v1960
        %2348 = vmatpush.msra.mxu0 %v1956
        %2349 = vmatpush.msra.mxu0 %v1952
        %2350 = vmatpush.msra.mxu0 %v1948
        %2351 = vmatmul.f32.gmra.mxu0 %v1396
        %v2352 = vpop.f32.mrf.mxu0
        %v2353 = vadd.f32 %v2288, %v2352
        %2354 = vmatmul.f32.gmra.mxu0 %v1399
        %v2355 = vpop.f32.mrf.mxu0
        %v2356 = vadd.f32 %v2291, %v2355
        %2357 = vmatmul.f32.gmra.mxu0 %v1402
        %v2358 = vpop.f32.mrf.mxu0
        %v2359 = vadd.f32 %v2294, %v2358
        %2360 = vmatmul.f32.gmra.mxu0 %v1405
        %v2361 = vpop.f32.mrf.mxu0
        %v2362 = vadd.f32 %v2297, %v2361
        %2363 = vmatmul.f32.gmra.mxu0 %v1408
        %v2364 = vpop.f32.mrf.mxu0
        %v2365 = vadd.f32 %v2300, %v2364
        %2366 = vmatmul.f32.gmra.mxu0 %v1411
        %v2367 = vpop.f32.mrf.mxu0
        %v2368 = vadd.f32 %v2303, %v2367
        %2369 = vmatmul.f32.gmra.mxu0 %v1414
        %v2370 = vpop.f32.mrf.mxu0
        %v2371 = vadd.f32 %v2306, %v2370
        %2372 = vmatmul.f32.gmra.mxu0 %v1417
        %v2373 = vpop.f32.mrf.mxu0
        %v2374 = vadd.f32 %v2309, %v2373
        %2375 = vmatmul.f32.gmra.mxu0 %v1420
        %v2376 = vpop.f32.mrf.mxu0
        %v2377 = vadd.f32 %v2312, %v2376
        %2378 = vmatmul.f32.gmra.mxu0 %v1423
        %v2379 = vpop.f32.mrf.mxu0
        %v2380 = vadd.f32 %v2315, %v2379
        %2381 = vmatmul.f32.gmra.mxu0 %v1426
        %v2382 = vpop.f32.mrf.mxu0
        %v2383 = vadd.f32 %v2318, %v2382
        %2384 = vmatmul.f32.gmra.mxu0 %v1429
        %v2385 = vpop.f32.mrf.mxu0
        %v2386 = vadd.f32 %v2321, %v2385
        %2387 = vmatmul.f32.gmra.mxu0 %v1432
        %v2388 = vpop.f32.mrf.mxu0
        %v2389 = vadd.f32 %v2324, %v2388
        %2390 = vmatmul.f32.gmra.mxu0 %v1435
        %v2391 = vpop.f32.mrf.mxu0
        %v2392 = vadd.f32 %v2327, %v2391
        %2393 = vmatmul.f32.gmra.mxu0 %v1438
        %v2394 = vpop.f32.mrf.mxu0
        %v2395 = vadd.f32 %v2330, %v2394
        %2396 = vmatmul.f32.gmra.mxu0 %v1441
        %v2397 = vpop.f32.mrf.mxu0
        %v2398 = vadd.f32 %v2333, %v2397
        %2399 = vdwg.mxu0
        %2400 = vmatpush.msra.mxu0 %v1945
        %2401 = vmatpush.msra.mxu0 %v1941
        %2402 = vmatpush.msra.mxu0 %v1937
        %2403 = vmatpush.msra.mxu0 %v1933
        %2404 = vmatpush.msra.mxu0 %v1929
        %2405 = vmatpush.msra.mxu0 %v1925
        %2406 = vmatpush.msra.mxu0 %v1921
        %2407 = vmatpush.msra.mxu0 %v1917
        %2408 = vmatpush.msra.mxu0 %v1913
        %2409 = vmatpush.msra.mxu0 %v1909
        %2410 = vmatpush.msra.mxu0 %v1905
        %2411 = vmatpush.msra.mxu0 %v1901
        %2412 = vmatpush.msra.mxu0 %v1897
        %2413 = vmatpush.msra.mxu0 %v1893
        %2414 = vmatpush.msra.mxu0 %v1889
        %2415 = vmatpush.msra.mxu0 %v1885
        %2416 = vmatmul.f32.gmra.mxu0 %v1331
        %v2417 = vpop.f32.mrf.mxu0
        %v2418 = vadd.f32 0.0, %v2417
        %2419 = vmatmul.f32.gmra.mxu0 %v1334
        %v2420 = vpop.f32.mrf.mxu0
        %v2421 = vadd.f32 0.0, %v2420
        %2422 = vmatmul.f32.gmra.mxu0 %v1337
        %v2423 = vpop.f32.mrf.mxu0
        %v2424 = vadd.f32 0.0, %v2423
        %2425 = vmatmul.f32.gmra.mxu0 %v1340
        %v2426 = vpop.f32.mrf.mxu0
        %v2427 = vadd.f32 0.0, %v2426
        %2428 = vmatmul.f32.gmra.mxu0 %v1343
        %v2429 = vpop.f32.mrf.mxu0
        %v2430 = vadd.f32 0.0, %v2429
        %2431 = vmatmul.f32.gmra.mxu0 %v1346
        %v2432 = vpop.f32.mrf.mxu0
        %v2433 = vadd.f32 0.0, %v2432
        %2434 = vmatmul.f32.gmra.mxu0 %v1349
        %v2435 = vpop.f32.mrf.mxu0
        %v2436 = vadd.f32 0.0, %v2435
        %2437 = vmatmul.f32.gmra.mxu0 %v1352
        %v2438 = vpop.f32.mrf.mxu0
        %v2439 = vadd.f32 0.0, %v2438
        %2440 = vmatmul.f32.gmra.mxu0 %v1355
        %v2441 = vpop.f32.mrf.mxu0
        %v2442 = vadd.f32 0.0, %v2441
        %2443 = vmatmul.f32.gmra.mxu0 %v1358
        %v2444 = vpop.f32.mrf.mxu0
        %v2445 = vadd.f32 0.0, %v2444
        %2446 = vmatmul.f32.gmra.mxu0 %v1361
        %v2447 = vpop.f32.mrf.mxu0
        %v2448 = vadd.f32 0.0, %v2447
        %2449 = vmatmul.f32.gmra.mxu0 %v1364
        %v2450 = vpop.f32.mrf.mxu0
        %v2451 = vadd.f32 0.0, %v2450
        %2452 = vmatmul.f32.gmra.mxu0 %v1367
        %v2453 = vpop.f32.mrf.mxu0
        %v2454 = vadd.f32 0.0, %v2453
        %2455 = vmatmul.f32.gmra.mxu0 %v1370
        %v2456 = vpop.f32.mrf.mxu0
        %v2457 = vadd.f32 0.0, %v2456
        %2458 = vmatmul.f32.gmra.mxu0 %v1373
        %v2459 = vpop.f32.mrf.mxu0
        %v2460 = vadd.f32 0.0, %v2459
        %2461 = vmatmul.f32.gmra.mxu0 %v1376
        %v2462 = vpop.f32.mrf.mxu0
        %v2463 = vadd.f32 0.0, %v2462
        %2464 = vdwg.mxu0
        %2465 = vmatpush.msra.mxu0 %v2009
        %2466 = vmatpush.msra.mxu0 %v2005
        %2467 = vmatpush.msra.mxu0 %v2001
        %2468 = vmatpush.msra.mxu0 %v1997
        %2469 = vmatpush.msra.mxu0 %v1993
        %2470 = vmatpush.msra.mxu0 %v1989
        %2471 = vmatpush.msra.mxu0 %v1985
        %2472 = vmatpush.msra.mxu0 %v1981
        %2473 = vmatpush.msra.mxu0 %v1977
        %2474 = vmatpush.msra.mxu0 %v1973
        %2475 = vmatpush.msra.mxu0 %v1969
        %2476 = vmatpush.msra.mxu0 %v1965
        %2477 = vmatpush.msra.mxu0 %v1961
        %2478 = vmatpush.msra.mxu0 %v1957
        %2479 = vmatpush.msra.mxu0 %v1953
        %2480 = vmatpush.msra.mxu0 %v1949
        %2481 = vmatmul.f32.gmra.mxu0 %v1396
        %v2482 = vpop.f32.mrf.mxu0
        %v2483 = vadd.f32 %v2418, %v2482
        %2484 = vmatmul.f32.gmra.mxu0 %v1399
        %v2485 = vpop.f32.mrf.mxu0
        %v2486 = vadd.f32 %v2421, %v2485
        %2487 = vmatmul.f32.gmra.mxu0 %v1402
        %v2488 = vpop.f32.mrf.mxu0
        %v2489 = vadd.f32 %v2424, %v2488
        %2490 = vmatmul.f32.gmra.mxu0 %v1405
        %v2491 = vpop.f32.mrf.mxu0
        %v2492 = vadd.f32 %v2427, %v2491
        %2493 = vmatmul.f32.gmra.mxu0 %v1408
        %v2494 = vpop.f32.mrf.mxu0
        %v2495 = vadd.f32 %v2430, %v2494
        %2496 = vmatmul.f32.gmra.mxu0 %v1411
        %v2497 = vpop.f32.mrf.mxu0
        %v2498 = vadd.f32 %v2433, %v2497
        %2499 = vmatmul.f32.gmra.mxu0 %v1414
        %v2500 = vpop.f32.mrf.mxu0
        %v2501 = vadd.f32 %v2436, %v2500
        %2502 = vmatmul.f32.gmra.mxu0 %v1417
        %v2503 = vpop.f32.mrf.mxu0
        %v2504 = vadd.f32 %v2439, %v2503
        %2505 = vmatmul.f32.gmra.mxu0 %v1420
        %v2506 = vpop.f32.mrf.mxu0
        %v2507 = vadd.f32 %v2442, %v2506
        %2508 = vmatmul.f32.gmra.mxu0 %v1423
        %v2509 = vpop.f32.mrf.mxu0
        %v2510 = vadd.f32 %v2445, %v2509
        %2511 = vmatmul.f32.gmra.mxu0 %v1426
        %v2512 = vpop.f32.mrf.mxu0
        %v2513 = vadd.f32 %v2448, %v2512
        %2514 = vmatmul.f32.gmra.mxu0 %v1429
        %v2515 = vpop.f32.mrf.mxu0
        %v2516 = vadd.f32 %v2451, %v2515
        %2517 = vmatmul.f32.gmra.mxu0 %v1432
        %v2518 = vpop.f32.mrf.mxu0
        %v2519 = vadd.f32 %v2454, %v2518
        %2520 = vmatmul.f32.gmra.mxu0 %v1435
        %v2521 = vpop.f32.mrf.mxu0
        %v2522 = vadd.f32 %v2457, %v2521
        %2523 = vmatmul.f32.gmra.mxu0 %v1438
        %v2524 = vpop.f32.mrf.mxu0
        %v2525 = vadd.f32 %v2460, %v2524
        %2526 = vmatmul.f32.gmra.mxu0 %v1441
        %v2527 = vpop.f32.mrf.mxu0
        %v2528 = vadd.f32 %v2463, %v2527
        %2529 = vdwg.mxu0
        %v2534 = vrot.slane %v1800, 7
        %v2535 = vrot.slane %v1840, 6
        %v2536 = vrot.slane %v1880, 5
        %vm2537 = vcmask 1040384
        %v2538 = vsel %vm2537, %v1760, %v2534
        %v2539 = vsel %vm1701, %v2535, %v2536
        %vm2540 = vcmask 1041408
        %v2541 = vsel %vm2540, %v2538, %v2539
        %v2542 = vsel %vm1699, %v1760, %v2534
        %v2543 = vsel %vm1703, %v2535, %v2536
        %vm2544 = vcmask 1042433
        %v2545 = vsel %vm2544, %v2542, %v2543
        %v2546 = vrot.slane %v2545, 1
        %v2547 = vsel %vm1701, %v1760, %v2534
        %v2548 = vsel %vm1705, %v2535, %v2536
        %vm2549 = vcmask 1043458
        %v2550 = vsel %vm2549, %v2547, %v2548
        %v2551 = vrot.slane %v2550, 2
        %v2552 = vsel %vm1703, %v1760, %v2534
        %v2553 = vsel %vm1707, %v2535, %v2536
        %vm2554 = vcmask 1044483
        %v2555 = vsel %vm2554, %v2552, %v2553
        %v2556 = vrot.slane %v2555, 3
        %v2557 = vsel %vm1705, %v1760, %v2534
        %v2558 = vsel %vm1709, %v2535, %v2536
        %vm2559 = vcmask 1045508
        %v2560 = vsel %vm2559, %v2557, %v2558
        %v2561 = vrot.slane %v2560, 4
        %v2562 = vsel %vm1707, %v1760, %v2534
        %vm2563 = vcmask 1046528
        %v2564 = vsel %vm2563, %v2536, %v2535
        %vm2565 = vcmask 1046533
        %v2566 = vsel %vm2565, %v2562, %v2564
        %v2567 = vrot.slane %v2566, 5
        %v2568 = vsel %vm1709, %v1760, %v2534
        %v2569 = vsel %vm2537, %v2535, %v2536
        %vm2570 = vcmask 1045504
        %v2571 = vsel %vm2570, %v2569, %v2568
        %v2572 = vrot.slane %v2571, 6
        %v2573 = vsel %vm2563, %v2534, %v1760
        %v2574 = vsel %vm1699, %v2535, %v2536
        %vm2575 = vcmask 1046529
        %v2576 = vsel %vm2575, %v2574, %v2573
        %v2577 = vrot.slane %v2576, 7
        %v2578 = vperm.slane %v2541, 0
        %v2579 = vperm.slane %v2541, 1
        %v2580 = vperm.slane %v2541, 2
        %v2581 = vperm.slane %v2541, 3
        %v2582 = vperm.slane %v2546, 0
        %v2583 = vperm.slane %v2546, 1
        %v2584 = vperm.slane %v2546, 2
        %v2585 = vperm.slane %v2546, 3
        %v2586 = vperm.slane %v2551, 0
        %v2587 = vperm.slane %v2551, 1
        %v2588 = vperm.slane %v2551, 2
        %v2589 = vperm.slane %v2551, 3
        %v2590 = vperm.slane %v2556, 0
        %v2591 = vperm.slane %v2556, 1
        %v2592 = vperm.slane %v2556, 2
        %v2593 = vperm.slane %v2556, 3
        %v2594 = vperm.slane %v2561, 0
        %v2595 = vperm.slane %v2561, 1
        %v2596 = vperm.slane %v2561, 2
        %v2597 = vperm.slane %v2561, 3
        %v2598 = vperm.slane %v2567, 0
        %v2599 = vperm.slane %v2567, 1
        %v2600 = vperm.slane %v2567, 2
        %v2601 = vperm.slane %v2567, 3
        %v2602 = vperm.slane %v2572, 0
        %v2603 = vperm.slane %v2572, 1
        %v2604 = vperm.slane %v2572, 2
        %v2605 = vperm.slane %v2572, 3
        %v2606 = vperm.slane %v2577, 0
        %v2607 = vperm.slane %v2577, 1
        %v2608 = vperm.slane %v2577, 2
        %v2609 = vperm.slane %v2577, 3
        %v2642 = vadd.f32 %v2093, %v2578
        %v2643 = vadd.f32 %v2223, %v2579
        %v2644 = vadd.f32 %v2353, %v2580
        %v2645 = vadd.f32 %v2483, %v2581
        %v2646 = vadd.f32 %v2096, %v2578
        %v2647 = vadd.f32 %v2226, %v2579
        %v2648 = vadd.f32 %v2356, %v2580
        %v2649 = vadd.f32 %v2486, %v2581
        %v2650 = vadd.f32 %v2099, %v2582
        %v2651 = vadd.f32 %v2229, %v2583
        %v2652 = vadd.f32 %v2359, %v2584
        %v2653 = vadd.f32 %v2489, %v2585
        %v2654 = vadd.f32 %v2102, %v2582
        %v2655 = vadd.f32 %v2232, %v2583
        %v2656 = vadd.f32 %v2362, %v2584
        %v2657 = vadd.f32 %v2492, %v2585
        %v2658 = vadd.f32 %v2105, %v2586
        %v2659 = vadd.f32 %v2235, %v2587
        %v2660 = vadd.f32 %v2365, %v2588
        %v2661 = vadd.f32 %v2495, %v2589
        %v2662 = vadd.f32 %v2108, %v2586
        %v2663 = vadd.f32 %v2238, %v2587
        %v2664 = vadd.f32 %v2368, %v2588
        %v2665 = vadd.f32 %v2498, %v2589
        %v2666 = vadd.f32 %v2111, %v2590
        %v2667 = vadd.f32 %v2241, %v2591
        %v2668 = vadd.f32 %v2371, %v2592
        %v2669 = vadd.f32 %v2501, %v2593
        %v2670 = vadd.f32 %v2114, %v2590
        %v2671 = vadd.f32 %v2244, %v2591
        %v2672 = vadd.f32 %v2374, %v2592
        %v2673 = vadd.f32 %v2504, %v2593
        %v2674 = vadd.f32 %v2117, %v2594
        %v2675 = vadd.f32 %v2247, %v2595
        %v2676 = vadd.f32 %v2377, %v2596
        %v2677 = vadd.f32 %v2507, %v2597
        %v2678 = vadd.f32 %v2120, %v2594
        %v2679 = vadd.f32 %v2250, %v2595
        %v2680 = vadd.f32 %v2380, %v2596
        %v2681 = vadd.f32 %v2510, %v2597
        %v2682 = vadd.f32 %v2123, %v2598
        %v2683 = vadd.f32 %v2253, %v2599
        %v2684 = vadd.f32 %v2383, %v2600
        %v2685 = vadd.f32 %v2513, %v2601
        %v2686 = vadd.f32 %v2126, %v2598
        %v2687 = vadd.f32 %v2256, %v2599
        %v2688 = vadd.f32 %v2386, %v2600
        %v2689 = vadd.f32 %v2516, %v2601
        %v2690 = vadd.f32 %v2129, %v2602
        %v2691 = vadd.f32 %v2259, %v2603
        %v2692 = vadd.f32 %v2389, %v2604
        %v2693 = vadd.f32 %v2519, %v2605
        %v2694 = vadd.f32 %v2132, %v2602
        %v2695 = vadd.f32 %v2262, %v2603
        %v2696 = vadd.f32 %v2392, %v2604
        %v2697 = vadd.f32 %v2522, %v2605
        %v2698 = vadd.f32 %v2135, %v2606
        %v2699 = vadd.f32 %v2265, %v2607
        %v2700 = vadd.f32 %v2395, %v2608
        %v2701 = vadd.f32 %v2525, %v2609
        %v2702 = vadd.f32 %v2138, %v2606
        %v2703 = vadd.f32 %v2268, %v2607
        %v2704 = vadd.f32 %v2398, %v2608
        %v2705 = vadd.f32 %v2528, %v2609
        %v2706 = vld [vmem:[%s17] sm:$0xf]
        %v2708 = vperm.slane %v2706, 0
        %v2709 = vperm.slane %v2706, 1
        %v2710 = vperm.slane %v2706, 2
        %v2711 = vperm.slane %v2706, 3
        %v2716 = vadd.f32 %v2642, %v2708
        %v2717 = vadd.f32 %v2643, %v2709
        %v2718 = vadd.f32 %v2644, %v2710
        %v2719 = vadd.f32 %v2645, %v2711
        %v2720 = vadd.f32 %v2646, %v2708
        %v2721 = vadd.f32 %v2647, %v2709
        %v2722 = vadd.f32 %v2648, %v2710
        %v2723 = vadd.f32 %v2649, %v2711
        %v2724 = vadd.f32 %v2650, %v2708
        %v2725 = vadd.f32 %v2651, %v2709
        %v2726 = vadd.f32 %v2652, %v2710
        %v2727 = vadd.f32 %v2653, %v2711
        %v2728 = vadd.f32 %v2654, %v2708
        %v2729 = vadd.f32 %v2655, %v2709
        %v2730 = vadd.f32 %v2656, %v2710
        %v2731 = vadd.f32 %v2657, %v2711
        %v2732 = vadd.f32 %v2658, %v2708
        %v2733 = vadd.f32 %v2659, %v2709
        %v2734 = vadd.f32 %v2660, %v2710
        %v2735 = vadd.f32 %v2661, %v2711
        %v2736 = vadd.f32 %v2662, %v2708
        %v2737 = vadd.f32 %v2663, %v2709
        %v2738 = vadd.f32 %v2664, %v2710
        %v2739 = vadd.f32 %v2665, %v2711
        %v2740 = vadd.f32 %v2666, %v2708
        %v2741 = vadd.f32 %v2667, %v2709
        %v2742 = vadd.f32 %v2668, %v2710
        %v2743 = vadd.f32 %v2669, %v2711
        %v2744 = vadd.f32 %v2670, %v2708
        %v2745 = vadd.f32 %v2671, %v2709
        %v2746 = vadd.f32 %v2672, %v2710
        %v2747 = vadd.f32 %v2673, %v2711
        %v2748 = vadd.f32 %v2674, %v2708
        %v2749 = vadd.f32 %v2675, %v2709
        %v2750 = vadd.f32 %v2676, %v2710
        %v2751 = vadd.f32 %v2677, %v2711
        %v2752 = vadd.f32 %v2678, %v2708
        %v2753 = vadd.f32 %v2679, %v2709
        %v2754 = vadd.f32 %v2680, %v2710
        %v2755 = vadd.f32 %v2681, %v2711
        %v2756 = vadd.f32 %v2682, %v2708
        %v2757 = vadd.f32 %v2683, %v2709
        %v2758 = vadd.f32 %v2684, %v2710
        %v2759 = vadd.f32 %v2685, %v2711
        %v2760 = vadd.f32 %v2686, %v2708
        %v2761 = vadd.f32 %v2687, %v2709
        %v2762 = vadd.f32 %v2688, %v2710
        %v2763 = vadd.f32 %v2689, %v2711
        %v2764 = vadd.f32 %v2690, %v2708
        %v2765 = vadd.f32 %v2691, %v2709
        %v2766 = vadd.f32 %v2692, %v2710
        %v2767 = vadd.f32 %v2693, %v2711
        %v2768 = vadd.f32 %v2694, %v2708
        %v2769 = vadd.f32 %v2695, %v2709
        %v2770 = vadd.f32 %v2696, %v2710
        %v2771 = vadd.f32 %v2697, %v2711
        %v2772 = vadd.f32 %v2698, %v2708
        %v2773 = vadd.f32 %v2699, %v2709
        %v2774 = vadd.f32 %v2700, %v2710
        %v2775 = vadd.f32 %v2701, %v2711
        %v2776 = vadd.f32 %v2702, %v2708
        %v2777 = vadd.f32 %v2703, %v2709
        %v2778 = vadd.f32 %v2704, %v2710
        %v2779 = vadd.f32 %v2705, %v2711
        %v2780 = vmax.f32 %v2716, 0.0
        %v2781 = vmax.f32 %v2717, 0.0
        %v2782 = vmax.f32 %v2718, 0.0
        %v2783 = vmax.f32 %v2719, 0.0
        %v2784 = vmax.f32 %v2720, 0.0
        %v2785 = vmax.f32 %v2721, 0.0
        %v2786 = vmax.f32 %v2722, 0.0
        %v2787 = vmax.f32 %v2723, 0.0
        %v2788 = vmax.f32 %v2724, 0.0
        %v2789 = vmax.f32 %v2725, 0.0
        %v2790 = vmax.f32 %v2726, 0.0
        %v2791 = vmax.f32 %v2727, 0.0
        %v2792 = vmax.f32 %v2728, 0.0
        %v2793 = vmax.f32 %v2729, 0.0
        %v2794 = vmax.f32 %v2730, 0.0
        %v2795 = vmax.f32 %v2731, 0.0
        %v2796 = vmax.f32 %v2732, 0.0
        %v2797 = vmax.f32 %v2733, 0.0
        %v2798 = vmax.f32 %v2734, 0.0
        %v2799 = vmax.f32 %v2735, 0.0
        %v2800 = vmax.f32 %v2736, 0.0
        %v2801 = vmax.f32 %v2737, 0.0
        %v2802 = vmax.f32 %v2738, 0.0
        %v2803 = vmax.f32 %v2739, 0.0
        %v2804 = vmax.f32 %v2740, 0.0
        %v2805 = vmax.f32 %v2741, 0.0
        %v2806 = vmax.f32 %v2742, 0.0
        %v2807 = vmax.f32 %v2743, 0.0
        %v2808 = vmax.f32 %v2744, 0.0
        %v2809 = vmax.f32 %v2745, 0.0
        %v2810 = vmax.f32 %v2746, 0.0
        %v2811 = vmax.f32 %v2747, 0.0
        %v2812 = vmax.f32 %v2748, 0.0
        %v2813 = vmax.f32 %v2749, 0.0
        %v2814 = vmax.f32 %v2750, 0.0
        %v2815 = vmax.f32 %v2751, 0.0
        %v2816 = vmax.f32 %v2752, 0.0
        %v2817 = vmax.f32 %v2753, 0.0
        %v2818 = vmax.f32 %v2754, 0.0
        %v2819 = vmax.f32 %v2755, 0.0
        %v2820 = vmax.f32 %v2756, 0.0
        %v2821 = vmax.f32 %v2757, 0.0
        %v2822 = vmax.f32 %v2758, 0.0
        %v2823 = vmax.f32 %v2759, 0.0
        %v2824 = vmax.f32 %v2760, 0.0
        %v2825 = vmax.f32 %v2761, 0.0
        %v2826 = vmax.f32 %v2762, 0.0
        %v2827 = vmax.f32 %v2763, 0.0
        %v2828 = vmax.f32 %v2764, 0.0
        %v2829 = vmax.f32 %v2765, 0.0
        %v2830 = vmax.f32 %v2766, 0.0
        %v2831 = vmax.f32 %v2767, 0.0
        %v2832 = vmax.f32 %v2768, 0.0
        %v2833 = vmax.f32 %v2769, 0.0
        %v2834 = vmax.f32 %v2770, 0.0
        %v2835 = vmax.f32 %v2771, 0.0
        %v2836 = vmax.f32 %v2772, 0.0
        %v2837 = vmax.f32 %v2773, 0.0
        %v2838 = vmax.f32 %v2774, 0.0
        %v2839 = vmax.f32 %v2775, 0.0
        %v2840 = vmax.f32 %v2776, 0.0
        %v2841 = vmax.f32 %v2777, 0.0
        %v2842 = vmax.f32 %v2778, 0.0
        %v2843 = vmax.f32 %v2779, 0.0
        %v2844 = vld [vmem:[%s19] sm:$0xff]
        %v2845 = vld [vmem:[%s19 + $0x8] sm:$0xff]
        %v2846 = vld [vmem:[%s19 + $0x10] sm:$0xff]
        %v2847 = vld [vmem:[%s19 + $0x18] sm:$0xff]
        %v2848 = vld [vmem:[%s19 + $0x20] sm:$0xff]
        %v2849 = vld [vmem:[%s19 + $0x28] sm:$0xff]
        %v2850 = vld [vmem:[%s19 + $0x30] sm:$0xff]
        %v2851 = vld [vmem:[%s19 + $0x38] sm:$0xff]
        %v2852 = vld [vmem:[%s19 + $0x40] sm:$0xff]
        %v2853 = vld [vmem:[%s19 + $0x48] sm:$0xff]
        %v2854 = vld [vmem:[%s19 + $0x50] sm:$0xff]
        %v2855 = vld [vmem:[%s19 + $0x58] sm:$0xff]
        %v2856 = vld [vmem:[%s19 + $0x60] sm:$0xff]
        %v2857 = vld [vmem:[%s19 + $0x68] sm:$0xff]
        %v2858 = vld [vmem:[%s19 + $0x70] sm:$0xff]
        %v2859 = vld [vmem:[%s19 + $0x78] sm:$0xff]
        %v2860 = vld [vmem:[%s19 + $0x80] sm:$0xff]
        %v2861 = vld [vmem:[%s19 + $0x88] sm:$0xff]
        %v2862 = vld [vmem:[%s19 + $0x90] sm:$0xff]
        %v2863 = vld [vmem:[%s19 + $0x98] sm:$0xff]
        %v2864 = vld [vmem:[%s19 + $0xa0] sm:$0xff]
        %v2865 = vld [vmem:[%s19 + $0xa8] sm:$0xff]
        %v2866 = vld [vmem:[%s19 + $0xb0] sm:$0xff]
        %v2867 = vld [vmem:[%s19 + $0xb8] sm:$0xff]
        %v2868 = vld [vmem:[%s19 + $0xc0] sm:$0xff]
        %v2869 = vld [vmem:[%s19 + $0xc8] sm:$0xff]
        %v2870 = vld [vmem:[%s19 + $0xd0] sm:$0xff]
        %v2871 = vld [vmem:[%s19 + $0xd8] sm:$0xff]
        %v2872 = vld [vmem:[%s19 + $0xe0] sm:$0xff]
        %v2873 = vld [vmem:[%s19 + $0xe8] sm:$0xff]
        %v2874 = vld [vmem:[%s19 + $0xf0] sm:$0xff]
        %v2875 = vld [vmem:[%s19 + $0xf8] sm:$0xff]
        %v2876 = vld [vmem:[%s19 + $0x100] sm:$0xff]
        %v2877 = vld [vmem:[%s19 + $0x108] sm:$0xff]
        %v2878 = vld [vmem:[%s19 + $0x110] sm:$0xff]
        %v2879 = vld [vmem:[%s19 + $0x118] sm:$0xff]
        %v2880 = vld [vmem:[%s19 + $0x120] sm:$0xff]
        %v2881 = vld [vmem:[%s19 + $0x128] sm:$0xff]
        %v2882 = vld [vmem:[%s19 + $0x130] sm:$0xff]
        %v2883 = vld [vmem:[%s19 + $0x138] sm:$0xff]
        %v2884 = vld [vmem:[%s19 + $0x140] sm:$0xff]
        %v2885 = vld [vmem:[%s19 + $0x148] sm:$0xff]
        %v2886 = vld [vmem:[%s19 + $0x150] sm:$0xff]
        %v2887 = vld [vmem:[%s19 + $0x158] sm:$0xff]
        %v2888 = vld [vmem:[%s19 + $0x160] sm:$0xff]
        %v2889 = vld [vmem:[%s19 + $0x168] sm:$0xff]
        %v2890 = vld [vmem:[%s19 + $0x170] sm:$0xff]
        %v2891 = vld [vmem:[%s19 + $0x178] sm:$0xff]
        %v2892 = vld [vmem:[%s19 + $0x180] sm:$0xff]
        %v2893 = vld [vmem:[%s19 + $0x188] sm:$0xff]
        %v2894 = vld [vmem:[%s19 + $0x190] sm:$0xff]
        %v2895 = vld [vmem:[%s19 + $0x198] sm:$0xff]
        %v2896 = vld [vmem:[%s19 + $0x1a0] sm:$0xff]
        %v2897 = vld [vmem:[%s19 + $0x1a8] sm:$0xff]
        %v2898 = vld [vmem:[%s19 + $0x1b0] sm:$0xff]
        %v2899 = vld [vmem:[%s19 + $0x1b8] sm:$0xff]
        %v2900 = vld [vmem:[%s19 + $0x1c0] sm:$0xff]
        %v2901 = vld [vmem:[%s19 + $0x1c8] sm:$0xff]
        %v2902 = vld [vmem:[%s19 + $0x1d0] sm:$0xff]
        %v2903 = vld [vmem:[%s19 + $0x1d8] sm:$0xff]
        %v2904 = vld [vmem:[%s19 + $0x1e0] sm:$0xff]
        %v2905 = vld [vmem:[%s19 + $0x1e8] sm:$0xff]
        %v2906 = vld [vmem:[%s19 + $0x1f0] sm:$0xff]
        %v2907 = vld [vmem:[%s19 + $0x1f8] sm:$0xff]
        %v2908 = vld [vmem:[%s21] sm:$0x1]
        %v2910 = vperm.slane %v2908, 0
        %2912 = vmatpush.msra.mxu0 %v2859
        %2913 = vmatpush.msra.mxu0 %v2858
        %2914 = vmatpush.msra.mxu0 %v2857
        %2915 = vmatpush.msra.mxu0 %v2856
        %2916 = vmatpush.msra.mxu0 %v2855
        %2917 = vmatpush.msra.mxu0 %v2854
        %2918 = vmatpush.msra.mxu0 %v2853
        %2919 = vmatpush.msra.mxu0 %v2852
        %2920 = vmatpush.msra.mxu0 %v2851
        %2921 = vmatpush.msra.mxu0 %v2850
        %2922 = vmatpush.msra.mxu0 %v2849
        %2923 = vmatpush.msra.mxu0 %v2848
        %2924 = vmatpush.msra.mxu0 %v2847
        %2925 = vmatpush.msra.mxu0 %v2846
        %2926 = vmatpush.msra.mxu0 %v2845
        %2927 = vmatpush.msra.mxu0 %v2844
        %2928 = vmatmul.f32.gmra.mxu0 %v2780
        %v2929 = vpop.f32.mrf.mxu0
        %v2930 = vadd.f32 %v2910, %v2929
        %2931 = vmatmul.f32.gmra.mxu0 %v2784
        %v2932 = vpop.f32.mrf.mxu0
        %v2933 = vadd.f32 %v2910, %v2932
        %2934 = vmatmul.f32.gmra.mxu0 %v2788
        %v2935 = vpop.f32.mrf.mxu0
        %v2936 = vadd.f32 %v2910, %v2935
        %2937 = vmatmul.f32.gmra.mxu0 %v2792
        %v2938 = vpop.f32.mrf.mxu0
        %v2939 = vadd.f32 %v2910, %v2938
        %2940 = vmatmul.f32.gmra.mxu0 %v2796
        %v2941 = vpop.f32.mrf.mxu0
        %v2942 = vadd.f32 %v2910, %v2941
        %2943 = vmatmul.f32.gmra.mxu0 %v2800
        %v2944 = vpop.f32.mrf.mxu0
        %v2945 = vadd.f32 %v2910, %v2944
        %2946 = vmatmul.f32.gmra.mxu0 %v2804
        %v2947 = vpop.f32.mrf.mxu0
        %v2948 = vadd.f32 %v2910, %v2947
        %2949 = vmatmul.f32.gmra.mxu0 %v2808
        %v2950 = vpop.f32.mrf.mxu0
        %v2951 = vadd.f32 %v2910, %v2950
        %2952 = vmatmul.f32.gmra.mxu0 %v2812
        %v2953 = vpop.f32.mrf.mxu0
        %v2954 = vadd.f32 %v2910, %v2953
        %2955 = vmatmul.f32.gmra.mxu0 %v2816
        %v2956 = vpop.f32.mrf.mxu0
        %v2957 = vadd.f32 %v2910, %v2956
        %2958 = vmatmul.f32.gmra.mxu0 %v2820
        %v2959 = vpop.f32.mrf.mxu0
        %v2960 = vadd.f32 %v2910, %v2959
        %2961 = vmatmul.f32.gmra.mxu0 %v2824
        %v2962 = vpop.f32.mrf.mxu0
        %v2963 = vadd.f32 %v2910, %v2962
        %2964 = vmatmul.f32.gmra.mxu0 %v2828
        %v2965 = vpop.f32.mrf.mxu0
        %v2966 = vadd.f32 %v2910, %v2965
        %2967 = vmatmul.f32.gmra.mxu0 %v2832
        %v2968 = vpop.f32.mrf.mxu0
        %v2969 = vadd.f32 %v2910, %v2968
        %2970 = vmatmul.f32.gmra.mxu0 %v2836
        %v2971 = vpop.f32.mrf.mxu0
        %v2972 = vadd.f32 %v2910, %v2971
        %2973 = vmatmul.f32.gmra.mxu0 %v2840
        %v2974 = vpop.f32.mrf.mxu0
        %v2975 = vadd.f32 %v2910, %v2974
        %2976 = vdwg.mxu0
        %2977 = vmatpush.msra.mxu0 %v2875
        %2978 = vmatpush.msra.mxu0 %v2874
        %2979 = vmatpush.msra.mxu0 %v2873
        %2980 = vmatpush.msra.mxu0 %v2872
        %2981 = vmatpush.msra.mxu0 %v2871
        %2982 = vmatpush.msra.mxu0 %v2870
        %2983 = vmatpush.msra.mxu0 %v2869
        %2984 = vmatpush.msra.mxu0 %v2868
        %2985 = vmatpush.msra.mxu0 %v2867
        %2986 = vmatpush.msra.mxu0 %v2866
        %2987 = vmatpush.msra.mxu0 %v2865
        %2988 = vmatpush.msra.mxu0 %v2864
        %2989 = vmatpush.msra.mxu0 %v2863
        %2990 = vmatpush.msra.mxu0 %v2862
        %2991 = vmatpush.msra.mxu0 %v2861
        %2992 = vmatpush.msra.mxu0 %v2860
        %2993 = vmatmul.f32.gmra.mxu0 %v2781
        %v2994 = vpop.f32.mrf.mxu0
        %v2995 = vadd.f32 %v2930, %v2994
        %2996 = vmatmul.f32.gmra.mxu0 %v2785
        %v2997 = vpop.f32.mrf.mxu0
        %v2998 = vadd.f32 %v2933, %v2997
        %2999 = vmatmul.f32.gmra.mxu0 %v2789
        %v3000 = vpop.f32.mrf.mxu0
        %v3001 = vadd.f32 %v2936, %v3000
        %3002 = vmatmul.f32.gmra.mxu0 %v2793
        %v3003 = vpop.f32.mrf.mxu0
        %v3004 = vadd.f32 %v2939, %v3003
        %3005 = vmatmul.f32.gmra.mxu0 %v2797
        %v3006 = vpop.f32.mrf.mxu0
        %v3007 = vadd.f32 %v2942, %v3006
        %3008 = vmatmul.f32.gmra.mxu0 %v2801
        %v3009 = vpop.f32.mrf.mxu0
        %v3010 = vadd.f32 %v2945, %v3009
        %3011 = vmatmul.f32.gmra.mxu0 %v2805
        %v3012 = vpop.f32.mrf.mxu0
        %v3013 = vadd.f32 %v2948, %v3012
        %3014 = vmatmul.f32.gmra.mxu0 %v2809
        %v3015 = vpop.f32.mrf.mxu0
        %v3016 = vadd.f32 %v2951, %v3015
        %3017 = vmatmul.f32.gmra.mxu0 %v2813
        %v3018 = vpop.f32.mrf.mxu0
        %v3019 = vadd.f32 %v2954, %v3018
        %3020 = vmatmul.f32.gmra.mxu0 %v2817
        %v3021 = vpop.f32.mrf.mxu0
        %v3022 = vadd.f32 %v2957, %v3021
        %3023 = vmatmul.f32.gmra.mxu0 %v2821
        %v3024 = vpop.f32.mrf.mxu0
        %v3025 = vadd.f32 %v2960, %v3024
        %3026 = vmatmul.f32.gmra.mxu0 %v2825
        %v3027 = vpop.f32.mrf.mxu0
        %v3028 = vadd.f32 %v2963, %v3027
        %3029 = vmatmul.f32.gmra.mxu0 %v2829
        %v3030 = vpop.f32.mrf.mxu0
        %v3031 = vadd.f32 %v2966, %v3030
        %3032 = vmatmul.f32.gmra.mxu0 %v2833
        %v3033 = vpop.f32.mrf.mxu0
        %v3034 = vadd.f32 %v2969, %v3033
        %3035 = vmatmul.f32.gmra.mxu0 %v2837
        %v3036 = vpop.f32.mrf.mxu0
        %v3037 = vadd.f32 %v2972, %v3036
        %3038 = vmatmul.f32.gmra.mxu0 %v2841
        %v3039 = vpop.f32.mrf.mxu0
        %v3040 = vadd.f32 %v2975, %v3039
        %3041 = vdwg.mxu0
        %3042 = vmatpush.msra.mxu0 %v2891
        %3043 = vmatpush.msra.mxu0 %v2890
        %3044 = vmatpush.msra.mxu0 %v2889
        %3045 = vmatpush.msra.mxu0 %v2888
        %3046 = vmatpush.msra.mxu0 %v2887
        %3047 = vmatpush.msra.mxu0 %v2886
        %3048 = vmatpush.msra.mxu0 %v2885
        %3049 = vmatpush.msra.mxu0 %v2884
        %3050 = vmatpush.msra.mxu0 %v2883
        %3051 = vmatpush.msra.mxu0 %v2882
        %3052 = vmatpush.msra.mxu0 %v2881
        %3053 = vmatpush.msra.mxu0 %v2880
        %3054 = vmatpush.msra.mxu0 %v2879
        %3055 = vmatpush.msra.mxu0 %v2878
        %3056 = vmatpush.msra.mxu0 %v2877
        %3057 = vmatpush.msra.mxu0 %v2876
        %3058 = vmatmul.f32.gmra.mxu0 %v2782
        %v3059 = vpop.f32.mrf.mxu0
        %v3060 = vadd.f32 %v2995, %v3059
        %3061 = vmatmul.f32.gmra.mxu0 %v2786
        %v3062 = vpop.f32.mrf.mxu0
        %v3063 = vadd.f32 %v2998, %v3062
        %3064 = vmatmul.f32.gmra.mxu0 %v2790
        %v3065 = vpop.f32.mrf.mxu0
        %v3066 = vadd.f32 %v3001, %v3065
        %3067 = vmatmul.f32.gmra.mxu0 %v2794
        %v3068 = vpop.f32.mrf.mxu0
        %v3069 = vadd.f32 %v3004, %v3068
        %3070 = vmatmul.f32.gmra.mxu0 %v2798
        %v3071 = vpop.f32.mrf.mxu0
        %v3072 = vadd.f32 %v3007, %v3071
        %3073 = vmatmul.f32.gmra.mxu0 %v2802
        %v3074 = vpop.f32.mrf.mxu0
        %v3075 = vadd.f32 %v3010, %v3074
        %3076 = vmatmul.f32.gmra.mxu0 %v2806
        %v3077 = vpop.f32.mrf.mxu0
        %v3078 = vadd.f32 %v3013, %v3077
        %3079 = vmatmul.f32.gmra.mxu0 %v2810
        %v3080 = vpop.f32.mrf.mxu0
        %v3081 = vadd.f32 %v3016, %v3080
        %3082 = vmatmul.f32.gmra.mxu0 %v2814
        %v3083 = vpop.f32.mrf.mxu0
        %v3084 = vadd.f32 %v3019, %v3083
        %3085 = vmatmul.f32.gmra.mxu0 %v2818
        %v3086 = vpop.f32.mrf.mxu0
        %v3087 = vadd.f32 %v3022, %v3086
        %3088 = vmatmul.f32.gmra.mxu0 %v2822
        %v3089 = vpop.f32.mrf.mxu0
        %v3090 = vadd.f32 %v3025, %v3089
        %3091 = vmatmul.f32.gmra.mxu0 %v2826
        %v3092 = vpop.f32.mrf.mxu0
        %v3093 = vadd.f32 %v3028, %v3092
        %3094 = vmatmul.f32.gmra.mxu0 %v2830
        %v3095 = vpop.f32.mrf.mxu0
        %v3096 = vadd.f32 %v3031, %v3095
        %3097 = vmatmul.f32.gmra.mxu0 %v2834
        %v3098 = vpop.f32.mrf.mxu0
        %v3099 = vadd.f32 %v3034, %v3098
        %3100 = vmatmul.f32.gmra.mxu0 %v2838
        %v3101 = vpop.f32.mrf.mxu0
        %v3102 = vadd.f32 %v3037, %v3101
        %3103 = vmatmul.f32.gmra.mxu0 %v2842
        %v3104 = vpop.f32.mrf.mxu0
        %v3105 = vadd.f32 %v3040, %v3104
        %3106 = vdwg.mxu0
        %3107 = vmatpush.msra.mxu0 %v2907
        %3108 = vmatpush.msra.mxu0 %v2906
        %3109 = vmatpush.msra.mxu0 %v2905
        %3110 = vmatpush.msra.mxu0 %v2904
        %3111 = vmatpush.msra.mxu0 %v2903
        %3112 = vmatpush.msra.mxu0 %v2902
        %3113 = vmatpush.msra.mxu0 %v2901
        %3114 = vmatpush.msra.mxu0 %v2900
        %3115 = vmatpush.msra.mxu0 %v2899
        %3116 = vmatpush.msra.mxu0 %v2898
        %3117 = vmatpush.msra.mxu0 %v2897
        %3118 = vmatpush.msra.mxu0 %v2896
        %3119 = vmatpush.msra.mxu0 %v2895
        %3120 = vmatpush.msra.mxu0 %v2894
        %3121 = vmatpush.msra.mxu0 %v2893
        %3122 = vmatpush.msra.mxu0 %v2892
        %3123 = vmatmul.f32.gmra.mxu0 %v2783
        %v3124 = vpop.f32.mrf.mxu0
        %v3125 = vadd.f32 %v3060, %v3124
        %3126 = vmatmul.f32.gmra.mxu0 %v2787
        %v3127 = vpop.f32.mrf.mxu0
        %v3128 = vadd.f32 %v3063, %v3127
        %3129 = vmatmul.f32.gmra.mxu0 %v2791
        %v3130 = vpop.f32.mrf.mxu0
        %v3131 = vadd.f32 %v3066, %v3130
        %3132 = vmatmul.f32.gmra.mxu0 %v2795
        %v3133 = vpop.f32.mrf.mxu0
        %v3134 = vadd.f32 %v3069, %v3133
        %3135 = vmatmul.f32.gmra.mxu0 %v2799
        %v3136 = vpop.f32.mrf.mxu0
        %v3137 = vadd.f32 %v3072, %v3136
        %3138 = vmatmul.f32.gmra.mxu0 %v2803
        %v3139 = vpop.f32.mrf.mxu0
        %v3140 = vadd.f32 %v3075, %v3139
        %3141 = vmatmul.f32.gmra.mxu0 %v2807
        %v3142 = vpop.f32.mrf.mxu0
        %v3143 = vadd.f32 %v3078, %v3142
        %3144 = vmatmul.f32.gmra.mxu0 %v2811
        %v3145 = vpop.f32.mrf.mxu0
        %v3146 = vadd.f32 %v3081, %v3145
        %3147 = vmatmul.f32.gmra.mxu0 %v2815
        %v3148 = vpop.f32.mrf.mxu0
        %v3149 = vadd.f32 %v3084, %v3148
        %3150 = vmatmul.f32.gmra.mxu0 %v2819
        %v3151 = vpop.f32.mrf.mxu0
        %v3152 = vadd.f32 %v3087, %v3151
        %3153 = vmatmul.f32.gmra.mxu0 %v2823
        %v3154 = vpop.f32.mrf.mxu0
        %v3155 = vadd.f32 %v3090, %v3154
        %3156 = vmatmul.f32.gmra.mxu0 %v2827
        %v3157 = vpop.f32.mrf.mxu0
        %v3158 = vadd.f32 %v3093, %v3157
        %3159 = vmatmul.f32.gmra.mxu0 %v2831
        %v3160 = vpop.f32.mrf.mxu0
        %v3161 = vadd.f32 %v3096, %v3160
        %3162 = vmatmul.f32.gmra.mxu0 %v2835
        %v3163 = vpop.f32.mrf.mxu0
        %v3164 = vadd.f32 %v3099, %v3163
        %3165 = vmatmul.f32.gmra.mxu0 %v2839
        %v3166 = vpop.f32.mrf.mxu0
        %v3167 = vadd.f32 %v3102, %v3166
        %3168 = vmatmul.f32.gmra.mxu0 %v2843
        %v3169 = vpop.f32.mrf.mxu0
        %v3170 = vadd.f32 %v3105, %v3169
        %3171 = vdwg.mxu0
        %vm3172 = vcmask 392192
        %v3173 = vsel %vm3172, %v3125, -inf
        %v3174 = vsel %vm3172, %v3128, -inf
        %v3175 = vmax.f32 %v3173, %v3174
        %v3176 = vrot.slane %v3175, 4
        %v3177 = vmax.f32 %v3175, %v3176
        %v3178 = vrot.slane %v3177, 2
        %v3179 = vmax.f32 %v3177, %v3178
        %v3180 = vrot.slane %v3179, 1
        %v3181 = vmax.f32 %v3179, %v3180
        %v3182 = vsel %vm3172, %v3131, -inf
        %v3183 = vsel %vm3172, %v3134, -inf
        %v3184 = vmax.f32 %v3182, %v3183
        %v3185 = vrot.slane %v3184, 4
        %v3186 = vmax.f32 %v3184, %v3185
        %v3187 = vrot.slane %v3186, 2
        %v3188 = vmax.f32 %v3186, %v3187
        %v3189 = vrot.slane %v3188, 1
        %v3190 = vmax.f32 %v3188, %v3189
        %v3191 = vsel %vm3172, %v3137, -inf
        %v3192 = vsel %vm3172, %v3140, -inf
        %v3193 = vmax.f32 %v3191, %v3192
        %v3194 = vrot.slane %v3193, 4
        %v3195 = vmax.f32 %v3193, %v3194
        %v3196 = vrot.slane %v3195, 2
        %v3197 = vmax.f32 %v3195, %v3196
        %v3198 = vrot.slane %v3197, 1
        %v3199 = vmax.f32 %v3197, %v3198
        %v3200 = vsel %vm3172, %v3143, -inf
        %v3201 = vsel %vm3172, %v3146, -inf
        %v3202 = vmax.f32 %v3200, %v3201
        %v3203 = vrot.slane %v3202, 4
        %v3204 = vmax.f32 %v3202, %v3203
        %v3205 = vrot.slane %v3204, 2
        %v3206 = vmax.f32 %v3204, %v3205
        %v3207 = vrot.slane %v3206, 1
        %v3208 = vmax.f32 %v3206, %v3207
        %v3209 = vsel %vm3172, %v3149, -inf
        %v3210 = vsel %vm3172, %v3152, -inf
        %v3211 = vmax.f32 %v3209, %v3210
        %v3212 = vrot.slane %v3211, 4
        %v3213 = vmax.f32 %v3211, %v3212
        %v3214 = vrot.slane %v3213, 2
        %v3215 = vmax.f32 %v3213, %v3214
        %v3216 = vrot.slane %v3215, 1
        %v3217 = vmax.f32 %v3215, %v3216
        %v3218 = vsel %vm3172, %v3155, -inf
        %v3219 = vsel %vm3172, %v3158, -inf
        %v3220 = vmax.f32 %v3218, %v3219
        %v3221 = vrot.slane %v3220, 4
        %v3222 = vmax.f32 %v3220, %v3221
        %v3223 = vrot.slane %v3222, 2
        %v3224 = vmax.f32 %v3222, %v3223
        %v3225 = vrot.slane %v3224, 1
        %v3226 = vmax.f32 %v3224, %v3225
        %v3227 = vsel %vm3172, %v3161, -inf
        %v3228 = vsel %vm3172, %v3164, -inf
        %v3229 = vmax.f32 %v3227, %v3228
        %v3230 = vrot.slane %v3229, 4
        %v3231 = vmax.f32 %v3229, %v3230
        %v3232 = vrot.slane %v3231, 2
        %v3233 = vmax.f32 %v3231, %v3232
        %v3234 = vrot.slane %v3233, 1
        %v3235 = vmax.f32 %v3233, %v3234
        %v3236 = vsel %vm3172, %v3167, -inf
        %v3237 = vsel %vm3172, %v3170, -inf
        %v3238 = vmax.f32 %v3236, %v3237
        %v3239 = vrot.slane %v3238, 4
        %v3240 = vmax.f32 %v3238, %v3239
        %v3241 = vrot.slane %v3240, 2
        %v3242 = vmax.f32 %v3240, %v3241
        %v3243 = vrot.slane %v3242, 1
        %v3244 = vmax.f32 %v3242, %v3243
        %v3245 = vld [vmem:[%s1115] sm:$0xff]
        %v3246 = vld [vmem:[%s23] sm:$0x7]
        %v3247 = vld [vmem:[%s25] sm:$0x1]
        %v3249 = vperm.slane %v3247, 0
        %v3252 = vsel %vm1141, %v3245, 0
        %v3255 = vsel %vm1190, %v3246, 0
        %3257 = vmatpush.msra.mxu0 0.0
        %3258 = vmatpush.msra.mxu0 0.0
        %3259 = vmatpush.msra.mxu0 0.0
        %3260 = vmatpush.msra.mxu0 0.0
        %3261 = vmatpush.msra.mxu0 0.0
        %3262 = vmatpush.msra.mxu0 0.0
        %3263 = vmatpush.msra.mxu0 0.0
        %3264 = vmatpush.msra.mxu0 0.0
        %3265 = vmatpush.msra.mxu0 0.0
        %3266 = vmatpush.msra.mxu0 0.0
        %3267 = vmatpush.msra.mxu0 0.0
        %3268 = vmatpush.msra.mxu0 0.0
        %3269 = vmatpush.msra.mxu0 0.0
        %3270 = vmatpush.msra.mxu0 0.0
        %3271 = vmatpush.msra.mxu0 0.0
        %3272 = vmatpush.msra.mxu0 %v3255
        %3273 = vmatmul.f32.gmra.mxu0 %v3252
        %v3274 = vpop.f32.mrf.mxu0
        %v3275 = vadd.f32 %v3249, %v3274
        %3276 = vdwg.mxu0
        %v3277 = vmul.f32 %v3275, 0.5
        %v3278 = vmul.f32 %v3275, 0.044715
        %v3279 = vmul.f32 %v3278, %v3275
        %v3280 = vmul.f32 %v3279, %v3275
        %v3281 = vadd.f32 %v3275, %v3280
        %v3282 = vmul.f32 %v3281, 0.7978846
        %v3283 = vtanh.pop %v3282
        %v3284 = vadd.f32 %v3283, 1.0
        %v3285 = vmul.f32 %v3277, %v3284
        %v3286 = vld [vmem:[%s27] sm:$0xff]
        %v3287 = vld [vmem:[%s27 + $0x8] sm:$0xff]
        %v3288 = vld [vmem:[%s27 + $0x10] sm:$0xff]
        %v3289 = vld [vmem:[%s27 + $0x18] sm:$0xff]
        %v3290 = vld [vmem:[%s27 + $0x20] sm:$0xff]
        %v3291 = vld [vmem:[%s27 + $0x28] sm:$0xff]
        %v3292 = vld [vmem:[%s27 + $0x30] sm:$0xff]
        %v3293 = vld [vmem:[%s27 + $0x38] sm:$0xff]
        %v3294 = vld [vmem:[%s27 + $0x40] sm:$0xff]
        %v3295 = vld [vmem:[%s27 + $0x48] sm:$0xff]
        %v3296 = vld [vmem:[%s27 + $0x50] sm:$0xff]
        %v3297 = vld [vmem:[%s27 + $0x58] sm:$0xff]
        %v3298 = vld [vmem:[%s27 + $0x60] sm:$0xff]
        %v3299 = vld [vmem:[%s27 + $0x68] sm:$0xff]
        %v3300 = vld [vmem:[%s27 + $0x70] sm:$0xff]
        %v3301 = vld [vmem:[%s27 + $0x78] sm:$0xff]
        %v3302 = vld [vmem:[%s29] sm:$0x1]
        %v3304 = vperm.slane %v3302, 0
        %3306 = vmatpush.msra.mxu0 %v3301
        %3307 = vmatpush.msra.mxu0 %v3300
        %3308 = vmatpush.msra.mxu0 %v3299
        %3309 = vmatpush.msra.mxu0 %v3298
        %3310 = vmatpush.msra.mxu0 %v3297
        %3311 = vmatpush.msra.mxu0 %v3296
        %3312 = vmatpush.msra.mxu0 %v3295
        %3313 = vmatpush.msra.mxu0 %v3294
        %3314 = vmatpush.msra.mxu0 %v3293
        %3315 = vmatpush.msra.mxu0 %v3292
        %3316 = vmatpush.msra.mxu0 %v3291
        %3317 = vmatpush.msra.mxu0 %v3290
        %3318 = vmatpush.msra.mxu0 %v3289
        %3319 = vmatpush.msra.mxu0 %v3288
        %3320 = vmatpush.msra.mxu0 %v3287
        %3321 = vmatpush.msra.mxu0 %v3286
        %3322 = vmatmul.f32.gmra.mxu0 %v3285
        %v3323 = vpop.f32.mrf.mxu0
        %v3324 = vadd.f32 %v3304, %v3323
        %3325 = vdwg.mxu0
        %v3327 = vrot.slane %v3324, 1
        %v3328 = vrot.slane %v3324, 2
        %v3329 = vrot.slane %v3324, 3
        %v3330 = vrot.slane %v3324, 4
        %v3331 = vrot.slane %v3324, 5
        %v3332 = vrot.slane %v3324, 6
        %v3333 = vrot.slane %v3324, 7
        %v3342 = vadd.f32 %v3181, %v3324
        %v3343 = vadd.f32 %v3190, %v3327
        %v3344 = vadd.f32 %v3199, %v3328
        %v3345 = vadd.f32 %v3208, %v3329
        %v3346 = vadd.f32 %v3217, %v3330
        %v3347 = vadd.f32 %v3226, %v3331
        %v3348 = vadd.f32 %v3235, %v3332
        %v3349 = vadd.f32 %v3244, %v3333
        %v3350 = vld [vmem:[%s31] sm:$0x1]
        %v3351 = vld [vmem:[%s33] sm:$0x1]
        %v3360 = vrot.slane %v3343, 7
        %v3361 = vsel %vm1699, %v3360, %v3342
        %v3362 = vrot.slane %v3344, 6
        %v3363 = vsel %vm1701, %v3362, %v3361
        %v3364 = vrot.slane %v3345, 5
        %v3365 = vsel %vm1703, %v3364, %v3363
        %v3366 = vrot.slane %v3346, 4
        %v3367 = vsel %vm1705, %v3366, %v3365
        %v3368 = vrot.slane %v3347, 3
        %v3369 = vsel %vm1707, %v3368, %v3367
        %v3370 = vrot.slane %v3348, 2
        %v3371 = vsel %vm1709, %v3370, %v3369
        %v3372 = vrot.slane %v3349, 1
        %v3373 = vsel %vm1711, %v3372, %v3371
        %v3375 = vsel %vm3172, %v3373, 0.0
        %3376 = vadd.xlane.f32.xlu0 %v3375
        %v3377 = vpop.xlane.xlu0 %3376
        %v3378 = vrcp.pop 48.0
        %v3379 = vmul.f32 48.0, %v3378
        %v3380 = vsub.f32 1.0, %v3379
        %v3381 = vmul.f32 %v3378, %v3380
        %v3382 = vadd.f32 %v3378, %v3381
        %vm3383 = vweird.f32 %v3378
        %v3384 = vsel %vm3383, %v3378, %v3382
        %v3385 = vmul.f32 %v3377, %v3384
        %v3387 = vrot.slane %v3385, 1
        %v3388 = vrot.slane %v3385, 2
        %v3389 = vrot.slane %v3385, 3
        %v3390 = vrot.slane %v3385, 4
        %v3391 = vrot.slane %v3385, 5
        %v3392 = vrot.slane %v3385, 6
        %v3393 = vrot.slane %v3385, 7
        %v3402 = vsub.f32 %v3342, %v3385
        %v3403 = vsub.f32 %v3343, %v3387
        %v3404 = vsub.f32 %v3344, %v3388
        %v3405 = vsub.f32 %v3345, %v3389
        %v3406 = vsub.f32 %v3346, %v3390
        %v3407 = vsub.f32 %v3347, %v3391
        %v3408 = vsub.f32 %v3348, %v3392
        %v3409 = vsub.f32 %v3349, %v3393
        %v3410 = vmul.f32 %v3402, %v3402
        %v3411 = vmul.f32 %v3403, %v3403
        %v3412 = vmul.f32 %v3404, %v3404
        %v3413 = vmul.f32 %v3405, %v3405
        %v3414 = vmul.f32 %v3406, %v3406
        %v3415 = vmul.f32 %v3407, %v3407
        %v3416 = vmul.f32 %v3408, %v3408
        %v3417 = vmul.f32 %v3409, %v3409
        %v3426 = vrot.slane %v3411, 7
        %v3427 = vsel %vm1699, %v3426, %v3410
        %v3428 = vrot.slane %v3412, 6
        %v3429 = vsel %vm1701, %v3428, %v3427
        %v3430 = vrot.slane %v3413, 5
        %v3431 = vsel %vm1703, %v3430, %v3429
        %v3432 = vrot.slane %v3414, 4
        %v3433 = vsel %vm1705, %v3432, %v3431
        %v3434 = vrot.slane %v3415, 3
        %v3435 = vsel %vm1707, %v3434, %v3433
        %v3436 = vrot.slane %v3416, 2
        %v3437 = vsel %vm1709, %v3436, %v3435
        %v3438 = vrot.slane %v3417, 1
        %v3439 = vsel %vm1711, %v3438, %v3437
        %v3441 = vsel %vm3172, %v3439, 0.0
        %3442 = vadd.xlane.f32.xlu0 %v3441
        %v3443 = vpop.xlane.xlu0 %3442
        %v3444 = vmul.f32 %v3443, %v3384
        %v3445 = vadd.f32 %v3444, 1e-05
        %v3446 = vrsqrt.pop %v3445
        %v3447 = vmul.f32 %v3446, %v3445
        %v3448 = vmul.f32 %v3447, %v3446
        %v3449 = vmul.f32 0.5, %v3448
        %v3450 = vsub.f32 1.5, %v3449
        %v3451 = vmul.f32 %v3446, %v3450
        %vm3452 = vweird.f32 %v3445
        %vm3453 = vweird.f32 %v3446
        %vm3454 = vmor %vm3452, %vm3453
        %v3455 = vsel %vm3454, %v3446, %v3451
        %v3457 = vrot.slane %v3455, 1
        %v3458 = vrot.slane %v3455, 2
        %v3459 = vrot.slane %v3455, 3
        %v3460 = vrot.slane %v3455, 4
        %v3461 = vrot.slane %v3455, 5
        %v3462 = vrot.slane %v3455, 6
        %v3463 = vrot.slane %v3455, 7
        %v3472 = vmul.f32 %v3402, %v3455
        %v3473 = vmul.f32 %v3403, %v3457
        %v3474 = vmul.f32 %v3404, %v3458
        %v3475 = vmul.f32 %v3405, %v3459
        %v3476 = vmul.f32 %v3406, %v3460
        %v3477 = vmul.f32 %v3407, %v3461
        %v3478 = vmul.f32 %v3408, %v3462
        %v3479 = vmul.f32 %v3409, %v3463
        %v3481 = vperm.slane %v3350, 0
        %v3483 = vmul.f32 %v3472, %v3481
        %v3484 = vmul.f32 %v3473, %v3481
        %v3485 = vmul.f32 %v3474, %v3481
        %v3486 = vmul.f32 %v3475, %v3481
        %v3487 = vmul.f32 %v3476, %v3481
        %v3488 = vmul.f32 %v3477, %v3481
        %v3489 = vmul.f32 %v3478, %v3481
        %v3490 = vmul.f32 %v3479, %v3481
        %v3492 = vperm.slane %v3351, 0
        %v3494 = vadd.f32 %v3483, %v3492
        %v3495 = vadd.f32 %v3484, %v3492
        %v3496 = vadd.f32 %v3485, %v3492
        %v3497 = vadd.f32 %v3486, %v3492
        %v3498 = vadd.f32 %v3487, %v3492
        %v3499 = vadd.f32 %v3488, %v3492
        %v3500 = vadd.f32 %v3489, %v3492
        %v3501 = vadd.f32 %v3490, %v3492
        %v3502 = vld [vmem:[%s35] sm:$0xff]
        %v3503 = vld [vmem:[%s35 + $0x8] sm:$0xff]
        %v3504 = vld [vmem:[%s35 + $0x10] sm:$0xff]
        %v3505 = vld [vmem:[%s35 + $0x18] sm:$0xff]
        %v3506 = vld [vmem:[%s35 + $0x20] sm:$0xff]
        %v3507 = vld [vmem:[%s35 + $0x28] sm:$0xff]
        %v3508 = vld [vmem:[%s37] sm:$0x1]
        %v3510 = vperm.slane %v3508, 0
        %v3520 = vrot.slane %v3495, 7
        %v3521 = vsel %vm1699, %v3520, %v3494
        %v3522 = vrot.slane %v3496, 6
        %v3523 = vsel %vm1701, %v3522, %v3521
        %v3524 = vrot.slane %v3497, 5
        %v3525 = vsel %vm1703, %v3524, %v3523
        %v3526 = vrot.slane %v3498, 4
        %v3527 = vsel %vm1705, %v3526, %v3525
        %v3528 = vrot.slane %v3499, 3
        %v3529 = vsel %vm1707, %v3528, %v3527
        %v3530 = vrot.slane %v3500, 2
        %v3531 = vsel %vm1709, %v3530, %v3529
        %v3532 = vrot.slane %v3501, 1
        %v3533 = vsel %vm1711, %v3532, %v3531
        %v3534 = vsel %vm3172, %v3533, 0
        %3536 = vmatpush.msra.mxu0 0.0
        %3537 = vmatpush.msra.mxu0 0.0
        %3538 = vmatpush.msra.mxu0 0.0
        %3539 = vmatpush.msra.mxu0 0.0
        %3540 = vmatpush.msra.mxu0 0.0
        %3541 = vmatpush.msra.mxu0 0.0
        %3542 = vmatpush.msra.mxu0 0.0
        %3543 = vmatpush.msra.mxu0 0.0
        %3544 = vmatpush.msra.mxu0 0.0
        %3545 = vmatpush.msra.mxu0 0.0
        %3546 = vmatpush.msra.mxu0 %v3507
        %3547 = vmatpush.msra.mxu0 %v3506
        %3548 = vmatpush.msra.mxu0 %v3505
        %3549 = vmatpush.msra.mxu0 %v3504
        %3550 = vmatpush.msra.mxu0 %v3503
        %3551 = vmatpush.msra.mxu0 %v3502
        %3552 = vmatmul.f32.gmra.mxu0 %v3534
        %v3553 = vpop.f32.mrf.mxu0
        %v3554 = vadd.f32 %v3510, %v3553
        %3555 = vdwg.mxu0
        %v3556 = vld [vmem:[%s39] sm:$0xff]
        %v3557 = vld [vmem:[%s39 + $0x8] sm:$0xff]
        %v3558 = vld [vmem:[%s39 + $0x10] sm:$0xff]
        %v3559 = vld [vmem:[%s39 + $0x18] sm:$0xff]
        %v3560 = vld [vmem:[%s39 + $0x20] sm:$0xff]
        %v3561 = vld [vmem:[%s39 + $0x28] sm:$0xff]
        %v3562 = vld [vmem:[%s41] sm:$0x1]
        %v3564 = vperm.slane %v3562, 0
        %3566 = vmatpush.msra.mxu0 0.0
        %3567 = vmatpush.msra.mxu0 0.0
        %3568 = vmatpush.msra.mxu0 0.0
        %3569 = vmatpush.msra.mxu0 0.0
        %3570 = vmatpush.msra.mxu0 0.0
        %3571 = vmatpush.msra.mxu0 0.0
        %3572 = vmatpush.msra.mxu0 0.0
        %3573 = vmatpush.msra.mxu0 0.0
        %3574 = vmatpush.msra.mxu0 0.0
        %3575 = vmatpush.msra.mxu0 0.0
        %3576 = vmatpush.msra.mxu0 %v3561
        %3577 = vmatpush.msra.mxu0 %v3560
        %3578 = vmatpush.msra.mxu0 %v3559
        %3579 = vmatpush.msra.mxu0 %v3558
        %3580 = vmatpush.msra.mxu0 %v3557
        %3581 = vmatpush.msra.mxu0 %v3556
        %3582 = vmatmul.f32.gmra.mxu0 %v3534
        %v3583 = vpop.f32.mrf.mxu0
        %v3584 = vadd.f32 %v3564, %v3583
        %3585 = vdwg.mxu0
        %v3586 = vld [vmem:[%s43] sm:$0xff]
        %v3587 = vld [vmem:[%s43 + $0x8] sm:$0xff]
        %v3588 = vld [vmem:[%s43 + $0x10] sm:$0xff]
        %v3589 = vld [vmem:[%s43 + $0x18] sm:$0xff]
        %v3590 = vld [vmem:[%s43 + $0x20] sm:$0xff]
        %v3591 = vld [vmem:[%s43 + $0x28] sm:$0xff]
        %v3592 = vld [vmem:[%s45] sm:$0x1]
        %v3594 = vperm.slane %v3592, 0
        %3596 = vmatpush.msra.mxu0 0.0
        %3597 = vmatpush.msra.mxu0 0.0
        %3598 = vmatpush.msra.mxu0 0.0
        %3599 = vmatpush.msra.mxu0 0.0
        %3600 = vmatpush.msra.mxu0 0.0
        %3601 = vmatpush.msra.mxu0 0.0
        %3602 = vmatpush.msra.mxu0 0.0
        %3603 = vmatpush.msra.mxu0 0.0
        %3604 = vmatpush.msra.mxu0 0.0
        %3605 = vmatpush.msra.mxu0 0.0
        %3606 = vmatpush.msra.mxu0 %v3591
        %3607 = vmatpush.msra.mxu0 %v3590
        %3608 = vmatpush.msra.mxu0 %v3589
        %3609 = vmatpush.msra.mxu0 %v3588
        %3610 = vmatpush.msra.mxu0 %v3587
        %3611 = vmatpush.msra.mxu0 %v3586
        %3612 = vmatmul.f32.gmra.mxu0 %v3534
        %v3613 = vpop.f32.mrf.mxu0
        %v3614 = vadd.f32 %v3594, %v3613
        %3615 = vdwg.mxu0
        %vm3616 = vcmask 130048
        %v3618 = vsel %vm3616, %v3554, 0
        %v3621 = vsel %vm3616, %v3584, 0
        %3623 = vmatpush.xpose.msra.mxu0 0.0
        %3624 = vmatpush.xpose.msra.mxu0 0.0
        %3625 = vmatpush.xpose.msra.mxu0 0.0
        %3626 = vmatpush.xpose.msra.mxu0 0.0
        %3627 = vmatpush.xpose.msra.mxu0 0.0
        %3628 = vmatpush.xpose.msra.mxu0 0.0
        %3629 = vmatpush.xpose.msra.mxu0 0.0
        %3630 = vmatpush.xpose.msra.mxu0 0.0
        %3631 = vmatpush.xpose.msra.mxu0 0.0
        %3632 = vmatpush.xpose.msra.mxu0 0.0
        %3633 = vmatpush.xpose.msra.mxu0 0.0
        %3634 = vmatpush.xpose.msra.mxu0 0.0
        %3635 = vmatpush.xpose.msra.mxu0 0.0
        %3636 = vmatpush.xpose.msra.mxu0 0.0
        %3637 = vmatpush.xpose.msra.mxu0 0.0
        %3638 = vmatpush.xpose.msra.mxu0 %v3621
        %3639 = vmatmul.f32.gmra.mxu0 %v3618
        %v3640 = vpop.f32.mrf.mxu0
        %v3641 = vadd.f32 0.0, %v3640
        %3642 = vdwg.mxu0
        %v3643 = vmul.f32 %v3641, 0.25
        %vm3644 = vcmask 64512
        %v3645 = vsel %vm3644, %v3643, -inf
        %3646 = vmax.xlane.f32.xlu0 %v3645
        %v3647 = vpop.xlane.xlu0 %3646
        %v3648 = vsub.f32 %v3643, %v3647
        %v3649 = vmul.f32 %v3648, 1.442695
        %v3650 = vpow.pop %v3649
        %v3651 = vsel %vm3644, %v3650, 0.0
        %3652 = vadd.xlane.f32.xlu0 %v3651
        %v3653 = vpop.xlane.xlu0 %3652
        %v3654 = vrcp.pop %v3653
        %v3655 = vmul.f32 %v3650, %v3654
        %v3657 = vsel %vm3644, %v3655, 0
        %3659 = vmatpush.msra.mxu0 0.0
        %3660 = vmatpush.msra.mxu0 0.0
        %3661 = vmatpush.msra.mxu0 0.0
        %3662 = vmatpush.msra.mxu0 0.0
        %3663 = vmatpush.msra.mxu0 0.0
        %3664 = vmatpush.msra.mxu0 0.0
        %3665 = vmatpush.msra.mxu0 0.0
        %3666 = vmatpush.msra.mxu0 0.0
        %3667 = vmatpush.msra.mxu0 0.0
        %3668 = vmatpush.msra.mxu0 0.0
        %3669 = vmatpush.msra.mxu0 0.0
        %3670 = vmatpush.msra.mxu0 0.0
        %3671 = vmatpush.msra.mxu0 0.0
        %3672 = vmatpush.msra.mxu0 0.0
        %3673 = vmatpush.msra.mxu0 0.0
        %3674 = vmatpush.msra.mxu0 %v3614
        %3675 = vmatmul.f32.gmra.mxu0 %v3657
        %v3676 = vpop.f32.mrf.mxu0
        %v3677 = vadd.f32 0.0, %v3676
        %3678 = vdwg.mxu0
        %v3679 = vld [vmem:[%s47] sm:$0xff]
        %v3680 = vld [vmem:[%s47 + $0x8] sm:$0xff]
        %s3681 = scalar_lea.vmem %s35, 48
        %v3682 = vld [vmem:[%s3681] sm:$0xff]
        %v3683 = vld [vmem:[%s3681 + $0x8] sm:$0xff]
        %v3684 = vld [vmem:[%s3681 + $0x10] sm:$0xff]
        %v3685 = vld [vmem:[%s3681 + $0x18] sm:$0xff]
        %v3686 = vld [vmem:[%s3681 + $0x20] sm:$0xff]
        %v3687 = vld [vmem:[%s3681 + $0x28] sm:$0xff]
        %s3688 = scalar_lea.vmem %s37, 1
        %v3689 = vld [vmem:[%s3688] sm:$0x1]
        %v3691 = vperm.slane %v3689, 0
        %3693 = vmatpush.msra.mxu0 0.0
        %3694 = vmatpush.msra.mxu0 0.0
        %3695 = vmatpush.msra.mxu0 0.0
        %3696 = vmatpush.msra.mxu0 0.0
        %3697 = vmatpush.msra.mxu0 0.0
        %3698 = vmatpush.msra.mxu0 0.0
        %3699 = vmatpush.msra.mxu0 0.0
        %3700 = vmatpush.msra.mxu0 0.0
        %3701 = vmatpush.msra.mxu0 0.0
        %3702 = vmatpush.msra.mxu0 0.0
        %3703 = vmatpush.msra.mxu0 %v3687
        %3704 = vmatpush.msra.mxu0 %v3686
        %3705 = vmatpush.msra.mxu0 %v3685
        %3706 = vmatpush.msra.mxu0 %v3684
        %3707 = vmatpush.msra.mxu0 %v3683
        %3708 = vmatpush.msra.mxu0 %v3682
        %3709 = vmatmul.f32.gmra.mxu0 %v3534
        %v3710 = vpop.f32.mrf.mxu0
        %v3711 = vadd.f32 %v3691, %v3710
        %3712 = vdwg.mxu0
        %s3713 = scalar_lea.vmem %s39, 48
        %v3714 = vld [vmem:[%s3713] sm:$0xff]
        %v3715 = vld [vmem:[%s3713 + $0x8] sm:$0xff]
        %v3716 = vld [vmem:[%s3713 + $0x10] sm:$0xff]
        %v3717 = vld [vmem:[%s3713 + $0x18] sm:$0xff]
        %v3718 = vld [vmem:[%s3713 + $0x20] sm:$0xff]
        %v3719 = vld [vmem:[%s3713 + $0x28] sm:$0xff]
        %s3720 = scalar_lea.vmem %s41, 1
        %v3721 = vld [vmem:[%s3720] sm:$0x1]
        %v3723 = vperm.slane %v3721, 0
        %3725 = vmatpush.msra.mxu0 0.0
        %3726 = vmatpush.msra.mxu0 0.0
        %3727 = vmatpush.msra.mxu0 0.0
        %3728 = vmatpush.msra.mxu0 0.0
        %3729 = vmatpush.msra.mxu0 0.0
        %3730 = vmatpush.msra.mxu0 0.0
        %3731 = vmatpush.msra.mxu0 0.0
        %3732 = vmatpush.msra.mxu0 0.0
        %3733 = vmatpush.msra.mxu0 0.0
        %3734 = vmatpush.msra.mxu0 0.0
        %3735 = vmatpush.msra.mxu0 %v3719
        %3736 = vmatpush.msra.mxu0 %v3718
        %3737 = vmatpush.msra.mxu0 %v3717
        %3738 = vmatpush.msra.mxu0 %v3716
        %3739 = vmatpush.msra.mxu0 %v3715
        %3740 = vmatpush.msra.mxu0 %v3714
        %3741 = vmatmul.f32.gmra.mxu0 %v3534
        %v3742 = vpop.f32.mrf.mxu0
        %v3743 = vadd.f32 %v3723, %v3742
        %3744 = vdwg.mxu0
        %s3745 = scalar_lea.vmem %s43, 48
        %v3746 = vld [vmem:[%s3745] sm:$0xff]
        %v3747 = vld [vmem:[%s3745 + $0x8] sm:$0xff]
        %v3748 = vld [vmem:[%s3745 + $0x10] sm:$0xff]
        %v3749 = vld [vmem:[%s3745 + $0x18] sm:$0xff]
        %v3750 = vld [vmem:[%s3745 + $0x20] sm:$0xff]
        %v3751 = vld [vmem:[%s3745 + $0x28] sm:$0xff]
        %s3752 = scalar_lea.vmem %s45, 1
        %v3753 = vld [vmem:[%s3752] sm:$0x1]
        %v3755 = vperm.slane %v3753, 0
        %3757 = vmatpush.msra.mxu0 0.0
        %3758 = vmatpush.msra.mxu0 0.0
        %3759 = vmatpush.msra.mxu0 0.0
        %3760 = vmatpush.msra.mxu0 0.0
        %3761 = vmatpush.msra.mxu0 0.0
        %3762 = vmatpush.msra.mxu0 0.0
        %3763 = vmatpush.msra.mxu0 0.0
        %3764 = vmatpush.msra.mxu0 0.0
        %3765 = vmatpush.msra.mxu0 0.0
        %3766 = vmatpush.msra.mxu0 0.0
        %3767 = vmatpush.msra.mxu0 %v3751
        %3768 = vmatpush.msra.mxu0 %v3750
        %3769 = vmatpush.msra.mxu0 %v3749
        %3770 = vmatpush.msra.mxu0 %v3748
        %3771 = vmatpush.msra.mxu0 %v3747
        %3772 = vmatpush.msra.mxu0 %v3746
        %3773 = vmatmul.f32.gmra.mxu0 %v3534
        %v3774 = vpop.f32.mrf.mxu0
        %v3775 = vadd.f32 %v3755, %v3774
        %3776 = vdwg.mxu0
        %v3778 = vsel %vm3616, %v3711, 0
        %v3781 = vsel %vm3616, %v3743, 0
        %3783 = vmatpush.xpose.msra.mxu0 0.0
        %3784 = vmatpush.xpose.msra.mxu0 0.0
        %3785 = vmatpush.xpose.msra.mxu0 0.0
        %3786 = vmatpush.xpose.msra.mxu0 0.0
        %3787 = vmatpush.xpose.msra.mxu0 0.0
        %3788 = vmatpush.xpose.msra.mxu0 0.0
        %3789 = vmatpush.xpose.msra.mxu0 0.0
        %3790 = vmatpush.xpose.msra.mxu0 0.0
        %3791 = vmatpush.xpose.msra.mxu0 0.0
        %3792 = vmatpush.xpose.msra.mxu0 0.0
        %3793 = vmatpush.xpose.msra.mxu0 0.0
        %3794 = vmatpush.xpose.msra.mxu0 0.0
        %3795 = vmatpush.xpose.msra.mxu0 0.0
        %3796 = vmatpush.xpose.msra.mxu0 0.0
        %3797 = vmatpush.xpose.msra.mxu0 0.0
        %3798 = vmatpush.xpose.msra.mxu0 %v3781
        %3799 = vmatmul.f32.gmra.mxu0 %v3778
        %v3800 = vpop.f32.mrf.mxu0
        %v3801 = vadd.f32 0.0, %v3800
        %3802 = vdwg.mxu0
        %v3803 = vmul.f32 %v3801, 0.25
        %v3804 = vsel %vm3644, %v3803, -inf
        %3805 = vmax.xlane.f32.xlu0 %v3804
        %v3806 = vpop.xlane.xlu0 %3805
        %v3807 = vsub.f32 %v3803, %v3806
        %v3808 = vmul.f32 %v3807, 1.442695
        %v3809 = vpow.pop %v3808
        %v3810 = vsel %vm3644, %v3809, 0.0
        %3811 = vadd.xlane.f32.xlu0 %v3810
        %v3812 = vpop.xlane.xlu0 %3811
        %v3813 = vrcp.pop %v3812
        %v3814 = vmul.f32 %v3809, %v3813
        %v3816 = vsel %vm3644, %v3814, 0
        %3818 = vmatpush.msra.mxu0 0.0
        %3819 = vmatpush.msra.mxu0 0.0
        %3820 = vmatpush.msra.mxu0 0.0
        %3821 = vmatpush.msra.mxu0 0.0
        %3822 = vmatpush.msra.mxu0 0.0
        %3823 = vmatpush.msra.mxu0 0.0
        %3824 = vmatpush.msra.mxu0 0.0
        %3825 = vmatpush.msra.mxu0 0.0
        %3826 = vmatpush.msra.mxu0 0.0
        %3827 = vmatpush.msra.mxu0 0.0
        %3828 = vmatpush.msra.mxu0 0.0
        %3829 = vmatpush.msra.mxu0 0.0
        %3830 = vmatpush.msra.mxu0 0.0
        %3831 = vmatpush.msra.mxu0 0.0
        %3832 = vmatpush.msra.mxu0 0.0
        %3833 = vmatpush.msra.mxu0 %v3775
        %3834 = vmatmul.f32.gmra.mxu0 %v3816
        %v3835 = vpop.f32.mrf.mxu0
        %v3836 = vadd.f32 0.0, %v3835
        %3837 = vdwg.mxu0
        %s3838 = scalar_lea.vmem %s47, 16
        %v3839 = vld [vmem:[%s3838] sm:$0xff]
        %v3840 = vld [vmem:[%s3838 + $0x8] sm:$0xff]
        %v3842 = vsel %vm3616, %v3836, 0
        %3844 = vmatpush.msra.mxu0 0.0
        %3845 = vmatpush.msra.mxu0 0.0
        %3846 = vmatpush.msra.mxu0 0.0
        %3847 = vmatpush.msra.mxu0 0.0
        %3848 = vmatpush.msra.mxu0 0.0
        %3849 = vmatpush.msra.mxu0 0.0
        %3850 = vmatpush.msra.mxu0 0.0
        %3851 = vmatpush.msra.mxu0 0.0
        %3852 = vmatpush.msra.mxu0 0.0
        %3853 = vmatpush.msra.mxu0 0.0
        %3854 = vmatpush.msra.mxu0 0.0
        %3855 = vmatpush.msra.mxu0 0.0
        %3856 = vmatpush.msra.mxu0 0.0
        %3857 = vmatpush.msra.mxu0 0.0
        %3858 = vmatpush.msra.mxu0 %v3840
        %3859 = vmatpush.msra.mxu0 %v3839
        %3860 = vmatmul.f32.gmra.mxu0 %v3842
        %v3861 = vpop.f32.mrf.mxu0
        %v3862 = vadd.f32 0.0, %v3861
        %3863 = vdwg.mxu0
        %v3865 = vsel %vm3616, %v3677, 0
        %3867 = vmatpush.msra.mxu0 0.0
        %3868 = vmatpush.msra.mxu0 0.0
        %3869 = vmatpush.msra.mxu0 0.0
        %3870 = vmatpush.msra.mxu0 0.0
        %3871 = vmatpush.msra.mxu0 0.0
        %3872 = vmatpush.msra.mxu0 0.0
        %3873 = vmatpush.msra.mxu0 0.0
        %3874 = vmatpush.msra.mxu0 0.0
        %3875 = vmatpush.msra.mxu0 0.0
        %3876 = vmatpush.msra.mxu0 0.0
        %3877 = vmatpush.msra.mxu0 0.0
        %3878 = vmatpush.msra.mxu0 0.0
        %3879 = vmatpush.msra.mxu0 0.0
        %3880 = vmatpush.msra.mxu0 0.0
        %3881 = vmatpush.msra.mxu0 %v3680
        %3882 = vmatpush.msra.mxu0 %v3679
        %3883 = vmatmul.f32.gmra.mxu0 %v3865
        %v3884 = vpop.f32.mrf.mxu0
        %v3885 = vadd.f32 %v3862, %v3884
        %3886 = vdwg.mxu0
        %s3887 = scalar_lea.vmem %s35, 96
        %v3888 = vld [vmem:[%s3887] sm:$0xff]
        %v3889 = vld [vmem:[%s3887 + $0x8] sm:$0xff]
        %v3890 = vld [vmem:[%s3887 + $0x10] sm:$0xff]
        %v3891 = vld [vmem:[%s3887 + $0x18] sm:$0xff]
        %v3892 = vld [vmem:[%s3887 + $0x20] sm:$0xff]
        %v3893 = vld [vmem:[%s3887 + $0x28] sm:$0xff]
        %s3894 = scalar_lea.vmem %s37, 2
        %v3895 = vld [vmem:[%s3894] sm:$0x1]
        %v3897 = vperm.slane %v3895, 0
        %3899 = vmatpush.msra.mxu0 0.0
        %3900 = vmatpush.msra.mxu0 0.0
        %3901 = vmatpush.msra.mxu0 0.0
        %3902 = vmatpush.msra.mxu0 0.0
        %3903 = vmatpush.msra.mxu0 0.0
        %3904 = vmatpush.msra.mxu0 0.0
        %3905 = vmatpush.msra.mxu0 0.0
        %3906 = vmatpush.msra.mxu0 0.0
        %3907 = vmatpush.msra.mxu0 0.0
        %3908 = vmatpush.msra.mxu0 0.0
        %3909 = vmatpush.msra.mxu0 %v3893
        %3910 = vmatpush.msra.mxu0 %v3892
        %3911 = vmatpush.msra.mxu0 %v3891
        %3912 = vmatpush.msra.mxu0 %v3890
        %3913 = vmatpush.msra.mxu0 %v3889
        %3914 = vmatpush.msra.mxu0 %v3888
        %3915 = vmatmul.f32.gmra.mxu0 %v3534
        %v3916 = vpop.f32.mrf.mxu0
        %v3917 = vadd.f32 %v3897, %v3916
        %3918 = vdwg.mxu0
        %s3919 = scalar_lea.vmem %s39, 96
        %v3920 = vld [vmem:[%s3919] sm:$0xff]
        %v3921 = vld [vmem:[%s3919 + $0x8] sm:$0xff]
        %v3922 = vld [vmem:[%s3919 + $0x10] sm:$0xff]
        %v3923 = vld [vmem:[%s3919 + $0x18] sm:$0xff]
        %v3924 = vld [vmem:[%s3919 + $0x20] sm:$0xff]
        %v3925 = vld [vmem:[%s3919 + $0x28] sm:$0xff]
        %s3926 = scalar_lea.vmem %s41, 2
        %v3927 = vld [vmem:[%s3926] sm:$0x1]
        %v3929 = vperm.slane %v3927, 0
        %3931 = vmatpush.msra.mxu0 0.0
        %3932 = vmatpush.msra.mxu0 0.0
        %3933 = vmatpush.msra.mxu0 0.0
        %3934 = vmatpush.msra.mxu0 0.0
        %3935 = vmatpush.msra.mxu0 0.0
        %3936 = vmatpush.msra.mxu0 0.0
        %3937 = vmatpush.msra.mxu0 0.0
        %3938 = vmatpush.msra.mxu0 0.0
        %3939 = vmatpush.msra.mxu0 0.0
        %3940 = vmatpush.msra.mxu0 0.0
        %3941 = vmatpush.msra.mxu0 %v3925
        %3942 = vmatpush.msra.mxu0 %v3924
        %3943 = vmatpush.msra.mxu0 %v3923
        %3944 = vmatpush.msra.mxu0 %v3922
        %3945 = vmatpush.msra.mxu0 %v3921
        %3946 = vmatpush.msra.mxu0 %v3920
        %3947 = vmatmul.f32.gmra.mxu0 %v3534
        %v3948 = vpop.f32.mrf.mxu0
        %v3949 = vadd.f32 %v3929, %v3948
        %3950 = vdwg.mxu0
        %s3951 = scalar_lea.vmem %s43, 96
        %v3952 = vld [vmem:[%s3951] sm:$0xff]
        %v3953 = vld [vmem:[%s3951 + $0x8] sm:$0xff]
        %v3954 = vld [vmem:[%s3951 + $0x10] sm:$0xff]
        %v3955 = vld [vmem:[%s3951 + $0x18] sm:$0xff]
        %v3956 = vld [vmem:[%s3951 + $0x20] sm:$0xff]
        %v3957 = vld [vmem:[%s3951 + $0x28] sm:$0xff]
        %s3958 = scalar_lea.vmem %s45, 2
        %v3959 = vld [vmem:[%s3958] sm:$0x1]
        %v3961 = vperm.slane %v3959, 0
        %3963 = vmatpush.msra.mxu0 0.0
        %3964 = vmatpush.msra.mxu0 0.0
        %3965 = vmatpush.msra.mxu0 0.0
        %3966 = vmatpush.msra.mxu0 0.0
        %3967 = vmatpush.msra.mxu0 0.0
        %3968 = vmatpush.msra.mxu0 0.0
        %3969 = vmatpush.msra.mxu0 0.0
        %3970 = vmatpush.msra.mxu0 0.0
        %3971 = vmatpush.msra.mxu0 0.0
        %3972 = vmatpush.msra.mxu0 0.0
        %3973 = vmatpush.msra.mxu0 %v3957
        %3974 = vmatpush.msra.mxu0 %v3956
        %3975 = vmatpush.msra.mxu0 %v3955
        %3976 = vmatpush.msra.mxu0 %v3954
        %3977 = vmatpush.msra.mxu0 %v3953
        %3978 = vmatpush.msra.mxu0 %v3952
        %3979 = vmatmul.f32.gmra.mxu0 %v3534
        %v3980 = vpop.f32.mrf.mxu0
        %v3981 = vadd.f32 %v3961, %v3980
        %3982 = vdwg.mxu0
        %v3984 = vsel %vm3616, %v3917, 0
        %v3987 = vsel %vm3616, %v3949, 0
        %3989 = vmatpush.xpose.msra.mxu0 0.0
        %3990 = vmatpush.xpose.msra.mxu0 0.0
        %3991 = vmatpush.xpose.msra.mxu0 0.0
        %3992 = vmatpush.xpose.msra.mxu0 0.0
        %3993 = vmatpush.xpose.msra.mxu0 0.0
        %3994 = vmatpush.xpose.msra.mxu0 0.0
        %3995 = vmatpush.xpose.msra.mxu0 0.0
        %3996 = vmatpush.xpose.msra.mxu0 0.0
        %3997 = vmatpush.xpose.msra.mxu0 0.0
        %3998 = vmatpush.xpose.msra.mxu0 0.0
        %3999 = vmatpush.xpose.msra.mxu0 0.0
        %4000 = vmatpush.xpose.msra.mxu0 0.0
        %4001 = vmatpush.xpose.msra.mxu0 0.0
        %4002 = vmatpush.xpose.msra.mxu0 0.0
        %4003 = vmatpush.xpose.msra.mxu0 0.0
        %4004 = vmatpush.xpose.msra.mxu0 %v3987
        %4005 = vmatmul.f32.gmra.mxu0 %v3984
        %v4006 = vpop.f32.mrf.mxu0
        %v4007 = vadd.f32 0.0, %v4006
        %4008 = vdwg.mxu0
        %v4009 = vmul.f32 %v4007, 0.25
        %v4010 = vsel %vm3644, %v4009, -inf
        %4011 = vmax.xlane.f32.xlu0 %v4010
        %v4012 = vpop.xlane.xlu0 %4011
        %v4013 = vsub.f32 %v4009, %v4012
        %v4014 = vmul.f32 %v4013, 1.442695
        %v4015 = vpow.pop %v4014
        %v4016 = vsel %vm3644, %v4015, 0.0
        %4017 = vadd.xlane.f32.xlu0 %v4016
        %v4018 = vpop.xlane.xlu0 %4017
        %v4019 = vrcp.pop %v4018
        %v4020 = vmul.f32 %v4015, %v4019
        %v4022 = vsel %vm3644, %v4020, 0
        %4024 = vmatpush.msra.mxu0 0.0
        %4025 = vmatpush.msra.mxu0 0.0
        %4026 = vmatpush.msra.mxu0 0.0
        %4027 = vmatpush.msra.mxu0 0.0
        %4028 = vmatpush.msra.mxu0 0.0
        %4029 = vmatpush.msra.mxu0 0.0
        %4030 = vmatpush.msra.mxu0 0.0
        %4031 = vmatpush.msra.mxu0 0.0
        %4032 = vmatpush.msra.mxu0 0.0
        %4033 = vmatpush.msra.mxu0 0.0
        %4034 = vmatpush.msra.mxu0 0.0
        %4035 = vmatpush.msra.mxu0 0.0
        %4036 = vmatpush.msra.mxu0 0.0
        %4037 = vmatpush.msra.mxu0 0.0
        %4038 = vmatpush.msra.mxu0 0.0
        %4039 = vmatpush.msra.mxu0 %v3981
        %4040 = vmatmul.f32.gmra.mxu0 %v4022
        %v4041 = vpop.f32.mrf.mxu0
        %v4042 = vadd.f32 0.0, %v4041
        %4043 = vdwg.mxu0
        %s4044 = scalar_lea.vmem %s47, 32
        %v4045 = vld [vmem:[%s4044] sm:$0xff]
        %v4046 = vld [vmem:[%s4044 + $0x8] sm:$0xff]
        %v4048 = vsel %vm3616, %v4042, 0
        %4050 = vmatpush.msra.mxu0 0.0
        %4051 = vmatpush.msra.mxu0 0.0
        %4052 = vmatpush.msra.mxu0 0.0
        %4053 = vmatpush.msra.mxu0 0.0
        %4054 = vmatpush.msra.mxu0 0.0
        %4055 = vmatpush.msra.mxu0 0.0
        %4056 = vmatpush.msra.mxu0 0.0
        %4057 = vmatpush.msra.mxu0 0.0
        %4058 = vmatpush.msra.mxu0 0.0
        %4059 = vmatpush.msra.mxu0 0.0
        %4060 = vmatpush.msra.mxu0 0.0
        %4061 = vmatpush.msra.mxu0 0.0
        %4062 = vmatpush.msra.mxu0 0.0
        %4063 = vmatpush.msra.mxu0 0.0
        %4064 = vmatpush.msra.mxu0 %v4046
        %4065 = vmatpush.msra.mxu0 %v4045
        %4066 = vmatmul.f32.gmra.mxu0 %v4048
        %v4067 = vpop.f32.mrf.mxu0
        %v4068 = vadd.f32 0.0, %v4067
        %4069 = vdwg.mxu0
        %v4070 = vadd.f32 %v3885, %v4068
        %v4071 = vld [vmem:[%s49] sm:$0x1]
        %v4073 = vperm.slane %v4071, 0
        %v4075 = vadd.f32 %v4070, %v4073
        %v4077 = vrot.slane %v4075, 1
        %v4078 = vrot.slane %v4075, 2
        %v4079 = vrot.slane %v4075, 3
        %v4080 = vrot.slane %v4075, 4
        %v4081 = vrot.slane %v4075, 5
        %v4082 = vrot.slane %v4075, 6
        %v4083 = vrot.slane %v4075, 7
        %v4092 = vadd.f32 %v3342, %v4075
        %v4093 = vadd.f32 %v3343, %v4077
        %v4094 = vadd.f32 %v3344, %v4078
        %v4095 = vadd.f32 %v3345, %v4079
        %v4096 = vadd.f32 %v3346, %v4080
        %v4097 = vadd.f32 %v3347, %v4081
        %v4098 = vadd.f32 %v3348, %v4082
        %v4099 = vadd.f32 %v3349, %v4083
        %v4100 = vld [vmem:[%s51] sm:$0x1]
        %v4101 = vld [vmem:[%s53] sm:$0x1]
        %v4110 = vrot.slane %v4093, 7
        %v4111 = vsel %vm1699, %v4110, %v4092
        %v4112 = vrot.slane %v4094, 6
        %v4113 = vsel %vm1701, %v4112, %v4111
        %v4114 = vrot.slane %v4095, 5
        %v4115 = vsel %vm1703, %v4114, %v4113
        %v4116 = vrot.slane %v4096, 4
        %v4117 = vsel %vm1705, %v4116, %v4115
        %v4118 = vrot.slane %v4097, 3
        %v4119 = vsel %vm1707, %v4118, %v4117
        %v4120 = vrot.slane %v4098, 2
        %v4121 = vsel %vm1709, %v4120, %v4119
        %v4122 = vrot.slane %v4099, 1
        %v4123 = vsel %vm1711, %v4122, %v4121
        %v4125 = vsel %vm3172, %v4123, 0.0
        %4126 = vadd.xlane.f32.xlu0 %v4125
        %v4127 = vpop.xlane.xlu0 %4126
        %v4128 = vmul.f32 %v4127, %v3384
        %v4130 = vrot.slane %v4128, 1
        %v4131 = vrot.slane %v4128, 2
        %v4132 = vrot.slane %v4128, 3
        %v4133 = vrot.slane %v4128, 4
        %v4134 = vrot.slane %v4128, 5
        %v4135 = vrot.slane %v4128, 6
        %v4136 = vrot.slane %v4128, 7
        %v4145 = vsub.f32 %v4092, %v4128
        %v4146 = vsub.f32 %v4093, %v4130
        %v4147 = vsub.f32 %v4094, %v4131
        %v4148 = vsub.f32 %v4095, %v4132
        %v4149 = vsub.f32 %v4096, %v4133
        %v4150 = vsub.f32 %v4097, %v4134
        %v4151 = vsub.f32 %v4098, %v4135
        %v4152 = vsub.f32 %v4099, %v4136
        %v4153 = vmul.f32 %v4145, %v4145
        %v4154 = vmul.f32 %v4146, %v4146
        %v4155 = vmul.f32 %v4147, %v4147
        %v4156 = vmul.f32 %v4148, %v4148
        %v4157 = vmul.f32 %v4149, %v4149
        %v4158 = vmul.f32 %v4150, %v4150
        %v4159 = vmul.f32 %v4151, %v4151
        %v4160 = vmul.f32 %v4152, %v4152
        %v4169 = vrot.slane %v4154, 7
        %v4170 = vsel %vm1699, %v4169, %v4153
        %v4171 = vrot.slane %v4155, 6
        %v4172 = vsel %vm1701, %v4171, %v4170
        %v4173 = vrot.slane %v4156, 5
        %v4174 = vsel %vm1703, %v4173, %v4172
        %v4175 = vrot.slane %v4157, 4
        %v4176 = vsel %vm1705, %v4175, %v4174
        %v4177 = vrot.slane %v4158, 3
        %v4178 = vsel %vm1707, %v4177, %v4176
        %v4179 = vrot.slane %v4159, 2
        %v4180 = vsel %vm1709, %v4179, %v4178
        %v4181 = vrot.slane %v4160, 1
        %v4182 = vsel %vm1711, %v4181, %v4180
        %v4184 = vsel %vm3172, %v4182, 0.0
        %4185 = vadd.xlane.f32.xlu0 %v4184
        %v4186 = vpop.xlane.xlu0 %4185
        %v4187 = vmul.f32 %v4186, %v3384
        %v4188 = vadd.f32 %v4187, 1e-05
        %v4189 = vrsqrt.pop %v4188
        %v4190 = vmul.f32 %v4189, %v4188
        %v4191 = vmul.f32 %v4190, %v4189
        %v4192 = vmul.f32 0.5, %v4191
        %v4193 = vsub.f32 1.5, %v4192
        %v4194 = vmul.f32 %v4189, %v4193
        %vm4195 = vweird.f32 %v4188
        %vm4196 = vweird.f32 %v4189
        %vm4197 = vmor %vm4195, %vm4196
        %v4198 = vsel %vm4197, %v4189, %v4194
        %v4200 = vrot.slane %v4198, 1
        %v4201 = vrot.slane %v4198, 2
        %v4202 = vrot.slane %v4198, 3
        %v4203 = vrot.slane %v4198, 4
        %v4204 = vrot.slane %v4198, 5
        %v4205 = vrot.slane %v4198, 6
        %v4206 = vrot.slane %v4198, 7
        %v4215 = vmul.f32 %v4145, %v4198
        %v4216 = vmul.f32 %v4146, %v4200
        %v4217 = vmul.f32 %v4147, %v4201
        %v4218 = vmul.f32 %v4148, %v4202
        %v4219 = vmul.f32 %v4149, %v4203
        %v4220 = vmul.f32 %v4150, %v4204
        %v4221 = vmul.f32 %v4151, %v4205
        %v4222 = vmul.f32 %v4152, %v4206
        %v4224 = vperm.slane %v4100, 0
        %v4226 = vmul.f32 %v4215, %v4224
        %v4227 = vmul.f32 %v4216, %v4224
        %v4228 = vmul.f32 %v4217, %v4224
        %v4229 = vmul.f32 %v4218, %v4224
        %v4230 = vmul.f32 %v4219, %v4224
        %v4231 = vmul.f32 %v4220, %v4224
        %v4232 = vmul.f32 %v4221, %v4224
        %v4233 = vmul.f32 %v4222, %v4224
        %v4235 = vperm.slane %v4101, 0
        %v4237 = vadd.f32 %v4226, %v4235
        %v4238 = vadd.f32 %v4227, %v4235
        %v4239 = vadd.f32 %v4228, %v4235
        %v4240 = vadd.f32 %v4229, %v4235
        %v4241 = vadd.f32 %v4230, %v4235
        %v4242 = vadd.f32 %v4231, %v4235
        %v4243 = vadd.f32 %v4232, %v4235
        %v4244 = vadd.f32 %v4233, %v4235
        %v4245 = vld [vmem:[%s55] sm:$0xff]
        %v4246 = vld [vmem:[%s55 + $0x8] sm:$0xff]
        %v4247 = vld [vmem:[%s55 + $0x10] sm:$0xff]
        %v4248 = vld [vmem:[%s55 + $0x18] sm:$0xff]
        %v4249 = vld [vmem:[%s55 + $0x20] sm:$0xff]
        %v4250 = vld [vmem:[%s55 + $0x28] sm:$0xff]
        %v4259 = vrot.slane %v4238, 7
        %v4260 = vsel %vm1699, %v4259, %v4237
        %v4261 = vrot.slane %v4239, 6
        %v4262 = vsel %vm1701, %v4261, %v4260
        %v4263 = vrot.slane %v4240, 5
        %v4264 = vsel %vm1703, %v4263, %v4262
        %v4265 = vrot.slane %v4241, 4
        %v4266 = vsel %vm1705, %v4265, %v4264
        %v4267 = vrot.slane %v4242, 3
        %v4268 = vsel %vm1707, %v4267, %v4266
        %v4269 = vrot.slane %v4243, 2
        %v4270 = vsel %vm1709, %v4269, %v4268
        %v4271 = vrot.slane %v4244, 1
        %v4272 = vsel %vm1711, %v4271, %v4270
        %v4273 = vsel %vm3172, %v4272, 0
        %4275 = vmatpush.msra.mxu0 0.0
        %4276 = vmatpush.msra.mxu0 0.0
        %4277 = vmatpush.msra.mxu0 0.0
        %4278 = vmatpush.msra.mxu0 0.0
        %4279 = vmatpush.msra.mxu0 0.0
        %4280 = vmatpush.msra.mxu0 0.0
        %4281 = vmatpush.msra.mxu0 0.0
        %4282 = vmatpush.msra.mxu0 0.0
        %4283 = vmatpush.msra.mxu0 0.0
        %4284 = vmatpush.msra.mxu0 0.0
        %4285 = vmatpush.msra.mxu0 %v4250
        %4286 = vmatpush.msra.mxu0 %v4249
        %4287 = vmatpush.msra.mxu0 %v4248
        %4288 = vmatpush.msra.mxu0 %v4247
        %4289 = vmatpush.msra.mxu0 %v4246
        %4290 = vmatpush.msra.mxu0 %v4245
        %4291 = vmatmul.f32.gmra.mxu0 %v4273
        %v4292 = vpop.f32.mrf.mxu0
        %v4293 = vadd.f32 0.0, %v4292
        %4294 = vdwg.mxu0
        %v4295 = vld [vmem:[%s57] sm:$0xff]
        %v4296 = vld [vmem:[%s57 + $0x8] sm:$0xff]
        %v4297 = vld [vmem:[%s57 + $0x10] sm:$0xff]
        %v4298 = vld [vmem:[%s57 + $0x18] sm:$0xff]
        %v4299 = vld [vmem:[%s57 + $0x20] sm:$0xff]
        %v4300 = vld [vmem:[%s57 + $0x28] sm:$0xff]
        %4301 = vmatpush.msra.mxu0 0.0
        %4302 = vmatpush.msra.mxu0 0.0
        %4303 = vmatpush.msra.mxu0 0.0
        %4304 = vmatpush.msra.mxu0 0.0
        %4305 = vmatpush.msra.mxu0 0.0
        %4306 = vmatpush.msra.mxu0 0.0
        %4307 = vmatpush.msra.mxu0 0.0
        %4308 = vmatpush.msra.mxu0 0.0
        %4309 = vmatpush.msra.mxu0 0.0
        %4310 = vmatpush.msra.mxu0 0.0
        %4311 = vmatpush.msra.mxu0 %v4300
        %4312 = vmatpush.msra.mxu0 %v4299
        %4313 = vmatpush.msra.mxu0 %v4298
        %4314 = vmatpush.msra.mxu0 %v4297
        %4315 = vmatpush.msra.mxu0 %v4296
        %4316 = vmatpush.msra.mxu0 %v4295
        %4317 = vmatmul.f32.gmra.mxu0 %v4273
        %v4318 = vpop.f32.mrf.mxu0
        %v4319 = vadd.f32 0.0, %v4318
        %4320 = vdwg.mxu0
        %v4321 = vsub.f32 0.0, %v4293
        %v4322 = vmul.f32 %v4321, 1.442695
        %v4323 = vpow.pop %v4322
        %v4324 = vadd.f32 %v4323, 1.0
        %v4325 = vrcp.pop %v4324
        %v4326 = vmul.f32 %v4324, %v4325
        %v4327 = vsub.f32 1.0, %v4326
        %v4328 = vmul.f32 %v4325, %v4327
        %v4329 = vadd.f32 %v4325, %v4328
        %vm4330 = vweird.f32 %v4324
        %vm4331 = vweird.f32 %v4325
        %vm4332 = vmor %vm4330, %vm4331
        %v4333 = vsel %vm4332, %v4325, %v4329
        %v4334 = vand.u32 2147483647, %v4324
        %vm4335 = vcmp.eq.f32.partialorder %v4334, 8.507059e+37
        %v4336 = vand.u32 %v4324, 2147483648
        %v4337 = vor.u32 1.1754944e-38, %v4336
        %v4338 = vsel %vm4335, %v4337, %v4333
        %v4339 = vmul.f32 1.0, %v4338
        %v4340 = vmul.f32 %v4293, %v4339
        %v4341 = vmul.f32 %v4340, %v4319
        %v4342 = vld [vmem:[%s59] sm:$0xff]
        %v4343 = vld [vmem:[%s59 + $0x8] sm:$0xff]
        %v4344 = vld [vmem:[%s59 + $0x10] sm:$0xff]
        %v4345 = vld [vmem:[%s59 + $0x18] sm:$0xff]
        %v4346 = vld [vmem:[%s59 + $0x20] sm:$0xff]
        %v4347 = vld [vmem:[%s59 + $0x28] sm:$0xff]
        %v4348 = vld [vmem:[%s59 + $0x30] sm:$0xff]
        %v4349 = vld [vmem:[%s59 + $0x38] sm:$0xff]
        %v4350 = vld [vmem:[%s59 + $0x40] sm:$0xff]
        %v4351 = vld [vmem:[%s59 + $0x48] sm:$0xff]
        %v4352 = vld [vmem:[%s59 + $0x50] sm:$0xff]
        %v4353 = vld [vmem:[%s59 + $0x58] sm:$0xff]
        %v4354 = vld [vmem:[%s59 + $0x60] sm:$0xff]
        %v4355 = vld [vmem:[%s59 + $0x68] sm:$0xff]
        %v4356 = vld [vmem:[%s59 + $0x70] sm:$0xff]
        %v4357 = vld [vmem:[%s59 + $0x78] sm:$0xff]
        %4358 = vmatpush.msra.mxu0 %v4357
        %4359 = vmatpush.msra.mxu0 %v4356
        %4360 = vmatpush.msra.mxu0 %v4355
        %4361 = vmatpush.msra.mxu0 %v4354
        %4362 = vmatpush.msra.mxu0 %v4353
        %4363 = vmatpush.msra.mxu0 %v4352
        %4364 = vmatpush.msra.mxu0 %v4351
        %4365 = vmatpush.msra.mxu0 %v4350
        %4366 = vmatpush.msra.mxu0 %v4349
        %4367 = vmatpush.msra.mxu0 %v4348
        %4368 = vmatpush.msra.mxu0 %v4347
        %4369 = vmatpush.msra.mxu0 %v4346
        %4370 = vmatpush.msra.mxu0 %v4345
        %4371 = vmatpush.msra.mxu0 %v4344
        %4372 = vmatpush.msra.mxu0 %v4343
        %4373 = vmatpush.msra.mxu0 %v4342
        %4374 = vmatmul.f32.gmra.mxu0 %v4341
        %v4375 = vpop.f32.mrf.mxu0
        %v4376 = vadd.f32 0.0, %v4375
        %4377 = vdwg.mxu0
        %v4379 = vrot.slane %v4376, 1
        %v4380 = vrot.slane %v4376, 2
        %v4381 = vrot.slane %v4376, 3
        %v4382 = vrot.slane %v4376, 4
        %v4383 = vrot.slane %v4376, 5
        %v4384 = vrot.slane %v4376, 6
        %v4385 = vrot.slane %v4376, 7
        %v4394 = vadd.f32 %v4092, %v4376
        %v4395 = vadd.f32 %v4093, %v4379
        %v4396 = vadd.f32 %v4094, %v4380
        %v4397 = vadd.f32 %v4095, %v4381
        %v4398 = vadd.f32 %v4096, %v4382
        %v4399 = vadd.f32 %v4097, %v4383
        %v4400 = vadd.f32 %v4098, %v4384
        %v4401 = vadd.f32 %v4099, %v4385
        %v4402 = vadd.f32 %v4394, %v3324
        %v4403 = vadd.f32 %v4395, %v3327
        %v4404 = vadd.f32 %v4396, %v3328
        %v4405 = vadd.f32 %v4397, %v3329
        %v4406 = vadd.f32 %v4398, %v3330
        %v4407 = vadd.f32 %v4399, %v3331
        %v4408 = vadd.f32 %v4400, %v3332
        %v4409 = vadd.f32 %v4401, %v3333
        %s4410 = scalar_lea.vmem %s31, 1
        %v4411 = vld [vmem:[%s4410] sm:$0x1]
        %s4412 = scalar_lea.vmem %s33, 1
        %v4413 = vld [vmem:[%s4412] sm:$0x1]
        %v4422 = vrot.slane %v4403, 7
        %v4423 = vsel %vm1699, %v4422, %v4402
        %v4424 = vrot.slane %v4404, 6
        %v4425 = vsel %vm1701, %v4424, %v4423
        %v4426 = vrot.slane %v4405, 5
        %v4427 = vsel %vm1703, %v4426, %v4425
        %v4428 = vrot.slane %v4406, 4
        %v4429 = vsel %vm1705, %v4428, %v4427
        %v4430 = vrot.slane %v4407, 3
        %v4431 = vsel %vm1707, %v4430, %v4429
        %v4432 = vrot.slane %v4408, 2
        %v4433 = vsel %vm1709, %v4432, %v4431
        %v4434 = vrot.slane %v4409, 1
        %v4435 = vsel %vm1711, %v4434, %v4433
        %v4437 = vsel %vm3172, %v4435, 0.0
        %4438 = vadd.xlane.f32.xlu0 %v4437
        %v4439 = vpop.xlane.xlu0 %4438
        %v4440 = vmul.f32 %v4439, %v3384
        %v4442 = vrot.slane %v4440, 1
        %v4443 = vrot.slane %v4440, 2
        %v4444 = vrot.slane %v4440, 3
        %v4445 = vrot.slane %v4440, 4
        %v4446 = vrot.slane %v4440, 5
        %v4447 = vrot.slane %v4440, 6
        %v4448 = vrot.slane %v4440, 7
        %v4457 = vsub.f32 %v4402, %v4440
        %v4458 = vsub.f32 %v4403, %v4442
        %v4459 = vsub.f32 %v4404, %v4443
        %v4460 = vsub.f32 %v4405, %v4444
        %v4461 = vsub.f32 %v4406, %v4445
        %v4462 = vsub.f32 %v4407, %v4446
        %v4463 = vsub.f32 %v4408, %v4447
        %v4464 = vsub.f32 %v4409, %v4448
        %v4465 = vmul.f32 %v4457, %v4457
        %v4466 = vmul.f32 %v4458, %v4458
        %v4467 = vmul.f32 %v4459, %v4459
        %v4468 = vmul.f32 %v4460, %v4460
        %v4469 = vmul.f32 %v4461, %v4461
        %v4470 = vmul.f32 %v4462, %v4462
        %v4471 = vmul.f32 %v4463, %v4463
        %v4472 = vmul.f32 %v4464, %v4464
        %v4481 = vrot.slane %v4466, 7
        %v4482 = vsel %vm1699, %v4481, %v4465
        %v4483 = vrot.slane %v4467, 6
        %v4484 = vsel %vm1701, %v4483, %v4482
        %v4485 = vrot.slane %v4468, 5
        %v4486 = vsel %vm1703, %v4485, %v4484
        %v4487 = vrot.slane %v4469, 4
        %v4488 = vsel %vm1705, %v4487, %v4486
        %v4489 = vrot.slane %v4470, 3
        %v4490 = vsel %vm1707, %v4489, %v4488
        %v4491 = vrot.slane %v4471, 2
        %v4492 = vsel %vm1709, %v4491, %v4490
        %v4493 = vrot.slane %v4472, 1
        %v4494 = vsel %vm1711, %v4493, %v4492
        %v4496 = vsel %vm3172, %v4494, 0.0
        %4497 = vadd.xlane.f32.xlu0 %v4496
        %v4498 = vpop.xlane.xlu0 %4497
        %v4499 = vmul.f32 %v4498, %v3384
        %v4500 = vadd.f32 %v4499, 1e-05
        %v4501 = vrsqrt.pop %v4500
        %v4502 = vmul.f32 %v4501, %v4500
        %v4503 = vmul.f32 %v4502, %v4501
        %v4504 = vmul.f32 0.5, %v4503
        %v4505 = vsub.f32 1.5, %v4504
        %v4506 = vmul.f32 %v4501, %v4505
        %vm4507 = vweird.f32 %v4500
        %vm4508 = vweird.f32 %v4501
        %vm4509 = vmor %vm4507, %vm4508
        %v4510 = vsel %vm4509, %v4501, %v4506
        %v4512 = vrot.slane %v4510, 1
        %v4513 = vrot.slane %v4510, 2
        %v4514 = vrot.slane %v4510, 3
        %v4515 = vrot.slane %v4510, 4
        %v4516 = vrot.slane %v4510, 5
        %v4517 = vrot.slane %v4510, 6
        %v4518 = vrot.slane %v4510, 7
        %v4527 = vmul.f32 %v4457, %v4510
        %v4528 = vmul.f32 %v4458, %v4512
        %v4529 = vmul.f32 %v4459, %v4513
        %v4530 = vmul.f32 %v4460, %v4514
        %v4531 = vmul.f32 %v4461, %v4515
        %v4532 = vmul.f32 %v4462, %v4516
        %v4533 = vmul.f32 %v4463, %v4517
        %v4534 = vmul.f32 %v4464, %v4518
        %v4536 = vperm.slane %v4411, 0
        %v4538 = vmul.f32 %v4527, %v4536
        %v4539 = vmul.f32 %v4528, %v4536
        %v4540 = vmul.f32 %v4529, %v4536
        %v4541 = vmul.f32 %v4530, %v4536
        %v4542 = vmul.f32 %v4531, %v4536
        %v4543 = vmul.f32 %v4532, %v4536
        %v4544 = vmul.f32 %v4533, %v4536
        %v4545 = vmul.f32 %v4534, %v4536
        %v4547 = vperm.slane %v4413, 0
        %v4549 = vadd.f32 %v4538, %v4547
        %v4550 = vadd.f32 %v4539, %v4547
        %v4551 = vadd.f32 %v4540, %v4547
        %v4552 = vadd.f32 %v4541, %v4547
        %v4553 = vadd.f32 %v4542, %v4547
        %v4554 = vadd.f32 %v4543, %v4547
        %v4555 = vadd.f32 %v4544, %v4547
        %v4556 = vadd.f32 %v4545, %v4547
        %s4557 = scalar_lea.vmem %s35, 144
        %v4558 = vld [vmem:[%s4557] sm:$0xff]
        %v4559 = vld [vmem:[%s4557 + $0x8] sm:$0xff]
        %v4560 = vld [vmem:[%s4557 + $0x10] sm:$0xff]
        %v4561 = vld [vmem:[%s4557 + $0x18] sm:$0xff]
        %v4562 = vld [vmem:[%s4557 + $0x20] sm:$0xff]
        %v4563 = vld [vmem:[%s4557 + $0x28] sm:$0xff]
        %s4564 = scalar_lea.vmem %s37, 3
        %v4565 = vld [vmem:[%s4564] sm:$0x1]
        %v4567 = vperm.slane %v4565, 0
        %v4577 = vrot.slane %v4550, 7
        %v4578 = vsel %vm1699, %v4577, %v4549
        %v4579 = vrot.slane %v4551, 6
        %v4580 = vsel %vm1701, %v4579, %v4578
        %v4581 = vrot.slane %v4552, 5
        %v4582 = vsel %vm1703, %v4581, %v4580
        %v4583 = vrot.slane %v4553, 4
        %v4584 = vsel %vm1705, %v4583, %v4582
        %v4585 = vrot.slane %v4554, 3
        %v4586 = vsel %vm1707, %v4585, %v4584
        %v4587 = vrot.slane %v4555, 2
        %v4588 = vsel %vm1709, %v4587, %v4586
        %v4589 = vrot.slane %v4556, 1
        %v4590 = vsel %vm1711, %v4589, %v4588
        %v4591 = vsel %vm3172, %v4590, 0
        %4593 = vmatpush.msra.mxu0 0.0
        %4594 = vmatpush.msra.mxu0 0.0
        %4595 = vmatpush.msra.mxu0 0.0
        %4596 = vmatpush.msra.mxu0 0.0
        %4597 = vmatpush.msra.mxu0 0.0
        %4598 = vmatpush.msra.mxu0 0.0
        %4599 = vmatpush.msra.mxu0 0.0
        %4600 = vmatpush.msra.mxu0 0.0
        %4601 = vmatpush.msra.mxu0 0.0
        %4602 = vmatpush.msra.mxu0 0.0
        %4603 = vmatpush.msra.mxu0 %v4563
        %4604 = vmatpush.msra.mxu0 %v4562
        %4605 = vmatpush.msra.mxu0 %v4561
        %4606 = vmatpush.msra.mxu0 %v4560
        %4607 = vmatpush.msra.mxu0 %v4559
        %4608 = vmatpush.msra.mxu0 %v4558
        %4609 = vmatmul.f32.gmra.mxu0 %v4591
        %v4610 = vpop.f32.mrf.mxu0
        %v4611 = vadd.f32 %v4567, %v4610
        %4612 = vdwg.mxu0
        %s4613 = scalar_lea.vmem %s39, 144
        %v4614 = vld [vmem:[%s4613] sm:$0xff]
        %v4615 = vld [vmem:[%s4613 + $0x8] sm:$0xff]
        %v4616 = vld [vmem:[%s4613 + $0x10] sm:$0xff]
        %v4617 = vld [vmem:[%s4613 + $0x18] sm:$0xff]
        %v4618 = vld [vmem:[%s4613 + $0x20] sm:$0xff]
        %v4619 = vld [vmem:[%s4613 + $0x28] sm:$0xff]
        %s4620 = scalar_lea.vmem %s41, 3
        %v4621 = vld [vmem:[%s4620] sm:$0x1]
        %v4623 = vperm.slane %v4621, 0
        %4625 = vmatpush.msra.mxu0 0.0
        %4626 = vmatpush.msra.mxu0 0.0
        %4627 = vmatpush.msra.mxu0 0.0
        %4628 = vmatpush.msra.mxu0 0.0
        %4629 = vmatpush.msra.mxu0 0.0
        %4630 = vmatpush.msra.mxu0 0.0
        %4631 = vmatpush.msra.mxu0 0.0
        %4632 = vmatpush.msra.mxu0 0.0
        %4633 = vmatpush.msra.mxu0 0.0
        %4634 = vmatpush.msra.mxu0 0.0
        %4635 = vmatpush.msra.mxu0 %v4619
        %4636 = vmatpush.msra.mxu0 %v4618
        %4637 = vmatpush.msra.mxu0 %v4617
        %4638 = vmatpush.msra.mxu0 %v4616
        %4639 = vmatpush.msra.mxu0 %v4615
        %4640 = vmatpush.msra.mxu0 %v4614
        %4641 = vmatmul.f32.gmra.mxu0 %v4591
        %v4642 = vpop.f32.mrf.mxu0
        %v4643 = vadd.f32 %v4623, %v4642
        %4644 = vdwg.mxu0
        %s4645 = scalar_lea.vmem %s43, 144
        %v4646 = vld [vmem:[%s4645] sm:$0xff]
        %v4647 = vld [vmem:[%s4645 + $0x8] sm:$0xff]
        %v4648 = vld [vmem:[%s4645 + $0x10] sm:$0xff]
        %v4649 = vld [vmem:[%s4645 + $0x18] sm:$0xff]
        %v4650 = vld [vmem:[%s4645 + $0x20] sm:$0xff]
        %v4651 = vld [vmem:[%s4645 + $0x28] sm:$0xff]
        %s4652 = scalar_lea.vmem %s45, 3
        %v4653 = vld [vmem:[%s4652] sm:$0x1]
        %v4655 = vperm.slane %v4653, 0
        %4657 = vmatpush.msra.mxu0 0.0
        %4658 = vmatpush.msra.mxu0 0.0
        %4659 = vmatpush.msra.mxu0 0.0
        %4660 = vmatpush.msra.mxu0 0.0
        %4661 = vmatpush.msra.mxu0 0.0
        %4662 = vmatpush.msra.mxu0 0.0
        %4663 = vmatpush.msra.mxu0 0.0
        %4664 = vmatpush.msra.mxu0 0.0
        %4665 = vmatpush.msra.mxu0 0.0
        %4666 = vmatpush.msra.mxu0 0.0
        %4667 = vmatpush.msra.mxu0 %v4651
        %4668 = vmatpush.msra.mxu0 %v4650
        %4669 = vmatpush.msra.mxu0 %v4649
        %4670 = vmatpush.msra.mxu0 %v4648
        %4671 = vmatpush.msra.mxu0 %v4647
        %4672 = vmatpush.msra.mxu0 %v4646
        %4673 = vmatmul.f32.gmra.mxu0 %v4591
        %v4674 = vpop.f32.mrf.mxu0
        %v4675 = vadd.f32 %v4655, %v4674
        %4676 = vdwg.mxu0
        %v4678 = vsel %vm3616, %v4611, 0
        %v4681 = vsel %vm3616, %v4643, 0
        %4683 = vmatpush.xpose.msra.mxu0 0.0
        %4684 = vmatpush.xpose.msra.mxu0 0.0
        %4685 = vmatpush.xpose.msra.mxu0 0.0
        %4686 = vmatpush.xpose.msra.mxu0 0.0
        %4687 = vmatpush.xpose.msra.mxu0 0.0
        %4688 = vmatpush.xpose.msra.mxu0 0.0
        %4689 = vmatpush.xpose.msra.mxu0 0.0
        %4690 = vmatpush.xpose.msra.mxu0 0.0
        %4691 = vmatpush.xpose.msra.mxu0 0.0
        %4692 = vmatpush.xpose.msra.mxu0 0.0
        %4693 = vmatpush.xpose.msra.mxu0 0.0
        %4694 = vmatpush.xpose.msra.mxu0 0.0
        %4695 = vmatpush.xpose.msra.mxu0 0.0
        %4696 = vmatpush.xpose.msra.mxu0 0.0
        %4697 = vmatpush.xpose.msra.mxu0 0.0
        %4698 = vmatpush.xpose.msra.mxu0 %v4681
        %4699 = vmatmul.f32.gmra.mxu0 %v4678
        %v4700 = vpop.f32.mrf.mxu0
        %v4701 = vadd.f32 0.0, %v4700
        %4702 = vdwg.mxu0
        %v4703 = vmul.f32 %v4701, 0.25
        %v4704 = vsel %vm3644, %v4703, -inf
        %4705 = vmax.xlane.f32.xlu0 %v4704
        %v4706 = vpop.xlane.xlu0 %4705
        %v4707 = vsub.f32 %v4703, %v4706
        %v4708 = vmul.f32 %v4707, 1.442695
        %v4709 = vpow.pop %v4708
        %v4710 = vsel %vm3644, %v4709, 0.0
        %4711 = vadd.xlane.f32.xlu0 %v4710
        %v4712 = vpop.xlane.xlu0 %4711
        %v4713 = vrcp.pop %v4712
        %v4714 = vmul.f32 %v4709, %v4713
        %v4716 = vsel %vm3644, %v4714, 0
        %4718 = vmatpush.msra.mxu0 0.0
        %4719 = vmatpush.msra.mxu0 0.0
        %4720 = vmatpush.msra.mxu0 0.0
        %4721 = vmatpush.msra.mxu0 0.0
        %4722 = vmatpush.msra.mxu0 0.0
        %4723 = vmatpush.msra.mxu0 0.0
        %4724 = vmatpush.msra.mxu0 0.0
        %4725 = vmatpush.msra.mxu0 0.0
        %4726 = vmatpush.msra.mxu0 0.0
        %4727 = vmatpush.msra.mxu0 0.0
        %4728 = vmatpush.msra.mxu0 0.0
        %4729 = vmatpush.msra.mxu0 0.0
        %4730 = vmatpush.msra.mxu0 0.0
        %4731 = vmatpush.msra.mxu0 0.0
        %4732 = vmatpush.msra.mxu0 0.0
        %4733 = vmatpush.msra.mxu0 %v4675
        %4734 = vmatmul.f32.gmra.mxu0 %v4716
        %v4735 = vpop.f32.mrf.mxu0
        %v4736 = vadd.f32 0.0, %v4735
        %4737 = vdwg.mxu0
        %s4738 = scalar_lea.vmem %s47, 48
        %v4739 = vld [vmem:[%s4738] sm:$0xff]
        %v4740 = vld [vmem:[%s4738 + $0x8] sm:$0xff]
        %s4741 = scalar_lea.vmem %s35, 192
        %v4742 = vld [vmem:[%s4741] sm:$0xff]
        %v4743 = vld [vmem:[%s4741 + $0x8] sm:$0xff]
        %v4744 = vld [vmem:[%s4741 + $0x10] sm:$0xff]
        %v4745 = vld [vmem:[%s4741 + $0x18] sm:$0xff]
        %v4746 = vld [vmem:[%s4741 + $0x20] sm:$0xff]
        %v4747 = vld [vmem:[%s4741 + $0x28] sm:$0xff]
        %s4748 = scalar_lea.vmem %s37, 4
        %v4749 = vld [vmem:[%s4748] sm:$0x1]
        %v4751 = vperm.slane %v4749, 0
        %4753 = vmatpush.msra.mxu0 0.0
        %4754 = vmatpush.msra.mxu0 0.0
        %4755 = vmatpush.msra.mxu0 0.0
        %4756 = vmatpush.msra.mxu0 0.0
        %4757 = vmatpush.msra.mxu0 0.0
        %4758 = vmatpush.msra.mxu0 0.0
        %4759 = vmatpush.msra.mxu0 0.0
        %4760 = vmatpush.msra.mxu0 0.0
        %4761 = vmatpush.msra.mxu0 0.0
        %4762 = vmatpush.msra.mxu0 0.0
        %4763 = vmatpush.msra.mxu0 %v4747
        %4764 = vmatpush.msra.mxu0 %v4746
        %4765 = vmatpush.msra.mxu0 %v4745
        %4766 = vmatpush.msra.mxu0 %v4744
        %4767 = vmatpush.msra.mxu0 %v4743
        %4768 = vmatpush.msra.mxu0 %v4742
        %4769 = vmatmul.f32.gmra.mxu0 %v4591
        %v4770 = vpop.f32.mrf.mxu0
        %v4771 = vadd.f32 %v4751, %v4770
        %4772 = vdwg.mxu0
        %s4773 = scalar_lea.vmem %s39, 192
        %v4774 = vld [vmem:[%s4773] sm:$0xff]
        %v4775 = vld [vmem:[%s4773 + $0x8] sm:$0xff]
        %v4776 = vld [vmem:[%s4773 + $0x10] sm:$0xff]
        %v4777 = vld [vmem:[%s4773 + $0x18] sm:$0xff]
        %v4778 = vld [vmem:[%s4773 + $0x20] sm:$0xff]
        %v4779 = vld [vmem:[%s4773 + $0x28] sm:$0xff]
        %s4780 = scalar_lea.vmem %s41, 4
        %v4781 = vld [vmem:[%s4780] sm:$0x1]
        %v4783 = vperm.slane %v4781, 0
        %4785 = vmatpush.msra.mxu0 0.0
        %4786 = vmatpush.msra.mxu0 0.0
        %4787 = vmatpush.msra.mxu0 0.0
        %4788 = vmatpush.msra.mxu0 0.0
        %4789 = vmatpush.msra.mxu0 0.0
        %4790 = vmatpush.msra.mxu0 0.0
        %4791 = vmatpush.msra.mxu0 0.0
        %4792 = vmatpush.msra.mxu0 0.0
        %4793 = vmatpush.msra.mxu0 0.0
        %4794 = vmatpush.msra.mxu0 0.0
        %4795 = vmatpush.msra.mxu0 %v4779
        %4796 = vmatpush.msra.mxu0 %v4778
        %4797 = vmatpush.msra.mxu0 %v4777
        %4798 = vmatpush.msra.mxu0 %v4776
        %4799 = vmatpush.msra.mxu0 %v4775
        %4800 = vmatpush.msra.mxu0 %v4774
        %4801 = vmatmul.f32.gmra.mxu0 %v4591
        %v4802 = vpop.f32.mrf.mxu0
        %v4803 = vadd.f32 %v4783, %v4802
        %4804 = vdwg.mxu0
        %s4805 = scalar_lea.vmem %s43, 192
        %v4806 = vld [vmem:[%s4805] sm:$0xff]
        %v4807 = vld [vmem:[%s4805 + $0x8] sm:$0xff]
        %v4808 = vld [vmem:[%s4805 + $0x10] sm:$0xff]
        %v4809 = vld [vmem:[%s4805 + $0x18] sm:$0xff]
        %v4810 = vld [vmem:[%s4805 + $0x20] sm:$0xff]
        %v4811 = vld [vmem:[%s4805 + $0x28] sm:$0xff]
        %s4812 = scalar_lea.vmem %s45, 4
        %v4813 = vld [vmem:[%s4812] sm:$0x1]
        %v4815 = vperm.slane %v4813, 0
        %4817 = vmatpush.msra.mxu0 0.0
        %4818 = vmatpush.msra.mxu0 0.0
        %4819 = vmatpush.msra.mxu0 0.0
        %4820 = vmatpush.msra.mxu0 0.0
        %4821 = vmatpush.msra.mxu0 0.0
        %4822 = vmatpush.msra.mxu0 0.0
        %4823 = vmatpush.msra.mxu0 0.0
        %4824 = vmatpush.msra.mxu0 0.0
        %4825 = vmatpush.msra.mxu0 0.0
        %4826 = vmatpush.msra.mxu0 0.0
        %4827 = vmatpush.msra.mxu0 %v4811
        %4828 = vmatpush.msra.mxu0 %v4810
        %4829 = vmatpush.msra.mxu0 %v4809
        %4830 = vmatpush.msra.mxu0 %v4808
        %4831 = vmatpush.msra.mxu0 %v4807
        %4832 = vmatpush.msra.mxu0 %v4806
        %4833 = vmatmul.f32.gmra.mxu0 %v4591
        %v4834 = vpop.f32.mrf.mxu0
        %v4835 = vadd.f32 %v4815, %v4834
        %4836 = vdwg.mxu0
        %v4838 = vsel %vm3616, %v4771, 0
        %v4841 = vsel %vm3616, %v4803, 0
        %4843 = vmatpush.xpose.msra.mxu0 0.0
        %4844 = vmatpush.xpose.msra.mxu0 0.0
        %4845 = vmatpush.xpose.msra.mxu0 0.0
        %4846 = vmatpush.xpose.msra.mxu0 0.0
        %4847 = vmatpush.xpose.msra.mxu0 0.0
        %4848 = vmatpush.xpose.msra.mxu0 0.0
        %4849 = vmatpush.xpose.msra.mxu0 0.0
        %4850 = vmatpush.xpose.msra.mxu0 0.0
        %4851 = vmatpush.xpose.msra.mxu0 0.0
        %4852 = vmatpush.xpose.msra.mxu0 0.0
        %4853 = vmatpush.xpose.msra.mxu0 0.0
        %4854 = vmatpush.xpose.msra.mxu0 0.0
        %4855 = vmatpush.xpose.msra.mxu0 0.0
        %4856 = vmatpush.xpose.msra.mxu0 0.0
        %4857 = vmatpush.xpose.msra.mxu0 0.0
        %4858 = vmatpush.xpose.msra.mxu0 %v4841
        %4859 = vmatmul.f32.gmra.mxu0 %v4838
        %v4860 = vpop.f32.mrf.mxu0
        %v4861 = vadd.f32 0.0, %v4860
        %4862 = vdwg.mxu0
        %v4863 = vmul.f32 %v4861, 0.25
        %v4864 = vsel %vm3644, %v4863, -inf
        %4865 = vmax.xlane.f32.xlu0 %v4864
        %v4866 = vpop.xlane.xlu0 %4865
        %v4867 = vsub.f32 %v4863, %v4866
        %v4868 = vmul.f32 %v4867, 1.442695
        %v4869 = vpow.pop %v4868
        %v4870 = vsel %vm3644, %v4869, 0.0
        %4871 = vadd.xlane.f32.xlu0 %v4870
        %v4872 = vpop.xlane.xlu0 %4871
        %v4873 = vrcp.pop %v4872
        %v4874 = vmul.f32 %v4869, %v4873
        %v4876 = vsel %vm3644, %v4874, 0
        %4878 = vmatpush.msra.mxu0 0.0
        %4879 = vmatpush.msra.mxu0 0.0
        %4880 = vmatpush.msra.mxu0 0.0
        %4881 = vmatpush.msra.mxu0 0.0
        %4882 = vmatpush.msra.mxu0 0.0
        %4883 = vmatpush.msra.mxu0 0.0
        %4884 = vmatpush.msra.mxu0 0.0
        %4885 = vmatpush.msra.mxu0 0.0
        %4886 = vmatpush.msra.mxu0 0.0
        %4887 = vmatpush.msra.mxu0 0.0
        %4888 = vmatpush.msra.mxu0 0.0
        %4889 = vmatpush.msra.mxu0 0.0
        %4890 = vmatpush.msra.mxu0 0.0
        %4891 = vmatpush.msra.mxu0 0.0
        %4892 = vmatpush.msra.mxu0 0.0
        %4893 = vmatpush.msra.mxu0 %v4835
        %4894 = vmatmul.f32.gmra.mxu0 %v4876
        %v4895 = vpop.f32.mrf.mxu0
        %v4896 = vadd.f32 0.0, %v4895
        %4897 = vdwg.mxu0
        %s4898 = scalar_lea.vmem %s47, 64
        %v4899 = vld [vmem:[%s4898] sm:$0xff]
        %v4900 = vld [vmem:[%s4898 + $0x8] sm:$0xff]
        %v4902 = vsel %vm3616, %v4896, 0
        %4904 = vmatpush.msra.mxu0 0.0
        %4905 = vmatpush.msra.mxu0 0.0
        %4906 = vmatpush.msra.mxu0 0.0
        %4907 = vmatpush.msra.mxu0 0.0
        %4908 = vmatpush.msra.mxu0 0.0
        %4909 = vmatpush.msra.mxu0 0.0
        %4910 = vmatpush.msra.mxu0 0.0
        %4911 = vmatpush.msra.mxu0 0.0
        %4912 = vmatpush.msra.mxu0 0.0
        %4913 = vmatpush.msra.mxu0 0.0
        %4914 = vmatpush.msra.mxu0 0.0
        %4915 = vmatpush.msra.mxu0 0.0
        %4916 = vmatpush.msra.mxu0 0.0
        %4917 = vmatpush.msra.mxu0 0.0
        %4918 = vmatpush.msra.mxu0 %v4900
        %4919 = vmatpush.msra.mxu0 %v4899
        %4920 = vmatmul.f32.gmra.mxu0 %v4902
        %v4921 = vpop.f32.mrf.mxu0
        %v4922 = vadd.f32 0.0, %v4921
        %4923 = vdwg.mxu0
        %v4925 = vsel %vm3616, %v4736, 0
        %4927 = vmatpush.msra.mxu0 0.0
        %4928 = vmatpush.msra.mxu0 0.0
        %4929 = vmatpush.msra.mxu0 0.0
        %4930 = vmatpush.msra.mxu0 0.0
        %4931 = vmatpush.msra.mxu0 0.0
        %4932 = vmatpush.msra.mxu0 0.0
        %4933 = vmatpush.msra.mxu0 0.0
        %4934 = vmatpush.msra.mxu0 0.0
        %4935 = vmatpush.msra.mxu0 0.0
        %4936 = vmatpush.msra.mxu0 0.0
        %4937 = vmatpush.msra.mxu0 0.0
        %4938 = vmatpush.msra.mxu0 0.0
        %4939 = vmatpush.msra.mxu0 0.0
        %4940 = vmatpush.msra.mxu0 0.0
        %4941 = vmatpush.msra.mxu0 %v4740
        %4942 = vmatpush.msra.mxu0 %v4739
        %4943 = vmatmul.f32.gmra.mxu0 %v4925
        %v4944 = vpop.f32.mrf.mxu0
        %v4945 = vadd.f32 %v4922, %v4944
        %4946 = vdwg.mxu0
        %s4947 = scalar_lea.vmem %s35, 240
        %v4948 = vld [vmem:[%s4947] sm:$0xff]
        %v4949 = vld [vmem:[%s4947 + $0x8] sm:$0xff]
        %v4950 = vld [vmem:[%s4947 + $0x10] sm:$0xff]
        %v4951 = vld [vmem:[%s4947 + $0x18] sm:$0xff]
        %v4952 = vld [vmem:[%s4947 + $0x20] sm:$0xff]
        %v4953 = vld [vmem:[%s4947 + $0x28] sm:$0xff]
        %s4954 = scalar_lea.vmem %s37, 5
        %v4955 = vld [vmem:[%s4954] sm:$0x1]
        %v4957 = vperm.slane %v4955, 0
        %4959 = vmatpush.msra.mxu0 0.0
        %4960 = vmatpush.msra.mxu0 0.0
        %4961 = vmatpush.msra.mxu0 0.0
        %4962 = vmatpush.msra.mxu0 0.0
        %4963 = vmatpush.msra.mxu0 0.0
        %4964 = vmatpush.msra.mxu0 0.0
        %4965 = vmatpush.msra.mxu0 0.0
        %4966 = vmatpush.msra.mxu0 0.0
        %4967 = vmatpush.msra.mxu0 0.0
        %4968 = vmatpush.msra.mxu0 0.0
        %4969 = vmatpush.msra.mxu0 %v4953
        %4970 = vmatpush.msra.mxu0 %v4952
        %4971 = vmatpush.msra.mxu0 %v4951
        %4972 = vmatpush.msra.mxu0 %v4950
        %4973 = vmatpush.msra.mxu0 %v4949
        %4974 = vmatpush.msra.mxu0 %v4948
        %4975 = vmatmul.f32.gmra.mxu0 %v4591
        %v4976 = vpop.f32.mrf.mxu0
        %v4977 = vadd.f32 %v4957, %v4976
        %4978 = vdwg.mxu0
        %s4979 = scalar_lea.vmem %s39, 240
        %v4980 = vld [vmem:[%s4979] sm:$0xff]
        %v4981 = vld [vmem:[%s4979 + $0x8] sm:$0xff]
        %v4982 = vld [vmem:[%s4979 + $0x10] sm:$0xff]
        %v4983 = vld [vmem:[%s4979 + $0x18] sm:$0xff]
        %v4984 = vld [vmem:[%s4979 + $0x20] sm:$0xff]
        %v4985 = vld [vmem:[%s4979 + $0x28] sm:$0xff]
        %s4986 = scalar_lea.vmem %s41, 5
        %v4987 = vld [vmem:[%s4986] sm:$0x1]
        %v4989 = vperm.slane %v4987, 0
        %4991 = vmatpush.msra.mxu0 0.0
        %4992 = vmatpush.msra.mxu0 0.0
        %4993 = vmatpush.msra.mxu0 0.0
        %4994 = vmatpush.msra.mxu0 0.0
        %4995 = vmatpush.msra.mxu0 0.0
        %4996 = vmatpush.msra.mxu0 0.0
        %4997 = vmatpush.msra.mxu0 0.0
        %4998 = vmatpush.msra.mxu0 0.0
        %4999 = vmatpush.msra.mxu0 0.0
        %5000 = vmatpush.msra.mxu0 0.0
        %5001 = vmatpush.msra.mxu0 %v4985
        %5002 = vmatpush.msra.mxu0 %v4984
        %5003 = vmatpush.msra.mxu0 %v4983
        %5004 = vmatpush.msra.mxu0 %v4982
        %5005 = vmatpush.msra.mxu0 %v4981
        %5006 = vmatpush.msra.mxu0 %v4980
        %5007 = vmatmul.f32.gmra.mxu0 %v4591
        %v5008 = vpop.f32.mrf.mxu0
        %v5009 = vadd.f32 %v4989, %v5008
        %5010 = vdwg.mxu0
        %s5011 = scalar_lea.vmem %s43, 240
        %v5012 = vld [vmem:[%s5011] sm:$0xff]
        %v5013 = vld [vmem:[%s5011 + $0x8] sm:$0xff]
        %v5014 = vld [vmem:[%s5011 + $0x10] sm:$0xff]
        %v5015 = vld [vmem:[%s5011 + $0x18] sm:$0xff]
        %v5016 = vld [vmem:[%s5011 + $0x20] sm:$0xff]
        %v5017 = vld [vmem:[%s5011 + $0x28] sm:$0xff]
        %s5018 = scalar_lea.vmem %s45, 5
        %v5019 = vld [vmem:[%s5018] sm:$0x1]
        %v5021 = vperm.slane %v5019, 0
        %5023 = vmatpush.msra.mxu0 0.0
        %5024 = vmatpush.msra.mxu0 0.0
        %5025 = vmatpush.msra.mxu0 0.0
        %5026 = vmatpush.msra.mxu0 0.0
        %5027 = vmatpush.msra.mxu0 0.0
        %5028 = vmatpush.msra.mxu0 0.0
        %5029 = vmatpush.msra.mxu0 0.0
        %5030 = vmatpush.msra.mxu0 0.0
        %5031 = vmatpush.msra.mxu0 0.0
        %5032 = vmatpush.msra.mxu0 0.0
        %5033 = vmatpush.msra.mxu0 %v5017
        %5034 = vmatpush.msra.mxu0 %v5016
        %5035 = vmatpush.msra.mxu0 %v5015
        %5036 = vmatpush.msra.mxu0 %v5014
        %5037 = vmatpush.msra.mxu0 %v5013
        %5038 = vmatpush.msra.mxu0 %v5012
        %5039 = vmatmul.f32.gmra.mxu0 %v4591
        %v5040 = vpop.f32.mrf.mxu0
        %v5041 = vadd.f32 %v5021, %v5040
        %5042 = vdwg.mxu0
        %v5044 = vsel %vm3616, %v4977, 0
        %v5047 = vsel %vm3616, %v5009, 0
        %5049 = vmatpush.xpose.msra.mxu0 0.0
        %5050 = vmatpush.xpose.msra.mxu0 0.0
        %5051 = vmatpush.xpose.msra.mxu0 0.0
        %5052 = vmatpush.xpose.msra.mxu0 0.0
        %5053 = vmatpush.xpose.msra.mxu0 0.0
        %5054 = vmatpush.xpose.msra.mxu0 0.0
        %5055 = vmatpush.xpose.msra.mxu0 0.0
        %5056 = vmatpush.xpose.msra.mxu0 0.0
        %5057 = vmatpush.xpose.msra.mxu0 0.0
        %5058 = vmatpush.xpose.msra.mxu0 0.0
        %5059 = vmatpush.xpose.msra.mxu0 0.0
        %5060 = vmatpush.xpose.msra.mxu0 0.0
        %5061 = vmatpush.xpose.msra.mxu0 0.0
        %5062 = vmatpush.xpose.msra.mxu0 0.0
        %5063 = vmatpush.xpose.msra.mxu0 0.0
        %5064 = vmatpush.xpose.msra.mxu0 %v5047
        %5065 = vmatmul.f32.gmra.mxu0 %v5044
        %v5066 = vpop.f32.mrf.mxu0
        %v5067 = vadd.f32 0.0, %v5066
        %5068 = vdwg.mxu0
        %v5069 = vmul.f32 %v5067, 0.25
        %v5070 = vsel %vm3644, %v5069, -inf
        %5071 = vmax.xlane.f32.xlu0 %v5070
        %v5072 = vpop.xlane.xlu0 %5071
        %v5073 = vsub.f32 %v5069, %v5072
        %v5074 = vmul.f32 %v5073, 1.442695
        %v5075 = vpow.pop %v5074
        %v5076 = vsel %vm3644, %v5075, 0.0
        %5077 = vadd.xlane.f32.xlu0 %v5076
        %v5078 = vpop.xlane.xlu0 %5077
        %v5079 = vrcp.pop %v5078
        %v5080 = vmul.f32 %v5075, %v5079
        %v5082 = vsel %vm3644, %v5080, 0
        %5084 = vmatpush.msra.mxu0 0.0
        %5085 = vmatpush.msra.mxu0 0.0
        %5086 = vmatpush.msra.mxu0 0.0
        %5087 = vmatpush.msra.mxu0 0.0
        %5088 = vmatpush.msra.mxu0 0.0
        %5089 = vmatpush.msra.mxu0 0.0
        %5090 = vmatpush.msra.mxu0 0.0
        %5091 = vmatpush.msra.mxu0 0.0
        %5092 = vmatpush.msra.mxu0 0.0
        %5093 = vmatpush.msra.mxu0 0.0
        %5094 = vmatpush.msra.mxu0 0.0
        %5095 = vmatpush.msra.mxu0 0.0
        %5096 = vmatpush.msra.mxu0 0.0
        %5097 = vmatpush.msra.mxu0 0.0
        %5098 = vmatpush.msra.mxu0 0.0
        %5099 = vmatpush.msra.mxu0 %v5041
        %5100 = vmatmul.f32.gmra.mxu0 %v5082
        %v5101 = vpop.f32.mrf.mxu0
        %v5102 = vadd.f32 0.0, %v5101
        %5103 = vdwg.mxu0
        %s5104 = scalar_lea.vmem %s47, 80
        %v5105 = vld [vmem:[%s5104] sm:$0xff]
        %v5106 = vld [vmem:[%s5104 + $0x8] sm:$0xff]
        %v5108 = vsel %vm3616, %v5102, 0
        %5110 = vmatpush.msra.mxu0 0.0
        %5111 = vmatpush.msra.mxu0 0.0
        %5112 = vmatpush.msra.mxu0 0.0
        %5113 = vmatpush.msra.mxu0 0.0
        %5114 = vmatpush.msra.mxu0 0.0
        %5115 = vmatpush.msra.mxu0 0.0
        %5116 = vmatpush.msra.mxu0 0.0
        %5117 = vmatpush.msra.mxu0 0.0
        %5118 = vmatpush.msra.mxu0 0.0
        %5119 = vmatpush.msra.mxu0 0.0
        %5120 = vmatpush.msra.mxu0 0.0
        %5121 = vmatpush.msra.mxu0 0.0
        %5122 = vmatpush.msra.mxu0 0.0
        %5123 = vmatpush.msra.mxu0 0.0
        %5124 = vmatpush.msra.mxu0 %v5106
        %5125 = vmatpush.msra.mxu0 %v5105
        %5126 = vmatmul.f32.gmra.mxu0 %v5108
        %v5127 = vpop.f32.mrf.mxu0
        %v5128 = vadd.f32 0.0, %v5127
        %5129 = vdwg.mxu0
        %v5130 = vadd.f32 %v4945, %v5128
        %s5131 = scalar_lea.vmem %s49, 1
        %v5132 = vld [vmem:[%s5131] sm:$0x1]
        %v5134 = vperm.slane %v5132, 0
        %v5136 = vadd.f32 %v5130, %v5134
        %v5138 = vrot.slane %v5136, 1
        %v5139 = vrot.slane %v5136, 2
        %v5140 = vrot.slane %v5136, 3
        %v5141 = vrot.slane %v5136, 4
        %v5142 = vrot.slane %v5136, 5
        %v5143 = vrot.slane %v5136, 6
        %v5144 = vrot.slane %v5136, 7
        %v5153 = vadd.f32 %v4402, %v5136
        %v5154 = vadd.f32 %v4403, %v5138
        %v5155 = vadd.f32 %v4404, %v5139
        %v5156 = vadd.f32 %v4405, %v5140
        %v5157 = vadd.f32 %v4406, %v5141
        %v5158 = vadd.f32 %v4407, %v5142
        %v5159 = vadd.f32 %v4408, %v5143
        %v5160 = vadd.f32 %v4409, %v5144
        %s5161 = scalar_lea.vmem %s51, 1
        %v5162 = vld [vmem:[%s5161] sm:$0x1]
        %s5163 = scalar_lea.vmem %s53, 1
        %v5164 = vld [vmem:[%s5163] sm:$0x1]
        %v5173 = vrot.slane %v5154, 7
        %v5174 = vsel %vm1699, %v5173, %v5153
        %v5175 = vrot.slane %v5155, 6
        %v5176 = vsel %vm1701, %v5175, %v5174
        %v5177 = vrot.slane %v5156, 5
        %v5178 = vsel %vm1703, %v5177, %v5176
        %v5179 = vrot.slane %v5157, 4
        %v5180 = vsel %vm1705, %v5179, %v5178
        %v5181 = vrot.slane %v5158, 3
        %v5182 = vsel %vm1707, %v5181, %v5180
        %v5183 = vrot.slane %v5159, 2
        %v5184 = vsel %vm1709, %v5183, %v5182
        %v5185 = vrot.slane %v5160, 1
        %v5186 = vsel %vm1711, %v5185, %v5184
        %v5188 = vsel %vm3172, %v5186, 0.0
        %5189 = vadd.xlane.f32.xlu0 %v5188
        %v5190 = vpop.xlane.xlu0 %5189
        %v5191 = vmul.f32 %v5190, %v3384
        %v5193 = vrot.slane %v5191, 1
        %v5194 = vrot.slane %v5191, 2
        %v5195 = vrot.slane %v5191, 3
        %v5196 = vrot.slane %v5191, 4
        %v5197 = vrot.slane %v5191, 5
        %v5198 = vrot.slane %v5191, 6
        %v5199 = vrot.slane %v5191, 7
        %v5208 = vsub.f32 %v5153, %v5191
        %v5209 = vsub.f32 %v5154, %v5193
        %v5210 = vsub.f32 %v5155, %v5194
        %v5211 = vsub.f32 %v5156, %v5195
        %v5212 = vsub.f32 %v5157, %v5196
        %v5213 = vsub.f32 %v5158, %v5197
        %v5214 = vsub.f32 %v5159, %v5198
        %v5215 = vsub.f32 %v5160, %v5199
        %v5216 = vmul.f32 %v5208, %v5208
        %v5217 = vmul.f32 %v5209, %v5209
        %v5218 = vmul.f32 %v5210, %v5210
        %v5219 = vmul.f32 %v5211, %v5211
        %v5220 = vmul.f32 %v5212, %v5212
        %v5221 = vmul.f32 %v5213, %v5213
        %v5222 = vmul.f32 %v5214, %v5214
        %v5223 = vmul.f32 %v5215, %v5215
        %v5232 = vrot.slane %v5217, 7
        %v5233 = vsel %vm1699, %v5232, %v5216
        %v5234 = vrot.slane %v5218, 6
        %v5235 = vsel %vm1701, %v5234, %v5233
        %v5236 = vrot.slane %v5219, 5
        %v5237 = vsel %vm1703, %v5236, %v5235
        %v5238 = vrot.slane %v5220, 4
        %v5239 = vsel %vm1705, %v5238, %v5237
        %v5240 = vrot.slane %v5221, 3
        %v5241 = vsel %vm1707, %v5240, %v5239
        %v5242 = vrot.slane %v5222, 2
        %v5243 = vsel %vm1709, %v5242, %v5241
        %v5244 = vrot.slane %v5223, 1
        %v5245 = vsel %vm1711, %v5244, %v5243
        %v5247 = vsel %vm3172, %v5245, 0.0
        %5248 = vadd.xlane.f32.xlu0 %v5247
        %v5249 = vpop.xlane.xlu0 %5248
        %v5250 = vmul.f32 %v5249, %v3384
        %v5251 = vadd.f32 %v5250, 1e-05
        %v5252 = vrsqrt.pop %v5251
        %v5253 = vmul.f32 %v5252, %v5251
        %v5254 = vmul.f32 %v5253, %v5252
        %v5255 = vmul.f32 0.5, %v5254
        %v5256 = vsub.f32 1.5, %v5255
        %v5257 = vmul.f32 %v5252, %v5256
        %vm5258 = vweird.f32 %v5251
        %vm5259 = vweird.f32 %v5252
        %vm5260 = vmor %vm5258, %vm5259
        %v5261 = vsel %vm5260, %v5252, %v5257
        %v5263 = vrot.slane %v5261, 1
        %v5264 = vrot.slane %v5261, 2
        %v5265 = vrot.slane %v5261, 3
        %v5266 = vrot.slane %v5261, 4
        %v5267 = vrot.slane %v5261, 5
        %v5268 = vrot.slane %v5261, 6
        %v5269 = vrot.slane %v5261, 7
        %v5278 = vmul.f32 %v5208, %v5261
        %v5279 = vmul.f32 %v5209, %v5263
        %v5280 = vmul.f32 %v5210, %v5264
        %v5281 = vmul.f32 %v5211, %v5265
        %v5282 = vmul.f32 %v5212, %v5266
        %v5283 = vmul.f32 %v5213, %v5267
        %v5284 = vmul.f32 %v5214, %v5268
        %v5285 = vmul.f32 %v5215, %v5269
        %v5287 = vperm.slane %v5162, 0
        %v5289 = vmul.f32 %v5278, %v5287
        %v5290 = vmul.f32 %v5279, %v5287
        %v5291 = vmul.f32 %v5280, %v5287
        %v5292 = vmul.f32 %v5281, %v5287
        %v5293 = vmul.f32 %v5282, %v5287
        %v5294 = vmul.f32 %v5283, %v5287
        %v5295 = vmul.f32 %v5284, %v5287
        %v5296 = vmul.f32 %v5285, %v5287
        %v5298 = vperm.slane %v5164, 0
        %v5300 = vadd.f32 %v5289, %v5298
        %v5301 = vadd.f32 %v5290, %v5298
        %v5302 = vadd.f32 %v5291, %v5298
        %v5303 = vadd.f32 %v5292, %v5298
        %v5304 = vadd.f32 %v5293, %v5298
        %v5305 = vadd.f32 %v5294, %v5298
        %v5306 = vadd.f32 %v5295, %v5298
        %v5307 = vadd.f32 %v5296, %v5298
        %s5308 = scalar_lea.vmem %s55, 48
        %v5309 = vld [vmem:[%s5308] sm:$0xff]
        %v5310 = vld [vmem:[%s5308 + $0x8] sm:$0xff]
        %v5311 = vld [vmem:[%s5308 + $0x10] sm:$0xff]
        %v5312 = vld [vmem:[%s5308 + $0x18] sm:$0xff]
        %v5313 = vld [vmem:[%s5308 + $0x20] sm:$0xff]
        %v5314 = vld [vmem:[%s5308 + $0x28] sm:$0xff]
        %v5323 = vrot.slane %v5301, 7
        %v5324 = vsel %vm1699, %v5323, %v5300
        %v5325 = vrot.slane %v5302, 6
        %v5326 = vsel %vm1701, %v5325, %v5324
        %v5327 = vrot.slane %v5303, 5
        %v5328 = vsel %vm1703, %v5327, %v5326
        %v5329 = vrot.slane %v5304, 4
        %v5330 = vsel %vm1705, %v5329, %v5328
        %v5331 = vrot.slane %v5305, 3
        %v5332 = vsel %vm1707, %v5331, %v5330
        %v5333 = vrot.slane %v5306, 2
        %v5334 = vsel %vm1709, %v5333, %v5332
        %v5335 = vrot.slane %v5307, 1
        %v5336 = vsel %vm1711, %v5335, %v5334
        %v5337 = vsel %vm3172, %v5336, 0
        %5339 = vmatpush.msra.mxu0 0.0
        %5340 = vmatpush.msra.mxu0 0.0
        %5341 = vmatpush.msra.mxu0 0.0
        %5342 = vmatpush.msra.mxu0 0.0
        %5343 = vmatpush.msra.mxu0 0.0
        %5344 = vmatpush.msra.mxu0 0.0
        %5345 = vmatpush.msra.mxu0 0.0
        %5346 = vmatpush.msra.mxu0 0.0
        %5347 = vmatpush.msra.mxu0 0.0
        %5348 = vmatpush.msra.mxu0 0.0
        %5349 = vmatpush.msra.mxu0 %v5314
        %5350 = vmatpush.msra.mxu0 %v5313
        %5351 = vmatpush.msra.mxu0 %v5312
        %5352 = vmatpush.msra.mxu0 %v5311
        %5353 = vmatpush.msra.mxu0 %v5310
        %5354 = vmatpush.msra.mxu0 %v5309
        %5355 = vmatmul.f32.gmra.mxu0 %v5337
        %v5356 = vpop.f32.mrf.mxu0
        %v5357 = vadd.f32 0.0, %v5356
        %5358 = vdwg.mxu0
        %s5359 = scalar_lea.vmem %s57, 48
        %v5360 = vld [vmem:[%s5359] sm:$0xff]
        %v5361 = vld [vmem:[%s5359 + $0x8] sm:$0xff]
        %v5362 = vld [vmem:[%s5359 + $0x10] sm:$0xff]
        %v5363 = vld [vmem:[%s5359 + $0x18] sm:$0xff]
        %v5364 = vld [vmem:[%s5359 + $0x20] sm:$0xff]
        %v5365 = vld [vmem:[%s5359 + $0x28] sm:$0xff]
        %5366 = vmatpush.msra.mxu0 0.0
        %5367 = vmatpush.msra.mxu0 0.0
        %5368 = vmatpush.msra.mxu0 0.0
        %5369 = vmatpush.msra.mxu0 0.0
        %5370 = vmatpush.msra.mxu0 0.0
        %5371 = vmatpush.msra.mxu0 0.0
        %5372 = vmatpush.msra.mxu0 0.0
        %5373 = vmatpush.msra.mxu0 0.0
        %5374 = vmatpush.msra.mxu0 0.0
        %5375 = vmatpush.msra.mxu0 0.0
        %5376 = vmatpush.msra.mxu0 %v5365
        %5377 = vmatpush.msra.mxu0 %v5364
        %5378 = vmatpush.msra.mxu0 %v5363
        %5379 = vmatpush.msra.mxu0 %v5362
        %5380 = vmatpush.msra.mxu0 %v5361
        %5381 = vmatpush.msra.mxu0 %v5360
        %5382 = vmatmul.f32.gmra.mxu0 %v5337
        %v5383 = vpop.f32.mrf.mxu0
        %v5384 = vadd.f32 0.0, %v5383
        %5385 = vdwg.mxu0
        %v5386 = vsub.f32 0.0, %v5357
        %v5387 = vmul.f32 %v5386, 1.442695
        %v5388 = vpow.pop %v5387
        %v5389 = vadd.f32 %v5388, 1.0
        %v5390 = vrcp.pop %v5389
        %v5391 = vmul.f32 %v5389, %v5390
        %v5392 = vsub.f32 1.0, %v5391
        %v5393 = vmul.f32 %v5390, %v5392
        %v5394 = vadd.f32 %v5390, %v5393
        %vm5395 = vweird.f32 %v5389
        %vm5396 = vweird.f32 %v5390
        %vm5397 = vmor %vm5395, %vm5396
        %v5398 = vsel %vm5397, %v5390, %v5394
        %v5399 = vand.u32 2147483647, %v5389
        %vm5400 = vcmp.eq.f32.partialorder %v5399, 8.507059e+37
        %v5401 = vand.u32 %v5389, 2147483648
        %v5402 = vor.u32 1.1754944e-38, %v5401
        %v5403 = vsel %vm5400, %v5402, %v5398
        %v5404 = vmul.f32 1.0, %v5403
        %v5405 = vmul.f32 %v5357, %v5404
        %v5406 = vmul.f32 %v5405, %v5384
        %s5407 = scalar_lea.vmem %s59, 128
        %v5408 = vld [vmem:[%s5407] sm:$0xff]
        %v5409 = vld [vmem:[%s5407 + $0x8] sm:$0xff]
        %v5410 = vld [vmem:[%s5407 + $0x10] sm:$0xff]
        %v5411 = vld [vmem:[%s5407 + $0x18] sm:$0xff]
        %v5412 = vld [vmem:[%s5407 + $0x20] sm:$0xff]
        %v5413 = vld [vmem:[%s5407 + $0x28] sm:$0xff]
        %v5414 = vld [vmem:[%s5407 + $0x30] sm:$0xff]
        %v5415 = vld [vmem:[%s5407 + $0x38] sm:$0xff]
        %v5416 = vld [vmem:[%s5407 + $0x40] sm:$0xff]
        %v5417 = vld [vmem:[%s5407 + $0x48] sm:$0xff]
        %v5418 = vld [vmem:[%s5407 + $0x50] sm:$0xff]
        %v5419 = vld [vmem:[%s5407 + $0x58] sm:$0xff]
        %v5420 = vld [vmem:[%s5407 + $0x60] sm:$0xff]
        %v5421 = vld [vmem:[%s5407 + $0x68] sm:$0xff]
        %v5422 = vld [vmem:[%s5407 + $0x70] sm:$0xff]
        %v5423 = vld [vmem:[%s5407 + $0x78] sm:$0xff]
        %5424 = vmatpush.msra.mxu0 %v5423
        %5425 = vmatpush.msra.mxu0 %v5422
        %5426 = vmatpush.msra.mxu0 %v5421
        %5427 = vmatpush.msra.mxu0 %v5420
        %5428 = vmatpush.msra.mxu0 %v5419
        %5429 = vmatpush.msra.mxu0 %v5418
        %5430 = vmatpush.msra.mxu0 %v5417
        %5431 = vmatpush.msra.mxu0 %v5416
        %5432 = vmatpush.msra.mxu0 %v5415
        %5433 = vmatpush.msra.mxu0 %v5414
        %5434 = vmatpush.msra.mxu0 %v5413
        %5435 = vmatpush.msra.mxu0 %v5412
        %5436 = vmatpush.msra.mxu0 %v5411
        %5437 = vmatpush.msra.mxu0 %v5410
        %5438 = vmatpush.msra.mxu0 %v5409
        %5439 = vmatpush.msra.mxu0 %v5408
        %5440 = vmatmul.f32.gmra.mxu0 %v5406
        %v5441 = vpop.f32.mrf.mxu0
        %v5442 = vadd.f32 0.0, %v5441
        %5443 = vdwg.mxu0
        %v5445 = vrot.slane %v5442, 1
        %v5446 = vrot.slane %v5442, 2
        %v5447 = vrot.slane %v5442, 3
        %v5448 = vrot.slane %v5442, 4
        %v5449 = vrot.slane %v5442, 5
        %v5450 = vrot.slane %v5442, 6
        %v5451 = vrot.slane %v5442, 7
        %v5460 = vadd.f32 %v5153, %v5442
        %v5461 = vadd.f32 %v5154, %v5445
        %v5462 = vadd.f32 %v5155, %v5446
        %v5463 = vadd.f32 %v5156, %v5447
        %v5464 = vadd.f32 %v5157, %v5448
        %v5465 = vadd.f32 %v5158, %v5449
        %v5466 = vadd.f32 %v5159, %v5450
        %v5467 = vadd.f32 %v5160, %v5451
        %v5468 = vld [vmem:[%s61] sm:$0x1]
        %v5469 = vld [vmem:[%s63] sm:$0x1]
        %v5478 = vrot.slane %v5461, 7
        %v5479 = vsel %vm1699, %v5478, %v5460
        %v5480 = vrot.slane %v5462, 6
        %v5481 = vsel %vm1701, %v5480, %v5479
        %v5482 = vrot.slane %v5463, 5
        %v5483 = vsel %vm1703, %v5482, %v5481
        %v5484 = vrot.slane %v5464, 4
        %v5485 = vsel %vm1705, %v5484, %v5483
        %v5486 = vrot.slane %v5465, 3
        %v5487 = vsel %vm1707, %v5486, %v5485
        %v5488 = vrot.slane %v5466, 2
        %v5489 = vsel %vm1709, %v5488, %v5487
        %v5490 = vrot.slane %v5467, 1
        %v5491 = vsel %vm1711, %v5490, %v5489
        %v5493 = vsel %vm3172, %v5491, 0.0
        %5494 = vadd.xlane.f32.xlu0 %v5493
        %v5495 = vpop.xlane.xlu0 %5494
        %v5496 = vmul.f32 %v5495, %v3384
        %v5498 = vrot.slane %v5496, 1
        %v5499 = vrot.slane %v5496, 2
        %v5500 = vrot.slane %v5496, 3
        %v5501 = vrot.slane %v5496, 4
        %v5502 = vrot.slane %v5496, 5
        %v5503 = vrot.slane %v5496, 6
        %v5504 = vrot.slane %v5496, 7
        %v5513 = vsub.f32 %v5460, %v5496
        %v5514 = vsub.f32 %v5461, %v5498
        %v5515 = vsub.f32 %v5462, %v5499
        %v5516 = vsub.f32 %v5463, %v5500
        %v5517 = vsub.f32 %v5464, %v5501
        %v5518 = vsub.f32 %v5465, %v5502
        %v5519 = vsub.f32 %v5466, %v5503
        %v5520 = vsub.f32 %v5467, %v5504
        %v5521 = vmul.f32 %v5513, %v5513
        %v5522 = vmul.f32 %v5514, %v5514
        %v5523 = vmul.f32 %v5515, %v5515
        %v5524 = vmul.f32 %v5516, %v5516
        %v5525 = vmul.f32 %v5517, %v5517
        %v5526 = vmul.f32 %v5518, %v5518
        %v5527 = vmul.f32 %v5519, %v5519
        %v5528 = vmul.f32 %v5520, %v5520
        %v5537 = vrot.slane %v5522, 7
        %v5538 = vsel %vm1699, %v5537, %v5521
        %v5539 = vrot.slane %v5523, 6
        %v5540 = vsel %vm1701, %v5539, %v5538
        %v5541 = vrot.slane %v5524, 5
        %v5542 = vsel %vm1703, %v5541, %v5540
        %v5543 = vrot.slane %v5525, 4
        %v5544 = vsel %vm1705, %v5543, %v5542
        %v5545 = vrot.slane %v5526, 3
        %v5546 = vsel %vm1707, %v5545, %v5544
        %v5547 = vrot.slane %v5527, 2
        %v5548 = vsel %vm1709, %v5547, %v5546
        %v5549 = vrot.slane %v5528, 1
        %v5550 = vsel %vm1711, %v5549, %v5548
        %v5552 = vsel %vm3172, %v5550, 0.0
        %5553 = vadd.xlane.f32.xlu0 %v5552
        %v5554 = vpop.xlane.xlu0 %5553
        %v5555 = vmul.f32 %v5554, %v3384
        %v5556 = vadd.f32 %v5555, 1e-05
        %v5557 = vrsqrt.pop %v5556
        %v5558 = vmul.f32 %v5557, %v5556
        %v5559 = vmul.f32 %v5558, %v5557
        %v5560 = vmul.f32 0.5, %v5559
        %v5561 = vsub.f32 1.5, %v5560
        %v5562 = vmul.f32 %v5557, %v5561
        %vm5563 = vweird.f32 %v5556
        %vm5564 = vweird.f32 %v5557
        %vm5565 = vmor %vm5563, %vm5564
        %v5566 = vsel %vm5565, %v5557, %v5562
        %v5568 = vrot.slane %v5566, 1
        %v5569 = vrot.slane %v5566, 2
        %v5570 = vrot.slane %v5566, 3
        %v5571 = vrot.slane %v5566, 4
        %v5572 = vrot.slane %v5566, 5
        %v5573 = vrot.slane %v5566, 6
        %v5574 = vrot.slane %v5566, 7
        %v5583 = vmul.f32 %v5513, %v5566
        %v5584 = vmul.f32 %v5514, %v5568
        %v5585 = vmul.f32 %v5515, %v5569
        %v5586 = vmul.f32 %v5516, %v5570
        %v5587 = vmul.f32 %v5517, %v5571
        %v5588 = vmul.f32 %v5518, %v5572
        %v5589 = vmul.f32 %v5519, %v5573
        %v5590 = vmul.f32 %v5520, %v5574
        %v5592 = vperm.slane %v5468, 0
        %v5594 = vmul.f32 %v5583, %v5592
        %v5595 = vmul.f32 %v5584, %v5592
        %v5596 = vmul.f32 %v5585, %v5592
        %v5597 = vmul.f32 %v5586, %v5592
        %v5598 = vmul.f32 %v5587, %v5592
        %v5599 = vmul.f32 %v5588, %v5592
        %v5600 = vmul.f32 %v5589, %v5592
        %v5601 = vmul.f32 %v5590, %v5592
        %v5603 = vperm.slane %v5469, 0
        %v5605 = vadd.f32 %v5594, %v5603
        %v5606 = vadd.f32 %v5595, %v5603
        %v5607 = vadd.f32 %v5596, %v5603
        %v5608 = vadd.f32 %v5597, %v5603
        %v5609 = vadd.f32 %v5598, %v5603
        %v5610 = vadd.f32 %v5599, %v5603
        %v5611 = vadd.f32 %v5600, %v5603
        %v5612 = vadd.f32 %v5601, %v5603
        %v5613 = vld [vmem:[%s65] sm:$0xff]
        %v5614 = vld [vmem:[%s65 + $0x8] sm:$0xff]
        %v5615 = vld [vmem:[%s65 + $0x10] sm:$0xff]
        %v5616 = vld [vmem:[%s65 + $0x18] sm:$0xff]
        %v5617 = vld [vmem:[%s65 + $0x20] sm:$0xff]
        %v5618 = vld [vmem:[%s65 + $0x28] sm:$0xff]
        %v5619 = vld [vmem:[%s65 + $0x30] sm:$0xff]
        %v5620 = vld [vmem:[%s65 + $0x38] sm:$0xff]
        %v5621 = vld [vmem:[%s65 + $0x40] sm:$0xff]
        %v5622 = vld [vmem:[%s65 + $0x48] sm:$0xff]
        %v5623 = vld [vmem:[%s65 + $0x50] sm:$0xff]
        %v5624 = vld [vmem:[%s65 + $0x58] sm:$0xff]
        %v5625 = vld [vmem:[%s67] sm:$0x3]
        %v5627 = vperm.slane %v5625, 0
        %v5628 = vperm.slane %v5625, 1
        %v5639 = vrot.slane %v5606, 7
        %v5640 = vsel %vm1699, %v5639, %v5605
        %v5641 = vrot.slane %v5607, 6
        %v5642 = vsel %vm1701, %v5641, %v5640
        %v5643 = vrot.slane %v5608, 5
        %v5644 = vsel %vm1703, %v5643, %v5642
        %v5645 = vrot.slane %v5609, 4
        %v5646 = vsel %vm1705, %v5645, %v5644
        %v5647 = vrot.slane %v5610, 3
        %v5648 = vsel %vm1707, %v5647, %v5646
        %v5649 = vrot.slane %v5611, 2
        %v5650 = vsel %vm1709, %v5649, %v5648
        %v5651 = vrot.slane %v5612, 1
        %v5652 = vsel %vm1711, %v5651, %v5650
        %v5653 = vsel %vm3172, %v5652, 0
        %5655 = vmatpush.msra.mxu0 0.0
        %5656 = vmatpush.msra.mxu0 0.0
        %5657 = vmatpush.msra.mxu0 0.0
        %5658 = vmatpush.msra.mxu0 0.0
        %5659 = vmatpush.msra.mxu0 0.0
        %5660 = vmatpush.msra.mxu0 0.0
        %5661 = vmatpush.msra.mxu0 0.0
        %5662 = vmatpush.msra.mxu0 0.0
        %5663 = vmatpush.msra.mxu0 0.0
        %5664 = vmatpush.msra.mxu0 0.0
        %5665 = vmatpush.msra.mxu0 %v5623
        %5666 = vmatpush.msra.mxu0 %v5621
        %5667 = vmatpush.msra.mxu0 %v5619
        %5668 = vmatpush.msra.mxu0 %v5617
        %5669 = vmatpush.msra.mxu0 %v5615
        %5670 = vmatpush.msra.mxu0 %v5613
        %5671 = vmatmul.f32.gmra.mxu0 %v5653
        %v5672 = vpop.f32.mrf.mxu0
        %v5673 = vadd.f32 %v5627, %v5672
        %5674 = vdwg.mxu0
        %5675 = vmatpush.msra.mxu0 0.0
        %5676 = vmatpush.msra.mxu0 0.0
        %5677 = vmatpush.msra.mxu0 0.0
        %5678 = vmatpush.msra.mxu0 0.0
        %5679 = vmatpush.msra.mxu0 0.0
        %5680 = vmatpush.msra.mxu0 0.0
        %5681 = vmatpush.msra.mxu0 0.0
        %5682 = vmatpush.msra.mxu0 0.0
        %5683 = vmatpush.msra.mxu0 0.0
        %5684 = vmatpush.msra.mxu0 0.0
        %5685 = vmatpush.msra.mxu0 %v5624
        %5686 = vmatpush.msra.mxu0 %v5622
        %5687 = vmatpush.msra.mxu0 %v5620
        %5688 = vmatpush.msra.mxu0 %v5618
        %5689 = vmatpush.msra.mxu0 %v5616
        %5690 = vmatpush.msra.mxu0 %v5614
        %5691 = vmatmul.f32.gmra.mxu0 %v5653
        %v5692 = vpop.f32.mrf.mxu0
        %v5693 = vadd.f32 %v5628, %v5692
        %5694 = vdwg.mxu0
        %v5695 = vmul.f32 %v5673, 0.5
        %v5696 = vmul.f32 %v5693, 0.5
        %v5697 = vmul.f32 %v5673, 0.044715
        %v5698 = vmul.f32 %v5693, 0.044715
        %v5699 = vmul.f32 %v5697, %v5673
        %v5700 = vmul.f32 %v5698, %v5693
        %v5701 = vmul.f32 %v5699, %v5673
        %v5702 = vmul.f32 %v5700, %v5693
        %v5703 = vadd.f32 %v5673, %v5701
        %v5704 = vadd.f32 %v5693, %v5702
        %v5705 = vmul.f32 %v5703, 0.7978846
        %v5706 = vmul.f32 %v5704, 0.7978846
        %v5707 = vtanh.pop %v5705
        %v5708 = vtanh.pop %v5706
        %v5709 = vadd.f32 %v5707, 1.0
        %v5710 = vadd.f32 %v5708, 1.0
        %v5711 = vmul.f32 %v5695, %v5709
        %v5712 = vmul.f32 %v5696, %v5710
        %v5713 = vld [vmem:[%s69] sm:$0xff]
        %v5714 = vld [vmem:[%s69 + $0x8] sm:$0xff]
        %v5715 = vld [vmem:[%s69 + $0x10] sm:$0xff]
        %v5716 = vld [vmem:[%s69 + $0x18] sm:$0xff]
        %v5717 = vld [vmem:[%s69 + $0x20] sm:$0xff]
        %v5718 = vld [vmem:[%s69 + $0x28] sm:$0xff]
        %v5719 = vld [vmem:[%s69 + $0x30] sm:$0xff]
        %v5720 = vld [vmem:[%s69 + $0x38] sm:$0xff]
        %v5721 = vld [vmem:[%s69 + $0x40] sm:$0xff]
        %v5722 = vld [vmem:[%s69 + $0x48] sm:$0xff]
        %v5723 = vld [vmem:[%s69 + $0x50] sm:$0xff]
        %v5724 = vld [vmem:[%s69 + $0x58] sm:$0xff]
        %v5725 = vld [vmem:[%s69 + $0x60] sm:$0xff]
        %v5726 = vld [vmem:[%s69 + $0x68] sm:$0xff]
        %v5727 = vld [vmem:[%s69 + $0x70] sm:$0xff]
        %v5728 = vld [vmem:[%s69 + $0x78] sm:$0xff]
        %v5729 = vld [vmem:[%s69 + $0x80] sm:$0xff]
        %v5730 = vld [vmem:[%s69 + $0x88] sm:$0xff]
        %v5731 = vld [vmem:[%s69 + $0x90] sm:$0xff]
        %v5732 = vld [vmem:[%s69 + $0x98] sm:$0xff]
        %v5733 = vld [vmem:[%s69 + $0xa0] sm:$0xff]
        %v5734 = vld [vmem:[%s69 + $0xa8] sm:$0xff]
        %v5735 = vld [vmem:[%s69 + $0xb0] sm:$0xff]
        %v5736 = vld [vmem:[%s69 + $0xb8] sm:$0xff]
        %v5737 = vld [vmem:[%s69 + $0xc0] sm:$0xff]
        %v5738 = vld [vmem:[%s69 + $0xc8] sm:$0xff]
        %v5739 = vld [vmem:[%s69 + $0xd0] sm:$0xff]
        %v5740 = vld [vmem:[%s69 + $0xd8] sm:$0xff]
        %v5741 = vld [vmem:[%s69 + $0xe0] sm:$0xff]
        %v5742 = vld [vmem:[%s69 + $0xe8] sm:$0xff]
        %v5743 = vld [vmem:[%s69 + $0xf0] sm:$0xff]
        %v5744 = vld [vmem:[%s69 + $0xf8] sm:$0xff]
        %5745 = vmatpush.msra.mxu0 %v5728
        %5746 = vmatpush.msra.mxu0 %v5727
        %5747 = vmatpush.msra.mxu0 %v5726
        %5748 = vmatpush.msra.mxu0 %v5725
        %5749 = vmatpush.msra.mxu0 %v5724
        %5750 = vmatpush.msra.mxu0 %v5723
        %5751 = vmatpush.msra.mxu0 %v5722
        %5752 = vmatpush.msra.mxu0 %v5721
        %5753 = vmatpush.msra.mxu0 %v5720
        %5754 = vmatpush.msra.mxu0 %v5719
        %5755 = vmatpush.msra.mxu0 %v5718
        %5756 = vmatpush.msra.mxu0 %v5717
        %5757 = vmatpush.msra.mxu0 %v5716
        %5758 = vmatpush.msra.mxu0 %v5715
        %5759 = vmatpush.msra.mxu0 %v5714
        %5760 = vmatpush.msra.mxu0 %v5713
        %5761 = vmatmul.f32.gmra.mxu0 %v5711
        %v5762 = vpop.f32.mrf.mxu0
        %v5763 = vadd.f32 0.0, %v5762
        %5764 = vdwg.mxu0
        %5765 = vmatpush.msra.mxu0 %v5744
        %5766 = vmatpush.msra.mxu0 %v5743
        %5767 = vmatpush.msra.mxu0 %v5742
        %5768 = vmatpush.msra.mxu0 %v5741
        %5769 = vmatpush.msra.mxu0 %v5740
        %5770 = vmatpush.msra.mxu0 %v5739
        %5771 = vmatpush.msra.mxu0 %v5738
        %5772 = vmatpush.msra.mxu0 %v5737
        %5773 = vmatpush.msra.mxu0 %v5736
        %5774 = vmatpush.msra.mxu0 %v5735
        %5775 = vmatpush.msra.mxu0 %v5734
        %5776 = vmatpush.msra.mxu0 %v5733
        %5777 = vmatpush.msra.mxu0 %v5732
        %5778 = vmatpush.msra.mxu0 %v5731
        %5779 = vmatpush.msra.mxu0 %v5730
        %5780 = vmatpush.msra.mxu0 %v5729
        %5781 = vmatmul.f32.gmra.mxu0 %v5712
        %v5782 = vpop.f32.mrf.mxu0
        %v5783 = vadd.f32 %v5763, %v5782
        %5784 = vdwg.mxu0
        %v5785 = vmul.f32 %v5783, 50.0
        %v5786 = vsel %vm1141, %v5785, -inf
        %5787 = vmax.xlane.f32.xlu0 %v5786
        %v5788 = vpop.xlane.xlu0 %5787
        %v5789 = vsub.f32 %v5785, %v5788
        %v5790 = vmul.f32 %v5789, 1.442695
        %v5791 = vpow.pop %v5790
        %v5792 = vsel %vm1141, %v5791, 0.0
        %5793 = vadd.xlane.f32.xlu0 %v5792
        %v5794 = vpop.xlane.xlu0 %5793
        %v5795 = vrcp.pop %v5794
        %v5796 = vmul.f32 %v5794, %v5795
        %v5797 = vsub.f32 1.0, %v5796
        %v5798 = vmul.f32 %v5795, %v5797
        %v5799 = vadd.f32 %v5795, %v5798
        %vm5800 = vweird.f32 %v5794
        %vm5801 = vweird.f32 %v5795
        %vm5802 = vmor %vm5800, %vm5801
        %v5803 = vsel %vm5802, %v5795, %v5799
        %v5804 = vand.u32 2147483647, %v5794
        %vm5805 = vcmp.eq.f32.partialorder %v5804, 8.507059e+37
        %v5806 = vand.u32 %v5794, 2147483648
        %v5807 = vor.u32 1.1754944e-38, %v5806
        %v5808 = vsel %vm5805, %v5807, %v5803
        %v5809 = vmul.f32 %v5791, %v5808
        %5810 = vst.msk [vmem:[%s1119] sm:$0xff] %vm1141, %v5809
        %p5811 = scmp.lt.s32.totalorder %s84, 1
        %s5812 = scalar_select %p5811, %s84, 1
        %s5813 = smul.addr %s5812, 8
        %s5814 = scalar_lea.vmem %s71, %s5813
        // Predicated region
        $region169: #{tpu_custom_call.1} parent=159 // pred_check
          %p5815 = pneg %p847
        $region170: #{tpu_custom_call.1} parent=159 // pred_check_branch
          %5817 = sbr.rel (%p5815) target = $region172
        $region171: #{tpu_custom_call.1} parent=159 // pred_region
          _
        $region172: #{tpu_custom_call.1} parent=159 // pred_fallthru
          _
      $region160: #{tpu_custom_call.1} parent=5 // pred_fallthru
        _
      %p5818 = scmp.le.s32.totalorder 2, %s79
      // Predicated region
      $region173: #{tpu_custom_call.1} parent=5 // pred_check
        %p5819 = pneg %p5818
      $region174: #{tpu_custom_call.1} parent=5 // pred_check_branch
        %5821 = sbr.rel (%p5819) target = $region176
      $region175: #{tpu_custom_call.1} parent=5 // pred_region
        %s5822 = ssub.s32 %s79, 2
        // Predicated region
        $region177: #{tpu_custom_call.1} parent=175 // pred_check
          %p5823 = pneg %p853
        $region178: #{tpu_custom_call.1} parent=175 // pred_check_branch
          %5825 = sbr.rel (%p5823) target = $region180
        $region179: #{tpu_custom_call.1} parent=175 // pred_region
          %p5826 = scmp.lt.s32.totalorder %s85, 1
          %s5827 = scalar_select %p5826, %s85, 1
          %s5828 = smul.addr %s5827, 8
          %s5829 = scalar_lea.vmem %s71, %s5828
        $region180: #{tpu_custom_call.1} parent=175 // pred_fallthru
          _
      $region176: #{tpu_custom_call.1} parent=5 // pred_fallthru
        _
    $region6: #{tpu_custom_call.1} parent=1 // loop_footer
      %s83 = sadd.s32 1, %s79
    $region7: #{tpu_custom_call.1} parent=1 // loop_footer_branch
      %78 = sbr.rel target = $region3
    $region8: #{tpu_custom_call.1} parent=1 // loop_exit
      _
    %5830 = vsyncpa [#allocation3], 1
    %s5831 = scalar_lea.sflag [#allocation3], 1
    %5832 = vsyncpa %s5831, 1
    %5833 = vsyncpa [#allocation5], 1

</llo_original>
